<compile_context>
chip_gen: v6e
topology: v6e:2x2x1
jax: 0.10.0
libtpu: 0.0.40
codegen_flags: <defaults>
</compile_context>

<pallas_src>
import functools

import jax
import jax.numpy as jnp
import numpy as np
from jax.experimental import pallas as pl
from jax.experimental.pallas import tpu as pltpu

KERNEL_SIZES = (3, 5, 7, 11)
GROUPS = 8
EPS = 1e-5


def _inception_kernel(xi_ref, g_ref, m_ref, gamma_ref, beta_ref, out_ref, *,
                      B, H, W, NB, Cout):
    """One grid step == B batch samples (GroupNorm stats are per-sample).

    xi_ref    : (B, H, Kmax*Ca*Wp)       bf16  im2col rows (1x1 conv folded in)
    g_ref     : (Kmax*Ca*Wp, NB*Cout*W)  bf16  fused banded conv weights
    m_ref     : (NB*Cout*W, NB*Cout*W)   f32   fused per-group average matrix
    gamma_ref : (1, NB*Cout*W)           f32   per-channel scale, lane-expanded
    beta_ref  : (1, NB*Cout*W)           f32   per-channel shift, lane-expanded
    out_ref   : (B, H, Cout*W)           f32
    """
    CW = Cout * W
    NCW = NB * CW
    Kd = xi_ref.shape[2]

    # ---- all branches + all taps in ONE MXU matmul (M=B*H, K=Kmax*Ca*Wp) ----
    lhs = xi_ref[...].reshape(B * H, Kd)                      # bf16, no re-cast
    acc = jnp.dot(lhs, g_ref[...],
                  preferred_element_type=jnp.float32)         # (B*H, NCW) f32
    acc = acc.reshape(B, H, NCW)

    # ---- per-sample GroupNorm stats (centered two-pass, f32) ----
    rowsum = jnp.sum(acc, axis=1)                             # (B, NCW)
    mean = jnp.dot(rowsum, m_ref[...],
                   preferred_element_type=jnp.float32)        # (B, NCW)
    centered = acc - mean[:, None, :]                         # (B, H, NCW)
    sqsum = jnp.sum(centered * centered, axis=1)              # (B, NCW)
    var = jnp.dot(sqsum, m_ref[...],
                  preferred_element_type=jnp.float32)         # (B, NCW)
    scale = jax.lax.rsqrt(var + EPS) * gamma_ref[...]         # EUP rsqrt
    beta = beta_ref[...]                                      # (1, NCW)

    # ---- per-branch affine + ReLU + sum (128-aligned 256-lane slices) ----
    y = None
    for br in range(NB):
        sl = slice(br * CW, (br + 1) * CW)
        act = jnp.maximum(
            centered[:, :, sl] * scale[:, None, sl] + beta[:, None, sl], 0.0)
        y = act if y is None else y + act
    out_ref[...] = y


def _pick_block_batch(N, H, target_rows=256):
    """Largest divisor of N with B*H <= target_rows, keeping >= 2 grid steps."""
    cap = max(1, min(target_rows // max(H, 1), N // 2 if N >= 2 else 1))
    b = 1
    for cand in range(1, cap + 1):
        if N % cand == 0:
            b = cand
    return b


def inception_forward(x_nchw, packed):
    """Pallas implementation of Inception.forward (input/output in NCHW)."""
    G2, gn_mat, gamma_f, beta_f = packed
    N, Cin, H, W = x_nchw.shape
    NB = len(KERNEL_SIZES)
    Kmax = max(KERNEL_SIZES)
    pmax = Kmax // 2
    Hp, Wp = H + 2 * pmax, W + 2 * pmax
    Ca = Cin + 1
    Cout = gamma_f.shape[1] // (NB * W)
    CW = Cout * W
    NCW = NB * CW
    Kd = Kmax * Ca * Wp

    # ---- layout plumbing (XLA): ones channel, zero pad, bf16 im2col rows ----
    x32 = x_nchw.astype(jnp.float32)
    ones = jnp.ones((N, 1, H, W), jnp.float32)
    xa = jnp.concatenate([x32, ones], axis=1)                 # (N, Ca, H, W)
    xa = jnp.transpose(xa, (0, 2, 1, 3))                      # (N, H, Ca, W)
    xp = jnp.pad(xa, ((0, 0), (pmax, pmax), (0, 0), (pmax, pmax)))
    xp = xp.reshape(N, Hp, Ca * Wp).astype(jnp.bfloat16)      # pre-cast to bf16
    # im2col over height taps: row h = [xp[h], xp[h+1], ..., xp[h+Kmax-1]]
    xi = jnp.concatenate([xp[:, kh:kh + H, :] for kh in range(Kmax)], axis=-1)

    B = _pick_block_batch(N, H)
    grid = (N // B,)

    kernel = functools.partial(_inception_kernel, B=B, H=H, W=W, NB=NB,
                               Cout=Cout)

    cost = pl.CostEstimate(
        flops=2 * N * H * Kd * NCW + 4 * N * NCW * NCW,
        transcendentals=N * NCW,
        bytes_accessed=(xi.size * 2 + G2.size * 2 + gn_mat.size * 4
                        + gamma_f.size * 4 + beta_f.size * 4
                        + N * H * CW * 4),
    )

    out = pl.pallas_call(
        kernel,
        out_shape=jax.ShapeDtypeStruct((N, H, CW), jnp.float32),
        grid=grid,
        in_specs=[
            pl.BlockSpec((B, H, Kd), lambda n: (n, 0, 0)),    # im2col rows
            # Grid-invariant operands: block index never changes, DMA'd once.
            pl.BlockSpec(G2.shape, lambda n: (0, 0)),         # fused weights
            pl.BlockSpec(gn_mat.shape, lambda n: (0, 0)),     # group-avg matrix
            pl.BlockSpec(gamma_f.shape, lambda n: (0, 0)),
            pl.BlockSpec(beta_f.shape, lambda n: (0, 0)),
        ],
        out_specs=pl.BlockSpec((B, H, CW), lambda n: (n, 0, 0)),
        compiler_params=pltpu.CompilerParams(
            dimension_semantics=("parallel",)),
        cost_estimate=cost,
    )(xi, G2, gn_mat, gamma_f, beta_f)

    # (N, H, Cout*W) -> (N, Cout, H, W)
    return jnp.transpose(out.reshape(N, H, Cout, W), (0, 2, 1, 3))


def make_params(key, Cin, Chid, Cout):
    """Deterministic synthetic parameters matching the PyTorch module shapes."""
    assert Chid % GROUPS == 0 and Cout % GROUPS == 0
    nb = len(KERNEL_SIZES)
    keys = iter(jax.random.split(key, nb + 5))
    s = 0.1

    w1 = s * jax.random.normal(next(keys), (Chid, Cin), jnp.float32)   # 1x1 conv
    b1 = s * jax.random.normal(next(keys), (Chid,), jnp.float32)

    icg, ocg = Chid // GROUPS, Cout // GROUPS
    wgs = []
    for K in KERNEL_SIZES:
        blocks = s * jax.random.normal(next(keys), (GROUPS, ocg, icg, K, K),
                                       jnp.float32)
        dense = np.zeros((Cout, Chid, K, K), np.float32)
        bnp = np.asarray(blocks)
        for g in range(GROUPS):
            dense[g * ocg:(g + 1) * ocg, g * icg:(g + 1) * icg] = bnp[g]
        wgs.append(jnp.asarray(dense))               # dense block-diag grouped conv

    bconv = s * jax.random.normal(next(keys), (nb, Cout), jnp.float32)
    gamma = 1.0 + s * jax.random.normal(next(keys), (nb, Cout), jnp.float32)
    beta = s * jax.random.normal(next(keys), (nb, Cout), jnp.float32)
    return w1, b1, tuple(wgs), bconv, gamma, beta


def pack_params(params, H, W):
    """Offline fold of conv1 + biases into one banded, branch-fused weight."""
    w1, b1, wgs, bconv, gamma, beta = params
    w1 = np.asarray(w1, np.float32)
    b1 = np.asarray(b1, np.float32)
    wgs = [np.asarray(w, np.float32) for w in wgs]
    bconv = np.asarray(bconv, np.float32)
    gamma = np.asarray(gamma, np.float32)
    beta = np.asarray(beta, np.float32)

    Chid, Cin = w1.shape
    Cout = wgs[0].shape[0]
    NB = len(KERNEL_SIZES)
    Kmax = max(KERNEL_SIZES)
    pmax = Kmax // 2
    Wp = W + 2 * pmax
    Ca = Cin + 1
    NC = NB * Cout
    cg = Cout // GROUPS

    # fold 1x1 conv + its bias (ones channel) into each branch tap
    w1_aug = np.concatenate([w1, b1[:, None]], axis=1)            # (Chid, Ca)
    wglob = np.zeros((NB, Cout, Ca, Kmax, Kmax), np.float32)
    for b, K in enumerate(KERNEL_SIZES):
        off = pmax - K // 2
        wc = np.einsum('oiuv,ia->oauv', wgs[b], w1_aug)           # (Cout, Ca, K, K)
        wglob[b, :, :, off:off + K, off:off + K] = wc
    # fold branch conv bias: ones channel at the (always interior) center tap
    wglob[:, :, Ca - 1, pmax, pmax] += bconv
    wglob = wglob.reshape(NC, Ca, Kmax, Kmax)

    # banded (Toeplitz-in-width) fused weight -> flattened (Kmax*Ca*Wp, NC*W)
    G = np.zeros((Kmax, Ca * Wp, NC * W), np.float32)
    j_idx = np.arange(W)
    col = np.arange(NC)[:, None] * W + j_idx[None, :]             # (NC, W)
    for kh in range(Kmax):
        for kw in range(Kmax):
            for ca in range(Ca):
                rows = (ca * Wp + kw + j_idx)[None, :]            # (1, W)
                G[kh, rows, col] = wglob[:, ca, kh, kw][:, None]
    G2 = G.reshape(Kmax * Ca * Wp, NC * W)

    # fused GroupNorm group-average matrix in lane space (lane l = c_all*W + j)
    lane_ch = np.arange(NC * W) // W                              # channel per lane
    gid_c = (np.arange(NC) // Cout) * GROUPS + (np.arange(NC) % Cout) // cg
    gid_lane = gid_c[lane_ch]
    gn_mat = (gid_lane[:, None] == gid_lane[None, :]).astype(np.float32)
    gn_mat /= float(cg * H * W)

    gamma_f = np.repeat(gamma.reshape(-1), W)[None, :].astype(np.float32)
    beta_f = np.repeat(beta.reshape(-1), W)[None, :].astype(np.float32)

    return (jnp.asarray(G2, dtype=jnp.bfloat16),      # bf16 MXU weights
            jnp.asarray(gn_mat, dtype=jnp.float32),   # f32 stats matrix
            jnp.asarray(gamma_f), jnp.asarray(beta_f))


def reference_forward(x, params):
    """Pure-JAX reference reproducing the PyTorch module semantics (NCHW)."""
    w1, b1, wgs, bconv, gamma, beta = params
    h = jnp.einsum('oc,nchw->nohw', w1, x,
                   precision=jax.lax.Precision.HIGHEST) + b1[None, :, None, None]
    y = 0.0
    for b, K in enumerate(KERNEL_SIZES):
        P = K // 2
        c = jax.lax.conv_general_dilated(
            h, wgs[b], (1, 1), [(P, P), (P, P)],
            dimension_numbers=('NCHW', 'OIHW', 'NCHW'),
            precision=jax.lax.Precision.HIGHEST) + bconv[b][None, :, None, None]
        Nn, C, Hh, Ww = c.shape
        g = c.reshape(Nn, GROUPS, C // GROUPS, Hh, Ww)
        mean = g.mean(axis=(2, 3, 4), keepdims=True)
        var = ((g - mean) ** 2).mean(axis=(2, 3, 4), keepdims=True)
        gn = ((g - mean) / jnp.sqrt(var + EPS)).reshape(Nn, C, Hh, Ww)
        gn = gn * gamma[b][None, :, None, None] + beta[b][None, :, None, None]
        y = y + jnp.maximum(gn, 0.0)
    return y


if __name__ == "__main__":
    key = jax.random.PRNGKey(0)
    kx, kp = jax.random.split(key)

    N, Cin, H, W = 2, 4, 16, 16        # NCHW input, as in the PyTorch module
    Chid, Cout = 16, 16                # divisible by groups=8

    x = jax.random.normal(kx, (N, Cin, H, W), jnp.float32)
    params = make_params(kp, Cin, Chid, Cout)
    packed = pack_params(params, H, W)

    out = inception_forward(x, packed)
    out = jax.block_until_ready(out)

    ref = reference_forward(x, params)
    # bf16 MXU conv weights / bf16 im2col LHS -> looser tolerance than pure f32
    np.testing.assert_allclose(np.asarray(out), np.asarray(ref),
                               rtol=2e-2, atol=2e-2)
    print("KERNEL_OK")
</pallas_src>

<mosaic_0001>
module attributes {stable_mosaic.version = 11 : i64} {
  func.func @_inception_kernel(%arg0: i32, %arg1: memref<1x16x1430xbf16, #tpu.memory_space<vmem>>, %arg2: memref<1430x1024xbf16, #tpu.memory_space<vmem>>, %arg3: memref<1024x1024xf32, #tpu.memory_space<vmem>>, %arg4: memref<1x1024xf32, #tpu.memory_space<vmem>>, %arg5: memref<1x1024xf32, #tpu.memory_space<vmem>>, %arg6: memref<1x16x256xf32, #tpu.memory_space<vmem>>) attributes {dimension_semantics = [#tpu.dimension_semantics<parallel>], iteration_bounds = array<i64: 2>, scalar_prefetch = 0 : i64, scratch_operands = 0 : i64, tpu.core_type = #tpu.core_type<tc>, window_params = [{transform_indices = @transform_0, window_bounds = array<i64: 1, 16, 1430>}, {pipeline_mode = #tpu.pipeline_mode<synchronous>, transform_indices = @transform_1, window_bounds = array<i64: 1430, 1024>}, {pipeline_mode = #tpu.pipeline_mode<synchronous>, transform_indices = @transform_2, window_bounds = array<i64: 1024, 1024>}, {pipeline_mode = #tpu.pipeline_mode<synchronous>, transform_indices = @transform_3, window_bounds = array<i64: 1, 1024>}, {pipeline_mode = #tpu.pipeline_mode<synchronous>, transform_indices = @transform_4, window_bounds = array<i64: 1, 1024>}, {transform_indices = @transform_5, window_bounds = array<i64: 1, 16, 256>}]} {
    %c0 = arith.constant 0 : index
    %c0_0 = arith.constant 0 : index
    %c0_1 = arith.constant 0 : index
    %0 = vector.load %arg1[%c0, %c0_0, %c0_1] : memref<1x16x1430xbf16, #tpu.memory_space<vmem>>, vector<1x16x1430xbf16>
    %1 = vector.shape_cast %0 : vector<1x16x1430xbf16> to vector<16x1430xbf16>
    %c0_2 = arith.constant 0 : index
    %c0_3 = arith.constant 0 : index
    %2 = vector.load %arg2[%c0_2, %c0_3] : memref<1430x1024xbf16, #tpu.memory_space<vmem>>, vector<1430x1024xbf16>
    %cst = arith.constant dense<0.000000e+00> : vector<16x1024xf32>
    %3 = tpu.matmul %1, %2, %cst {dimension_numbers = #tpu.dot_dimension_numbers<[1], [0], [0], [1], [0, 0, 1, 1], [], []>} : vector<16x1430xbf16>, vector<1430x1024xbf16>, vector<16x1024xf32> -> vector<16x1024xf32>
    %4 = vector.shape_cast %3 : vector<16x1024xf32> to vector<1x16x1024xf32>
    %cst_4 = arith.constant dense<0.000000e+00> : vector<1x1024xf32>
    %5 = vector.multi_reduction <add>, %4, %cst_4 [1] : vector<1x16x1024xf32> to vector<1x1024xf32>
    %c0_5 = arith.constant 0 : index
    %c0_6 = arith.constant 0 : index
    %6 = vector.load %arg3[%c0_5, %c0_6] : memref<1024x1024xf32, #tpu.memory_space<vmem>>, vector<1024x1024xf32>
    %cst_7 = arith.constant dense<0.000000e+00> : vector<1x1024xf32>
    %7 = tpu.matmul %5, %6, %cst_7 {dimension_numbers = #tpu.dot_dimension_numbers<[1], [0], [0], [1], [0, 0, 1, 1], [], []>} : vector<1x1024xf32>, vector<1024x1024xf32>, vector<1x1024xf32> -> vector<1x1024xf32>
    %8 = vector.shape_cast %7 : vector<1x1024xf32> to vector<1x1x1024xf32>
    %9 = vector.broadcast %8 : vector<1x1x1024xf32> to vector<1x16x1024xf32>
    %10 = arith.subf %4, %9 : vector<1x16x1024xf32>
    %11 = arith.mulf %10, %10 : vector<1x16x1024xf32>
    %cst_8 = arith.constant dense<0.000000e+00> : vector<1x1024xf32>
    %12 = vector.multi_reduction <add>, %11, %cst_8 [1] : vector<1x16x1024xf32> to vector<1x1024xf32>
    %c0_9 = arith.constant 0 : index
    %c0_10 = arith.constant 0 : index
    %13 = vector.load %arg3[%c0_9, %c0_10] : memref<1024x1024xf32, #tpu.memory_space<vmem>>, vector<1024x1024xf32>
    %cst_11 = arith.constant dense<0.000000e+00> : vector<1x1024xf32>
    %14 = tpu.matmul %12, %13, %cst_11 {dimension_numbers = #tpu.dot_dimension_numbers<[1], [0], [0], [1], [0, 0, 1, 1], [], []>} : vector<1x1024xf32>, vector<1024x1024xf32>, vector<1x1024xf32> -> vector<1x1024xf32>
    %cst_12 = arith.constant 9.99999974E-6 : f32
    %15 = vector.broadcast %cst_12 : f32 to vector<1x1024xf32>
    %16 = arith.addf %14, %15 : vector<1x1024xf32>
    %17 = math.rsqrt %16 : vector<1x1024xf32>
    %c0_13 = arith.constant 0 : index
    %c0_14 = arith.constant 0 : index
    %18 = vector.load %arg4[%c0_13, %c0_14] : memref<1x1024xf32, #tpu.memory_space<vmem>>, vector<1x1024xf32>
    %19 = arith.mulf %17, %18 : vector<1x1024xf32>
    %c0_15 = arith.constant 0 : index
    %c0_16 = arith.constant 0 : index
    %20 = vector.load %arg5[%c0_15, %c0_16] : memref<1x1024xf32, #tpu.memory_space<vmem>>, vector<1x1024xf32>
    %21 = vector.extract_strided_slice %10 {offsets = [0, 0, 0], sizes = [1, 16, 256], strides = [1, 1, 1]} : vector<1x16x1024xf32> to vector<1x16x256xf32>
    %22 = vector.extract_strided_slice %19 {offsets = [0, 0], sizes = [1, 256], strides = [1, 1]} : vector<1x1024xf32> to vector<1x256xf32>
    %23 = vector.shape_cast %22 : vector<1x256xf32> to vector<1x1x256xf32>
    %24 = vector.broadcast %23 : vector<1x1x256xf32> to vector<1x16x256xf32>
    %25 = arith.mulf %21, %24 : vector<1x16x256xf32>
    %26 = vector.extract_strided_slice %20 {offsets = [0, 0], sizes = [1, 256], strides = [1, 1]} : vector<1x1024xf32> to vector<1x256xf32>
    %27 = vector.shape_cast %26 : vector<1x256xf32> to vector<1x1x256xf32>
    %28 = vector.broadcast %27 : vector<1x1x256xf32> to vector<1x16x256xf32>
    %29 = arith.addf %25, %28 : vector<1x16x256xf32>
    %cst_17 = arith.constant 0.000000e+00 : f32
    %30 = vector.broadcast %cst_17 : f32 to vector<1x16x256xf32>
    %31 = arith.maximumf %29, %30 : vector<1x16x256xf32>
    %32 = vector.extract_strided_slice %10 {offsets = [0, 0, 256], sizes = [1, 16, 256], strides = [1, 1, 1]} : vector<1x16x1024xf32> to vector<1x16x256xf32>
    %33 = vector.extract_strided_slice %19 {offsets = [0, 256], sizes = [1, 256], strides = [1, 1]} : vector<1x1024xf32> to vector<1x256xf32>
    %34 = vector.shape_cast %33 : vector<1x256xf32> to vector<1x1x256xf32>
    %35 = vector.broadcast %34 : vector<1x1x256xf32> to vector<1x16x256xf32>
    %36 = arith.mulf %32, %35 : vector<1x16x256xf32>
    %37 = vector.extract_strided_slice %20 {offsets = [0, 256], sizes = [1, 256], strides = [1, 1]} : vector<1x1024xf32> to vector<1x256xf32>
    %38 = vector.shape_cast %37 : vector<1x256xf32> to vector<1x1x256xf32>
    %39 = vector.broadcast %38 : vector<1x1x256xf32> to vector<1x16x256xf32>
    %40 = arith.addf %36, %39 : vector<1x16x256xf32>
    %cst_18 = arith.constant 0.000000e+00 : f32
    %41 = vector.broadcast %cst_18 : f32 to vector<1x16x256xf32>
    %42 = arith.maximumf %40, %41 : vector<1x16x256xf32>
    %43 = arith.addf %31, %42 : vector<1x16x256xf32>
    %44 = vector.extract_strided_slice %10 {offsets = [0, 0, 512], sizes = [1, 16, 256], strides = [1, 1, 1]} : vector<1x16x1024xf32> to vector<1x16x256xf32>
    %45 = vector.extract_strided_slice %19 {offsets = [0, 512], sizes = [1, 256], strides = [1, 1]} : vector<1x1024xf32> to vector<1x256xf32>
    %46 = vector.shape_cast %45 : vector<1x256xf32> to vector<1x1x256xf32>
    %47 = vector.broadcast %46 : vector<1x1x256xf32> to vector<1x16x256xf32>
    %48 = arith.mulf %44, %47 : vector<1x16x256xf32>
    %49 = vector.extract_strided_slice %20 {offsets = [0, 512], sizes = [1, 256], strides = [1, 1]} : vector<1x1024xf32> to vector<1x256xf32>
    %50 = vector.shape_cast %49 : vector<1x256xf32> to vector<1x1x256xf32>
    %51 = vector.broadcast %50 : vector<1x1x256xf32> to vector<1x16x256xf32>
    %52 = arith.addf %48, %51 : vector<1x16x256xf32>
    %cst_19 = arith.constant 0.000000e+00 : f32
    %53 = vector.broadcast %cst_19 : f32 to vector<1x16x256xf32>
    %54 = arith.maximumf %52, %53 : vector<1x16x256xf32>
    %55 = arith.addf %43, %54 : vector<1x16x256xf32>
    %56 = vector.extract_strided_slice %10 {offsets = [0, 0, 768], sizes = [1, 16, 256], strides = [1, 1, 1]} : vector<1x16x1024xf32> to vector<1x16x256xf32>
    %57 = vector.extract_strided_slice %19 {offsets = [0, 768], sizes = [1, 256], strides = [1, 1]} : vector<1x1024xf32> to vector<1x256xf32>
    %58 = vector.shape_cast %57 : vector<1x256xf32> to vector<1x1x256xf32>
    %59 = vector.broadcast %58 : vector<1x1x256xf32> to vector<1x16x256xf32>
    %60 = arith.mulf %56, %59 : vector<1x16x256xf32>
    %61 = vector.extract_strided_slice %20 {offsets = [0, 768], sizes = [1, 256], strides = [1, 1]} : vector<1x1024xf32> to vector<1x256xf32>
    %62 = vector.shape_cast %61 : vector<1x256xf32> to vector<1x1x256xf32>
    %63 = vector.broadcast %62 : vector<1x1x256xf32> to vector<1x16x256xf32>
    %64 = arith.addf %60, %63 : vector<1x16x256xf32>
    %cst_20 = arith.constant 0.000000e+00 : f32
    %65 = vector.broadcast %cst_20 : f32 to vector<1x16x256xf32>
    %66 = arith.maximumf %64, %65 : vector<1x16x256xf32>
    %67 = arith.addf %55, %66 : vector<1x16x256xf32>
    %c0_21 = arith.constant 0 : index
    %c0_22 = arith.constant 0 : index
    %c0_23 = arith.constant 0 : index
    %68 = vector.load %arg6[%c0_21, %c0_22, %c0_23] : memref<1x16x256xf32, #tpu.memory_space<vmem>>, vector<1x16x256xf32>
    tpu.vector_store %arg6[%c0_21, %c0_22, %c0_23], %67 {strides = array<i32>} : memref<1x16x256xf32, #tpu.memory_space<vmem>>, vector<1x16x256xf32>,
    return
  }
  func.func @transform_0(%arg0: i32) -> (i32, i32, i32) {
    %c0_i32 = arith.constant 0 : i32
    %c0_i32_0 = arith.constant 0 : i32
    %c0_i32_1 = arith.constant 0 : i32
    return %arg0, %c0_i32, %c0_i32_0 : i32, i32, i32
  }
  func.func @transform_1(%arg0: i32) -> (i32, i32) {
    %c0_i32 = arith.constant 0 : i32
    %c0_i32_0 = arith.constant 0 : i32
    %c0_i32_1 = arith.constant 0 : i32
    return %c0_i32, %c0_i32_0 : i32, i32
  }
  func.func @transform_2(%arg0: i32) -> (i32, i32) {
    %c0_i32 = arith.constant 0 : i32
    %c0_i32_0 = arith.constant 0 : i32
    %c0_i32_1 = arith.constant 0 : i32
    return %c0_i32, %c0_i32_0 : i32, i32
  }
  func.func @transform_3(%arg0: i32) -> (i32, i32) {
    %c0_i32 = arith.constant 0 : i32
    %c0_i32_0 = arith.constant 0 : i32
    %c0_i32_1 = arith.constant 0 : i32
    return %c0_i32, %c0_i32_0 : i32, i32
  }
  func.func @transform_4(%arg0: i32) -> (i32, i32) {
    %c0_i32 = arith.constant 0 : i32
    %c0_i32_0 = arith.constant 0 : i32
    %c0_i32_1 = arith.constant 0 : i32
    return %c0_i32, %c0_i32_0 : i32, i32
  }
  func.func @transform_5(%arg0: i32) -> (i32, i32, i32) {
    %c0_i32 = arith.constant 0 : i32
    %c0_i32_0 = arith.constant 0 : i32
    %c0_i32_1 = arith.constant 0 : i32
    return %arg0, %c0_i32, %c0_i32_0 : i32, i32, i32
  }
}

</mosaic_0001>

<llo_original>
// kernel: tpu_custom_call.1
$region0: #{tpu_custom_call.1}
  #allocation0 [shape = 'u32[]', space=smem, size = 0x4, offset = 0x4, fixed_abs, tag = 'smem constant byte address 0x4 - core index']
  #allocation1 [shape = 'u32[144,128]{1,0:T(1,128)}', space=vmem, size = 0x12000, scoped, tag = 'internal scratch']
  %s0 = inlined_call_operand.hbm [shape: bf16[2,16,1430], index: 0, kind: input, shape index: {}]
  %s1 = inlined_call_operand.hbm [shape: bf16[1430,1024], index: 1, kind: input, shape index: {}]
  %s2 = inlined_call_operand.hbm [shape: f32[1024,1024], index: 2, kind: input, shape index: {}]
  %s3 = inlined_call_operand.hbm [shape: f32[1,1024], index: 3, kind: input, shape index: {}]
  %s4 = inlined_call_operand.hbm [shape: f32[1,1024], index: 4, kind: input, shape index: {}]
  %s5 = inlined_call_operand.hbm [shape: f32[2,16,256], index: 5, kind: output, shape index: {}]
  %s6 = sld [smem:[#allocation0]]
  $region73: #{tpu_custom_call.1} parent=0
    _
  %s8 = ssub.s32 1, %s6
  %s9 = scalar_select 0, %s8, %s6
  $region1: #{tpu_custom_call.1} parent=0
    #allocation2 [shape = 'u8[98304]{0}', space=vmem, size = 0x18000, scoped, tag = 'input window, operand 0']
    #allocation3 [shape = 's32[2]{0}', space=sflag, size = 0x8, scoped, tag = 'scoped memory for tpu_custom_call.1']
    #allocation4 [shape = 's32[2]{0}', space=sflag, size = 0x8, scoped, tag = 'scoped memory for tpu_custom_call.1']
    #allocation5 [shape = 'u8[2932736]{0}', space=vmem, size = 0x2cc000, scoped, tag = 'input window, operand 1, single buffered']
    #allocation6 [shape = 's32[1]{0}', space=sflag, size = 0x4, scoped, tag = 'scoped memory for tpu_custom_call.1']
    #allocation7 [shape = 'u8[4194304]{0}', space=vmem, size = 0x400000, scoped, tag = 'input window, operand 2, single buffered']
    #allocation8 [shape = 'u8[4096]{0}', space=vmem, size = 0x1000, scoped, tag = 'input window, operand 3, single buffered']
    #allocation9 [shape = 's32[1]{0}', space=sflag, size = 0x4, scoped, tag = 'scoped memory for tpu_custom_call.1']
    #allocation10 [shape = 'u8[4096]{0}', space=vmem, size = 0x1000, scoped, tag = 'input window, operand 4, single buffered']
    #allocation11 [shape = 'u8[32768]{0}', space=vmem, size = 0x8000, scoped, tag = 'output window, operand 0']
    %10 = vsyncpa [#allocation3], 0
    %s11 = scalar_lea.sflag [#allocation3], 1
    %12 = vsyncpa %s11, 0
    %13 = vsyncpa [#allocation6], 0
    %14 = vsyncpa [#allocation9], 0
    %15 = vsyncpa [#allocation4], 0
    %s16 = scalar_lea.sflag [#allocation4], 1
    %17 = vsyncpa %s16, 0
    loop: start=0, step=1, limit=4
    $region2: #{tpu_custom_call.1} parent=1 // loop_pre_header
      _
    $region3: #{tpu_custom_call.1} parent=1 // loop_header
      %s19 = sphi 0, %s23
      %p20 = scmp.ge.s32.totalorder %s19, 4
      %s29 = sphi 0, %s31
      %s32 = sphi 0, %s29
      %s33 = sphi 0, %s32
      %s49 = sphi 0, %s33
      %s53 = sphi 0, %s53
      %s55 = sphi 0, %s53
      %s56 = sphi 0, %s55
      %s70 = sphi 0, %s56
      %s74 = sphi 0, %s74
      %s76 = sphi 0, %s74
      %s77 = sphi 0, %s76
      %s91 = sphi 0, %s77
      %s95 = sphi 0, %s95
      %s97 = sphi 0, %s95
      %s98 = sphi 0, %s97
      %s112 = sphi 0, %s98
      %s116 = sphi 0, %s116
      %s118 = sphi 0, %s116
      %s119 = sphi 0, %s118
      %s133 = sphi 0, %s119
      %s139 = sphi 0, %s141
      %s142 = sphi 0, %s139
      %s143 = sphi 0, %s142
      %s159 = sphi 0, %s143
    $region4: #{tpu_custom_call.1} parent=1 // loop_header_branch
      %22 = sbr.rel (%p20) target = $region8
    $region5: #{tpu_custom_call.1} parent=1 // loop_body
      %s24 = ssub.s32 %s19, 1
      %s25 = ssub.s32 %s19, 2
      %s26 = sadd.s32 %s19, 1
      %s27 = ssub.s32 %s19, %s26
      %p28 = scmp.eq.s32.totalorder %s27, 0
      %s30 = sadd.s32 %s29, 1
      %s31 = scalar_select %p28, %s29, %s30
      %p34 = pneg %p28
      %p35 = scmp.eq.s32.totalorder %s19, 1
      %p36 = por %p34, %p35
      %p37 = scmp.ne.s32.totalorder %s29, %s32
      %p38 = scmp.eq.s32.totalorder %s19, 0
      %p39 = por %p37, %p38
      %p40 = scmp.ne.s32.totalorder %s29, %s32
      %p41 = scmp.eq.s32.totalorder %s24, 1
      %p42 = por %p40, %p41
      %p43 = scmp.ne.s32.totalorder %s32, %s33
      %p44 = scmp.eq.s32.totalorder %s24, 0
      %p45 = por %p43, %p44
      %p46 = scmp.ne.s32.totalorder %s32, %s33
      %p47 = scmp.eq.s32.totalorder %s25, 1
      %p48 = por %p46, %p47
      %p50 = scmp.ne.s32.totalorder %s33, %s49
      %p51 = scmp.eq.s32.totalorder %s25, 0
      %p52 = por %p50, %p51
      %s54 = sadd.s32 %s53, 1
      %p57 = scmp.eq.s32.totalorder %s19, 1
      %p58 = scmp.ne.s32.totalorder %s53, %s55
      %p59 = scmp.eq.s32.totalorder %s19, 0
      %p60 = por %p58, %p59
      %p61 = scmp.ne.s32.totalorder %s53, %s55
      %p62 = scmp.eq.s32.totalorder %s24, 1
      %p63 = por %p61, %p62
      %p64 = scmp.ne.s32.totalorder %s55, %s56
      %p65 = scmp.eq.s32.totalorder %s24, 0
      %p66 = por %p64, %p65
      %p67 = scmp.ne.s32.totalorder %s55, %s56
      %p68 = scmp.eq.s32.totalorder %s25, 1
      %p69 = por %p67, %p68
      %p71 = scmp.ne.s32.totalorder %s56, %s70
      %p72 = scmp.eq.s32.totalorder %s25, 0
      %p73 = por %p71, %p72
      %s75 = sadd.s32 %s74, 1
      %p78 = scmp.eq.s32.totalorder %s19, 1
      %p79 = scmp.ne.s32.totalorder %s74, %s76
      %p80 = scmp.eq.s32.totalorder %s19, 0
      %p81 = por %p79, %p80
      %p82 = scmp.ne.s32.totalorder %s74, %s76
      %p83 = scmp.eq.s32.totalorder %s24, 1
      %p84 = por %p82, %p83
      %p85 = scmp.ne.s32.totalorder %s76, %s77
      %p86 = scmp.eq.s32.totalorder %s24, 0
      %p87 = por %p85, %p86
      %p88 = scmp.ne.s32.totalorder %s76, %s77
      %p89 = scmp.eq.s32.totalorder %s25, 1
      %p90 = por %p88, %p89
      %p92 = scmp.ne.s32.totalorder %s77, %s91
      %p93 = scmp.eq.s32.totalorder %s25, 0
      %p94 = por %p92, %p93
      %s96 = sadd.s32 %s95, 1
      %p99 = scmp.eq.s32.totalorder %s19, 1
      %p100 = scmp.ne.s32.totalorder %s95, %s97
      %p101 = scmp.eq.s32.totalorder %s19, 0
      %p102 = por %p100, %p101
      %p103 = scmp.ne.s32.totalorder %s95, %s97
      %p104 = scmp.eq.s32.totalorder %s24, 1
      %p105 = por %p103, %p104
      %p106 = scmp.ne.s32.totalorder %s97, %s98
      %p107 = scmp.eq.s32.totalorder %s24, 0
      %p108 = por %p106, %p107
      %p109 = scmp.ne.s32.totalorder %s97, %s98
      %p110 = scmp.eq.s32.totalorder %s25, 1
      %p111 = por %p109, %p110
      %p113 = scmp.ne.s32.totalorder %s98, %s112
      %p114 = scmp.eq.s32.totalorder %s25, 0
      %p115 = por %p113, %p114
      %s117 = sadd.s32 %s116, 1
      %p120 = scmp.eq.s32.totalorder %s19, 1
      %p121 = scmp.ne.s32.totalorder %s116, %s118
      %p122 = scmp.eq.s32.totalorder %s19, 0
      %p123 = por %p121, %p122
      %p124 = scmp.ne.s32.totalorder %s116, %s118
      %p125 = scmp.eq.s32.totalorder %s24, 1
      %p126 = por %p124, %p125
      %p127 = scmp.ne.s32.totalorder %s118, %s119
      %p128 = scmp.eq.s32.totalorder %s24, 0
      %p129 = por %p127, %p128
      %p130 = scmp.ne.s32.totalorder %s118, %s119
      %p131 = scmp.eq.s32.totalorder %s25, 1
      %p132 = por %p130, %p131
      %p134 = scmp.ne.s32.totalorder %s119, %s133
      %p135 = scmp.eq.s32.totalorder %s25, 0
      %p136 = por %p134, %p135
      %s137 = ssub.s32 %s19, %s26
      %p138 = scmp.eq.s32.totalorder %s137, 0
      %s140 = sadd.s32 %s139, 1
      %s141 = scalar_select %p138, %s139, %s140
      %p144 = pneg %p138
      %p145 = scmp.eq.s32.totalorder %s19, 1
      %p146 = por %p144, %p145
      %p147 = scmp.ne.s32.totalorder %s139, %s142
      %p148 = scmp.eq.s32.totalorder %s19, 0
      %p149 = por %p147, %p148
      %p150 = scmp.ne.s32.totalorder %s139, %s142
      %p151 = scmp.eq.s32.totalorder %s24, 1
      %p152 = por %p150, %p151
      %p153 = scmp.ne.s32.totalorder %s142, %s143
      %p154 = scmp.eq.s32.totalorder %s24, 0
      %p155 = por %p153, %p154
      %p156 = scmp.ne.s32.totalorder %s142, %s143
      %p157 = scmp.eq.s32.totalorder %s25, 1
      %p158 = por %p156, %p157
      %p160 = scmp.ne.s32.totalorder %s143, %s159
      %p161 = scmp.eq.s32.totalorder %s25, 0
      %p162 = por %p160, %p161
      %p163 = scmp.le.s32.totalorder 1, %s19
      %p164 = scmp.lt.s32.totalorder %s19, 3
      %p165 = pnand %p163, %p164
      %p166 = pneg %p165
      // Predicated region
      $region9: #{tpu_custom_call.1} parent=5 // pred_check
        _
      $region10: #{tpu_custom_call.1} parent=5 // pred_check_branch
        %168 = sbr.rel (%p165) target = $region12
      $region11: #{tpu_custom_call.1} parent=5 // pred_region
        %s169 = ssub.s32 %s19, 1
        // Predicated region
        $region13: #{tpu_custom_call.1} parent=11 // pred_check
          %p170 = pneg %p66
        $region14: #{tpu_custom_call.1} parent=11 // pred_check_branch
          %172 = sbr.rel (%p170) target = $region16
        $region15: #{tpu_custom_call.1} parent=11 // pred_region
          %s174 = ssub.s32 91648, 91648
          %175 = vsyncadd [#allocation6], %s174
          %s176 = sshll.u32 [#allocation5], 4
          %s177 = int_to_ptr.vmem [resolvable:$true] %s176
          %182 = dma.hbm_to_vmem [thread:$0]  %s1, 91648, %s177, [#allocation6], 512, 512, 32
        $region16: #{tpu_custom_call.1} parent=11 // pred_fallthru
          _
        // Predicated region
        $region17: #{tpu_custom_call.1} parent=11 // pred_check
          %p183 = pneg %p87
        $region18: #{tpu_custom_call.1} parent=11 // pred_check_branch
          %185 = sbr.rel (%p183) target = $region20
        $region19: #{tpu_custom_call.1} parent=11 // pred_region
          %s187 = ssub.s32 131072, 131072
          %188 = vsyncadd [#allocation6], %s187
          %s189 = sshll.u32 [#allocation7], 4
          %s190 = int_to_ptr.vmem [resolvable:$true] %s189
          %195 = dma.hbm_to_vmem [thread:$0]  %s2, 131072, %s190, [#allocation6], 1024, 1024, 64
        $region20: #{tpu_custom_call.1} parent=11 // pred_fallthru
          _
        // Predicated region
        $region21: #{tpu_custom_call.1} parent=11 // pred_check
          %p196 = pneg %p108
        $region22: #{tpu_custom_call.1} parent=11 // pred_check_branch
          %198 = sbr.rel (%p196) target = $region24
        $region23: #{tpu_custom_call.1} parent=11 // pred_region
          %s200 = ssub.s32 128, 128
          %201 = vsyncadd [#allocation9], %s200
          %s203 = sshll.u32 [#allocation8], 4
          %s204 = int_to_ptr.vmem [resolvable:$true] %s203
          %206 = dma.hbm_to_vmem [thread:$0]  %s3, 128, %s204, [#allocation9]
        $region24: #{tpu_custom_call.1} parent=11 // pred_fallthru
          _
        // Predicated region
        $region25: #{tpu_custom_call.1} parent=11 // pred_check
          %p207 = pneg %p129
        $region26: #{tpu_custom_call.1} parent=11 // pred_check_branch
          %209 = sbr.rel (%p207) target = $region28
        $region27: #{tpu_custom_call.1} parent=11 // pred_region
          %s211 = ssub.s32 128, 128
          %212 = vsyncadd [#allocation9], %s211
          %s214 = sshll.u32 [#allocation10], 4
          %s215 = int_to_ptr.vmem [resolvable:$true] %s214
          %217 = dma.hbm_to_vmem [thread:$0]  %s4, 128, %s215, [#allocation9]
        $region28: #{tpu_custom_call.1} parent=11 // pred_fallthru
          _
      $region12: #{tpu_custom_call.1} parent=5 // pred_fallthru
        _
      %p218 = scmp.lt.s32.totalorder %s19, 2
      // Predicated region
      $region29: #{tpu_custom_call.1} parent=5 // pred_check
        %p219 = pneg %p218
      $region30: #{tpu_custom_call.1} parent=5 // pred_check_branch
        %221 = sbr.rel (%p219) target = $region32
      $region31: #{tpu_custom_call.1} parent=5 // pred_region
        // Predicated region
        $region33: #{tpu_custom_call.1} parent=31 // pred_check
          %p222 = pneg %p39
        $region34: #{tpu_custom_call.1} parent=31 // pred_check_branch
          %224 = sbr.rel (%p222) target = $region36
        $region35: #{tpu_custom_call.1} parent=31 // pred_region
          %s225 = sand.u32 %s29, 1
          %s226 = scalar_lea.sflag [#allocation3], %s225
          %s227 = sand.u32 %s29, 1
          %s228 = smul.addr %s227, 96
          %s229 = scalar_lea.vmem [#allocation2], %s228
          %s231 = ssub.s32 1536, 1536
          %232 = vsyncadd %s226, %s231
          %s233 = smul.addr %s19, 24
          %s234 = smul.addr %s233, 64
          %s235 = scalar_lea.hbm %s0, %s234
          %s236 = sshll.u32 %s229, 4
          %s237 = int_to_ptr.vmem [resolvable:$true] %s236
          %242 = dma.hbm_to_vmem [thread:$0]  %s235, 1536, %s237, %s226, 768, 768, 48
        $region36: #{tpu_custom_call.1} parent=31 // pred_fallthru
          _
      $region32: #{tpu_custom_call.1} parent=5 // pred_fallthru
        _
      %p243 = scmp.le.s32.totalorder 1, %s19
      %p244 = scmp.lt.s32.totalorder %s19, 3
      %p245 = pnand %p243, %p244
      %p246 = pneg %p245
      // Predicated region
      $region37: #{tpu_custom_call.1} parent=5 // pred_check
        _
      $region38: #{tpu_custom_call.1} parent=5 // pred_check_branch
        %248 = sbr.rel (%p245) target = $region40
      $region39: #{tpu_custom_call.1} parent=5 // pred_region
        %s249 = ssub.s32 %s19, 1
        %s250 = sand.u32 %s32, 1
        %s251 = scalar_lea.sflag [#allocation3], %s250
        %s252 = sand.u32 %s32, 1
        %s253 = smul.addr %s252, 96
        %s254 = scalar_lea.vmem [#allocation2], %s253
        // Predicated region
        $region41: #{tpu_custom_call.1} parent=39 // pred_check
          %p255 = pneg %p45
        $region42: #{tpu_custom_call.1} parent=39 // pred_check_branch
          %257 = sbr.rel (%p255) target = $region44
        $region43: #{tpu_custom_call.1} parent=39 // pred_region
          %258 = dma.done %s251, 1536
        $region44: #{tpu_custom_call.1} parent=39 // pred_fallthru
          _
        // Predicated region
        $region45: #{tpu_custom_call.1} parent=39 // pred_check
          %p259 = pneg %p66
        $region46: #{tpu_custom_call.1} parent=39 // pred_check_branch
          %261 = sbr.rel (%p259) target = $region48
        $region47: #{tpu_custom_call.1} parent=39 // pred_region
          %262 = dma.done [#allocation6], 91648
        $region48: #{tpu_custom_call.1} parent=39 // pred_fallthru
          _
        // Predicated region
        $region49: #{tpu_custom_call.1} parent=39 // pred_check
          %p263 = pneg %p87
        $region50: #{tpu_custom_call.1} parent=39 // pred_check_branch
          %265 = sbr.rel (%p263) target = $region52
        $region51: #{tpu_custom_call.1} parent=39 // pred_region
          %266 = dma.done [#allocation6], 131072
        $region52: #{tpu_custom_call.1} parent=39 // pred_fallthru
          _
        // Predicated region
        $region53: #{tpu_custom_call.1} parent=39 // pred_check
          %p267 = pneg %p108
        $region54: #{tpu_custom_call.1} parent=39 // pred_check_branch
          %269 = sbr.rel (%p267) target = $region56
        $region55: #{tpu_custom_call.1} parent=39 // pred_region
          %270 = dma.done [#allocation9], 128
        $region56: #{tpu_custom_call.1} parent=39 // pred_fallthru
          _
        // Predicated region
        $region57: #{tpu_custom_call.1} parent=39 // pred_check
          %p271 = pneg %p129
        $region58: #{tpu_custom_call.1} parent=39 // pred_check_branch
          %273 = sbr.rel (%p271) target = $region60
        $region59: #{tpu_custom_call.1} parent=39 // pred_region
          %274 = dma.done [#allocation9], 128
        $region60: #{tpu_custom_call.1} parent=39 // pred_fallthru
          _
        %s275 = sand.u32 %s32, 1
        %s276 = scalar_lea.sflag [#allocation3], %s275
        %s277 = sand.u32 %s32, 1
        %s278 = smul.addr %s277, 96
        %s279 = scalar_lea.vmem [#allocation2], %s278
        %p280 = pneg %p45
        %p281 = pneg %p42
        %p282 = pneg %p66
        %p283 = pneg %p63
        %p284 = pneg %p87
        %p285 = pneg %p84
        %p286 = pneg %p108
        %p287 = pneg %p105
        %p288 = pneg %p129
        %p289 = pneg %p126
        %p290 = pneg %p155
        %p291 = pneg %p152
        %s292 = sand.u32 %s142, 1
        %s293 = scalar_lea.sflag [#allocation4], %s292
        %s294 = sand.u32 %s142, 1
        %s295 = smul.addr %s294, 32
        %s296 = scalar_lea.vmem [#allocation11], %s295
        %v298 = vld [vmem:[%s254] sm:$0xff]
        %v299 = vld [vmem:[%s254 + $0x8] sm:$0xff]
        %v300 = vld [vmem:[%s254 + $0x10] sm:$0xff]
        %v301 = vld [vmem:[%s254 + $0x18] sm:$0xff]
        %v302 = vld [vmem:[%s254 + $0x20] sm:$0xff]
        %v303 = vld [vmem:[%s254 + $0x28] sm:$0xff]
        %v304 = vld [vmem:[%s254 + $0x30] sm:$0xff]
        %v305 = vld [vmem:[%s254 + $0x38] sm:$0xff]
        %v306 = vld [vmem:[%s254 + $0x40] sm:$0xff]
        %v307 = vld [vmem:[%s254 + $0x48] sm:$0xff]
        %v308 = vld [vmem:[%s254 + $0x50] sm:$0xff]
        %v309 = vld [vmem:[%s254 + $0x58] sm:$0xff]
        %v310 = vld [vmem:[#allocation5] sm:$0xff]
        %v311 = vld [vmem:[#allocation5 + $0x8] sm:$0xff]
        %v312 = vld [vmem:[#allocation5 + $0x10] sm:$0xff]
        %v313 = vld [vmem:[#allocation5 + $0x18] sm:$0xff]
        %v314 = vld [vmem:[#allocation5 + $0x20] sm:$0xff]
        %v315 = vld [vmem:[#allocation5 + $0x28] sm:$0xff]
        %v316 = vld [vmem:[#allocation5 + $0x30] sm:$0xff]
        %v317 = vld [vmem:[#allocation5 + $0x38] sm:$0xff]
        %v318 = vld [vmem:[#allocation5 + $0x40] sm:$0xff]
        %v319 = vld [vmem:[#allocation5 + $0x48] sm:$0xff]
        %v320 = vld [vmem:[#allocation5 + $0x50] sm:$0xff]
        %v321 = vld [vmem:[#allocation5 + $0x58] sm:$0xff]
        %v322 = vld [vmem:[#allocation5 + $0x60] sm:$0xff]
        %v323 = vld [vmem:[#allocation5 + $0x68] sm:$0xff]
        %v324 = vld [vmem:[#allocation5 + $0x70] sm:$0xff]
        %v325 = vld [vmem:[#allocation5 + $0x78] sm:$0xff]
        %v326 = vld [vmem:[#allocation5 + $0x80] sm:$0xff]
        %v327 = vld [vmem:[#allocation5 + $0x88] sm:$0xff]
        %v328 = vld [vmem:[#allocation5 + $0x90] sm:$0xff]
        %v329 = vld [vmem:[#allocation5 + $0x98] sm:$0xff]
        %v330 = vld [vmem:[#allocation5 + $0xa0] sm:$0xff]
        %v331 = vld [vmem:[#allocation5 + $0xa8] sm:$0xff]
        %v332 = vld [vmem:[#allocation5 + $0xb0] sm:$0xff]
        %v333 = vld [vmem:[#allocation5 + $0xb8] sm:$0xff]
        %v334 = vld [vmem:[#allocation5 + $0xc0] sm:$0xff]
        %v335 = vld [vmem:[#allocation5 + $0xc8] sm:$0xff]
        %v336 = vld [vmem:[#allocation5 + $0xd0] sm:$0xff]
        %v337 = vld [vmem:[#allocation5 + $0xd8] sm:$0xff]
        %v338 = vld [vmem:[#allocation5 + $0xe0] sm:$0xff]
        %v339 = vld [vmem:[#allocation5 + $0xe8] sm:$0xff]
        %v340 = vld [vmem:[#allocation5 + $0xf0] sm:$0xff]
        %v341 = vld [vmem:[#allocation5 + $0xf8] sm:$0xff]
        %v342 = vld [vmem:[#allocation5 + $0x100] sm:$0xff]
        %v343 = vld [vmem:[#allocation5 + $0x108] sm:$0xff]
        %v344 = vld [vmem:[#allocation5 + $0x110] sm:$0xff]
        %v345 = vld [vmem:[#allocation5 + $0x118] sm:$0xff]
        %v346 = vld [vmem:[#allocation5 + $0x120] sm:$0xff]
        %v347 = vld [vmem:[#allocation5 + $0x128] sm:$0xff]
        %v348 = vld [vmem:[#allocation5 + $0x130] sm:$0xff]
        %v349 = vld [vmem:[#allocation5 + $0x138] sm:$0xff]
        %v350 = vld [vmem:[#allocation5 + $0x140] sm:$0xff]
        %v351 = vld [vmem:[#allocation5 + $0x148] sm:$0xff]
        %v352 = vld [vmem:[#allocation5 + $0x150] sm:$0xff]
        %v353 = vld [vmem:[#allocation5 + $0x158] sm:$0xff]
        %v354 = vld [vmem:[#allocation5 + $0x160] sm:$0xff]
        %v355 = vld [vmem:[#allocation5 + $0x168] sm:$0xff]
        %v356 = vld [vmem:[#allocation5 + $0x170] sm:$0xff]
        %v357 = vld [vmem:[#allocation5 + $0x178] sm:$0xff]
        %v358 = vld [vmem:[#allocation5 + $0x180] sm:$0xff]
        %v359 = vld [vmem:[#allocation5 + $0x188] sm:$0xff]
        %v360 = vld [vmem:[#allocation5 + $0x190] sm:$0xff]
        %v361 = vld [vmem:[#allocation5 + $0x198] sm:$0xff]
        %v362 = vld [vmem:[#allocation5 + $0x1a0] sm:$0xff]
        %v363 = vld [vmem:[#allocation5 + $0x1a8] sm:$0xff]
        %v364 = vld [vmem:[#allocation5 + $0x1b0] sm:$0xff]
        %v365 = vld [vmem:[#allocation5 + $0x1b8] sm:$0xff]
        %v366 = vld [vmem:[#allocation5 + $0x1c0] sm:$0xff]
        %v367 = vld [vmem:[#allocation5 + $0x1c8] sm:$0xff]
        %v368 = vld [vmem:[#allocation5 + $0x1d0] sm:$0xff]
        %v369 = vld [vmem:[#allocation5 + $0x1d8] sm:$0xff]
        %v370 = vld [vmem:[#allocation5 + $0x1e0] sm:$0xff]
        %v371 = vld [vmem:[#allocation5 + $0x1e8] sm:$0xff]
        %v372 = vld [vmem:[#allocation5 + $0x1f0] sm:$0xff]
        %v373 = vld [vmem:[#allocation5 + $0x1f8] sm:$0xff]
        %v374 = vld [vmem:[#allocation5 + $0x200] sm:$0xff]
        %v375 = vld [vmem:[#allocation5 + $0x208] sm:$0xff]
        %v376 = vld [vmem:[#allocation5 + $0x210] sm:$0xff]
        %v377 = vld [vmem:[#allocation5 + $0x218] sm:$0xff]
        %v378 = vld [vmem:[#allocation5 + $0x220] sm:$0xff]
        %v379 = vld [vmem:[#allocation5 + $0x228] sm:$0xff]
        %v380 = vld [vmem:[#allocation5 + $0x230] sm:$0xff]
        %v381 = vld [vmem:[#allocation5 + $0x238] sm:$0xff]
        %v382 = vld [vmem:[#allocation5 + $0x240] sm:$0xff]
        %v383 = vld [vmem:[#allocation5 + $0x248] sm:$0xff]
        %v384 = vld [vmem:[#allocation5 + $0x250] sm:$0xff]
        %v385 = vld [vmem:[#allocation5 + $0x258] sm:$0xff]
        %v386 = vld [vmem:[#allocation5 + $0x260] sm:$0xff]
        %v387 = vld [vmem:[#allocation5 + $0x268] sm:$0xff]
        %v388 = vld [vmem:[#allocation5 + $0x270] sm:$0xff]
        %v389 = vld [vmem:[#allocation5 + $0x278] sm:$0xff]
        %v390 = vld [vmem:[#allocation5 + $0x280] sm:$0xff]
        %v391 = vld [vmem:[#allocation5 + $0x288] sm:$0xff]
        %v392 = vld [vmem:[#allocation5 + $0x290] sm:$0xff]
        %v393 = vld [vmem:[#allocation5 + $0x298] sm:$0xff]
        %v394 = vld [vmem:[#allocation5 + $0x2a0] sm:$0xff]
        %v395 = vld [vmem:[#allocation5 + $0x2a8] sm:$0xff]
        %v396 = vld [vmem:[#allocation5 + $0x2b0] sm:$0xff]
        %v397 = vld [vmem:[#allocation5 + $0x2b8] sm:$0xff]
        %v398 = vld [vmem:[#allocation5 + $0x2c0] sm:$0xff]
        %v399 = vld [vmem:[#allocation5 + $0x2c8] sm:$0xff]
        %v400 = vld [vmem:[#allocation5 + $0x2d0] sm:$0xff]
        %v401 = vld [vmem:[#allocation5 + $0x2d8] sm:$0xff]
        %v402 = vld [vmem:[#allocation5 + $0x2e0] sm:$0xff]
        %v403 = vld [vmem:[#allocation5 + $0x2e8] sm:$0xff]
        %v404 = vld [vmem:[#allocation5 + $0x2f0] sm:$0xff]
        %v405 = vld [vmem:[#allocation5 + $0x2f8] sm:$0xff]
        %v406 = vld [vmem:[#allocation5 + $0x300] sm:$0xff]
        %v407 = vld [vmem:[#allocation5 + $0x308] sm:$0xff]
        %v408 = vld [vmem:[#allocation5 + $0x310] sm:$0xff]
        %v409 = vld [vmem:[#allocation5 + $0x318] sm:$0xff]
        %v410 = vld [vmem:[#allocation5 + $0x320] sm:$0xff]
        %v411 = vld [vmem:[#allocation5 + $0x328] sm:$0xff]
        %v412 = vld [vmem:[#allocation5 + $0x330] sm:$0xff]
        %v413 = vld [vmem:[#allocation5 + $0x338] sm:$0xff]
        %v414 = vld [vmem:[#allocation5 + $0x340] sm:$0xff]
        %v415 = vld [vmem:[#allocation5 + $0x348] sm:$0xff]
        %v416 = vld [vmem:[#allocation5 + $0x350] sm:$0xff]
        %v417 = vld [vmem:[#allocation5 + $0x358] sm:$0xff]
        %v418 = vld [vmem:[#allocation5 + $0x360] sm:$0xff]
        %v419 = vld [vmem:[#allocation5 + $0x368] sm:$0xff]
        %v420 = vld [vmem:[#allocation5 + $0x370] sm:$0xff]
        %v421 = vld [vmem:[#allocation5 + $0x378] sm:$0xff]
        %v422 = vld [vmem:[#allocation5 + $0x380] sm:$0xff]
        %v423 = vld [vmem:[#allocation5 + $0x388] sm:$0xff]
        %v424 = vld [vmem:[#allocation5 + $0x390] sm:$0xff]
        %v425 = vld [vmem:[#allocation5 + $0x398] sm:$0xff]
        %v426 = vld [vmem:[#allocation5 + $0x3a0] sm:$0xff]
        %v427 = vld [vmem:[#allocation5 + $0x3a8] sm:$0xff]
        %v428 = vld [vmem:[#allocation5 + $0x3b0] sm:$0xff]
        %v429 = vld [vmem:[#allocation5 + $0x3b8] sm:$0xff]
        %v430 = vld [vmem:[#allocation5 + $0x3c0] sm:$0xff]
        %v431 = vld [vmem:[#allocation5 + $0x3c8] sm:$0xff]
        %v432 = vld [vmem:[#allocation5 + $0x3d0] sm:$0xff]
        %v433 = vld [vmem:[#allocation5 + $0x3d8] sm:$0xff]
        %v434 = vld [vmem:[#allocation5 + $0x3e0] sm:$0xff]
        %v435 = vld [vmem:[#allocation5 + $0x3e8] sm:$0xff]
        %v436 = vld [vmem:[#allocation5 + $0x3f0] sm:$0xff]
        %v437 = vld [vmem:[#allocation5 + $0x3f8] sm:$0xff]
        %v438 = vld [vmem:[#allocation5 + $0x400] sm:$0xff]
        %v439 = vld [vmem:[#allocation5 + $0x408] sm:$0xff]
        %v440 = vld [vmem:[#allocation5 + $0x410] sm:$0xff]
        %v441 = vld [vmem:[#allocation5 + $0x418] sm:$0xff]
        %v442 = vld [vmem:[#allocation5 + $0x420] sm:$0xff]
        %v443 = vld [vmem:[#allocation5 + $0x428] sm:$0xff]
        %v444 = vld [vmem:[#allocation5 + $0x430] sm:$0xff]
        %v445 = vld [vmem:[#allocation5 + $0x438] sm:$0xff]
        %v446 = vld [vmem:[#allocation5 + $0x440] sm:$0xff]
        %v447 = vld [vmem:[#allocation5 + $0x448] sm:$0xff]
        %v448 = vld [vmem:[#allocation5 + $0x450] sm:$0xff]
        %v449 = vld [vmem:[#allocation5 + $0x458] sm:$0xff]
        %v450 = vld [vmem:[#allocation5 + $0x460] sm:$0xff]
        %v451 = vld [vmem:[#allocation5 + $0x468] sm:$0xff]
        %v452 = vld [vmem:[#allocation5 + $0x470] sm:$0xff]
        %v453 = vld [vmem:[#allocation5 + $0x478] sm:$0xff]
        %v454 = vld [vmem:[#allocation5 + $0x480] sm:$0xff]
        %v455 = vld [vmem:[#allocation5 + $0x488] sm:$0xff]
        %v456 = vld [vmem:[#allocation5 + $0x490] sm:$0xff]
        %v457 = vld [vmem:[#allocation5 + $0x498] sm:$0xff]
        %v458 = vld [vmem:[#allocation5 + $0x4a0] sm:$0xff]
        %v459 = vld [vmem:[#allocation5 + $0x4a8] sm:$0xff]
        %v460 = vld [vmem:[#allocation5 + $0x4b0] sm:$0xff]
        %v461 = vld [vmem:[#allocation5 + $0x4b8] sm:$0xff]
        %v462 = vld [vmem:[#allocation5 + $0x4c0] sm:$0xff]
        %v463 = vld [vmem:[#allocation5 + $0x4c8] sm:$0xff]
        %v464 = vld [vmem:[#allocation5 + $0x4d0] sm:$0xff]
        %v465 = vld [vmem:[#allocation5 + $0x4d8] sm:$0xff]
        %v466 = vld [vmem:[#allocation5 + $0x4e0] sm:$0xff]
        %v467 = vld [vmem:[#allocation5 + $0x4e8] sm:$0xff]
        %v468 = vld [vmem:[#allocation5 + $0x4f0] sm:$0xff]
        %v469 = vld [vmem:[#allocation5 + $0x4f8] sm:$0xff]
        %v470 = vld [vmem:[#allocation5 + $0x500] sm:$0xff]
        %v471 = vld [vmem:[#allocation5 + $0x508] sm:$0xff]
        %v472 = vld [vmem:[#allocation5 + $0x510] sm:$0xff]
        %v473 = vld [vmem:[#allocation5 + $0x518] sm:$0xff]
        %v474 = vld [vmem:[#allocation5 + $0x520] sm:$0xff]
        %v475 = vld [vmem:[#allocation5 + $0x528] sm:$0xff]
        %v476 = vld [vmem:[#allocation5 + $0x530] sm:$0xff]
        %v477 = vld [vmem:[#allocation5 + $0x538] sm:$0xff]
        %v478 = vld [vmem:[#allocation5 + $0x540] sm:$0xff]
        %v479 = vld [vmem:[#allocation5 + $0x548] sm:$0xff]
        %v480 = vld [vmem:[#allocation5 + $0x550] sm:$0xff]
        %v481 = vld [vmem:[#allocation5 + $0x558] sm:$0xff]
        %v482 = vld [vmem:[#allocation5 + $0x560] sm:$0xff]
        %v483 = vld [vmem:[#allocation5 + $0x568] sm:$0xff]
        %v484 = vld [vmem:[#allocation5 + $0x570] sm:$0xff]
        %v485 = vld [vmem:[#allocation5 + $0x578] sm:$0xff]
        %v486 = vld [vmem:[#allocation5 + $0x580] sm:$0xff]
        %v487 = vld [vmem:[#allocation5 + $0x588] sm:$0xff]
        %v488 = vld [vmem:[#allocation5 + $0x590] sm:$0xff]
        %v489 = vld [vmem:[#allocation5 + $0x598] sm:$0xff]
        %v490 = vld [vmem:[#allocation5 + $0x5a0] sm:$0xff]
        %v491 = vld [vmem:[#allocation5 + $0x5a8] sm:$0xff]
        %v492 = vld [vmem:[#allocation5 + $0x5b0] sm:$0xff]
        %v493 = vld [vmem:[#allocation5 + $0x5b8] sm:$0xff]
        %v494 = vld [vmem:[#allocation5 + $0x5c0] sm:$0xff]
        %v495 = vld [vmem:[#allocation5 + $0x5c8] sm:$0xff]
        %v496 = vld [vmem:[#allocation5 + $0x5d0] sm:$0xff]
        %v497 = vld [vmem:[#allocation5 + $0x5d8] sm:$0xff]
        %v498 = vld [vmem:[#allocation5 + $0x5e0] sm:$0xff]
        %v499 = vld [vmem:[#allocation5 + $0x5e8] sm:$0xff]
        %v500 = vld [vmem:[#allocation5 + $0x5f0] sm:$0xff]
        %v501 = vld [vmem:[#allocation5 + $0x5f8] sm:$0xff]
        %v502 = vld [vmem:[#allocation5 + $0x600] sm:$0xff]
        %v503 = vld [vmem:[#allocation5 + $0x608] sm:$0xff]
        %v504 = vld [vmem:[#allocation5 + $0x610] sm:$0xff]
        %v505 = vld [vmem:[#allocation5 + $0x618] sm:$0xff]
        %v506 = vld [vmem:[#allocation5 + $0x620] sm:$0xff]
        %v507 = vld [vmem:[#allocation5 + $0x628] sm:$0xff]
        %v508 = vld [vmem:[#allocation5 + $0x630] sm:$0xff]
        %v509 = vld [vmem:[#allocation5 + $0x638] sm:$0xff]
        %v510 = vld [vmem:[#allocation5 + $0x640] sm:$0xff]
        %v511 = vld [vmem:[#allocation5 + $0x648] sm:$0xff]
        %v512 = vld [vmem:[#allocation5 + $0x650] sm:$0xff]
        %v513 = vld [vmem:[#allocation5 + $0x658] sm:$0xff]
        %v514 = vld [vmem:[#allocation5 + $0x660] sm:$0xff]
        %v515 = vld [vmem:[#allocation5 + $0x668] sm:$0xff]
        %v516 = vld [vmem:[#allocation5 + $0x670] sm:$0xff]
        %v517 = vld [vmem:[#allocation5 + $0x678] sm:$0xff]
        %v518 = vld [vmem:[#allocation5 + $0x680] sm:$0xff]
        %v519 = vld [vmem:[#allocation5 + $0x688] sm:$0xff]
        %v520 = vld [vmem:[#allocation5 + $0x690] sm:$0xff]
        %v521 = vld [vmem:[#allocation5 + $0x698] sm:$0xff]
        %v522 = vld [vmem:[#allocation5 + $0x6a0] sm:$0xff]
        %v523 = vld [vmem:[#allocation5 + $0x6a8] sm:$0xff]
        %v524 = vld [vmem:[#allocation5 + $0x6b0] sm:$0xff]
        %v525 = vld [vmem:[#allocation5 + $0x6b8] sm:$0xff]
        %v526 = vld [vmem:[#allocation5 + $0x6c0] sm:$0xff]
        %v527 = vld [vmem:[#allocation5 + $0x6c8] sm:$0xff]
        %v528 = vld [vmem:[#allocation5 + $0x6d0] sm:$0xff]
        %v529 = vld [vmem:[#allocation5 + $0x6d8] sm:$0xff]
        %v530 = vld [vmem:[#allocation5 + $0x6e0] sm:$0xff]
        %v531 = vld [vmem:[#allocation5 + $0x6e8] sm:$0xff]
        %v532 = vld [vmem:[#allocation5 + $0x6f0] sm:$0xff]
        %v533 = vld [vmem:[#allocation5 + $0x6f8] sm:$0xff]
        %v534 = vld [vmem:[#allocation5 + $0x700] sm:$0xff]
        %v535 = vld [vmem:[#allocation5 + $0x708] sm:$0xff]
        %v536 = vld [vmem:[#allocation5 + $0x710] sm:$0xff]
        %v537 = vld [vmem:[#allocation5 + $0x718] sm:$0xff]
        %v538 = vld [vmem:[#allocation5 + $0x720] sm:$0xff]
        %v539 = vld [vmem:[#allocation5 + $0x728] sm:$0xff]
        %v540 = vld [vmem:[#allocation5 + $0x730] sm:$0xff]
        %v541 = vld [vmem:[#allocation5 + $0x738] sm:$0xff]
        %v542 = vld [vmem:[#allocation5 + $0x740] sm:$0xff]
        %v543 = vld [vmem:[#allocation5 + $0x748] sm:$0xff]
        %v544 = vld [vmem:[#allocation5 + $0x750] sm:$0xff]
        %v545 = vld [vmem:[#allocation5 + $0x758] sm:$0xff]
        %v546 = vld [vmem:[#allocation5 + $0x760] sm:$0xff]
        %v547 = vld [vmem:[#allocation5 + $0x768] sm:$0xff]
        %v548 = vld [vmem:[#allocation5 + $0x770] sm:$0xff]
        %v549 = vld [vmem:[#allocation5 + $0x778] sm:$0xff]
        %v550 = vld [vmem:[#allocation5 + $0x780] sm:$0xff]
        %v551 = vld [vmem:[#allocation5 + $0x788] sm:$0xff]
        %v552 = vld [vmem:[#allocation5 + $0x790] sm:$0xff]
        %v553 = vld [vmem:[#allocation5 + $0x798] sm:$0xff]
        %v554 = vld [vmem:[#allocation5 + $0x7a0] sm:$0xff]
        %v555 = vld [vmem:[#allocation5 + $0x7a8] sm:$0xff]
        %v556 = vld [vmem:[#allocation5 + $0x7b0] sm:$0xff]
        %v557 = vld [vmem:[#allocation5 + $0x7b8] sm:$0xff]
        %v558 = vld [vmem:[#allocation5 + $0x7c0] sm:$0xff]
        %v559 = vld [vmem:[#allocation5 + $0x7c8] sm:$0xff]
        %v560 = vld [vmem:[#allocation5 + $0x7d0] sm:$0xff]
        %v561 = vld [vmem:[#allocation5 + $0x7d8] sm:$0xff]
        %v562 = vld [vmem:[#allocation5 + $0x7e0] sm:$0xff]
        %v563 = vld [vmem:[#allocation5 + $0x7e8] sm:$0xff]
        %v564 = vld [vmem:[#allocation5 + $0x7f0] sm:$0xff]
        %v565 = vld [vmem:[#allocation5 + $0x7f8] sm:$0xff]
        %v566 = vld [vmem:[#allocation5 + $0x800] sm:$0xff]
        %v567 = vld [vmem:[#allocation5 + $0x808] sm:$0xff]
        %v568 = vld [vmem:[#allocation5 + $0x810] sm:$0xff]
        %v569 = vld [vmem:[#allocation5 + $0x818] sm:$0xff]
        %v570 = vld [vmem:[#allocation5 + $0x820] sm:$0xff]
        %v571 = vld [vmem:[#allocation5 + $0x828] sm:$0xff]
        %v572 = vld [vmem:[#allocation5 + $0x830] sm:$0xff]
        %v573 = vld [vmem:[#allocation5 + $0x838] sm:$0xff]
        %v574 = vld [vmem:[#allocation5 + $0x840] sm:$0xff]
        %v575 = vld [vmem:[#allocation5 + $0x848] sm:$0xff]
        %v576 = vld [vmem:[#allocation5 + $0x850] sm:$0xff]
        %v577 = vld [vmem:[#allocation5 + $0x858] sm:$0xff]
        %v578 = vld [vmem:[#allocation5 + $0x860] sm:$0xff]
        %v579 = vld [vmem:[#allocation5 + $0x868] sm:$0xff]
        %v580 = vld [vmem:[#allocation5 + $0x870] sm:$0xff]
        %v581 = vld [vmem:[#allocation5 + $0x878] sm:$0xff]
        %v582 = vld [vmem:[#allocation5 + $0x880] sm:$0xff]
        %v583 = vld [vmem:[#allocation5 + $0x888] sm:$0xff]
        %v584 = vld [vmem:[#allocation5 + $0x890] sm:$0xff]
        %v585 = vld [vmem:[#allocation5 + $0x898] sm:$0xff]
        %v586 = vld [vmem:[#allocation5 + $0x8a0] sm:$0xff]
        %v587 = vld [vmem:[#allocation5 + $0x8a8] sm:$0xff]
        %v588 = vld [vmem:[#allocation5 + $0x8b0] sm:$0xff]
        %v589 = vld [vmem:[#allocation5 + $0x8b8] sm:$0xff]
        %v590 = vld [vmem:[#allocation5 + $0x8c0] sm:$0xff]
        %v591 = vld [vmem:[#allocation5 + $0x8c8] sm:$0xff]
        %v592 = vld [vmem:[#allocation5 + $0x8d0] sm:$0xff]
        %v593 = vld [vmem:[#allocation5 + $0x8d8] sm:$0xff]
        %v594 = vld [vmem:[#allocation5 + $0x8e0] sm:$0xff]
        %v595 = vld [vmem:[#allocation5 + $0x8e8] sm:$0xff]
        %v596 = vld [vmem:[#allocation5 + $0x8f0] sm:$0xff]
        %v597 = vld [vmem:[#allocation5 + $0x8f8] sm:$0xff]
        %v598 = vld [vmem:[#allocation5 + $0x900] sm:$0xff]
        %v599 = vld [vmem:[#allocation5 + $0x908] sm:$0xff]
        %v600 = vld [vmem:[#allocation5 + $0x910] sm:$0xff]
        %v601 = vld [vmem:[#allocation5 + $0x918] sm:$0xff]
        %v602 = vld [vmem:[#allocation5 + $0x920] sm:$0xff]
        %v603 = vld [vmem:[#allocation5 + $0x928] sm:$0xff]
        %v604 = vld [vmem:[#allocation5 + $0x930] sm:$0xff]
        %v605 = vld [vmem:[#allocation5 + $0x938] sm:$0xff]
        %v606 = vld [vmem:[#allocation5 + $0x940] sm:$0xff]
        %v607 = vld [vmem:[#allocation5 + $0x948] sm:$0xff]
        %v608 = vld [vmem:[#allocation5 + $0x950] sm:$0xff]
        %v609 = vld [vmem:[#allocation5 + $0x958] sm:$0xff]
        %v610 = vld [vmem:[#allocation5 + $0x960] sm:$0xff]
        %v611 = vld [vmem:[#allocation5 + $0x968] sm:$0xff]
        %v612 = vld [vmem:[#allocation5 + $0x970] sm:$0xff]
        %v613 = vld [vmem:[#allocation5 + $0x978] sm:$0xff]
        %v614 = vld [vmem:[#allocation5 + $0x980] sm:$0xff]
        %v615 = vld [vmem:[#allocation5 + $0x988] sm:$0xff]
        %v616 = vld [vmem:[#allocation5 + $0x990] sm:$0xff]
        %v617 = vld [vmem:[#allocation5 + $0x998] sm:$0xff]
        %v618 = vld [vmem:[#allocation5 + $0x9a0] sm:$0xff]
        %v619 = vld [vmem:[#allocation5 + $0x9a8] sm:$0xff]
        %v620 = vld [vmem:[#allocation5 + $0x9b0] sm:$0xff]
        %v621 = vld [vmem:[#allocation5 + $0x9b8] sm:$0xff]
        %v622 = vld [vmem:[#allocation5 + $0x9c0] sm:$0xff]
        %v623 = vld [vmem:[#allocation5 + $0x9c8] sm:$0xff]
        %v624 = vld [vmem:[#allocation5 + $0x9d0] sm:$0xff]
        %v625 = vld [vmem:[#allocation5 + $0x9d8] sm:$0xff]
        %v626 = vld [vmem:[#allocation5 + $0x9e0] sm:$0xff]
        %v627 = vld [vmem:[#allocation5 + $0x9e8] sm:$0xff]
        %v628 = vld [vmem:[#allocation5 + $0x9f0] sm:$0xff]
        %v629 = vld [vmem:[#allocation5 + $0x9f8] sm:$0xff]
        %v630 = vld [vmem:[#allocation5 + $0xa00] sm:$0xff]
        %v631 = vld [vmem:[#allocation5 + $0xa08] sm:$0xff]
        %v632 = vld [vmem:[#allocation5 + $0xa10] sm:$0xff]
        %v633 = vld [vmem:[#allocation5 + $0xa18] sm:$0xff]
        %v634 = vld [vmem:[#allocation5 + $0xa20] sm:$0xff]
        %v635 = vld [vmem:[#allocation5 + $0xa28] sm:$0xff]
        %v636 = vld [vmem:[#allocation5 + $0xa30] sm:$0xff]
        %v637 = vld [vmem:[#allocation5 + $0xa38] sm:$0xff]
        %v638 = vld [vmem:[#allocation5 + $0xa40] sm:$0xff]
        %v639 = vld [vmem:[#allocation5 + $0xa48] sm:$0xff]
        %v640 = vld [vmem:[#allocation5 + $0xa50] sm:$0xff]
        %v641 = vld [vmem:[#allocation5 + $0xa58] sm:$0xff]
        %v642 = vld [vmem:[#allocation5 + $0xa60] sm:$0xff]
        %v643 = vld [vmem:[#allocation5 + $0xa68] sm:$0xff]
        %v644 = vld [vmem:[#allocation5 + $0xa70] sm:$0xff]
        %v645 = vld [vmem:[#allocation5 + $0xa78] sm:$0xff]
        %v646 = vld [vmem:[#allocation5 + $0xa80] sm:$0xff]
        %v647 = vld [vmem:[#allocation5 + $0xa88] sm:$0xff]
        %v648 = vld [vmem:[#allocation5 + $0xa90] sm:$0xff]
        %v649 = vld [vmem:[#allocation5 + $0xa98] sm:$0xff]
        %v650 = vld [vmem:[#allocation5 + $0xaa0] sm:$0xff]
        %v651 = vld [vmem:[#allocation5 + $0xaa8] sm:$0xff]
        %v652 = vld [vmem:[#allocation5 + $0xab0] sm:$0xff]
        %v653 = vld [vmem:[#allocation5 + $0xab8] sm:$0xff]
        %v654 = vld [vmem:[#allocation5 + $0xac0] sm:$0xff]
        %v655 = vld [vmem:[#allocation5 + $0xac8] sm:$0xff]
        %v656 = vld [vmem:[#allocation5 + $0xad0] sm:$0xff]
        %v657 = vld [vmem:[#allocation5 + $0xad8] sm:$0xff]
        %v658 = vld [vmem:[#allocation5 + $0xae0] sm:$0xff]
        %v659 = vld [vmem:[#allocation5 + $0xae8] sm:$0xff]
        %v660 = vld [vmem:[#allocation5 + $0xaf0] sm:$0xff]
        %v661 = vld [vmem:[#allocation5 + $0xaf8] sm:$0xff]
        %v662 = vld [vmem:[#allocation5 + $0xb00] sm:$0xff]
        %v663 = vld [vmem:[#allocation5 + $0xb08] sm:$0xff]
        %v664 = vld [vmem:[#allocation5 + $0xb10] sm:$0xff]
        %v665 = vld [vmem:[#allocation5 + $0xb18] sm:$0xff]
        %v666 = vld [vmem:[#allocation5 + $0xb20] sm:$0xff]
        %v667 = vld [vmem:[#allocation5 + $0xb28] sm:$0xff]
        %v668 = vld [vmem:[#allocation5 + $0xb30] sm:$0xff]
        %v669 = vld [vmem:[#allocation5 + $0xb38] sm:$0xff]
        %v670 = vld [vmem:[#allocation5 + $0xb40] sm:$0xff]
        %v671 = vld [vmem:[#allocation5 + $0xb48] sm:$0xff]
        %v672 = vld [vmem:[#allocation5 + $0xb50] sm:$0xff]
        %v673 = vld [vmem:[#allocation5 + $0xb58] sm:$0xff]
        %v674 = vld [vmem:[#allocation5 + $0xb60] sm:$0xff]
        %v675 = vld [vmem:[#allocation5 + $0xb68] sm:$0xff]
        %v676 = vld [vmem:[#allocation5 + $0xb70] sm:$0xff]
        %v677 = vld [vmem:[#allocation5 + $0xb78] sm:$0xff]
        %v678 = vld [vmem:[#allocation5 + $0xb80] sm:$0xff]
        %v679 = vld [vmem:[#allocation5 + $0xb88] sm:$0xff]
        %v680 = vld [vmem:[#allocation5 + $0xb90] sm:$0xff]
        %v681 = vld [vmem:[#allocation5 + $0xb98] sm:$0xff]
        %v682 = vld [vmem:[#allocation5 + $0xba0] sm:$0xff]
        %v683 = vld [vmem:[#allocation5 + $0xba8] sm:$0xff]
        %v684 = vld [vmem:[#allocation5 + $0xbb0] sm:$0xff]
        %v685 = vld [vmem:[#allocation5 + $0xbb8] sm:$0xff]
        %v686 = vld [vmem:[#allocation5 + $0xbc0] sm:$0xff]
        %v687 = vld [vmem:[#allocation5 + $0xbc8] sm:$0xff]
        %v688 = vld [vmem:[#allocation5 + $0xbd0] sm:$0xff]
        %v689 = vld [vmem:[#allocation5 + $0xbd8] sm:$0xff]
        %v690 = vld [vmem:[#allocation5 + $0xbe0] sm:$0xff]
        %v691 = vld [vmem:[#allocation5 + $0xbe8] sm:$0xff]
        %v692 = vld [vmem:[#allocation5 + $0xbf0] sm:$0xff]
        %v693 = vld [vmem:[#allocation5 + $0xbf8] sm:$0xff]
        %v694 = vld [vmem:[#allocation5 + $0xc00] sm:$0xff]
        %v695 = vld [vmem:[#allocation5 + $0xc08] sm:$0xff]
        %v696 = vld [vmem:[#allocation5 + $0xc10] sm:$0xff]
        %v697 = vld [vmem:[#allocation5 + $0xc18] sm:$0xff]
        %v698 = vld [vmem:[#allocation5 + $0xc20] sm:$0xff]
        %v699 = vld [vmem:[#allocation5 + $0xc28] sm:$0xff]
        %v700 = vld [vmem:[#allocation5 + $0xc30] sm:$0xff]
        %v701 = vld [vmem:[#allocation5 + $0xc38] sm:$0xff]
        %v702 = vld [vmem:[#allocation5 + $0xc40] sm:$0xff]
        %v703 = vld [vmem:[#allocation5 + $0xc48] sm:$0xff]
        %v704 = vld [vmem:[#allocation5 + $0xc50] sm:$0xff]
        %v705 = vld [vmem:[#allocation5 + $0xc58] sm:$0xff]
        %v706 = vld [vmem:[#allocation5 + $0xc60] sm:$0xff]
        %v707 = vld [vmem:[#allocation5 + $0xc68] sm:$0xff]
        %v708 = vld [vmem:[#allocation5 + $0xc70] sm:$0xff]
        %v709 = vld [vmem:[#allocation5 + $0xc78] sm:$0xff]
        %v710 = vld [vmem:[#allocation5 + $0xc80] sm:$0xff]
        %v711 = vld [vmem:[#allocation5 + $0xc88] sm:$0xff]
        %v712 = vld [vmem:[#allocation5 + $0xc90] sm:$0xff]
        %v713 = vld [vmem:[#allocation5 + $0xc98] sm:$0xff]
        %v714 = vld [vmem:[#allocation5 + $0xca0] sm:$0xff]
        %v715 = vld [vmem:[#allocation5 + $0xca8] sm:$0xff]
        %v716 = vld [vmem:[#allocation5 + $0xcb0] sm:$0xff]
        %v717 = vld [vmem:[#allocation5 + $0xcb8] sm:$0xff]
        %v718 = vld [vmem:[#allocation5 + $0xcc0] sm:$0xff]
        %v719 = vld [vmem:[#allocation5 + $0xcc8] sm:$0xff]
        %v720 = vld [vmem:[#allocation5 + $0xcd0] sm:$0xff]
        %v721 = vld [vmem:[#allocation5 + $0xcd8] sm:$0xff]
        %v722 = vld [vmem:[#allocation5 + $0xce0] sm:$0xff]
        %v723 = vld [vmem:[#allocation5 + $0xce8] sm:$0xff]
        %v724 = vld [vmem:[#allocation5 + $0xcf0] sm:$0xff]
        %v725 = vld [vmem:[#allocation5 + $0xcf8] sm:$0xff]
        %v726 = vld [vmem:[#allocation5 + $0xd00] sm:$0xff]
        %v727 = vld [vmem:[#allocation5 + $0xd08] sm:$0xff]
        %v728 = vld [vmem:[#allocation5 + $0xd10] sm:$0xff]
        %v729 = vld [vmem:[#allocation5 + $0xd18] sm:$0xff]
        %v730 = vld [vmem:[#allocation5 + $0xd20] sm:$0xff]
        %v731 = vld [vmem:[#allocation5 + $0xd28] sm:$0xff]
        %v732 = vld [vmem:[#allocation5 + $0xd30] sm:$0xff]
        %v733 = vld [vmem:[#allocation5 + $0xd38] sm:$0xff]
        %v734 = vld [vmem:[#allocation5 + $0xd40] sm:$0xff]
        %v735 = vld [vmem:[#allocation5 + $0xd48] sm:$0xff]
        %v736 = vld [vmem:[#allocation5 + $0xd50] sm:$0xff]
        %v737 = vld [vmem:[#allocation5 + $0xd58] sm:$0xff]
        %v738 = vld [vmem:[#allocation5 + $0xd60] sm:$0xff]
        %v739 = vld [vmem:[#allocation5 + $0xd68] sm:$0xff]
        %v740 = vld [vmem:[#allocation5 + $0xd70] sm:$0xff]
        %v741 = vld [vmem:[#allocation5 + $0xd78] sm:$0xff]
        %v742 = vld [vmem:[#allocation5 + $0xd80] sm:$0xff]
        %v743 = vld [vmem:[#allocation5 + $0xd88] sm:$0xff]
        %v744 = vld [vmem:[#allocation5 + $0xd90] sm:$0xff]
        %v745 = vld [vmem:[#allocation5 + $0xd98] sm:$0xff]
        %v746 = vld [vmem:[#allocation5 + $0xda0] sm:$0xff]
        %v747 = vld [vmem:[#allocation5 + $0xda8] sm:$0xff]
        %v748 = vld [vmem:[#allocation5 + $0xdb0] sm:$0xff]
        %v749 = vld [vmem:[#allocation5 + $0xdb8] sm:$0xff]
        %v750 = vld [vmem:[#allocation5 + $0xdc0] sm:$0xff]
        %v751 = vld [vmem:[#allocation5 + $0xdc8] sm:$0xff]
        %v752 = vld [vmem:[#allocation5 + $0xdd0] sm:$0xff]
        %v753 = vld [vmem:[#allocation5 + $0xdd8] sm:$0xff]
        %v754 = vld [vmem:[#allocation5 + $0xde0] sm:$0xff]
        %v755 = vld [vmem:[#allocation5 + $0xde8] sm:$0xff]
        %v756 = vld [vmem:[#allocation5 + $0xdf0] sm:$0xff]
        %v757 = vld [vmem:[#allocation5 + $0xdf8] sm:$0xff]
        %v758 = vld [vmem:[#allocation5 + $0xe00] sm:$0xff]
        %v759 = vld [vmem:[#allocation5 + $0xe08] sm:$0xff]
        %v760 = vld [vmem:[#allocation5 + $0xe10] sm:$0xff]
        %v761 = vld [vmem:[#allocation5 + $0xe18] sm:$0xff]
        %v762 = vld [vmem:[#allocation5 + $0xe20] sm:$0xff]
        %v763 = vld [vmem:[#allocation5 + $0xe28] sm:$0xff]
        %v764 = vld [vmem:[#allocation5 + $0xe30] sm:$0xff]
        %v765 = vld [vmem:[#allocation5 + $0xe38] sm:$0xff]
        %v766 = vld [vmem:[#allocation5 + $0xe40] sm:$0xff]
        %v767 = vld [vmem:[#allocation5 + $0xe48] sm:$0xff]
        %v768 = vld [vmem:[#allocation5 + $0xe50] sm:$0xff]
        %v769 = vld [vmem:[#allocation5 + $0xe58] sm:$0xff]
        %v770 = vld [vmem:[#allocation5 + $0xe60] sm:$0xff]
        %v771 = vld [vmem:[#allocation5 + $0xe68] sm:$0xff]
        %v772 = vld [vmem:[#allocation5 + $0xe70] sm:$0xff]
        %v773 = vld [vmem:[#allocation5 + $0xe78] sm:$0xff]
        %v774 = vld [vmem:[#allocation5 + $0xe80] sm:$0xff]
        %v775 = vld [vmem:[#allocation5 + $0xe88] sm:$0xff]
        %v776 = vld [vmem:[#allocation5 + $0xe90] sm:$0xff]
        %v777 = vld [vmem:[#allocation5 + $0xe98] sm:$0xff]
        %v778 = vld [vmem:[#allocation5 + $0xea0] sm:$0xff]
        %v779 = vld [vmem:[#allocation5 + $0xea8] sm:$0xff]
        %v780 = vld [vmem:[#allocation5 + $0xeb0] sm:$0xff]
        %v781 = vld [vmem:[#allocation5 + $0xeb8] sm:$0xff]
        %v782 = vld [vmem:[#allocation5 + $0xec0] sm:$0xff]
        %v783 = vld [vmem:[#allocation5 + $0xec8] sm:$0xff]
        %v784 = vld [vmem:[#allocation5 + $0xed0] sm:$0xff]
        %v785 = vld [vmem:[#allocation5 + $0xed8] sm:$0xff]
        %v786 = vld [vmem:[#allocation5 + $0xee0] sm:$0xff]
        %v787 = vld [vmem:[#allocation5 + $0xee8] sm:$0xff]
        %v788 = vld [vmem:[#allocation5 + $0xef0] sm:$0xff]
        %v789 = vld [vmem:[#allocation5 + $0xef8] sm:$0xff]
        %v790 = vld [vmem:[#allocation5 + $0xf00] sm:$0xff]
        %v791 = vld [vmem:[#allocation5 + $0xf08] sm:$0xff]
        %v792 = vld [vmem:[#allocation5 + $0xf10] sm:$0xff]
        %v793 = vld [vmem:[#allocation5 + $0xf18] sm:$0xff]
        %v794 = vld [vmem:[#allocation5 + $0xf20] sm:$0xff]
        %v795 = vld [vmem:[#allocation5 + $0xf28] sm:$0xff]
        %v796 = vld [vmem:[#allocation5 + $0xf30] sm:$0xff]
        %v797 = vld [vmem:[#allocation5 + $0xf38] sm:$0xff]
        %v798 = vld [vmem:[#allocation5 + $0xf40] sm:$0xff]
        %v799 = vld [vmem:[#allocation5 + $0xf48] sm:$0xff]
        %v800 = vld [vmem:[#allocation5 + $0xf50] sm:$0xff]
        %v801 = vld [vmem:[#allocation5 + $0xf58] sm:$0xff]
        %v802 = vld [vmem:[#allocation5 + $0xf60] sm:$0xff]
        %v803 = vld [vmem:[#allocation5 + $0xf68] sm:$0xff]
        %v804 = vld [vmem:[#allocation5 + $0xf70] sm:$0xff]
        %v805 = vld [vmem:[#allocation5 + $0xf78] sm:$0xff]
        %v806 = vld [vmem:[#allocation5 + $0xf80] sm:$0xff]
        %v807 = vld [vmem:[#allocation5 + $0xf88] sm:$0xff]
        %v808 = vld [vmem:[#allocation5 + $0xf90] sm:$0xff]
        %v809 = vld [vmem:[#allocation5 + $0xf98] sm:$0xff]
        %v810 = vld [vmem:[#allocation5 + $0xfa0] sm:$0xff]
        %v811 = vld [vmem:[#allocation5 + $0xfa8] sm:$0xff]
        %v812 = vld [vmem:[#allocation5 + $0xfb0] sm:$0xff]
        %v813 = vld [vmem:[#allocation5 + $0xfb8] sm:$0xff]
        %v814 = vld [vmem:[#allocation5 + $0xfc0] sm:$0xff]
        %v815 = vld [vmem:[#allocation5 + $0xfc8] sm:$0xff]
        %v816 = vld [vmem:[#allocation5 + $0xfd0] sm:$0xff]
        %v817 = vld [vmem:[#allocation5 + $0xfd8] sm:$0xff]
        %v818 = vld [vmem:[#allocation5 + $0xfe0] sm:$0xff]
        %v819 = vld [vmem:[#allocation5 + $0xfe8] sm:$0xff]
        %v820 = vld [vmem:[#allocation5 + $0xff0] sm:$0xff]
        %v821 = vld [vmem:[#allocation5 + $0xff8] sm:$0xff]
        %v822 = vld [vmem:[#allocation5 + $0x1000] sm:$0xff]
        %v823 = vld [vmem:[#allocation5 + $0x1008] sm:$0xff]
        %v824 = vld [vmem:[#allocation5 + $0x1010] sm:$0xff]
        %v825 = vld [vmem:[#allocation5 + $0x1018] sm:$0xff]
        %v826 = vld [vmem:[#allocation5 + $0x1020] sm:$0xff]
        %v827 = vld [vmem:[#allocation5 + $0x1028] sm:$0xff]
        %v828 = vld [vmem:[#allocation5 + $0x1030] sm:$0xff]
        %v829 = vld [vmem:[#allocation5 + $0x1038] sm:$0xff]
        %v830 = vld [vmem:[#allocation5 + $0x1040] sm:$0xff]
        %v831 = vld [vmem:[#allocation5 + $0x1048] sm:$0xff]
        %v832 = vld [vmem:[#allocation5 + $0x1050] sm:$0xff]
        %v833 = vld [vmem:[#allocation5 + $0x1058] sm:$0xff]
        %v834 = vld [vmem:[#allocation5 + $0x1060] sm:$0xff]
        %v835 = vld [vmem:[#allocation5 + $0x1068] sm:$0xff]
        %v836 = vld [vmem:[#allocation5 + $0x1070] sm:$0xff]
        %v837 = vld [vmem:[#allocation5 + $0x1078] sm:$0xff]
        %v838 = vld [vmem:[#allocation5 + $0x1080] sm:$0xff]
        %v839 = vld [vmem:[#allocation5 + $0x1088] sm:$0xff]
        %v840 = vld [vmem:[#allocation5 + $0x1090] sm:$0xff]
        %v841 = vld [vmem:[#allocation5 + $0x1098] sm:$0xff]
        %v842 = vld [vmem:[#allocation5 + $0x10a0] sm:$0xff]
        %v843 = vld [vmem:[#allocation5 + $0x10a8] sm:$0xff]
        %v844 = vld [vmem:[#allocation5 + $0x10b0] sm:$0xff]
        %v845 = vld [vmem:[#allocation5 + $0x10b8] sm:$0xff]
        %v846 = vld [vmem:[#allocation5 + $0x10c0] sm:$0xff]
        %v847 = vld [vmem:[#allocation5 + $0x10c8] sm:$0xff]
        %v848 = vld [vmem:[#allocation5 + $0x10d0] sm:$0xff]
        %v849 = vld [vmem:[#allocation5 + $0x10d8] sm:$0xff]
        %v850 = vld [vmem:[#allocation5 + $0x10e0] sm:$0xff]
        %v851 = vld [vmem:[#allocation5 + $0x10e8] sm:$0xff]
        %v852 = vld [vmem:[#allocation5 + $0x10f0] sm:$0xff]
        %v853 = vld [vmem:[#allocation5 + $0x10f8] sm:$0xff]
        %v854 = vld [vmem:[#allocation5 + $0x1100] sm:$0xff]
        %v855 = vld [vmem:[#allocation5 + $0x1108] sm:$0xff]
        %v856 = vld [vmem:[#allocation5 + $0x1110] sm:$0xff]
        %v857 = vld [vmem:[#allocation5 + $0x1118] sm:$0xff]
        %v858 = vld [vmem:[#allocation5 + $0x1120] sm:$0xff]
        %v859 = vld [vmem:[#allocation5 + $0x1128] sm:$0xff]
        %v860 = vld [vmem:[#allocation5 + $0x1130] sm:$0xff]
        %v861 = vld [vmem:[#allocation5 + $0x1138] sm:$0xff]
        %v862 = vld [vmem:[#allocation5 + $0x1140] sm:$0xff]
        %v863 = vld [vmem:[#allocation5 + $0x1148] sm:$0xff]
        %v864 = vld [vmem:[#allocation5 + $0x1150] sm:$0xff]
        %v865 = vld [vmem:[#allocation5 + $0x1158] sm:$0xff]
        %v866 = vld [vmem:[#allocation5 + $0x1160] sm:$0xff]
        %v867 = vld [vmem:[#allocation5 + $0x1168] sm:$0xff]
        %v868 = vld [vmem:[#allocation5 + $0x1170] sm:$0xff]
        %v869 = vld [vmem:[#allocation5 + $0x1178] sm:$0xff]
        %v870 = vld [vmem:[#allocation5 + $0x1180] sm:$0xff]
        %v871 = vld [vmem:[#allocation5 + $0x1188] sm:$0xff]
        %v872 = vld [vmem:[#allocation5 + $0x1190] sm:$0xff]
        %v873 = vld [vmem:[#allocation5 + $0x1198] sm:$0xff]
        %v874 = vld [vmem:[#allocation5 + $0x11a0] sm:$0xff]
        %v875 = vld [vmem:[#allocation5 + $0x11a8] sm:$0xff]
        %v876 = vld [vmem:[#allocation5 + $0x11b0] sm:$0xff]
        %v877 = vld [vmem:[#allocation5 + $0x11b8] sm:$0xff]
        %v878 = vld [vmem:[#allocation5 + $0x11c0] sm:$0xff]
        %v879 = vld [vmem:[#allocation5 + $0x11c8] sm:$0xff]
        %v880 = vld [vmem:[#allocation5 + $0x11d0] sm:$0xff]
        %v881 = vld [vmem:[#allocation5 + $0x11d8] sm:$0xff]
        %v882 = vld [vmem:[#allocation5 + $0x11e0] sm:$0xff]
        %v883 = vld [vmem:[#allocation5 + $0x11e8] sm:$0xff]
        %v884 = vld [vmem:[#allocation5 + $0x11f0] sm:$0xff]
        %v885 = vld [vmem:[#allocation5 + $0x11f8] sm:$0xff]
        %v886 = vld [vmem:[#allocation5 + $0x1200] sm:$0xff]
        %v887 = vld [vmem:[#allocation5 + $0x1208] sm:$0xff]
        %v888 = vld [vmem:[#allocation5 + $0x1210] sm:$0xff]
        %v889 = vld [vmem:[#allocation5 + $0x1218] sm:$0xff]
        %v890 = vld [vmem:[#allocation5 + $0x1220] sm:$0xff]
        %v891 = vld [vmem:[#allocation5 + $0x1228] sm:$0xff]
        %v892 = vld [vmem:[#allocation5 + $0x1230] sm:$0xff]
        %v893 = vld [vmem:[#allocation5 + $0x1238] sm:$0xff]
        %v894 = vld [vmem:[#allocation5 + $0x1240] sm:$0xff]
        %v895 = vld [vmem:[#allocation5 + $0x1248] sm:$0xff]
        %v896 = vld [vmem:[#allocation5 + $0x1250] sm:$0xff]
        %v897 = vld [vmem:[#allocation5 + $0x1258] sm:$0xff]
        %v898 = vld [vmem:[#allocation5 + $0x1260] sm:$0xff]
        %v899 = vld [vmem:[#allocation5 + $0x1268] sm:$0xff]
        %v900 = vld [vmem:[#allocation5 + $0x1270] sm:$0xff]
        %v901 = vld [vmem:[#allocation5 + $0x1278] sm:$0xff]
        %v902 = vld [vmem:[#allocation5 + $0x1280] sm:$0xff]
        %v903 = vld [vmem:[#allocation5 + $0x1288] sm:$0xff]
        %v904 = vld [vmem:[#allocation5 + $0x1290] sm:$0xff]
        %v905 = vld [vmem:[#allocation5 + $0x1298] sm:$0xff]
        %v906 = vld [vmem:[#allocation5 + $0x12a0] sm:$0xff]
        %v907 = vld [vmem:[#allocation5 + $0x12a8] sm:$0xff]
        %v908 = vld [vmem:[#allocation5 + $0x12b0] sm:$0xff]
        %v909 = vld [vmem:[#allocation5 + $0x12b8] sm:$0xff]
        %v910 = vld [vmem:[#allocation5 + $0x12c0] sm:$0xff]
        %v911 = vld [vmem:[#allocation5 + $0x12c8] sm:$0xff]
        %v912 = vld [vmem:[#allocation5 + $0x12d0] sm:$0xff]
        %v913 = vld [vmem:[#allocation5 + $0x12d8] sm:$0xff]
        %v914 = vld [vmem:[#allocation5 + $0x12e0] sm:$0xff]
        %v915 = vld [vmem:[#allocation5 + $0x12e8] sm:$0xff]
        %v916 = vld [vmem:[#allocation5 + $0x12f0] sm:$0xff]
        %v917 = vld [vmem:[#allocation5 + $0x12f8] sm:$0xff]
        %v918 = vld [vmem:[#allocation5 + $0x1300] sm:$0xff]
        %v919 = vld [vmem:[#allocation5 + $0x1308] sm:$0xff]
        %v920 = vld [vmem:[#allocation5 + $0x1310] sm:$0xff]
        %v921 = vld [vmem:[#allocation5 + $0x1318] sm:$0xff]
        %v922 = vld [vmem:[#allocation5 + $0x1320] sm:$0xff]
        %v923 = vld [vmem:[#allocation5 + $0x1328] sm:$0xff]
        %v924 = vld [vmem:[#allocation5 + $0x1330] sm:$0xff]
        %v925 = vld [vmem:[#allocation5 + $0x1338] sm:$0xff]
        %v926 = vld [vmem:[#allocation5 + $0x1340] sm:$0xff]
        %v927 = vld [vmem:[#allocation5 + $0x1348] sm:$0xff]
        %v928 = vld [vmem:[#allocation5 + $0x1350] sm:$0xff]
        %v929 = vld [vmem:[#allocation5 + $0x1358] sm:$0xff]
        %v930 = vld [vmem:[#allocation5 + $0x1360] sm:$0xff]
        %v931 = vld [vmem:[#allocation5 + $0x1368] sm:$0xff]
        %v932 = vld [vmem:[#allocation5 + $0x1370] sm:$0xff]
        %v933 = vld [vmem:[#allocation5 + $0x1378] sm:$0xff]
        %v934 = vld [vmem:[#allocation5 + $0x1380] sm:$0xff]
        %v935 = vld [vmem:[#allocation5 + $0x1388] sm:$0xff]
        %v936 = vld [vmem:[#allocation5 + $0x1390] sm:$0xff]
        %v937 = vld [vmem:[#allocation5 + $0x1398] sm:$0xff]
        %v938 = vld [vmem:[#allocation5 + $0x13a0] sm:$0xff]
        %v939 = vld [vmem:[#allocation5 + $0x13a8] sm:$0xff]
        %v940 = vld [vmem:[#allocation5 + $0x13b0] sm:$0xff]
        %v941 = vld [vmem:[#allocation5 + $0x13b8] sm:$0xff]
        %v942 = vld [vmem:[#allocation5 + $0x13c0] sm:$0xff]
        %v943 = vld [vmem:[#allocation5 + $0x13c8] sm:$0xff]
        %v944 = vld [vmem:[#allocation5 + $0x13d0] sm:$0xff]
        %v945 = vld [vmem:[#allocation5 + $0x13d8] sm:$0xff]
        %v946 = vld [vmem:[#allocation5 + $0x13e0] sm:$0xff]
        %v947 = vld [vmem:[#allocation5 + $0x13e8] sm:$0xff]
        %v948 = vld [vmem:[#allocation5 + $0x13f0] sm:$0xff]
        %v949 = vld [vmem:[#allocation5 + $0x13f8] sm:$0xff]
        %v950 = vld [vmem:[#allocation5 + $0x1400] sm:$0xff]
        %v951 = vld [vmem:[#allocation5 + $0x1408] sm:$0xff]
        %v952 = vld [vmem:[#allocation5 + $0x1410] sm:$0xff]
        %v953 = vld [vmem:[#allocation5 + $0x1418] sm:$0xff]
        %v954 = vld [vmem:[#allocation5 + $0x1420] sm:$0xff]
        %v955 = vld [vmem:[#allocation5 + $0x1428] sm:$0xff]
        %v956 = vld [vmem:[#allocation5 + $0x1430] sm:$0xff]
        %v957 = vld [vmem:[#allocation5 + $0x1438] sm:$0xff]
        %v958 = vld [vmem:[#allocation5 + $0x1440] sm:$0xff]
        %v959 = vld [vmem:[#allocation5 + $0x1448] sm:$0xff]
        %v960 = vld [vmem:[#allocation5 + $0x1450] sm:$0xff]
        %v961 = vld [vmem:[#allocation5 + $0x1458] sm:$0xff]
        %v962 = vld [vmem:[#allocation5 + $0x1460] sm:$0xff]
        %v963 = vld [vmem:[#allocation5 + $0x1468] sm:$0xff]
        %v964 = vld [vmem:[#allocation5 + $0x1470] sm:$0xff]
        %v965 = vld [vmem:[#allocation5 + $0x1478] sm:$0xff]
        %v966 = vld [vmem:[#allocation5 + $0x1480] sm:$0xff]
        %v967 = vld [vmem:[#allocation5 + $0x1488] sm:$0xff]
        %v968 = vld [vmem:[#allocation5 + $0x1490] sm:$0xff]
        %v969 = vld [vmem:[#allocation5 + $0x1498] sm:$0xff]
        %v970 = vld [vmem:[#allocation5 + $0x14a0] sm:$0xff]
        %v971 = vld [vmem:[#allocation5 + $0x14a8] sm:$0xff]
        %v972 = vld [vmem:[#allocation5 + $0x14b0] sm:$0xff]
        %v973 = vld [vmem:[#allocation5 + $0x14b8] sm:$0xff]
        %v974 = vld [vmem:[#allocation5 + $0x14c0] sm:$0xff]
        %v975 = vld [vmem:[#allocation5 + $0x14c8] sm:$0xff]
        %v976 = vld [vmem:[#allocation5 + $0x14d0] sm:$0xff]
        %v977 = vld [vmem:[#allocation5 + $0x14d8] sm:$0xff]
        %v978 = vld [vmem:[#allocation5 + $0x14e0] sm:$0xff]
        %v979 = vld [vmem:[#allocation5 + $0x14e8] sm:$0xff]
        %v980 = vld [vmem:[#allocation5 + $0x14f0] sm:$0xff]
        %v981 = vld [vmem:[#allocation5 + $0x14f8] sm:$0xff]
        %v982 = vld [vmem:[#allocation5 + $0x1500] sm:$0xff]
        %v983 = vld [vmem:[#allocation5 + $0x1508] sm:$0xff]
        %v984 = vld [vmem:[#allocation5 + $0x1510] sm:$0xff]
        %v985 = vld [vmem:[#allocation5 + $0x1518] sm:$0xff]
        %v986 = vld [vmem:[#allocation5 + $0x1520] sm:$0xff]
        %v987 = vld [vmem:[#allocation5 + $0x1528] sm:$0xff]
        %v988 = vld [vmem:[#allocation5 + $0x1530] sm:$0xff]
        %v989 = vld [vmem:[#allocation5 + $0x1538] sm:$0xff]
        %v990 = vld [vmem:[#allocation5 + $0x1540] sm:$0xff]
        %v991 = vld [vmem:[#allocation5 + $0x1548] sm:$0xff]
        %v992 = vld [vmem:[#allocation5 + $0x1550] sm:$0xff]
        %v993 = vld [vmem:[#allocation5 + $0x1558] sm:$0xff]
        %v994 = vld [vmem:[#allocation5 + $0x1560] sm:$0xff]
        %v995 = vld [vmem:[#allocation5 + $0x1568] sm:$0xff]
        %v996 = vld [vmem:[#allocation5 + $0x1570] sm:$0xff]
        %v997 = vld [vmem:[#allocation5 + $0x1578] sm:$0xff]
        %v998 = vld [vmem:[#allocation5 + $0x1580] sm:$0xff]
        %v999 = vld [vmem:[#allocation5 + $0x1588] sm:$0xff]
        %v1000 = vld [vmem:[#allocation5 + $0x1590] sm:$0xff]
        %v1001 = vld [vmem:[#allocation5 + $0x1598] sm:$0xff]
        %v1002 = vld [vmem:[#allocation5 + $0x15a0] sm:$0xff]
        %v1003 = vld [vmem:[#allocation5 + $0x15a8] sm:$0xff]
        %v1004 = vld [vmem:[#allocation5 + $0x15b0] sm:$0xff]
        %v1005 = vld [vmem:[#allocation5 + $0x15b8] sm:$0xff]
        %v1006 = vld [vmem:[#allocation5 + $0x15c0] sm:$0xff]
        %v1007 = vld [vmem:[#allocation5 + $0x15c8] sm:$0xff]
        %v1008 = vld [vmem:[#allocation5 + $0x15d0] sm:$0xff]
        %v1009 = vld [vmem:[#allocation5 + $0x15d8] sm:$0xff]
        %v1010 = vld [vmem:[#allocation5 + $0x15e0] sm:$0xff]
        %v1011 = vld [vmem:[#allocation5 + $0x15e8] sm:$0xff]
        %v1012 = vld [vmem:[#allocation5 + $0x15f0] sm:$0xff]
        %v1013 = vld [vmem:[#allocation5 + $0x15f8] sm:$0xff]
        %v1014 = vld [vmem:[#allocation5 + $0x1600] sm:$0xff]
        %v1015 = vld [vmem:[#allocation5 + $0x1608] sm:$0xff]
        %v1016 = vld [vmem:[#allocation5 + $0x1610] sm:$0xff]
        %v1017 = vld [vmem:[#allocation5 + $0x1618] sm:$0xff]
        %v1018 = vld [vmem:[#allocation5 + $0x1620] sm:$0xff]
        %v1019 = vld [vmem:[#allocation5 + $0x1628] sm:$0xff]
        %v1020 = vld [vmem:[#allocation5 + $0x1630] sm:$0xff]
        %v1021 = vld [vmem:[#allocation5 + $0x1638] sm:$0xff]
        %v1022 = vld [vmem:[#allocation5 + $0x1640] sm:$0x77]
        %v1023 = vld [vmem:[#allocation5 + $0x1648] sm:$0x77]
        %v1024 = vld [vmem:[#allocation5 + $0x1650] sm:$0x77]
        %v1025 = vld [vmem:[#allocation5 + $0x1658] sm:$0x77]
        %v1038 = vunpack.c.l.b16 %v298
        %v1039 = vunpack.c.h.b16 %v298
        %v1040 = vunpack.c.l.b16 %v299
        %v1041 = vunpack.c.h.b16 %v299
        %v1042 = vunpack.c.l.b16 %v300
        %v1043 = vunpack.c.h.b16 %v300
        %v1044 = vunpack.c.l.b16 %v301
        %v1045 = vunpack.c.h.b16 %v301
        %v1046 = vunpack.c.l.b16 %v302
        %v1047 = vunpack.c.h.b16 %v302
        %v1048 = vunpack.c.l.b16 %v303
        %v1049 = vunpack.c.h.b16 %v303
        %v1050 = vunpack.c.l.b16 %v304
        %v1051 = vunpack.c.h.b16 %v304
        %v1052 = vunpack.c.l.b16 %v305
        %v1053 = vunpack.c.h.b16 %v305
        %v1054 = vunpack.c.l.b16 %v306
        %v1055 = vunpack.c.h.b16 %v306
        %v1056 = vunpack.c.l.b16 %v307
        %v1057 = vunpack.c.h.b16 %v307
        %v1058 = vunpack.c.l.b16 %v308
        %v1059 = vunpack.c.h.b16 %v308
        %v1060 = vunpack.c.l.b16 %v309
        %v1061 = vunpack.c.h.b16 %v309
        %v1062 = vpack.c.b16 %v1050, %v1038
        %v1063 = vpack.c.b16 %v1051, %v1039
        %v1064 = vpack.c.b16 %v1052, %v1040
        %v1065 = vpack.c.b16 %v1053, %v1041
        %v1066 = vpack.c.b16 %v1054, %v1042
        %v1067 = vpack.c.b16 %v1055, %v1043
        %v1068 = vpack.c.b16 %v1056, %v1044
        %v1069 = vpack.c.b16 %v1057, %v1045
        %v1070 = vpack.c.b16 %v1058, %v1046
        %v1071 = vpack.c.b16 %v1059, %v1047
        %v1072 = vpack.c.b16 %v1060, %v1048
        %v1073 = vpack.c.b16 %v1061, %v1049
        %v1801 = vunpack.c.l.b16 %v310
        %v1802 = vunpack.c.h.b16 %v310
        %v1803 = vunpack.c.l.b16 %v311
        %v1804 = vunpack.c.h.b16 %v311
        %v1805 = vunpack.c.l.b16 %v312
        %v1806 = vunpack.c.h.b16 %v312
        %v1807 = vunpack.c.l.b16 %v313
        %v1808 = vunpack.c.h.b16 %v313
        %v1809 = vunpack.c.l.b16 %v314
        %v1810 = vunpack.c.h.b16 %v314
        %v1811 = vunpack.c.l.b16 %v315
        %v1812 = vunpack.c.h.b16 %v315
        %v1813 = vunpack.c.l.b16 %v316
        %v1814 = vunpack.c.h.b16 %v316
        %v1815 = vunpack.c.l.b16 %v317
        %v1816 = vunpack.c.h.b16 %v317
        %v1817 = vunpack.c.l.b16 %v318
        %v1818 = vunpack.c.h.b16 %v318
        %v1819 = vunpack.c.l.b16 %v319
        %v1820 = vunpack.c.h.b16 %v319
        %v1821 = vunpack.c.l.b16 %v320
        %v1822 = vunpack.c.h.b16 %v320
        %v1823 = vunpack.c.l.b16 %v321
        %v1824 = vunpack.c.h.b16 %v321
        %v1825 = vunpack.c.l.b16 %v322
        %v1826 = vunpack.c.h.b16 %v322
        %v1827 = vunpack.c.l.b16 %v323
        %v1828 = vunpack.c.h.b16 %v323
        %v1829 = vunpack.c.l.b16 %v324
        %v1830 = vunpack.c.h.b16 %v324
        %v1831 = vunpack.c.l.b16 %v325
        %v1832 = vunpack.c.h.b16 %v325
        %v1833 = vunpack.c.l.b16 %v326
        %v1834 = vunpack.c.h.b16 %v326
        %v1835 = vunpack.c.l.b16 %v327
        %v1836 = vunpack.c.h.b16 %v327
        %v1837 = vunpack.c.l.b16 %v328
        %v1838 = vunpack.c.h.b16 %v328
        %v1839 = vunpack.c.l.b16 %v329
        %v1840 = vunpack.c.h.b16 %v329
        %v1841 = vunpack.c.l.b16 %v330
        %v1842 = vunpack.c.h.b16 %v330
        %v1843 = vunpack.c.l.b16 %v331
        %v1844 = vunpack.c.h.b16 %v331
        %v1845 = vunpack.c.l.b16 %v332
        %v1846 = vunpack.c.h.b16 %v332
        %v1847 = vunpack.c.l.b16 %v333
        %v1848 = vunpack.c.h.b16 %v333
        %v1849 = vunpack.c.l.b16 %v334
        %v1850 = vunpack.c.h.b16 %v334
        %v1851 = vunpack.c.l.b16 %v335
        %v1852 = vunpack.c.h.b16 %v335
        %v1853 = vunpack.c.l.b16 %v336
        %v1854 = vunpack.c.h.b16 %v336
        %v1855 = vunpack.c.l.b16 %v337
        %v1856 = vunpack.c.h.b16 %v337
        %v1857 = vunpack.c.l.b16 %v338
        %v1858 = vunpack.c.h.b16 %v338
        %v1859 = vunpack.c.l.b16 %v339
        %v1860 = vunpack.c.h.b16 %v339
        %v1861 = vunpack.c.l.b16 %v340
        %v1862 = vunpack.c.h.b16 %v340
        %v1863 = vunpack.c.l.b16 %v341
        %v1864 = vunpack.c.h.b16 %v341
        %v1865 = vunpack.c.l.b16 %v342
        %v1866 = vunpack.c.h.b16 %v342
        %v1867 = vunpack.c.l.b16 %v343
        %v1868 = vunpack.c.h.b16 %v343
        %v1869 = vunpack.c.l.b16 %v344
        %v1870 = vunpack.c.h.b16 %v344
        %v1871 = vunpack.c.l.b16 %v345
        %v1872 = vunpack.c.h.b16 %v345
        %v1873 = vunpack.c.l.b16 %v346
        %v1874 = vunpack.c.h.b16 %v346
        %v1875 = vunpack.c.l.b16 %v347
        %v1876 = vunpack.c.h.b16 %v347
        %v1877 = vunpack.c.l.b16 %v348
        %v1878 = vunpack.c.h.b16 %v348
        %v1879 = vunpack.c.l.b16 %v349
        %v1880 = vunpack.c.h.b16 %v349
        %v1881 = vunpack.c.l.b16 %v350
        %v1882 = vunpack.c.h.b16 %v350
        %v1883 = vunpack.c.l.b16 %v351
        %v1884 = vunpack.c.h.b16 %v351
        %v1885 = vunpack.c.l.b16 %v352
        %v1886 = vunpack.c.h.b16 %v352
        %v1887 = vunpack.c.l.b16 %v353
        %v1888 = vunpack.c.h.b16 %v353
        %v1889 = vunpack.c.l.b16 %v354
        %v1890 = vunpack.c.h.b16 %v354
        %v1891 = vunpack.c.l.b16 %v355
        %v1892 = vunpack.c.h.b16 %v355
        %v1893 = vunpack.c.l.b16 %v356
        %v1894 = vunpack.c.h.b16 %v356
        %v1895 = vunpack.c.l.b16 %v357
        %v1896 = vunpack.c.h.b16 %v357
        %v1897 = vunpack.c.l.b16 %v358
        %v1898 = vunpack.c.h.b16 %v358
        %v1899 = vunpack.c.l.b16 %v359
        %v1900 = vunpack.c.h.b16 %v359
        %v1901 = vunpack.c.l.b16 %v360
        %v1902 = vunpack.c.h.b16 %v360
        %v1903 = vunpack.c.l.b16 %v361
        %v1904 = vunpack.c.h.b16 %v361
        %v1905 = vunpack.c.l.b16 %v362
        %v1906 = vunpack.c.h.b16 %v362
        %v1907 = vunpack.c.l.b16 %v363
        %v1908 = vunpack.c.h.b16 %v363
        %v1909 = vunpack.c.l.b16 %v364
        %v1910 = vunpack.c.h.b16 %v364
        %v1911 = vunpack.c.l.b16 %v365
        %v1912 = vunpack.c.h.b16 %v365
        %v1913 = vunpack.c.l.b16 %v366
        %v1914 = vunpack.c.h.b16 %v366
        %v1915 = vunpack.c.l.b16 %v367
        %v1916 = vunpack.c.h.b16 %v367
        %v1917 = vunpack.c.l.b16 %v368
        %v1918 = vunpack.c.h.b16 %v368
        %v1919 = vunpack.c.l.b16 %v369
        %v1920 = vunpack.c.h.b16 %v369
        %v1921 = vunpack.c.l.b16 %v370
        %v1922 = vunpack.c.h.b16 %v370
        %v1923 = vunpack.c.l.b16 %v371
        %v1924 = vunpack.c.h.b16 %v371
        %v1925 = vunpack.c.l.b16 %v372
        %v1926 = vunpack.c.h.b16 %v372
        %v1927 = vunpack.c.l.b16 %v373
        %v1928 = vunpack.c.h.b16 %v373
        %v1929 = vunpack.c.l.b16 %v374
        %v1930 = vunpack.c.h.b16 %v374
        %v1931 = vunpack.c.l.b16 %v375
        %v1932 = vunpack.c.h.b16 %v375
        %v1933 = vunpack.c.l.b16 %v376
        %v1934 = vunpack.c.h.b16 %v376
        %v1935 = vunpack.c.l.b16 %v377
        %v1936 = vunpack.c.h.b16 %v377
        %v1937 = vunpack.c.l.b16 %v378
        %v1938 = vunpack.c.h.b16 %v378
        %v1939 = vunpack.c.l.b16 %v379
        %v1940 = vunpack.c.h.b16 %v379
        %v1941 = vunpack.c.l.b16 %v380
        %v1942 = vunpack.c.h.b16 %v380
        %v1943 = vunpack.c.l.b16 %v381
        %v1944 = vunpack.c.h.b16 %v381
        %v1945 = vunpack.c.l.b16 %v382
        %v1946 = vunpack.c.h.b16 %v382
        %v1947 = vunpack.c.l.b16 %v383
        %v1948 = vunpack.c.h.b16 %v383
        %v1949 = vunpack.c.l.b16 %v384
        %v1950 = vunpack.c.h.b16 %v384
        %v1951 = vunpack.c.l.b16 %v385
        %v1952 = vunpack.c.h.b16 %v385
        %v1953 = vunpack.c.l.b16 %v386
        %v1954 = vunpack.c.h.b16 %v386
        %v1955 = vunpack.c.l.b16 %v387
        %v1956 = vunpack.c.h.b16 %v387
        %v1957 = vunpack.c.l.b16 %v388
        %v1958 = vunpack.c.h.b16 %v388
        %v1959 = vunpack.c.l.b16 %v389
        %v1960 = vunpack.c.h.b16 %v389
        %v1961 = vunpack.c.l.b16 %v390
        %v1962 = vunpack.c.h.b16 %v390
        %v1963 = vunpack.c.l.b16 %v391
        %v1964 = vunpack.c.h.b16 %v391
        %v1965 = vunpack.c.l.b16 %v392
        %v1966 = vunpack.c.h.b16 %v392
        %v1967 = vunpack.c.l.b16 %v393
        %v1968 = vunpack.c.h.b16 %v393
        %v1969 = vunpack.c.l.b16 %v394
        %v1970 = vunpack.c.h.b16 %v394
        %v1971 = vunpack.c.l.b16 %v395
        %v1972 = vunpack.c.h.b16 %v395
        %v1973 = vunpack.c.l.b16 %v396
        %v1974 = vunpack.c.h.b16 %v396
        %v1975 = vunpack.c.l.b16 %v397
        %v1976 = vunpack.c.h.b16 %v397
        %v1977 = vunpack.c.l.b16 %v398
        %v1978 = vunpack.c.h.b16 %v398
        %v1979 = vunpack.c.l.b16 %v399
        %v1980 = vunpack.c.h.b16 %v399
        %v1981 = vunpack.c.l.b16 %v400
        %v1982 = vunpack.c.h.b16 %v400
        %v1983 = vunpack.c.l.b16 %v401
        %v1984 = vunpack.c.h.b16 %v401
        %v1985 = vunpack.c.l.b16 %v402
        %v1986 = vunpack.c.h.b16 %v402
        %v1987 = vunpack.c.l.b16 %v403
        %v1988 = vunpack.c.h.b16 %v403
        %v1989 = vunpack.c.l.b16 %v404
        %v1990 = vunpack.c.h.b16 %v404
        %v1991 = vunpack.c.l.b16 %v405
        %v1992 = vunpack.c.h.b16 %v405
        %v1993 = vunpack.c.l.b16 %v406
        %v1994 = vunpack.c.h.b16 %v406
        %v1995 = vunpack.c.l.b16 %v407
        %v1996 = vunpack.c.h.b16 %v407
        %v1997 = vunpack.c.l.b16 %v408
        %v1998 = vunpack.c.h.b16 %v408
        %v1999 = vunpack.c.l.b16 %v409
        %v2000 = vunpack.c.h.b16 %v409
        %v2001 = vunpack.c.l.b16 %v410
        %v2002 = vunpack.c.h.b16 %v410
        %v2003 = vunpack.c.l.b16 %v411
        %v2004 = vunpack.c.h.b16 %v411
        %v2005 = vunpack.c.l.b16 %v412
        %v2006 = vunpack.c.h.b16 %v412
        %v2007 = vunpack.c.l.b16 %v413
        %v2008 = vunpack.c.h.b16 %v413
        %v2009 = vunpack.c.l.b16 %v414
        %v2010 = vunpack.c.h.b16 %v414
        %v2011 = vunpack.c.l.b16 %v415
        %v2012 = vunpack.c.h.b16 %v415
        %v2013 = vunpack.c.l.b16 %v416
        %v2014 = vunpack.c.h.b16 %v416
        %v2015 = vunpack.c.l.b16 %v417
        %v2016 = vunpack.c.h.b16 %v417
        %v2017 = vunpack.c.l.b16 %v418
        %v2018 = vunpack.c.h.b16 %v418
        %v2019 = vunpack.c.l.b16 %v419
        %v2020 = vunpack.c.h.b16 %v419
        %v2021 = vunpack.c.l.b16 %v420
        %v2022 = vunpack.c.h.b16 %v420
        %v2023 = vunpack.c.l.b16 %v421
        %v2024 = vunpack.c.h.b16 %v421
        %v2025 = vunpack.c.l.b16 %v422
        %v2026 = vunpack.c.h.b16 %v422
        %v2027 = vunpack.c.l.b16 %v423
        %v2028 = vunpack.c.h.b16 %v423
        %v2029 = vunpack.c.l.b16 %v424
        %v2030 = vunpack.c.h.b16 %v424
        %v2031 = vunpack.c.l.b16 %v425
        %v2032 = vunpack.c.h.b16 %v425
        %v2033 = vunpack.c.l.b16 %v426
        %v2034 = vunpack.c.h.b16 %v426
        %v2035 = vunpack.c.l.b16 %v427
        %v2036 = vunpack.c.h.b16 %v427
        %v2037 = vunpack.c.l.b16 %v428
        %v2038 = vunpack.c.h.b16 %v428
        %v2039 = vunpack.c.l.b16 %v429
        %v2040 = vunpack.c.h.b16 %v429
        %v2041 = vunpack.c.l.b16 %v430
        %v2042 = vunpack.c.h.b16 %v430
        %v2043 = vunpack.c.l.b16 %v431
        %v2044 = vunpack.c.h.b16 %v431
        %v2045 = vunpack.c.l.b16 %v432
        %v2046 = vunpack.c.h.b16 %v432
        %v2047 = vunpack.c.l.b16 %v433
        %v2048 = vunpack.c.h.b16 %v433
        %v2049 = vunpack.c.l.b16 %v434
        %v2050 = vunpack.c.h.b16 %v434
        %v2051 = vunpack.c.l.b16 %v435
        %v2052 = vunpack.c.h.b16 %v435
        %v2053 = vunpack.c.l.b16 %v436
        %v2054 = vunpack.c.h.b16 %v436
        %v2055 = vunpack.c.l.b16 %v437
        %v2056 = vunpack.c.h.b16 %v437
        %v2057 = vunpack.c.l.b16 %v438
        %v2058 = vunpack.c.h.b16 %v438
        %v2059 = vunpack.c.l.b16 %v439
        %v2060 = vunpack.c.h.b16 %v439
        %v2061 = vunpack.c.l.b16 %v440
        %v2062 = vunpack.c.h.b16 %v440
        %v2063 = vunpack.c.l.b16 %v441
        %v2064 = vunpack.c.h.b16 %v441
        %v2065 = vunpack.c.l.b16 %v442
        %v2066 = vunpack.c.h.b16 %v442
        %v2067 = vunpack.c.l.b16 %v443
        %v2068 = vunpack.c.h.b16 %v443
        %v2069 = vunpack.c.l.b16 %v444
        %v2070 = vunpack.c.h.b16 %v444
        %v2071 = vunpack.c.l.b16 %v445
        %v2072 = vunpack.c.h.b16 %v445
        %v2073 = vunpack.c.l.b16 %v446
        %v2074 = vunpack.c.h.b16 %v446
        %v2075 = vunpack.c.l.b16 %v447
        %v2076 = vunpack.c.h.b16 %v447
        %v2077 = vunpack.c.l.b16 %v448
        %v2078 = vunpack.c.h.b16 %v448
        %v2079 = vunpack.c.l.b16 %v449
        %v2080 = vunpack.c.h.b16 %v449
        %v2081 = vunpack.c.l.b16 %v450
        %v2082 = vunpack.c.h.b16 %v450
        %v2083 = vunpack.c.l.b16 %v451
        %v2084 = vunpack.c.h.b16 %v451
        %v2085 = vunpack.c.l.b16 %v452
        %v2086 = vunpack.c.h.b16 %v452
        %v2087 = vunpack.c.l.b16 %v453
        %v2088 = vunpack.c.h.b16 %v453
        %v2089 = vunpack.c.l.b16 %v454
        %v2090 = vunpack.c.h.b16 %v454
        %v2091 = vunpack.c.l.b16 %v455
        %v2092 = vunpack.c.h.b16 %v455
        %v2093 = vunpack.c.l.b16 %v456
        %v2094 = vunpack.c.h.b16 %v456
        %v2095 = vunpack.c.l.b16 %v457
        %v2096 = vunpack.c.h.b16 %v457
        %v2097 = vunpack.c.l.b16 %v458
        %v2098 = vunpack.c.h.b16 %v458
        %v2099 = vunpack.c.l.b16 %v459
        %v2100 = vunpack.c.h.b16 %v459
        %v2101 = vunpack.c.l.b16 %v460
        %v2102 = vunpack.c.h.b16 %v460
        %v2103 = vunpack.c.l.b16 %v461
        %v2104 = vunpack.c.h.b16 %v461
        %v2105 = vunpack.c.l.b16 %v462
        %v2106 = vunpack.c.h.b16 %v462
        %v2107 = vunpack.c.l.b16 %v463
        %v2108 = vunpack.c.h.b16 %v463
        %v2109 = vunpack.c.l.b16 %v464
        %v2110 = vunpack.c.h.b16 %v464
        %v2111 = vunpack.c.l.b16 %v465
        %v2112 = vunpack.c.h.b16 %v465
        %v2113 = vunpack.c.l.b16 %v466
        %v2114 = vunpack.c.h.b16 %v466
        %v2115 = vunpack.c.l.b16 %v467
        %v2116 = vunpack.c.h.b16 %v467
        %v2117 = vunpack.c.l.b16 %v468
        %v2118 = vunpack.c.h.b16 %v468
        %v2119 = vunpack.c.l.b16 %v469
        %v2120 = vunpack.c.h.b16 %v469
        %v2121 = vunpack.c.l.b16 %v470
        %v2122 = vunpack.c.h.b16 %v470
        %v2123 = vunpack.c.l.b16 %v471
        %v2124 = vunpack.c.h.b16 %v471
        %v2125 = vunpack.c.l.b16 %v472
        %v2126 = vunpack.c.h.b16 %v472
        %v2127 = vunpack.c.l.b16 %v473
        %v2128 = vunpack.c.h.b16 %v473
        %v2129 = vunpack.c.l.b16 %v474
        %v2130 = vunpack.c.h.b16 %v474
        %v2131 = vunpack.c.l.b16 %v475
        %v2132 = vunpack.c.h.b16 %v475
        %v2133 = vunpack.c.l.b16 %v476
        %v2134 = vunpack.c.h.b16 %v476
        %v2135 = vunpack.c.l.b16 %v477
        %v2136 = vunpack.c.h.b16 %v477
        %v2137 = vunpack.c.l.b16 %v478
        %v2138 = vunpack.c.h.b16 %v478
        %v2139 = vunpack.c.l.b16 %v479
        %v2140 = vunpack.c.h.b16 %v479
        %v2141 = vunpack.c.l.b16 %v480
        %v2142 = vunpack.c.h.b16 %v480
        %v2143 = vunpack.c.l.b16 %v481
        %v2144 = vunpack.c.h.b16 %v481
        %v2145 = vunpack.c.l.b16 %v482
        %v2146 = vunpack.c.h.b16 %v482
        %v2147 = vunpack.c.l.b16 %v483
        %v2148 = vunpack.c.h.b16 %v483
        %v2149 = vunpack.c.l.b16 %v484
        %v2150 = vunpack.c.h.b16 %v484
        %v2151 = vunpack.c.l.b16 %v485
        %v2152 = vunpack.c.h.b16 %v485
        %v2153 = vunpack.c.l.b16 %v486
        %v2154 = vunpack.c.h.b16 %v486
        %v2155 = vunpack.c.l.b16 %v487
        %v2156 = vunpack.c.h.b16 %v487
        %v2157 = vunpack.c.l.b16 %v488
        %v2158 = vunpack.c.h.b16 %v488
        %v2159 = vunpack.c.l.b16 %v489
        %v2160 = vunpack.c.h.b16 %v489
        %v2161 = vunpack.c.l.b16 %v490
        %v2162 = vunpack.c.h.b16 %v490
        %v2163 = vunpack.c.l.b16 %v491
        %v2164 = vunpack.c.h.b16 %v491
        %v2165 = vunpack.c.l.b16 %v492
        %v2166 = vunpack.c.h.b16 %v492
        %v2167 = vunpack.c.l.b16 %v493
        %v2168 = vunpack.c.h.b16 %v493
        %v2169 = vunpack.c.l.b16 %v494
        %v2170 = vunpack.c.h.b16 %v494
        %v2171 = vunpack.c.l.b16 %v495
        %v2172 = vunpack.c.h.b16 %v495
        %v2173 = vunpack.c.l.b16 %v496
        %v2174 = vunpack.c.h.b16 %v496
        %v2175 = vunpack.c.l.b16 %v497
        %v2176 = vunpack.c.h.b16 %v497
        %v2177 = vunpack.c.l.b16 %v498
        %v2178 = vunpack.c.h.b16 %v498
        %v2179 = vunpack.c.l.b16 %v499
        %v2180 = vunpack.c.h.b16 %v499
        %v2181 = vunpack.c.l.b16 %v500
        %v2182 = vunpack.c.h.b16 %v500
        %v2183 = vunpack.c.l.b16 %v501
        %v2184 = vunpack.c.h.b16 %v501
        %v2185 = vunpack.c.l.b16 %v502
        %v2186 = vunpack.c.h.b16 %v502
        %v2187 = vunpack.c.l.b16 %v503
        %v2188 = vunpack.c.h.b16 %v503
        %v2189 = vunpack.c.l.b16 %v504
        %v2190 = vunpack.c.h.b16 %v504
        %v2191 = vunpack.c.l.b16 %v505
        %v2192 = vunpack.c.h.b16 %v505
        %v2193 = vunpack.c.l.b16 %v506
        %v2194 = vunpack.c.h.b16 %v506
        %v2195 = vunpack.c.l.b16 %v507
        %v2196 = vunpack.c.h.b16 %v507
        %v2197 = vunpack.c.l.b16 %v508
        %v2198 = vunpack.c.h.b16 %v508
        %v2199 = vunpack.c.l.b16 %v509
        %v2200 = vunpack.c.h.b16 %v509
        %v2201 = vunpack.c.l.b16 %v510
        %v2202 = vunpack.c.h.b16 %v510
        %v2203 = vunpack.c.l.b16 %v511
        %v2204 = vunpack.c.h.b16 %v511
        %v2205 = vunpack.c.l.b16 %v512
        %v2206 = vunpack.c.h.b16 %v512
        %v2207 = vunpack.c.l.b16 %v513
        %v2208 = vunpack.c.h.b16 %v513
        %v2209 = vunpack.c.l.b16 %v514
        %v2210 = vunpack.c.h.b16 %v514
        %v2211 = vunpack.c.l.b16 %v515
        %v2212 = vunpack.c.h.b16 %v515
        %v2213 = vunpack.c.l.b16 %v516
        %v2214 = vunpack.c.h.b16 %v516
        %v2215 = vunpack.c.l.b16 %v517
        %v2216 = vunpack.c.h.b16 %v517
        %v2217 = vunpack.c.l.b16 %v518
        %v2218 = vunpack.c.h.b16 %v518
        %v2219 = vunpack.c.l.b16 %v519
        %v2220 = vunpack.c.h.b16 %v519
        %v2221 = vunpack.c.l.b16 %v520
        %v2222 = vunpack.c.h.b16 %v520
        %v2223 = vunpack.c.l.b16 %v521
        %v2224 = vunpack.c.h.b16 %v521
        %v2225 = vunpack.c.l.b16 %v522
        %v2226 = vunpack.c.h.b16 %v522
        %v2227 = vunpack.c.l.b16 %v523
        %v2228 = vunpack.c.h.b16 %v523
        %v2229 = vunpack.c.l.b16 %v524
        %v2230 = vunpack.c.h.b16 %v524
        %v2231 = vunpack.c.l.b16 %v525
        %v2232 = vunpack.c.h.b16 %v525
        %v2233 = vunpack.c.l.b16 %v526
        %v2234 = vunpack.c.h.b16 %v526
        %v2235 = vunpack.c.l.b16 %v527
        %v2236 = vunpack.c.h.b16 %v527
        %v2237 = vunpack.c.l.b16 %v528
        %v2238 = vunpack.c.h.b16 %v528
        %v2239 = vunpack.c.l.b16 %v529
        %v2240 = vunpack.c.h.b16 %v529
        %v2241 = vunpack.c.l.b16 %v530
        %v2242 = vunpack.c.h.b16 %v530
        %v2243 = vunpack.c.l.b16 %v531
        %v2244 = vunpack.c.h.b16 %v531
        %v2245 = vunpack.c.l.b16 %v532
        %v2246 = vunpack.c.h.b16 %v532
        %v2247 = vunpack.c.l.b16 %v533
        %v2248 = vunpack.c.h.b16 %v533
        %v2249 = vunpack.c.l.b16 %v534
        %v2250 = vunpack.c.h.b16 %v534
        %v2251 = vunpack.c.l.b16 %v535
        %v2252 = vunpack.c.h.b16 %v535
        %v2253 = vunpack.c.l.b16 %v536
        %v2254 = vunpack.c.h.b16 %v536
        %v2255 = vunpack.c.l.b16 %v537
        %v2256 = vunpack.c.h.b16 %v537
        %v2257 = vunpack.c.l.b16 %v538
        %v2258 = vunpack.c.h.b16 %v538
        %v2259 = vunpack.c.l.b16 %v539
        %v2260 = vunpack.c.h.b16 %v539
        %v2261 = vunpack.c.l.b16 %v540
        %v2262 = vunpack.c.h.b16 %v540
        %v2263 = vunpack.c.l.b16 %v541
        %v2264 = vunpack.c.h.b16 %v541
        %v2265 = vunpack.c.l.b16 %v542
        %v2266 = vunpack.c.h.b16 %v542
        %v2267 = vunpack.c.l.b16 %v543
        %v2268 = vunpack.c.h.b16 %v543
        %v2269 = vunpack.c.l.b16 %v544
        %v2270 = vunpack.c.h.b16 %v544
        %v2271 = vunpack.c.l.b16 %v545
        %v2272 = vunpack.c.h.b16 %v545
        %v2273 = vunpack.c.l.b16 %v546
        %v2274 = vunpack.c.h.b16 %v546
        %v2275 = vunpack.c.l.b16 %v547
        %v2276 = vunpack.c.h.b16 %v547
        %v2277 = vunpack.c.l.b16 %v548
        %v2278 = vunpack.c.h.b16 %v548
        %v2279 = vunpack.c.l.b16 %v549
        %v2280 = vunpack.c.h.b16 %v549
        %v2281 = vunpack.c.l.b16 %v550
        %v2282 = vunpack.c.h.b16 %v550
        %v2283 = vunpack.c.l.b16 %v551
        %v2284 = vunpack.c.h.b16 %v551
        %v2285 = vunpack.c.l.b16 %v552
        %v2286 = vunpack.c.h.b16 %v552
        %v2287 = vunpack.c.l.b16 %v553
        %v2288 = vunpack.c.h.b16 %v553
        %v2289 = vunpack.c.l.b16 %v554
        %v2290 = vunpack.c.h.b16 %v554
        %v2291 = vunpack.c.l.b16 %v555
        %v2292 = vunpack.c.h.b16 %v555
        %v2293 = vunpack.c.l.b16 %v556
        %v2294 = vunpack.c.h.b16 %v556
        %v2295 = vunpack.c.l.b16 %v557
        %v2296 = vunpack.c.h.b16 %v557
        %v2297 = vunpack.c.l.b16 %v558
        %v2298 = vunpack.c.h.b16 %v558
        %v2299 = vunpack.c.l.b16 %v559
        %v2300 = vunpack.c.h.b16 %v559
        %v2301 = vunpack.c.l.b16 %v560
        %v2302 = vunpack.c.h.b16 %v560
        %v2303 = vunpack.c.l.b16 %v561
        %v2304 = vunpack.c.h.b16 %v561
        %v2305 = vunpack.c.l.b16 %v562
        %v2306 = vunpack.c.h.b16 %v562
        %v2307 = vunpack.c.l.b16 %v563
        %v2308 = vunpack.c.h.b16 %v563
        %v2309 = vunpack.c.l.b16 %v564
        %v2310 = vunpack.c.h.b16 %v564
        %v2311 = vunpack.c.l.b16 %v565
        %v2312 = vunpack.c.h.b16 %v565
        %v2313 = vunpack.c.l.b16 %v566
        %v2314 = vunpack.c.h.b16 %v566
        %v2315 = vunpack.c.l.b16 %v567
        %v2316 = vunpack.c.h.b16 %v567
        %v2317 = vunpack.c.l.b16 %v568
        %v2318 = vunpack.c.h.b16 %v568
        %v2319 = vunpack.c.l.b16 %v569
        %v2320 = vunpack.c.h.b16 %v569
        %v2321 = vunpack.c.l.b16 %v570
        %v2322 = vunpack.c.h.b16 %v570
        %v2323 = vunpack.c.l.b16 %v571
        %v2324 = vunpack.c.h.b16 %v571
        %v2325 = vunpack.c.l.b16 %v572
        %v2326 = vunpack.c.h.b16 %v572
        %v2327 = vunpack.c.l.b16 %v573
        %v2328 = vunpack.c.h.b16 %v573
        %v2329 = vunpack.c.l.b16 %v574
        %v2330 = vunpack.c.h.b16 %v574
        %v2331 = vunpack.c.l.b16 %v575
        %v2332 = vunpack.c.h.b16 %v575
        %v2333 = vunpack.c.l.b16 %v576
        %v2334 = vunpack.c.h.b16 %v576
        %v2335 = vunpack.c.l.b16 %v577
        %v2336 = vunpack.c.h.b16 %v577
        %v2337 = vunpack.c.l.b16 %v578
        %v2338 = vunpack.c.h.b16 %v578
        %v2339 = vunpack.c.l.b16 %v579
        %v2340 = vunpack.c.h.b16 %v579
        %v2341 = vunpack.c.l.b16 %v580
        %v2342 = vunpack.c.h.b16 %v580
        %v2343 = vunpack.c.l.b16 %v581
        %v2344 = vunpack.c.h.b16 %v581
        %v2345 = vunpack.c.l.b16 %v582
        %v2346 = vunpack.c.h.b16 %v582
        %v2347 = vunpack.c.l.b16 %v583
        %v2348 = vunpack.c.h.b16 %v583
        %v2349 = vunpack.c.l.b16 %v584
        %v2350 = vunpack.c.h.b16 %v584
        %v2351 = vunpack.c.l.b16 %v585
        %v2352 = vunpack.c.h.b16 %v585
        %v2353 = vunpack.c.l.b16 %v586
        %v2354 = vunpack.c.h.b16 %v586
        %v2355 = vunpack.c.l.b16 %v587
        %v2356 = vunpack.c.h.b16 %v587
        %v2357 = vunpack.c.l.b16 %v588
        %v2358 = vunpack.c.h.b16 %v588
        %v2359 = vunpack.c.l.b16 %v589
        %v2360 = vunpack.c.h.b16 %v589
        %v2361 = vunpack.c.l.b16 %v590
        %v2362 = vunpack.c.h.b16 %v590
        %v2363 = vunpack.c.l.b16 %v591
        %v2364 = vunpack.c.h.b16 %v591
        %v2365 = vunpack.c.l.b16 %v592
        %v2366 = vunpack.c.h.b16 %v592
        %v2367 = vunpack.c.l.b16 %v593
        %v2368 = vunpack.c.h.b16 %v593
        %v2369 = vunpack.c.l.b16 %v594
        %v2370 = vunpack.c.h.b16 %v594
        %v2371 = vunpack.c.l.b16 %v595
        %v2372 = vunpack.c.h.b16 %v595
        %v2373 = vunpack.c.l.b16 %v596
        %v2374 = vunpack.c.h.b16 %v596
        %v2375 = vunpack.c.l.b16 %v597
        %v2376 = vunpack.c.h.b16 %v597
        %v2377 = vunpack.c.l.b16 %v598
        %v2378 = vunpack.c.h.b16 %v598
        %v2379 = vunpack.c.l.b16 %v599
        %v2380 = vunpack.c.h.b16 %v599
        %v2381 = vunpack.c.l.b16 %v600
        %v2382 = vunpack.c.h.b16 %v600
        %v2383 = vunpack.c.l.b16 %v601
        %v2384 = vunpack.c.h.b16 %v601
        %v2385 = vunpack.c.l.b16 %v602
        %v2386 = vunpack.c.h.b16 %v602
        %v2387 = vunpack.c.l.b16 %v603
        %v2388 = vunpack.c.h.b16 %v603
        %v2389 = vunpack.c.l.b16 %v604
        %v2390 = vunpack.c.h.b16 %v604
        %v2391 = vunpack.c.l.b16 %v605
        %v2392 = vunpack.c.h.b16 %v605
        %v2393 = vunpack.c.l.b16 %v606
        %v2394 = vunpack.c.h.b16 %v606
        %v2395 = vunpack.c.l.b16 %v607
        %v2396 = vunpack.c.h.b16 %v607
        %v2397 = vunpack.c.l.b16 %v608
        %v2398 = vunpack.c.h.b16 %v608
        %v2399 = vunpack.c.l.b16 %v609
        %v2400 = vunpack.c.h.b16 %v609
        %v2401 = vunpack.c.l.b16 %v610
        %v2402 = vunpack.c.h.b16 %v610
        %v2403 = vunpack.c.l.b16 %v611
        %v2404 = vunpack.c.h.b16 %v611
        %v2405 = vunpack.c.l.b16 %v612
        %v2406 = vunpack.c.h.b16 %v612
        %v2407 = vunpack.c.l.b16 %v613
        %v2408 = vunpack.c.h.b16 %v613
        %v2409 = vunpack.c.l.b16 %v614
        %v2410 = vunpack.c.h.b16 %v614
        %v2411 = vunpack.c.l.b16 %v615
        %v2412 = vunpack.c.h.b16 %v615
        %v2413 = vunpack.c.l.b16 %v616
        %v2414 = vunpack.c.h.b16 %v616
        %v2415 = vunpack.c.l.b16 %v617
        %v2416 = vunpack.c.h.b16 %v617
        %v2417 = vunpack.c.l.b16 %v618
        %v2418 = vunpack.c.h.b16 %v618
        %v2419 = vunpack.c.l.b16 %v619
        %v2420 = vunpack.c.h.b16 %v619
        %v2421 = vunpack.c.l.b16 %v620
        %v2422 = vunpack.c.h.b16 %v620
        %v2423 = vunpack.c.l.b16 %v621
        %v2424 = vunpack.c.h.b16 %v621
        %v2425 = vunpack.c.l.b16 %v622
        %v2426 = vunpack.c.h.b16 %v622
        %v2427 = vunpack.c.l.b16 %v623
        %v2428 = vunpack.c.h.b16 %v623
        %v2429 = vunpack.c.l.b16 %v624
        %v2430 = vunpack.c.h.b16 %v624
        %v2431 = vunpack.c.l.b16 %v625
        %v2432 = vunpack.c.h.b16 %v625
        %v2433 = vunpack.c.l.b16 %v626
        %v2434 = vunpack.c.h.b16 %v626
        %v2435 = vunpack.c.l.b16 %v627
        %v2436 = vunpack.c.h.b16 %v627
        %v2437 = vunpack.c.l.b16 %v628
        %v2438 = vunpack.c.h.b16 %v628
        %v2439 = vunpack.c.l.b16 %v629
        %v2440 = vunpack.c.h.b16 %v629
        %v2441 = vunpack.c.l.b16 %v630
        %v2442 = vunpack.c.h.b16 %v630
        %v2443 = vunpack.c.l.b16 %v631
        %v2444 = vunpack.c.h.b16 %v631
        %v2445 = vunpack.c.l.b16 %v632
        %v2446 = vunpack.c.h.b16 %v632
        %v2447 = vunpack.c.l.b16 %v633
        %v2448 = vunpack.c.h.b16 %v633
        %v2449 = vunpack.c.l.b16 %v634
        %v2450 = vunpack.c.h.b16 %v634
        %v2451 = vunpack.c.l.b16 %v635
        %v2452 = vunpack.c.h.b16 %v635
        %v2453 = vunpack.c.l.b16 %v636
        %v2454 = vunpack.c.h.b16 %v636
        %v2455 = vunpack.c.l.b16 %v637
        %v2456 = vunpack.c.h.b16 %v637
        %v2457 = vunpack.c.l.b16 %v638
        %v2458 = vunpack.c.h.b16 %v638
        %v2459 = vunpack.c.l.b16 %v639
        %v2460 = vunpack.c.h.b16 %v639
        %v2461 = vunpack.c.l.b16 %v640
        %v2462 = vunpack.c.h.b16 %v640
        %v2463 = vunpack.c.l.b16 %v641
        %v2464 = vunpack.c.h.b16 %v641
        %v2465 = vunpack.c.l.b16 %v642
        %v2466 = vunpack.c.h.b16 %v642
        %v2467 = vunpack.c.l.b16 %v643
        %v2468 = vunpack.c.h.b16 %v643
        %v2469 = vunpack.c.l.b16 %v644
        %v2470 = vunpack.c.h.b16 %v644
        %v2471 = vunpack.c.l.b16 %v645
        %v2472 = vunpack.c.h.b16 %v645
        %v2473 = vunpack.c.l.b16 %v646
        %v2474 = vunpack.c.h.b16 %v646
        %v2475 = vunpack.c.l.b16 %v647
        %v2476 = vunpack.c.h.b16 %v647
        %v2477 = vunpack.c.l.b16 %v648
        %v2478 = vunpack.c.h.b16 %v648
        %v2479 = vunpack.c.l.b16 %v649
        %v2480 = vunpack.c.h.b16 %v649
        %v2481 = vunpack.c.l.b16 %v650
        %v2482 = vunpack.c.h.b16 %v650
        %v2483 = vunpack.c.l.b16 %v651
        %v2484 = vunpack.c.h.b16 %v651
        %v2485 = vunpack.c.l.b16 %v652
        %v2486 = vunpack.c.h.b16 %v652
        %v2487 = vunpack.c.l.b16 %v653
        %v2488 = vunpack.c.h.b16 %v653
        %v2489 = vunpack.c.l.b16 %v654
        %v2490 = vunpack.c.h.b16 %v654
        %v2491 = vunpack.c.l.b16 %v655
        %v2492 = vunpack.c.h.b16 %v655
        %v2493 = vunpack.c.l.b16 %v656
        %v2494 = vunpack.c.h.b16 %v656
        %v2495 = vunpack.c.l.b16 %v657
        %v2496 = vunpack.c.h.b16 %v657
        %v2497 = vunpack.c.l.b16 %v658
        %v2498 = vunpack.c.h.b16 %v658
        %v2499 = vunpack.c.l.b16 %v659
        %v2500 = vunpack.c.h.b16 %v659
        %v2501 = vunpack.c.l.b16 %v660
        %v2502 = vunpack.c.h.b16 %v660
        %v2503 = vunpack.c.l.b16 %v661
        %v2504 = vunpack.c.h.b16 %v661
        %v2505 = vunpack.c.l.b16 %v662
        %v2506 = vunpack.c.h.b16 %v662
        %v2507 = vunpack.c.l.b16 %v663
        %v2508 = vunpack.c.h.b16 %v663
        %v2509 = vunpack.c.l.b16 %v664
        %v2510 = vunpack.c.h.b16 %v664
        %v2511 = vunpack.c.l.b16 %v665
        %v2512 = vunpack.c.h.b16 %v665
        %v2513 = vunpack.c.l.b16 %v666
        %v2514 = vunpack.c.h.b16 %v666
        %v2515 = vunpack.c.l.b16 %v667
        %v2516 = vunpack.c.h.b16 %v667
        %v2517 = vunpack.c.l.b16 %v668
        %v2518 = vunpack.c.h.b16 %v668
        %v2519 = vunpack.c.l.b16 %v669
        %v2520 = vunpack.c.h.b16 %v669
        %v2521 = vunpack.c.l.b16 %v670
        %v2522 = vunpack.c.h.b16 %v670
        %v2523 = vunpack.c.l.b16 %v671
        %v2524 = vunpack.c.h.b16 %v671
        %v2525 = vunpack.c.l.b16 %v672
        %v2526 = vunpack.c.h.b16 %v672
        %v2527 = vunpack.c.l.b16 %v673
        %v2528 = vunpack.c.h.b16 %v673
        %v2529 = vunpack.c.l.b16 %v674
        %v2530 = vunpack.c.h.b16 %v674
        %v2531 = vunpack.c.l.b16 %v675
        %v2532 = vunpack.c.h.b16 %v675
        %v2533 = vunpack.c.l.b16 %v676
        %v2534 = vunpack.c.h.b16 %v676
        %v2535 = vunpack.c.l.b16 %v677
        %v2536 = vunpack.c.h.b16 %v677
        %v2537 = vunpack.c.l.b16 %v678
        %v2538 = vunpack.c.h.b16 %v678
        %v2539 = vunpack.c.l.b16 %v679
        %v2540 = vunpack.c.h.b16 %v679
        %v2541 = vunpack.c.l.b16 %v680
        %v2542 = vunpack.c.h.b16 %v680
        %v2543 = vunpack.c.l.b16 %v681
        %v2544 = vunpack.c.h.b16 %v681
        %v2545 = vunpack.c.l.b16 %v682
        %v2546 = vunpack.c.h.b16 %v682
        %v2547 = vunpack.c.l.b16 %v683
        %v2548 = vunpack.c.h.b16 %v683
        %v2549 = vunpack.c.l.b16 %v684
        %v2550 = vunpack.c.h.b16 %v684
        %v2551 = vunpack.c.l.b16 %v685
        %v2552 = vunpack.c.h.b16 %v685
        %v2553 = vunpack.c.l.b16 %v686
        %v2554 = vunpack.c.h.b16 %v686
        %v2555 = vunpack.c.l.b16 %v687
        %v2556 = vunpack.c.h.b16 %v687
        %v2557 = vunpack.c.l.b16 %v688
        %v2558 = vunpack.c.h.b16 %v688
        %v2559 = vunpack.c.l.b16 %v689
        %v2560 = vunpack.c.h.b16 %v689
        %v2561 = vunpack.c.l.b16 %v690
        %v2562 = vunpack.c.h.b16 %v690
        %v2563 = vunpack.c.l.b16 %v691
        %v2564 = vunpack.c.h.b16 %v691
        %v2565 = vunpack.c.l.b16 %v692
        %v2566 = vunpack.c.h.b16 %v692
        %v2567 = vunpack.c.l.b16 %v693
        %v2568 = vunpack.c.h.b16 %v693
        %v2569 = vunpack.c.l.b16 %v694
        %v2570 = vunpack.c.h.b16 %v694
        %v2571 = vunpack.c.l.b16 %v695
        %v2572 = vunpack.c.h.b16 %v695
        %v2573 = vunpack.c.l.b16 %v696
        %v2574 = vunpack.c.h.b16 %v696
        %v2575 = vunpack.c.l.b16 %v697
        %v2576 = vunpack.c.h.b16 %v697
        %v2577 = vunpack.c.l.b16 %v698
        %v2578 = vunpack.c.h.b16 %v698
        %v2579 = vunpack.c.l.b16 %v699
        %v2580 = vunpack.c.h.b16 %v699
        %v2581 = vunpack.c.l.b16 %v700
        %v2582 = vunpack.c.h.b16 %v700
        %v2583 = vunpack.c.l.b16 %v701
        %v2584 = vunpack.c.h.b16 %v701
        %v2585 = vunpack.c.l.b16 %v702
        %v2586 = vunpack.c.h.b16 %v702
        %v2587 = vunpack.c.l.b16 %v703
        %v2588 = vunpack.c.h.b16 %v703
        %v2589 = vunpack.c.l.b16 %v704
        %v2590 = vunpack.c.h.b16 %v704
        %v2591 = vunpack.c.l.b16 %v705
        %v2592 = vunpack.c.h.b16 %v705
        %v2593 = vunpack.c.l.b16 %v706
        %v2594 = vunpack.c.h.b16 %v706
        %v2595 = vunpack.c.l.b16 %v707
        %v2596 = vunpack.c.h.b16 %v707
        %v2597 = vunpack.c.l.b16 %v708
        %v2598 = vunpack.c.h.b16 %v708
        %v2599 = vunpack.c.l.b16 %v709
        %v2600 = vunpack.c.h.b16 %v709
        %v2601 = vunpack.c.l.b16 %v710
        %v2602 = vunpack.c.h.b16 %v710
        %v2603 = vunpack.c.l.b16 %v711
        %v2604 = vunpack.c.h.b16 %v711
        %v2605 = vunpack.c.l.b16 %v712
        %v2606 = vunpack.c.h.b16 %v712
        %v2607 = vunpack.c.l.b16 %v713
        %v2608 = vunpack.c.h.b16 %v713
        %v2609 = vunpack.c.l.b16 %v714
        %v2610 = vunpack.c.h.b16 %v714
        %v2611 = vunpack.c.l.b16 %v715
        %v2612 = vunpack.c.h.b16 %v715
        %v2613 = vunpack.c.l.b16 %v716
        %v2614 = vunpack.c.h.b16 %v716
        %v2615 = vunpack.c.l.b16 %v717
        %v2616 = vunpack.c.h.b16 %v717
        %v2617 = vunpack.c.l.b16 %v718
        %v2618 = vunpack.c.h.b16 %v718
        %v2619 = vunpack.c.l.b16 %v719
        %v2620 = vunpack.c.h.b16 %v719
        %v2621 = vunpack.c.l.b16 %v720
        %v2622 = vunpack.c.h.b16 %v720
        %v2623 = vunpack.c.l.b16 %v721
        %v2624 = vunpack.c.h.b16 %v721
        %v2625 = vunpack.c.l.b16 %v722
        %v2626 = vunpack.c.h.b16 %v722
        %v2627 = vunpack.c.l.b16 %v723
        %v2628 = vunpack.c.h.b16 %v723
        %v2629 = vunpack.c.l.b16 %v724
        %v2630 = vunpack.c.h.b16 %v724
        %v2631 = vunpack.c.l.b16 %v725
        %v2632 = vunpack.c.h.b16 %v725
        %v2633 = vunpack.c.l.b16 %v726
        %v2634 = vunpack.c.h.b16 %v726
        %v2635 = vunpack.c.l.b16 %v727
        %v2636 = vunpack.c.h.b16 %v727
        %v2637 = vunpack.c.l.b16 %v728
        %v2638 = vunpack.c.h.b16 %v728
        %v2639 = vunpack.c.l.b16 %v729
        %v2640 = vunpack.c.h.b16 %v729
        %v2641 = vunpack.c.l.b16 %v730
        %v2642 = vunpack.c.h.b16 %v730
        %v2643 = vunpack.c.l.b16 %v731
        %v2644 = vunpack.c.h.b16 %v731
        %v2645 = vunpack.c.l.b16 %v732
        %v2646 = vunpack.c.h.b16 %v732
        %v2647 = vunpack.c.l.b16 %v733
        %v2648 = vunpack.c.h.b16 %v733
        %v2649 = vunpack.c.l.b16 %v734
        %v2650 = vunpack.c.h.b16 %v734
        %v2651 = vunpack.c.l.b16 %v735
        %v2652 = vunpack.c.h.b16 %v735
        %v2653 = vunpack.c.l.b16 %v736
        %v2654 = vunpack.c.h.b16 %v736
        %v2655 = vunpack.c.l.b16 %v737
        %v2656 = vunpack.c.h.b16 %v737
        %v2657 = vunpack.c.l.b16 %v738
        %v2658 = vunpack.c.h.b16 %v738
        %v2659 = vunpack.c.l.b16 %v739
        %v2660 = vunpack.c.h.b16 %v739
        %v2661 = vunpack.c.l.b16 %v740
        %v2662 = vunpack.c.h.b16 %v740
        %v2663 = vunpack.c.l.b16 %v741
        %v2664 = vunpack.c.h.b16 %v741
        %v2665 = vunpack.c.l.b16 %v742
        %v2666 = vunpack.c.h.b16 %v742
        %v2667 = vunpack.c.l.b16 %v743
        %v2668 = vunpack.c.h.b16 %v743
        %v2669 = vunpack.c.l.b16 %v744
        %v2670 = vunpack.c.h.b16 %v744
        %v2671 = vunpack.c.l.b16 %v745
        %v2672 = vunpack.c.h.b16 %v745
        %v2673 = vunpack.c.l.b16 %v746
        %v2674 = vunpack.c.h.b16 %v746
        %v2675 = vunpack.c.l.b16 %v747
        %v2676 = vunpack.c.h.b16 %v747
        %v2677 = vunpack.c.l.b16 %v748
        %v2678 = vunpack.c.h.b16 %v748
        %v2679 = vunpack.c.l.b16 %v749
        %v2680 = vunpack.c.h.b16 %v749
        %v2681 = vunpack.c.l.b16 %v750
        %v2682 = vunpack.c.h.b16 %v750
        %v2683 = vunpack.c.l.b16 %v751
        %v2684 = vunpack.c.h.b16 %v751
        %v2685 = vunpack.c.l.b16 %v752
        %v2686 = vunpack.c.h.b16 %v752
        %v2687 = vunpack.c.l.b16 %v753
        %v2688 = vunpack.c.h.b16 %v753
        %v2689 = vunpack.c.l.b16 %v754
        %v2690 = vunpack.c.h.b16 %v754
        %v2691 = vunpack.c.l.b16 %v755
        %v2692 = vunpack.c.h.b16 %v755
        %v2693 = vunpack.c.l.b16 %v756
        %v2694 = vunpack.c.h.b16 %v756
        %v2695 = vunpack.c.l.b16 %v757
        %v2696 = vunpack.c.h.b16 %v757
        %v2697 = vunpack.c.l.b16 %v758
        %v2698 = vunpack.c.h.b16 %v758
        %v2699 = vunpack.c.l.b16 %v759
        %v2700 = vunpack.c.h.b16 %v759
        %v2701 = vunpack.c.l.b16 %v760
        %v2702 = vunpack.c.h.b16 %v760
        %v2703 = vunpack.c.l.b16 %v761
        %v2704 = vunpack.c.h.b16 %v761
        %v2705 = vunpack.c.l.b16 %v762
        %v2706 = vunpack.c.h.b16 %v762
        %v2707 = vunpack.c.l.b16 %v763
        %v2708 = vunpack.c.h.b16 %v763
        %v2709 = vunpack.c.l.b16 %v764
        %v2710 = vunpack.c.h.b16 %v764
        %v2711 = vunpack.c.l.b16 %v765
        %v2712 = vunpack.c.h.b16 %v765
        %v2713 = vunpack.c.l.b16 %v766
        %v2714 = vunpack.c.h.b16 %v766
        %v2715 = vunpack.c.l.b16 %v767
        %v2716 = vunpack.c.h.b16 %v767
        %v2717 = vunpack.c.l.b16 %v768
        %v2718 = vunpack.c.h.b16 %v768
        %v2719 = vunpack.c.l.b16 %v769
        %v2720 = vunpack.c.h.b16 %v769
        %v2721 = vunpack.c.l.b16 %v770
        %v2722 = vunpack.c.h.b16 %v770
        %v2723 = vunpack.c.l.b16 %v771
        %v2724 = vunpack.c.h.b16 %v771
        %v2725 = vunpack.c.l.b16 %v772
        %v2726 = vunpack.c.h.b16 %v772
        %v2727 = vunpack.c.l.b16 %v773
        %v2728 = vunpack.c.h.b16 %v773
        %v2729 = vunpack.c.l.b16 %v774
        %v2730 = vunpack.c.h.b16 %v774
        %v2731 = vunpack.c.l.b16 %v775
        %v2732 = vunpack.c.h.b16 %v775
        %v2733 = vunpack.c.l.b16 %v776
        %v2734 = vunpack.c.h.b16 %v776
        %v2735 = vunpack.c.l.b16 %v777
        %v2736 = vunpack.c.h.b16 %v777
        %v2737 = vunpack.c.l.b16 %v778
        %v2738 = vunpack.c.h.b16 %v778
        %v2739 = vunpack.c.l.b16 %v779
        %v2740 = vunpack.c.h.b16 %v779
        %v2741 = vunpack.c.l.b16 %v780
        %v2742 = vunpack.c.h.b16 %v780
        %v2743 = vunpack.c.l.b16 %v781
        %v2744 = vunpack.c.h.b16 %v781
        %v2745 = vunpack.c.l.b16 %v782
        %v2746 = vunpack.c.h.b16 %v782
        %v2747 = vunpack.c.l.b16 %v783
        %v2748 = vunpack.c.h.b16 %v783
        %v2749 = vunpack.c.l.b16 %v784
        %v2750 = vunpack.c.h.b16 %v784
        %v2751 = vunpack.c.l.b16 %v785
        %v2752 = vunpack.c.h.b16 %v785
        %v2753 = vunpack.c.l.b16 %v786
        %v2754 = vunpack.c.h.b16 %v786
        %v2755 = vunpack.c.l.b16 %v787
        %v2756 = vunpack.c.h.b16 %v787
        %v2757 = vunpack.c.l.b16 %v788
        %v2758 = vunpack.c.h.b16 %v788
        %v2759 = vunpack.c.l.b16 %v789
        %v2760 = vunpack.c.h.b16 %v789
        %v2761 = vunpack.c.l.b16 %v790
        %v2762 = vunpack.c.h.b16 %v790
        %v2763 = vunpack.c.l.b16 %v791
        %v2764 = vunpack.c.h.b16 %v791
        %v2765 = vunpack.c.l.b16 %v792
        %v2766 = vunpack.c.h.b16 %v792
        %v2767 = vunpack.c.l.b16 %v793
        %v2768 = vunpack.c.h.b16 %v793
        %v2769 = vunpack.c.l.b16 %v794
        %v2770 = vunpack.c.h.b16 %v794
        %v2771 = vunpack.c.l.b16 %v795
        %v2772 = vunpack.c.h.b16 %v795
        %v2773 = vunpack.c.l.b16 %v796
        %v2774 = vunpack.c.h.b16 %v796
        %v2775 = vunpack.c.l.b16 %v797
        %v2776 = vunpack.c.h.b16 %v797
        %v2777 = vunpack.c.l.b16 %v798
        %v2778 = vunpack.c.h.b16 %v798
        %v2779 = vunpack.c.l.b16 %v799
        %v2780 = vunpack.c.h.b16 %v799
        %v2781 = vunpack.c.l.b16 %v800
        %v2782 = vunpack.c.h.b16 %v800
        %v2783 = vunpack.c.l.b16 %v801
        %v2784 = vunpack.c.h.b16 %v801
        %v2785 = vunpack.c.l.b16 %v802
        %v2786 = vunpack.c.h.b16 %v802
        %v2787 = vunpack.c.l.b16 %v803
        %v2788 = vunpack.c.h.b16 %v803
        %v2789 = vunpack.c.l.b16 %v804
        %v2790 = vunpack.c.h.b16 %v804
        %v2791 = vunpack.c.l.b16 %v805
        %v2792 = vunpack.c.h.b16 %v805
        %v2793 = vunpack.c.l.b16 %v806
        %v2794 = vunpack.c.h.b16 %v806
        %v2795 = vunpack.c.l.b16 %v807
        %v2796 = vunpack.c.h.b16 %v807
        %v2797 = vunpack.c.l.b16 %v808
        %v2798 = vunpack.c.h.b16 %v808
        %v2799 = vunpack.c.l.b16 %v809
        %v2800 = vunpack.c.h.b16 %v809
        %v2801 = vunpack.c.l.b16 %v810
        %v2802 = vunpack.c.h.b16 %v810
        %v2803 = vunpack.c.l.b16 %v811
        %v2804 = vunpack.c.h.b16 %v811
        %v2805 = vunpack.c.l.b16 %v812
        %v2806 = vunpack.c.h.b16 %v812
        %v2807 = vunpack.c.l.b16 %v813
        %v2808 = vunpack.c.h.b16 %v813
        %v2809 = vunpack.c.l.b16 %v814
        %v2810 = vunpack.c.h.b16 %v814
        %v2811 = vunpack.c.l.b16 %v815
        %v2812 = vunpack.c.h.b16 %v815
        %v2813 = vunpack.c.l.b16 %v816
        %v2814 = vunpack.c.h.b16 %v816
        %v2815 = vunpack.c.l.b16 %v817
        %v2816 = vunpack.c.h.b16 %v817
        %v2817 = vunpack.c.l.b16 %v818
        %v2818 = vunpack.c.h.b16 %v818
        %v2819 = vunpack.c.l.b16 %v819
        %v2820 = vunpack.c.h.b16 %v819
        %v2821 = vunpack.c.l.b16 %v820
        %v2822 = vunpack.c.h.b16 %v820
        %v2823 = vunpack.c.l.b16 %v821
        %v2824 = vunpack.c.h.b16 %v821
        %v2825 = vunpack.c.l.b16 %v822
        %v2826 = vunpack.c.h.b16 %v822
        %v2827 = vunpack.c.l.b16 %v823
        %v2828 = vunpack.c.h.b16 %v823
        %v2829 = vunpack.c.l.b16 %v824
        %v2830 = vunpack.c.h.b16 %v824
        %v2831 = vunpack.c.l.b16 %v825
        %v2832 = vunpack.c.h.b16 %v825
        %v2833 = vunpack.c.l.b16 %v826
        %v2834 = vunpack.c.h.b16 %v826
        %v2835 = vunpack.c.l.b16 %v827
        %v2836 = vunpack.c.h.b16 %v827
        %v2837 = vunpack.c.l.b16 %v828
        %v2838 = vunpack.c.h.b16 %v828
        %v2839 = vunpack.c.l.b16 %v829
        %v2840 = vunpack.c.h.b16 %v829
        %v2841 = vunpack.c.l.b16 %v830
        %v2842 = vunpack.c.h.b16 %v830
        %v2843 = vunpack.c.l.b16 %v831
        %v2844 = vunpack.c.h.b16 %v831
        %v2845 = vunpack.c.l.b16 %v832
        %v2846 = vunpack.c.h.b16 %v832
        %v2847 = vunpack.c.l.b16 %v833
        %v2848 = vunpack.c.h.b16 %v833
        %v2849 = vunpack.c.l.b16 %v834
        %v2850 = vunpack.c.h.b16 %v834
        %v2851 = vunpack.c.l.b16 %v835
        %v2852 = vunpack.c.h.b16 %v835
        %v2853 = vunpack.c.l.b16 %v836
        %v2854 = vunpack.c.h.b16 %v836
        %v2855 = vunpack.c.l.b16 %v837
        %v2856 = vunpack.c.h.b16 %v837
        %v2857 = vunpack.c.l.b16 %v838
        %v2858 = vunpack.c.h.b16 %v838
        %v2859 = vunpack.c.l.b16 %v839
        %v2860 = vunpack.c.h.b16 %v839
        %v2861 = vunpack.c.l.b16 %v840
        %v2862 = vunpack.c.h.b16 %v840
        %v2863 = vunpack.c.l.b16 %v841
        %v2864 = vunpack.c.h.b16 %v841
        %v2865 = vunpack.c.l.b16 %v842
        %v2866 = vunpack.c.h.b16 %v842
        %v2867 = vunpack.c.l.b16 %v843
        %v2868 = vunpack.c.h.b16 %v843
        %v2869 = vunpack.c.l.b16 %v844
        %v2870 = vunpack.c.h.b16 %v844
        %v2871 = vunpack.c.l.b16 %v845
        %v2872 = vunpack.c.h.b16 %v845
        %v2873 = vunpack.c.l.b16 %v846
        %v2874 = vunpack.c.h.b16 %v846
        %v2875 = vunpack.c.l.b16 %v847
        %v2876 = vunpack.c.h.b16 %v847
        %v2877 = vunpack.c.l.b16 %v848
        %v2878 = vunpack.c.h.b16 %v848
        %v2879 = vunpack.c.l.b16 %v849
        %v2880 = vunpack.c.h.b16 %v849
        %v2881 = vunpack.c.l.b16 %v850
        %v2882 = vunpack.c.h.b16 %v850
        %v2883 = vunpack.c.l.b16 %v851
        %v2884 = vunpack.c.h.b16 %v851
        %v2885 = vunpack.c.l.b16 %v852
        %v2886 = vunpack.c.h.b16 %v852
        %v2887 = vunpack.c.l.b16 %v853
        %v2888 = vunpack.c.h.b16 %v853
        %v2889 = vunpack.c.l.b16 %v854
        %v2890 = vunpack.c.h.b16 %v854
        %v2891 = vunpack.c.l.b16 %v855
        %v2892 = vunpack.c.h.b16 %v855
        %v2893 = vunpack.c.l.b16 %v856
        %v2894 = vunpack.c.h.b16 %v856
        %v2895 = vunpack.c.l.b16 %v857
        %v2896 = vunpack.c.h.b16 %v857
        %v2897 = vunpack.c.l.b16 %v858
        %v2898 = vunpack.c.h.b16 %v858
        %v2899 = vunpack.c.l.b16 %v859
        %v2900 = vunpack.c.h.b16 %v859
        %v2901 = vunpack.c.l.b16 %v860
        %v2902 = vunpack.c.h.b16 %v860
        %v2903 = vunpack.c.l.b16 %v861
        %v2904 = vunpack.c.h.b16 %v861
        %v2905 = vunpack.c.l.b16 %v862
        %v2906 = vunpack.c.h.b16 %v862
        %v2907 = vunpack.c.l.b16 %v863
        %v2908 = vunpack.c.h.b16 %v863
        %v2909 = vunpack.c.l.b16 %v864
        %v2910 = vunpack.c.h.b16 %v864
        %v2911 = vunpack.c.l.b16 %v865
        %v2912 = vunpack.c.h.b16 %v865
        %v2913 = vunpack.c.l.b16 %v866
        %v2914 = vunpack.c.h.b16 %v866
        %v2915 = vunpack.c.l.b16 %v867
        %v2916 = vunpack.c.h.b16 %v867
        %v2917 = vunpack.c.l.b16 %v868
        %v2918 = vunpack.c.h.b16 %v868
        %v2919 = vunpack.c.l.b16 %v869
        %v2920 = vunpack.c.h.b16 %v869
        %v2921 = vunpack.c.l.b16 %v870
        %v2922 = vunpack.c.h.b16 %v870
        %v2923 = vunpack.c.l.b16 %v871
        %v2924 = vunpack.c.h.b16 %v871
        %v2925 = vunpack.c.l.b16 %v872
        %v2926 = vunpack.c.h.b16 %v872
        %v2927 = vunpack.c.l.b16 %v873
        %v2928 = vunpack.c.h.b16 %v873
        %v2929 = vunpack.c.l.b16 %v874
        %v2930 = vunpack.c.h.b16 %v874
        %v2931 = vunpack.c.l.b16 %v875
        %v2932 = vunpack.c.h.b16 %v875
        %v2933 = vunpack.c.l.b16 %v876
        %v2934 = vunpack.c.h.b16 %v876
        %v2935 = vunpack.c.l.b16 %v877
        %v2936 = vunpack.c.h.b16 %v877
        %v2937 = vunpack.c.l.b16 %v878
        %v2938 = vunpack.c.h.b16 %v878
        %v2939 = vunpack.c.l.b16 %v879
        %v2940 = vunpack.c.h.b16 %v879
        %v2941 = vunpack.c.l.b16 %v880
        %v2942 = vunpack.c.h.b16 %v880
        %v2943 = vunpack.c.l.b16 %v881
        %v2944 = vunpack.c.h.b16 %v881
        %v2945 = vunpack.c.l.b16 %v882
        %v2946 = vunpack.c.h.b16 %v882
        %v2947 = vunpack.c.l.b16 %v883
        %v2948 = vunpack.c.h.b16 %v883
        %v2949 = vunpack.c.l.b16 %v884
        %v2950 = vunpack.c.h.b16 %v884
        %v2951 = vunpack.c.l.b16 %v885
        %v2952 = vunpack.c.h.b16 %v885
        %v2953 = vunpack.c.l.b16 %v886
        %v2954 = vunpack.c.h.b16 %v886
        %v2955 = vunpack.c.l.b16 %v887
        %v2956 = vunpack.c.h.b16 %v887
        %v2957 = vunpack.c.l.b16 %v888
        %v2958 = vunpack.c.h.b16 %v888
        %v2959 = vunpack.c.l.b16 %v889
        %v2960 = vunpack.c.h.b16 %v889
        %v2961 = vunpack.c.l.b16 %v890
        %v2962 = vunpack.c.h.b16 %v890
        %v2963 = vunpack.c.l.b16 %v891
        %v2964 = vunpack.c.h.b16 %v891
        %v2965 = vunpack.c.l.b16 %v892
        %v2966 = vunpack.c.h.b16 %v892
        %v2967 = vunpack.c.l.b16 %v893
        %v2968 = vunpack.c.h.b16 %v893
        %v2969 = vunpack.c.l.b16 %v894
        %v2970 = vunpack.c.h.b16 %v894
        %v2971 = vunpack.c.l.b16 %v895
        %v2972 = vunpack.c.h.b16 %v895
        %v2973 = vunpack.c.l.b16 %v896
        %v2974 = vunpack.c.h.b16 %v896
        %v2975 = vunpack.c.l.b16 %v897
        %v2976 = vunpack.c.h.b16 %v897
        %v2977 = vunpack.c.l.b16 %v898
        %v2978 = vunpack.c.h.b16 %v898
        %v2979 = vunpack.c.l.b16 %v899
        %v2980 = vunpack.c.h.b16 %v899
        %v2981 = vunpack.c.l.b16 %v900
        %v2982 = vunpack.c.h.b16 %v900
        %v2983 = vunpack.c.l.b16 %v901
        %v2984 = vunpack.c.h.b16 %v901
        %v2985 = vunpack.c.l.b16 %v902
        %v2986 = vunpack.c.h.b16 %v902
        %v2987 = vunpack.c.l.b16 %v903
        %v2988 = vunpack.c.h.b16 %v903
        %v2989 = vunpack.c.l.b16 %v904
        %v2990 = vunpack.c.h.b16 %v904
        %v2991 = vunpack.c.l.b16 %v905
        %v2992 = vunpack.c.h.b16 %v905
        %v2993 = vunpack.c.l.b16 %v906
        %v2994 = vunpack.c.h.b16 %v906
        %v2995 = vunpack.c.l.b16 %v907
        %v2996 = vunpack.c.h.b16 %v907
        %v2997 = vunpack.c.l.b16 %v908
        %v2998 = vunpack.c.h.b16 %v908
        %v2999 = vunpack.c.l.b16 %v909
        %v3000 = vunpack.c.h.b16 %v909
        %v3001 = vunpack.c.l.b16 %v910
        %v3002 = vunpack.c.h.b16 %v910
        %v3003 = vunpack.c.l.b16 %v911
        %v3004 = vunpack.c.h.b16 %v911
        %v3005 = vunpack.c.l.b16 %v912
        %v3006 = vunpack.c.h.b16 %v912
        %v3007 = vunpack.c.l.b16 %v913
        %v3008 = vunpack.c.h.b16 %v913
        %v3009 = vunpack.c.l.b16 %v914
        %v3010 = vunpack.c.h.b16 %v914
        %v3011 = vunpack.c.l.b16 %v915
        %v3012 = vunpack.c.h.b16 %v915
        %v3013 = vunpack.c.l.b16 %v916
        %v3014 = vunpack.c.h.b16 %v916
        %v3015 = vunpack.c.l.b16 %v917
        %v3016 = vunpack.c.h.b16 %v917
        %v3017 = vunpack.c.l.b16 %v918
        %v3018 = vunpack.c.h.b16 %v918
        %v3019 = vunpack.c.l.b16 %v919
        %v3020 = vunpack.c.h.b16 %v919
        %v3021 = vunpack.c.l.b16 %v920
        %v3022 = vunpack.c.h.b16 %v920
        %v3023 = vunpack.c.l.b16 %v921
        %v3024 = vunpack.c.h.b16 %v921
        %v3025 = vunpack.c.l.b16 %v922
        %v3026 = vunpack.c.h.b16 %v922
        %v3027 = vunpack.c.l.b16 %v923
        %v3028 = vunpack.c.h.b16 %v923
        %v3029 = vunpack.c.l.b16 %v924
        %v3030 = vunpack.c.h.b16 %v924
        %v3031 = vunpack.c.l.b16 %v925
        %v3032 = vunpack.c.h.b16 %v925
        %v3033 = vunpack.c.l.b16 %v926
        %v3034 = vunpack.c.h.b16 %v926
        %v3035 = vunpack.c.l.b16 %v927
        %v3036 = vunpack.c.h.b16 %v927
        %v3037 = vunpack.c.l.b16 %v928
        %v3038 = vunpack.c.h.b16 %v928
        %v3039 = vunpack.c.l.b16 %v929
        %v3040 = vunpack.c.h.b16 %v929
        %v3041 = vunpack.c.l.b16 %v930
        %v3042 = vunpack.c.h.b16 %v930
        %v3043 = vunpack.c.l.b16 %v931
        %v3044 = vunpack.c.h.b16 %v931
        %v3045 = vunpack.c.l.b16 %v932
        %v3046 = vunpack.c.h.b16 %v932
        %v3047 = vunpack.c.l.b16 %v933
        %v3048 = vunpack.c.h.b16 %v933
        %v3049 = vunpack.c.l.b16 %v934
        %v3050 = vunpack.c.h.b16 %v934
        %v3051 = vunpack.c.l.b16 %v935
        %v3052 = vunpack.c.h.b16 %v935
        %v3053 = vunpack.c.l.b16 %v936
        %v3054 = vunpack.c.h.b16 %v936
        %v3055 = vunpack.c.l.b16 %v937
        %v3056 = vunpack.c.h.b16 %v937
        %v3057 = vunpack.c.l.b16 %v938
        %v3058 = vunpack.c.h.b16 %v938
        %v3059 = vunpack.c.l.b16 %v939
        %v3060 = vunpack.c.h.b16 %v939
        %v3061 = vunpack.c.l.b16 %v940
        %v3062 = vunpack.c.h.b16 %v940
        %v3063 = vunpack.c.l.b16 %v941
        %v3064 = vunpack.c.h.b16 %v941
        %v3065 = vunpack.c.l.b16 %v942
        %v3066 = vunpack.c.h.b16 %v942
        %v3067 = vunpack.c.l.b16 %v943
        %v3068 = vunpack.c.h.b16 %v943
        %v3069 = vunpack.c.l.b16 %v944
        %v3070 = vunpack.c.h.b16 %v944
        %v3071 = vunpack.c.l.b16 %v945
        %v3072 = vunpack.c.h.b16 %v945
        %v3073 = vunpack.c.l.b16 %v946
        %v3074 = vunpack.c.h.b16 %v946
        %v3075 = vunpack.c.l.b16 %v947
        %v3076 = vunpack.c.h.b16 %v947
        %v3077 = vunpack.c.l.b16 %v948
        %v3078 = vunpack.c.h.b16 %v948
        %v3079 = vunpack.c.l.b16 %v949
        %v3080 = vunpack.c.h.b16 %v949
        %v3081 = vunpack.c.l.b16 %v950
        %v3082 = vunpack.c.h.b16 %v950
        %v3083 = vunpack.c.l.b16 %v951
        %v3084 = vunpack.c.h.b16 %v951
        %v3085 = vunpack.c.l.b16 %v952
        %v3086 = vunpack.c.h.b16 %v952
        %v3087 = vunpack.c.l.b16 %v953
        %v3088 = vunpack.c.h.b16 %v953
        %v3089 = vunpack.c.l.b16 %v954
        %v3090 = vunpack.c.h.b16 %v954
        %v3091 = vunpack.c.l.b16 %v955
        %v3092 = vunpack.c.h.b16 %v955
        %v3093 = vunpack.c.l.b16 %v956
        %v3094 = vunpack.c.h.b16 %v956
        %v3095 = vunpack.c.l.b16 %v957
        %v3096 = vunpack.c.h.b16 %v957
        %v3097 = vunpack.c.l.b16 %v958
        %v3098 = vunpack.c.h.b16 %v958
        %v3099 = vunpack.c.l.b16 %v959
        %v3100 = vunpack.c.h.b16 %v959
        %v3101 = vunpack.c.l.b16 %v960
        %v3102 = vunpack.c.h.b16 %v960
        %v3103 = vunpack.c.l.b16 %v961
        %v3104 = vunpack.c.h.b16 %v961
        %v3105 = vunpack.c.l.b16 %v962
        %v3106 = vunpack.c.h.b16 %v962
        %v3107 = vunpack.c.l.b16 %v963
        %v3108 = vunpack.c.h.b16 %v963
        %v3109 = vunpack.c.l.b16 %v964
        %v3110 = vunpack.c.h.b16 %v964
        %v3111 = vunpack.c.l.b16 %v965
        %v3112 = vunpack.c.h.b16 %v965
        %v3113 = vunpack.c.l.b16 %v966
        %v3114 = vunpack.c.h.b16 %v966
        %v3115 = vunpack.c.l.b16 %v967
        %v3116 = vunpack.c.h.b16 %v967
        %v3117 = vunpack.c.l.b16 %v968
        %v3118 = vunpack.c.h.b16 %v968
        %v3119 = vunpack.c.l.b16 %v969
        %v3120 = vunpack.c.h.b16 %v969
        %v3121 = vunpack.c.l.b16 %v970
        %v3122 = vunpack.c.h.b16 %v970
        %v3123 = vunpack.c.l.b16 %v971
        %v3124 = vunpack.c.h.b16 %v971
        %v3125 = vunpack.c.l.b16 %v972
        %v3126 = vunpack.c.h.b16 %v972
        %v3127 = vunpack.c.l.b16 %v973
        %v3128 = vunpack.c.h.b16 %v973
        %v3129 = vunpack.c.l.b16 %v974
        %v3130 = vunpack.c.h.b16 %v974
        %v3131 = vunpack.c.l.b16 %v975
        %v3132 = vunpack.c.h.b16 %v975
        %v3133 = vunpack.c.l.b16 %v976
        %v3134 = vunpack.c.h.b16 %v976
        %v3135 = vunpack.c.l.b16 %v977
        %v3136 = vunpack.c.h.b16 %v977
        %v3137 = vunpack.c.l.b16 %v978
        %v3138 = vunpack.c.h.b16 %v978
        %v3139 = vunpack.c.l.b16 %v979
        %v3140 = vunpack.c.h.b16 %v979
        %v3141 = vunpack.c.l.b16 %v980
        %v3142 = vunpack.c.h.b16 %v980
        %v3143 = vunpack.c.l.b16 %v981
        %v3144 = vunpack.c.h.b16 %v981
        %v3145 = vunpack.c.l.b16 %v982
        %v3146 = vunpack.c.h.b16 %v982
        %v3147 = vunpack.c.l.b16 %v983
        %v3148 = vunpack.c.h.b16 %v983
        %v3149 = vunpack.c.l.b16 %v984
        %v3150 = vunpack.c.h.b16 %v984
        %v3151 = vunpack.c.l.b16 %v985
        %v3152 = vunpack.c.h.b16 %v985
        %v3153 = vunpack.c.l.b16 %v986
        %v3154 = vunpack.c.h.b16 %v986
        %v3155 = vunpack.c.l.b16 %v987
        %v3156 = vunpack.c.h.b16 %v987
        %v3157 = vunpack.c.l.b16 %v988
        %v3158 = vunpack.c.h.b16 %v988
        %v3159 = vunpack.c.l.b16 %v989
        %v3160 = vunpack.c.h.b16 %v989
        %v3161 = vunpack.c.l.b16 %v990
        %v3162 = vunpack.c.h.b16 %v990
        %v3163 = vunpack.c.l.b16 %v991
        %v3164 = vunpack.c.h.b16 %v991
        %v3165 = vunpack.c.l.b16 %v992
        %v3166 = vunpack.c.h.b16 %v992
        %v3167 = vunpack.c.l.b16 %v993
        %v3168 = vunpack.c.h.b16 %v993
        %v3169 = vunpack.c.l.b16 %v994
        %v3170 = vunpack.c.h.b16 %v994
        %v3171 = vunpack.c.l.b16 %v995
        %v3172 = vunpack.c.h.b16 %v995
        %v3173 = vunpack.c.l.b16 %v996
        %v3174 = vunpack.c.h.b16 %v996
        %v3175 = vunpack.c.l.b16 %v997
        %v3176 = vunpack.c.h.b16 %v997
        %v3177 = vunpack.c.l.b16 %v998
        %v3178 = vunpack.c.h.b16 %v998
        %v3179 = vunpack.c.l.b16 %v999
        %v3180 = vunpack.c.h.b16 %v999
        %v3181 = vunpack.c.l.b16 %v1000
        %v3182 = vunpack.c.h.b16 %v1000
        %v3183 = vunpack.c.l.b16 %v1001
        %v3184 = vunpack.c.h.b16 %v1001
        %v3185 = vunpack.c.l.b16 %v1002
        %v3186 = vunpack.c.h.b16 %v1002
        %v3187 = vunpack.c.l.b16 %v1003
        %v3188 = vunpack.c.h.b16 %v1003
        %v3189 = vunpack.c.l.b16 %v1004
        %v3190 = vunpack.c.h.b16 %v1004
        %v3191 = vunpack.c.l.b16 %v1005
        %v3192 = vunpack.c.h.b16 %v1005
        %v3193 = vunpack.c.l.b16 %v1006
        %v3194 = vunpack.c.h.b16 %v1006
        %v3195 = vunpack.c.l.b16 %v1007
        %v3196 = vunpack.c.h.b16 %v1007
        %v3197 = vunpack.c.l.b16 %v1008
        %v3198 = vunpack.c.h.b16 %v1008
        %v3199 = vunpack.c.l.b16 %v1009
        %v3200 = vunpack.c.h.b16 %v1009
        %v3201 = vunpack.c.l.b16 %v1010
        %v3202 = vunpack.c.h.b16 %v1010
        %v3203 = vunpack.c.l.b16 %v1011
        %v3204 = vunpack.c.h.b16 %v1011
        %v3205 = vunpack.c.l.b16 %v1012
        %v3206 = vunpack.c.h.b16 %v1012
        %v3207 = vunpack.c.l.b16 %v1013
        %v3208 = vunpack.c.h.b16 %v1013
        %v3209 = vunpack.c.l.b16 %v1014
        %v3210 = vunpack.c.h.b16 %v1014
        %v3211 = vunpack.c.l.b16 %v1015
        %v3212 = vunpack.c.h.b16 %v1015
        %v3213 = vunpack.c.l.b16 %v1016
        %v3214 = vunpack.c.h.b16 %v1016
        %v3215 = vunpack.c.l.b16 %v1017
        %v3216 = vunpack.c.h.b16 %v1017
        %v3217 = vunpack.c.l.b16 %v1018
        %v3218 = vunpack.c.h.b16 %v1018
        %v3219 = vunpack.c.l.b16 %v1019
        %v3220 = vunpack.c.h.b16 %v1019
        %v3221 = vunpack.c.l.b16 %v1020
        %v3222 = vunpack.c.h.b16 %v1020
        %v3223 = vunpack.c.l.b16 %v1021
        %v3224 = vunpack.c.h.b16 %v1021
        %v3225 = vunpack.c.l.b16 %v1022
        %v3226 = vunpack.c.h.b16 %v1022
        %v3227 = vunpack.c.l.b16 %v1023
        %v3228 = vunpack.c.h.b16 %v1023
        %v3229 = vunpack.c.l.b16 %v1024
        %v3230 = vunpack.c.h.b16 %v1024
        %v3231 = vunpack.c.l.b16 %v1025
        %v3232 = vunpack.c.h.b16 %v1025
        %v3233 = vpack.c.b16 %v1809, %v1801
        %v3234 = vpack.c.b16 %v1810, %v1802
        %v3235 = vpack.c.b16 %v1811, %v1803
        %v3236 = vpack.c.b16 %v1812, %v1804
        %v3237 = vpack.c.b16 %v1813, %v1805
        %v3238 = vpack.c.b16 %v1814, %v1806
        %v3239 = vpack.c.b16 %v1815, %v1807
        %v3240 = vpack.c.b16 %v1816, %v1808
        %v3241 = vpack.c.b16 %v1825, %v1817
        %v3242 = vpack.c.b16 %v1826, %v1818
        %v3243 = vpack.c.b16 %v1827, %v1819
        %v3244 = vpack.c.b16 %v1828, %v1820
        %v3245 = vpack.c.b16 %v1829, %v1821
        %v3246 = vpack.c.b16 %v1830, %v1822
        %v3247 = vpack.c.b16 %v1831, %v1823
        %v3248 = vpack.c.b16 %v1832, %v1824
        %v3249 = vpack.c.b16 %v1841, %v1833
        %v3250 = vpack.c.b16 %v1842, %v1834
        %v3251 = vpack.c.b16 %v1843, %v1835
        %v3252 = vpack.c.b16 %v1844, %v1836
        %v3253 = vpack.c.b16 %v1845, %v1837
        %v3254 = vpack.c.b16 %v1846, %v1838
        %v3255 = vpack.c.b16 %v1847, %v1839
        %v3256 = vpack.c.b16 %v1848, %v1840
        %v3257 = vpack.c.b16 %v1857, %v1849
        %v3258 = vpack.c.b16 %v1858, %v1850
        %v3259 = vpack.c.b16 %v1859, %v1851
        %v3260 = vpack.c.b16 %v1860, %v1852
        %v3261 = vpack.c.b16 %v1861, %v1853
        %v3262 = vpack.c.b16 %v1862, %v1854
        %v3263 = vpack.c.b16 %v1863, %v1855
        %v3264 = vpack.c.b16 %v1864, %v1856
        %v3265 = vpack.c.b16 %v1873, %v1865
        %v3266 = vpack.c.b16 %v1874, %v1866
        %v3267 = vpack.c.b16 %v1875, %v1867
        %v3268 = vpack.c.b16 %v1876, %v1868
        %v3269 = vpack.c.b16 %v1877, %v1869
        %v3270 = vpack.c.b16 %v1878, %v1870
        %v3271 = vpack.c.b16 %v1879, %v1871
        %v3272 = vpack.c.b16 %v1880, %v1872
        %v3273 = vpack.c.b16 %v1889, %v1881
        %v3274 = vpack.c.b16 %v1890, %v1882
        %v3275 = vpack.c.b16 %v1891, %v1883
        %v3276 = vpack.c.b16 %v1892, %v1884
        %v3277 = vpack.c.b16 %v1893, %v1885
        %v3278 = vpack.c.b16 %v1894, %v1886
        %v3279 = vpack.c.b16 %v1895, %v1887
        %v3280 = vpack.c.b16 %v1896, %v1888
        %v3281 = vpack.c.b16 %v1905, %v1897
        %v3282 = vpack.c.b16 %v1906, %v1898
        %v3283 = vpack.c.b16 %v1907, %v1899
        %v3284 = vpack.c.b16 %v1908, %v1900
        %v3285 = vpack.c.b16 %v1909, %v1901
        %v3286 = vpack.c.b16 %v1910, %v1902
        %v3287 = vpack.c.b16 %v1911, %v1903
        %v3288 = vpack.c.b16 %v1912, %v1904
        %v3289 = vpack.c.b16 %v1921, %v1913
        %v3290 = vpack.c.b16 %v1922, %v1914
        %v3291 = vpack.c.b16 %v1923, %v1915
        %v3292 = vpack.c.b16 %v1924, %v1916
        %v3293 = vpack.c.b16 %v1925, %v1917
        %v3294 = vpack.c.b16 %v1926, %v1918
        %v3295 = vpack.c.b16 %v1927, %v1919
        %v3296 = vpack.c.b16 %v1928, %v1920
        %v3297 = vpack.c.b16 %v1937, %v1929
        %v3298 = vpack.c.b16 %v1938, %v1930
        %v3299 = vpack.c.b16 %v1939, %v1931
        %v3300 = vpack.c.b16 %v1940, %v1932
        %v3301 = vpack.c.b16 %v1941, %v1933
        %v3302 = vpack.c.b16 %v1942, %v1934
        %v3303 = vpack.c.b16 %v1943, %v1935
        %v3304 = vpack.c.b16 %v1944, %v1936
        %v3305 = vpack.c.b16 %v1953, %v1945
        %v3306 = vpack.c.b16 %v1954, %v1946
        %v3307 = vpack.c.b16 %v1955, %v1947
        %v3308 = vpack.c.b16 %v1956, %v1948
        %v3309 = vpack.c.b16 %v1957, %v1949
        %v3310 = vpack.c.b16 %v1958, %v1950
        %v3311 = vpack.c.b16 %v1959, %v1951
        %v3312 = vpack.c.b16 %v1960, %v1952
        %v3313 = vpack.c.b16 %v1969, %v1961
        %v3314 = vpack.c.b16 %v1970, %v1962
        %v3315 = vpack.c.b16 %v1971, %v1963
        %v3316 = vpack.c.b16 %v1972, %v1964
        %v3317 = vpack.c.b16 %v1973, %v1965
        %v3318 = vpack.c.b16 %v1974, %v1966
        %v3319 = vpack.c.b16 %v1975, %v1967
        %v3320 = vpack.c.b16 %v1976, %v1968
        %v3321 = vpack.c.b16 %v1985, %v1977
        %v3322 = vpack.c.b16 %v1986, %v1978
        %v3323 = vpack.c.b16 %v1987, %v1979
        %v3324 = vpack.c.b16 %v1988, %v1980
        %v3325 = vpack.c.b16 %v1989, %v1981
        %v3326 = vpack.c.b16 %v1990, %v1982
        %v3327 = vpack.c.b16 %v1991, %v1983
        %v3328 = vpack.c.b16 %v1992, %v1984
        %v3329 = vpack.c.b16 %v2001, %v1993
        %v3330 = vpack.c.b16 %v2002, %v1994
        %v3331 = vpack.c.b16 %v2003, %v1995
        %v3332 = vpack.c.b16 %v2004, %v1996
        %v3333 = vpack.c.b16 %v2005, %v1997
        %v3334 = vpack.c.b16 %v2006, %v1998
        %v3335 = vpack.c.b16 %v2007, %v1999
        %v3336 = vpack.c.b16 %v2008, %v2000
        %v3337 = vpack.c.b16 %v2017, %v2009
        %v3338 = vpack.c.b16 %v2018, %v2010
        %v3339 = vpack.c.b16 %v2019, %v2011
        %v3340 = vpack.c.b16 %v2020, %v2012
        %v3341 = vpack.c.b16 %v2021, %v2013
        %v3342 = vpack.c.b16 %v2022, %v2014
        %v3343 = vpack.c.b16 %v2023, %v2015
        %v3344 = vpack.c.b16 %v2024, %v2016
        %v3345 = vpack.c.b16 %v2033, %v2025
        %v3346 = vpack.c.b16 %v2034, %v2026
        %v3347 = vpack.c.b16 %v2035, %v2027
        %v3348 = vpack.c.b16 %v2036, %v2028
        %v3349 = vpack.c.b16 %v2037, %v2029
        %v3350 = vpack.c.b16 %v2038, %v2030
        %v3351 = vpack.c.b16 %v2039, %v2031
        %v3352 = vpack.c.b16 %v2040, %v2032
        %v3353 = vpack.c.b16 %v2049, %v2041
        %v3354 = vpack.c.b16 %v2050, %v2042
        %v3355 = vpack.c.b16 %v2051, %v2043
        %v3356 = vpack.c.b16 %v2052, %v2044
        %v3357 = vpack.c.b16 %v2053, %v2045
        %v3358 = vpack.c.b16 %v2054, %v2046
        %v3359 = vpack.c.b16 %v2055, %v2047
        %v3360 = vpack.c.b16 %v2056, %v2048
        %v3361 = vpack.c.b16 %v2065, %v2057
        %v3362 = vpack.c.b16 %v2066, %v2058
        %v3363 = vpack.c.b16 %v2067, %v2059
        %v3364 = vpack.c.b16 %v2068, %v2060
        %v3365 = vpack.c.b16 %v2069, %v2061
        %v3366 = vpack.c.b16 %v2070, %v2062
        %v3367 = vpack.c.b16 %v2071, %v2063
        %v3368 = vpack.c.b16 %v2072, %v2064
        %v3369 = vpack.c.b16 %v2081, %v2073
        %v3370 = vpack.c.b16 %v2082, %v2074
        %v3371 = vpack.c.b16 %v2083, %v2075
        %v3372 = vpack.c.b16 %v2084, %v2076
        %v3373 = vpack.c.b16 %v2085, %v2077
        %v3374 = vpack.c.b16 %v2086, %v2078
        %v3375 = vpack.c.b16 %v2087, %v2079
        %v3376 = vpack.c.b16 %v2088, %v2080
        %v3377 = vpack.c.b16 %v2097, %v2089
        %v3378 = vpack.c.b16 %v2098, %v2090
        %v3379 = vpack.c.b16 %v2099, %v2091
        %v3380 = vpack.c.b16 %v2100, %v2092
        %v3381 = vpack.c.b16 %v2101, %v2093
        %v3382 = vpack.c.b16 %v2102, %v2094
        %v3383 = vpack.c.b16 %v2103, %v2095
        %v3384 = vpack.c.b16 %v2104, %v2096
        %v3385 = vpack.c.b16 %v2113, %v2105
        %v3386 = vpack.c.b16 %v2114, %v2106
        %v3387 = vpack.c.b16 %v2115, %v2107
        %v3388 = vpack.c.b16 %v2116, %v2108
        %v3389 = vpack.c.b16 %v2117, %v2109
        %v3390 = vpack.c.b16 %v2118, %v2110
        %v3391 = vpack.c.b16 %v2119, %v2111
        %v3392 = vpack.c.b16 %v2120, %v2112
        %v3393 = vpack.c.b16 %v2129, %v2121
        %v3394 = vpack.c.b16 %v2130, %v2122
        %v3395 = vpack.c.b16 %v2131, %v2123
        %v3396 = vpack.c.b16 %v2132, %v2124
        %v3397 = vpack.c.b16 %v2133, %v2125
        %v3398 = vpack.c.b16 %v2134, %v2126
        %v3399 = vpack.c.b16 %v2135, %v2127
        %v3400 = vpack.c.b16 %v2136, %v2128
        %v3401 = vpack.c.b16 %v2145, %v2137
        %v3402 = vpack.c.b16 %v2146, %v2138
        %v3403 = vpack.c.b16 %v2147, %v2139
        %v3404 = vpack.c.b16 %v2148, %v2140
        %v3405 = vpack.c.b16 %v2149, %v2141
        %v3406 = vpack.c.b16 %v2150, %v2142
        %v3407 = vpack.c.b16 %v2151, %v2143
        %v3408 = vpack.c.b16 %v2152, %v2144
        %v3409 = vpack.c.b16 %v2161, %v2153
        %v3410 = vpack.c.b16 %v2162, %v2154
        %v3411 = vpack.c.b16 %v2163, %v2155
        %v3412 = vpack.c.b16 %v2164, %v2156
        %v3413 = vpack.c.b16 %v2165, %v2157
        %v3414 = vpack.c.b16 %v2166, %v2158
        %v3415 = vpack.c.b16 %v2167, %v2159
        %v3416 = vpack.c.b16 %v2168, %v2160
        %v3417 = vpack.c.b16 %v2177, %v2169
        %v3418 = vpack.c.b16 %v2178, %v2170
        %v3419 = vpack.c.b16 %v2179, %v2171
        %v3420 = vpack.c.b16 %v2180, %v2172
        %v3421 = vpack.c.b16 %v2181, %v2173
        %v3422 = vpack.c.b16 %v2182, %v2174
        %v3423 = vpack.c.b16 %v2183, %v2175
        %v3424 = vpack.c.b16 %v2184, %v2176
        %v3425 = vpack.c.b16 %v2193, %v2185
        %v3426 = vpack.c.b16 %v2194, %v2186
        %v3427 = vpack.c.b16 %v2195, %v2187
        %v3428 = vpack.c.b16 %v2196, %v2188
        %v3429 = vpack.c.b16 %v2197, %v2189
        %v3430 = vpack.c.b16 %v2198, %v2190
        %v3431 = vpack.c.b16 %v2199, %v2191
        %v3432 = vpack.c.b16 %v2200, %v2192
        %v3433 = vpack.c.b16 %v2209, %v2201
        %v3434 = vpack.c.b16 %v2210, %v2202
        %v3435 = vpack.c.b16 %v2211, %v2203
        %v3436 = vpack.c.b16 %v2212, %v2204
        %v3437 = vpack.c.b16 %v2213, %v2205
        %v3438 = vpack.c.b16 %v2214, %v2206
        %v3439 = vpack.c.b16 %v2215, %v2207
        %v3440 = vpack.c.b16 %v2216, %v2208
        %v3441 = vpack.c.b16 %v2225, %v2217
        %v3442 = vpack.c.b16 %v2226, %v2218
        %v3443 = vpack.c.b16 %v2227, %v2219
        %v3444 = vpack.c.b16 %v2228, %v2220
        %v3445 = vpack.c.b16 %v2229, %v2221
        %v3446 = vpack.c.b16 %v2230, %v2222
        %v3447 = vpack.c.b16 %v2231, %v2223
        %v3448 = vpack.c.b16 %v2232, %v2224
        %v3449 = vpack.c.b16 %v2241, %v2233
        %v3450 = vpack.c.b16 %v2242, %v2234
        %v3451 = vpack.c.b16 %v2243, %v2235
        %v3452 = vpack.c.b16 %v2244, %v2236
        %v3453 = vpack.c.b16 %v2245, %v2237
        %v3454 = vpack.c.b16 %v2246, %v2238
        %v3455 = vpack.c.b16 %v2247, %v2239
        %v3456 = vpack.c.b16 %v2248, %v2240
        %v3457 = vpack.c.b16 %v2257, %v2249
        %v3458 = vpack.c.b16 %v2258, %v2250
        %v3459 = vpack.c.b16 %v2259, %v2251
        %v3460 = vpack.c.b16 %v2260, %v2252
        %v3461 = vpack.c.b16 %v2261, %v2253
        %v3462 = vpack.c.b16 %v2262, %v2254
        %v3463 = vpack.c.b16 %v2263, %v2255
        %v3464 = vpack.c.b16 %v2264, %v2256
        %v3465 = vpack.c.b16 %v2273, %v2265
        %v3466 = vpack.c.b16 %v2274, %v2266
        %v3467 = vpack.c.b16 %v2275, %v2267
        %v3468 = vpack.c.b16 %v2276, %v2268
        %v3469 = vpack.c.b16 %v2277, %v2269
        %v3470 = vpack.c.b16 %v2278, %v2270
        %v3471 = vpack.c.b16 %v2279, %v2271
        %v3472 = vpack.c.b16 %v2280, %v2272
        %v3473 = vpack.c.b16 %v2289, %v2281
        %v3474 = vpack.c.b16 %v2290, %v2282
        %v3475 = vpack.c.b16 %v2291, %v2283
        %v3476 = vpack.c.b16 %v2292, %v2284
        %v3477 = vpack.c.b16 %v2293, %v2285
        %v3478 = vpack.c.b16 %v2294, %v2286
        %v3479 = vpack.c.b16 %v2295, %v2287
        %v3480 = vpack.c.b16 %v2296, %v2288
        %v3481 = vpack.c.b16 %v2305, %v2297
        %v3482 = vpack.c.b16 %v2306, %v2298
        %v3483 = vpack.c.b16 %v2307, %v2299
        %v3484 = vpack.c.b16 %v2308, %v2300
        %v3485 = vpack.c.b16 %v2309, %v2301
        %v3486 = vpack.c.b16 %v2310, %v2302
        %v3487 = vpack.c.b16 %v2311, %v2303
        %v3488 = vpack.c.b16 %v2312, %v2304
        %v3489 = vpack.c.b16 %v2321, %v2313
        %v3490 = vpack.c.b16 %v2322, %v2314
        %v3491 = vpack.c.b16 %v2323, %v2315
        %v3492 = vpack.c.b16 %v2324, %v2316
        %v3493 = vpack.c.b16 %v2325, %v2317
        %v3494 = vpack.c.b16 %v2326, %v2318
        %v3495 = vpack.c.b16 %v2327, %v2319
        %v3496 = vpack.c.b16 %v2328, %v2320
        %v3497 = vpack.c.b16 %v2337, %v2329
        %v3498 = vpack.c.b16 %v2338, %v2330
        %v3499 = vpack.c.b16 %v2339, %v2331
        %v3500 = vpack.c.b16 %v2340, %v2332
        %v3501 = vpack.c.b16 %v2341, %v2333
        %v3502 = vpack.c.b16 %v2342, %v2334
        %v3503 = vpack.c.b16 %v2343, %v2335
        %v3504 = vpack.c.b16 %v2344, %v2336
        %v3505 = vpack.c.b16 %v2353, %v2345
        %v3506 = vpack.c.b16 %v2354, %v2346
        %v3507 = vpack.c.b16 %v2355, %v2347
        %v3508 = vpack.c.b16 %v2356, %v2348
        %v3509 = vpack.c.b16 %v2357, %v2349
        %v3510 = vpack.c.b16 %v2358, %v2350
        %v3511 = vpack.c.b16 %v2359, %v2351
        %v3512 = vpack.c.b16 %v2360, %v2352
        %v3513 = vpack.c.b16 %v2369, %v2361
        %v3514 = vpack.c.b16 %v2370, %v2362
        %v3515 = vpack.c.b16 %v2371, %v2363
        %v3516 = vpack.c.b16 %v2372, %v2364
        %v3517 = vpack.c.b16 %v2373, %v2365
        %v3518 = vpack.c.b16 %v2374, %v2366
        %v3519 = vpack.c.b16 %v2375, %v2367
        %v3520 = vpack.c.b16 %v2376, %v2368
        %v3521 = vpack.c.b16 %v2385, %v2377
        %v3522 = vpack.c.b16 %v2386, %v2378
        %v3523 = vpack.c.b16 %v2387, %v2379
        %v3524 = vpack.c.b16 %v2388, %v2380
        %v3525 = vpack.c.b16 %v2389, %v2381
        %v3526 = vpack.c.b16 %v2390, %v2382
        %v3527 = vpack.c.b16 %v2391, %v2383
        %v3528 = vpack.c.b16 %v2392, %v2384
        %v3529 = vpack.c.b16 %v2401, %v2393
        %v3530 = vpack.c.b16 %v2402, %v2394
        %v3531 = vpack.c.b16 %v2403, %v2395
        %v3532 = vpack.c.b16 %v2404, %v2396
        %v3533 = vpack.c.b16 %v2405, %v2397
        %v3534 = vpack.c.b16 %v2406, %v2398
        %v3535 = vpack.c.b16 %v2407, %v2399
        %v3536 = vpack.c.b16 %v2408, %v2400
        %v3537 = vpack.c.b16 %v2417, %v2409
        %v3538 = vpack.c.b16 %v2418, %v2410
        %v3539 = vpack.c.b16 %v2419, %v2411
        %v3540 = vpack.c.b16 %v2420, %v2412
        %v3541 = vpack.c.b16 %v2421, %v2413
        %v3542 = vpack.c.b16 %v2422, %v2414
        %v3543 = vpack.c.b16 %v2423, %v2415
        %v3544 = vpack.c.b16 %v2424, %v2416
        %v3545 = vpack.c.b16 %v2433, %v2425
        %v3546 = vpack.c.b16 %v2434, %v2426
        %v3547 = vpack.c.b16 %v2435, %v2427
        %v3548 = vpack.c.b16 %v2436, %v2428
        %v3549 = vpack.c.b16 %v2437, %v2429
        %v3550 = vpack.c.b16 %v2438, %v2430
        %v3551 = vpack.c.b16 %v2439, %v2431
        %v3552 = vpack.c.b16 %v2440, %v2432
        %v3553 = vpack.c.b16 %v2449, %v2441
        %v3554 = vpack.c.b16 %v2450, %v2442
        %v3555 = vpack.c.b16 %v2451, %v2443
        %v3556 = vpack.c.b16 %v2452, %v2444
        %v3557 = vpack.c.b16 %v2453, %v2445
        %v3558 = vpack.c.b16 %v2454, %v2446
        %v3559 = vpack.c.b16 %v2455, %v2447
        %v3560 = vpack.c.b16 %v2456, %v2448
        %v3561 = vpack.c.b16 %v2465, %v2457
        %v3562 = vpack.c.b16 %v2466, %v2458
        %v3563 = vpack.c.b16 %v2467, %v2459
        %v3564 = vpack.c.b16 %v2468, %v2460
        %v3565 = vpack.c.b16 %v2469, %v2461
        %v3566 = vpack.c.b16 %v2470, %v2462
        %v3567 = vpack.c.b16 %v2471, %v2463
        %v3568 = vpack.c.b16 %v2472, %v2464
        %v3569 = vpack.c.b16 %v2481, %v2473
        %v3570 = vpack.c.b16 %v2482, %v2474
        %v3571 = vpack.c.b16 %v2483, %v2475
        %v3572 = vpack.c.b16 %v2484, %v2476
        %v3573 = vpack.c.b16 %v2485, %v2477
        %v3574 = vpack.c.b16 %v2486, %v2478
        %v3575 = vpack.c.b16 %v2487, %v2479
        %v3576 = vpack.c.b16 %v2488, %v2480
        %v3577 = vpack.c.b16 %v2497, %v2489
        %v3578 = vpack.c.b16 %v2498, %v2490
        %v3579 = vpack.c.b16 %v2499, %v2491
        %v3580 = vpack.c.b16 %v2500, %v2492
        %v3581 = vpack.c.b16 %v2501, %v2493
        %v3582 = vpack.c.b16 %v2502, %v2494
        %v3583 = vpack.c.b16 %v2503, %v2495
        %v3584 = vpack.c.b16 %v2504, %v2496
        %v3585 = vpack.c.b16 %v2513, %v2505
        %v3586 = vpack.c.b16 %v2514, %v2506
        %v3587 = vpack.c.b16 %v2515, %v2507
        %v3588 = vpack.c.b16 %v2516, %v2508
        %v3589 = vpack.c.b16 %v2517, %v2509
        %v3590 = vpack.c.b16 %v2518, %v2510
        %v3591 = vpack.c.b16 %v2519, %v2511
        %v3592 = vpack.c.b16 %v2520, %v2512
        %v3593 = vpack.c.b16 %v2529, %v2521
        %v3594 = vpack.c.b16 %v2530, %v2522
        %v3595 = vpack.c.b16 %v2531, %v2523
        %v3596 = vpack.c.b16 %v2532, %v2524
        %v3597 = vpack.c.b16 %v2533, %v2525
        %v3598 = vpack.c.b16 %v2534, %v2526
        %v3599 = vpack.c.b16 %v2535, %v2527
        %v3600 = vpack.c.b16 %v2536, %v2528
        %v3601 = vpack.c.b16 %v2545, %v2537
        %v3602 = vpack.c.b16 %v2546, %v2538
        %v3603 = vpack.c.b16 %v2547, %v2539
        %v3604 = vpack.c.b16 %v2548, %v2540
        %v3605 = vpack.c.b16 %v2549, %v2541
        %v3606 = vpack.c.b16 %v2550, %v2542
        %v3607 = vpack.c.b16 %v2551, %v2543
        %v3608 = vpack.c.b16 %v2552, %v2544
        %v3609 = vpack.c.b16 %v2561, %v2553
        %v3610 = vpack.c.b16 %v2562, %v2554
        %v3611 = vpack.c.b16 %v2563, %v2555
        %v3612 = vpack.c.b16 %v2564, %v2556
        %v3613 = vpack.c.b16 %v2565, %v2557
        %v3614 = vpack.c.b16 %v2566, %v2558
        %v3615 = vpack.c.b16 %v2567, %v2559
        %v3616 = vpack.c.b16 %v2568, %v2560
        %v3617 = vpack.c.b16 %v2577, %v2569
        %v3618 = vpack.c.b16 %v2578, %v2570
        %v3619 = vpack.c.b16 %v2579, %v2571
        %v3620 = vpack.c.b16 %v2580, %v2572
        %v3621 = vpack.c.b16 %v2581, %v2573
        %v3622 = vpack.c.b16 %v2582, %v2574
        %v3623 = vpack.c.b16 %v2583, %v2575
        %v3624 = vpack.c.b16 %v2584, %v2576
        %v3625 = vpack.c.b16 %v2593, %v2585
        %v3626 = vpack.c.b16 %v2594, %v2586
        %v3627 = vpack.c.b16 %v2595, %v2587
        %v3628 = vpack.c.b16 %v2596, %v2588
        %v3629 = vpack.c.b16 %v2597, %v2589
        %v3630 = vpack.c.b16 %v2598, %v2590
        %v3631 = vpack.c.b16 %v2599, %v2591
        %v3632 = vpack.c.b16 %v2600, %v2592
        %v3633 = vpack.c.b16 %v2609, %v2601
        %v3634 = vpack.c.b16 %v2610, %v2602
        %v3635 = vpack.c.b16 %v2611, %v2603
        %v3636 = vpack.c.b16 %v2612, %v2604
        %v3637 = vpack.c.b16 %v2613, %v2605
        %v3638 = vpack.c.b16 %v2614, %v2606
        %v3639 = vpack.c.b16 %v2615, %v2607
        %v3640 = vpack.c.b16 %v2616, %v2608
        %v3641 = vpack.c.b16 %v2625, %v2617
        %v3642 = vpack.c.b16 %v2626, %v2618
        %v3643 = vpack.c.b16 %v2627, %v2619
        %v3644 = vpack.c.b16 %v2628, %v2620
        %v3645 = vpack.c.b16 %v2629, %v2621
        %v3646 = vpack.c.b16 %v2630, %v2622
        %v3647 = vpack.c.b16 %v2631, %v2623
        %v3648 = vpack.c.b16 %v2632, %v2624
        %v3649 = vpack.c.b16 %v2641, %v2633
        %v3650 = vpack.c.b16 %v2642, %v2634
        %v3651 = vpack.c.b16 %v2643, %v2635
        %v3652 = vpack.c.b16 %v2644, %v2636
        %v3653 = vpack.c.b16 %v2645, %v2637
        %v3654 = vpack.c.b16 %v2646, %v2638
        %v3655 = vpack.c.b16 %v2647, %v2639
        %v3656 = vpack.c.b16 %v2648, %v2640
        %v3657 = vpack.c.b16 %v2657, %v2649
        %v3658 = vpack.c.b16 %v2658, %v2650
        %v3659 = vpack.c.b16 %v2659, %v2651
        %v3660 = vpack.c.b16 %v2660, %v2652
        %v3661 = vpack.c.b16 %v2661, %v2653
        %v3662 = vpack.c.b16 %v2662, %v2654
        %v3663 = vpack.c.b16 %v2663, %v2655
        %v3664 = vpack.c.b16 %v2664, %v2656
        %v3665 = vpack.c.b16 %v2673, %v2665
        %v3666 = vpack.c.b16 %v2674, %v2666
        %v3667 = vpack.c.b16 %v2675, %v2667
        %v3668 = vpack.c.b16 %v2676, %v2668
        %v3669 = vpack.c.b16 %v2677, %v2669
        %v3670 = vpack.c.b16 %v2678, %v2670
        %v3671 = vpack.c.b16 %v2679, %v2671
        %v3672 = vpack.c.b16 %v2680, %v2672
        %v3673 = vpack.c.b16 %v2689, %v2681
        %v3674 = vpack.c.b16 %v2690, %v2682
        %v3675 = vpack.c.b16 %v2691, %v2683
        %v3676 = vpack.c.b16 %v2692, %v2684
        %v3677 = vpack.c.b16 %v2693, %v2685
        %v3678 = vpack.c.b16 %v2694, %v2686
        %v3679 = vpack.c.b16 %v2695, %v2687
        %v3680 = vpack.c.b16 %v2696, %v2688
        %v3681 = vpack.c.b16 %v2705, %v2697
        %v3682 = vpack.c.b16 %v2706, %v2698
        %v3683 = vpack.c.b16 %v2707, %v2699
        %v3684 = vpack.c.b16 %v2708, %v2700
        %v3685 = vpack.c.b16 %v2709, %v2701
        %v3686 = vpack.c.b16 %v2710, %v2702
        %v3687 = vpack.c.b16 %v2711, %v2703
        %v3688 = vpack.c.b16 %v2712, %v2704
        %v3689 = vpack.c.b16 %v2721, %v2713
        %v3690 = vpack.c.b16 %v2722, %v2714
        %v3691 = vpack.c.b16 %v2723, %v2715
        %v3692 = vpack.c.b16 %v2724, %v2716
        %v3693 = vpack.c.b16 %v2725, %v2717
        %v3694 = vpack.c.b16 %v2726, %v2718
        %v3695 = vpack.c.b16 %v2727, %v2719
        %v3696 = vpack.c.b16 %v2728, %v2720
        %v3697 = vpack.c.b16 %v2737, %v2729
        %v3698 = vpack.c.b16 %v2738, %v2730
        %v3699 = vpack.c.b16 %v2739, %v2731
        %v3700 = vpack.c.b16 %v2740, %v2732
        %v3701 = vpack.c.b16 %v2741, %v2733
        %v3702 = vpack.c.b16 %v2742, %v2734
        %v3703 = vpack.c.b16 %v2743, %v2735
        %v3704 = vpack.c.b16 %v2744, %v2736
        %v3705 = vpack.c.b16 %v2753, %v2745
        %v3706 = vpack.c.b16 %v2754, %v2746
        %v3707 = vpack.c.b16 %v2755, %v2747
        %v3708 = vpack.c.b16 %v2756, %v2748
        %v3709 = vpack.c.b16 %v2757, %v2749
        %v3710 = vpack.c.b16 %v2758, %v2750
        %v3711 = vpack.c.b16 %v2759, %v2751
        %v3712 = vpack.c.b16 %v2760, %v2752
        %v3713 = vpack.c.b16 %v2769, %v2761
        %v3714 = vpack.c.b16 %v2770, %v2762
        %v3715 = vpack.c.b16 %v2771, %v2763
        %v3716 = vpack.c.b16 %v2772, %v2764
        %v3717 = vpack.c.b16 %v2773, %v2765
        %v3718 = vpack.c.b16 %v2774, %v2766
        %v3719 = vpack.c.b16 %v2775, %v2767
        %v3720 = vpack.c.b16 %v2776, %v2768
        %v3721 = vpack.c.b16 %v2785, %v2777
        %v3722 = vpack.c.b16 %v2786, %v2778
        %v3723 = vpack.c.b16 %v2787, %v2779
        %v3724 = vpack.c.b16 %v2788, %v2780
        %v3725 = vpack.c.b16 %v2789, %v2781
        %v3726 = vpack.c.b16 %v2790, %v2782
        %v3727 = vpack.c.b16 %v2791, %v2783
        %v3728 = vpack.c.b16 %v2792, %v2784
        %v3729 = vpack.c.b16 %v2801, %v2793
        %v3730 = vpack.c.b16 %v2802, %v2794
        %v3731 = vpack.c.b16 %v2803, %v2795
        %v3732 = vpack.c.b16 %v2804, %v2796
        %v3733 = vpack.c.b16 %v2805, %v2797
        %v3734 = vpack.c.b16 %v2806, %v2798
        %v3735 = vpack.c.b16 %v2807, %v2799
        %v3736 = vpack.c.b16 %v2808, %v2800
        %v3737 = vpack.c.b16 %v2817, %v2809
        %v3738 = vpack.c.b16 %v2818, %v2810
        %v3739 = vpack.c.b16 %v2819, %v2811
        %v3740 = vpack.c.b16 %v2820, %v2812
        %v3741 = vpack.c.b16 %v2821, %v2813
        %v3742 = vpack.c.b16 %v2822, %v2814
        %v3743 = vpack.c.b16 %v2823, %v2815
        %v3744 = vpack.c.b16 %v2824, %v2816
        %v3745 = vpack.c.b16 %v2833, %v2825
        %v3746 = vpack.c.b16 %v2834, %v2826
        %v3747 = vpack.c.b16 %v2835, %v2827
        %v3748 = vpack.c.b16 %v2836, %v2828
        %v3749 = vpack.c.b16 %v2837, %v2829
        %v3750 = vpack.c.b16 %v2838, %v2830
        %v3751 = vpack.c.b16 %v2839, %v2831
        %v3752 = vpack.c.b16 %v2840, %v2832
        %v3753 = vpack.c.b16 %v2849, %v2841
        %v3754 = vpack.c.b16 %v2850, %v2842
        %v3755 = vpack.c.b16 %v2851, %v2843
        %v3756 = vpack.c.b16 %v2852, %v2844
        %v3757 = vpack.c.b16 %v2853, %v2845
        %v3758 = vpack.c.b16 %v2854, %v2846
        %v3759 = vpack.c.b16 %v2855, %v2847
        %v3760 = vpack.c.b16 %v2856, %v2848
        %v3761 = vpack.c.b16 %v2865, %v2857
        %v3762 = vpack.c.b16 %v2866, %v2858
        %v3763 = vpack.c.b16 %v2867, %v2859
        %v3764 = vpack.c.b16 %v2868, %v2860
        %v3765 = vpack.c.b16 %v2869, %v2861
        %v3766 = vpack.c.b16 %v2870, %v2862
        %v3767 = vpack.c.b16 %v2871, %v2863
        %v3768 = vpack.c.b16 %v2872, %v2864
        %v3769 = vpack.c.b16 %v2881, %v2873
        %v3770 = vpack.c.b16 %v2882, %v2874
        %v3771 = vpack.c.b16 %v2883, %v2875
        %v3772 = vpack.c.b16 %v2884, %v2876
        %v3773 = vpack.c.b16 %v2885, %v2877
        %v3774 = vpack.c.b16 %v2886, %v2878
        %v3775 = vpack.c.b16 %v2887, %v2879
        %v3776 = vpack.c.b16 %v2888, %v2880
        %v3777 = vpack.c.b16 %v2897, %v2889
        %v3778 = vpack.c.b16 %v2898, %v2890
        %v3779 = vpack.c.b16 %v2899, %v2891
        %v3780 = vpack.c.b16 %v2900, %v2892
        %v3781 = vpack.c.b16 %v2901, %v2893
        %v3782 = vpack.c.b16 %v2902, %v2894
        %v3783 = vpack.c.b16 %v2903, %v2895
        %v3784 = vpack.c.b16 %v2904, %v2896
        %v3785 = vpack.c.b16 %v2913, %v2905
        %v3786 = vpack.c.b16 %v2914, %v2906
        %v3787 = vpack.c.b16 %v2915, %v2907
        %v3788 = vpack.c.b16 %v2916, %v2908
        %v3789 = vpack.c.b16 %v2917, %v2909
        %v3790 = vpack.c.b16 %v2918, %v2910
        %v3791 = vpack.c.b16 %v2919, %v2911
        %v3792 = vpack.c.b16 %v2920, %v2912
        %v3793 = vpack.c.b16 %v2929, %v2921
        %v3794 = vpack.c.b16 %v2930, %v2922
        %v3795 = vpack.c.b16 %v2931, %v2923
        %v3796 = vpack.c.b16 %v2932, %v2924
        %v3797 = vpack.c.b16 %v2933, %v2925
        %v3798 = vpack.c.b16 %v2934, %v2926
        %v3799 = vpack.c.b16 %v2935, %v2927
        %v3800 = vpack.c.b16 %v2936, %v2928
        %v3801 = vpack.c.b16 %v2945, %v2937
        %v3802 = vpack.c.b16 %v2946, %v2938
        %v3803 = vpack.c.b16 %v2947, %v2939
        %v3804 = vpack.c.b16 %v2948, %v2940
        %v3805 = vpack.c.b16 %v2949, %v2941
        %v3806 = vpack.c.b16 %v2950, %v2942
        %v3807 = vpack.c.b16 %v2951, %v2943
        %v3808 = vpack.c.b16 %v2952, %v2944
        %v3809 = vpack.c.b16 %v2961, %v2953
        %v3810 = vpack.c.b16 %v2962, %v2954
        %v3811 = vpack.c.b16 %v2963, %v2955
        %v3812 = vpack.c.b16 %v2964, %v2956
        %v3813 = vpack.c.b16 %v2965, %v2957
        %v3814 = vpack.c.b16 %v2966, %v2958
        %v3815 = vpack.c.b16 %v2967, %v2959
        %v3816 = vpack.c.b16 %v2968, %v2960
        %v3817 = vpack.c.b16 %v2977, %v2969
        %v3818 = vpack.c.b16 %v2978, %v2970
        %v3819 = vpack.c.b16 %v2979, %v2971
        %v3820 = vpack.c.b16 %v2980, %v2972
        %v3821 = vpack.c.b16 %v2981, %v2973
        %v3822 = vpack.c.b16 %v2982, %v2974
        %v3823 = vpack.c.b16 %v2983, %v2975
        %v3824 = vpack.c.b16 %v2984, %v2976
        %v3825 = vpack.c.b16 %v2993, %v2985
        %v3826 = vpack.c.b16 %v2994, %v2986
        %v3827 = vpack.c.b16 %v2995, %v2987
        %v3828 = vpack.c.b16 %v2996, %v2988
        %v3829 = vpack.c.b16 %v2997, %v2989
        %v3830 = vpack.c.b16 %v2998, %v2990
        %v3831 = vpack.c.b16 %v2999, %v2991
        %v3832 = vpack.c.b16 %v3000, %v2992
        %v3833 = vpack.c.b16 %v3009, %v3001
        %v3834 = vpack.c.b16 %v3010, %v3002
        %v3835 = vpack.c.b16 %v3011, %v3003
        %v3836 = vpack.c.b16 %v3012, %v3004
        %v3837 = vpack.c.b16 %v3013, %v3005
        %v3838 = vpack.c.b16 %v3014, %v3006
        %v3839 = vpack.c.b16 %v3015, %v3007
        %v3840 = vpack.c.b16 %v3016, %v3008
        %v3841 = vpack.c.b16 %v3025, %v3017
        %v3842 = vpack.c.b16 %v3026, %v3018
        %v3843 = vpack.c.b16 %v3027, %v3019
        %v3844 = vpack.c.b16 %v3028, %v3020
        %v3845 = vpack.c.b16 %v3029, %v3021
        %v3846 = vpack.c.b16 %v3030, %v3022
        %v3847 = vpack.c.b16 %v3031, %v3023
        %v3848 = vpack.c.b16 %v3032, %v3024
        %v3849 = vpack.c.b16 %v3041, %v3033
        %v3850 = vpack.c.b16 %v3042, %v3034
        %v3851 = vpack.c.b16 %v3043, %v3035
        %v3852 = vpack.c.b16 %v3044, %v3036
        %v3853 = vpack.c.b16 %v3045, %v3037
        %v3854 = vpack.c.b16 %v3046, %v3038
        %v3855 = vpack.c.b16 %v3047, %v3039
        %v3856 = vpack.c.b16 %v3048, %v3040
        %v3857 = vpack.c.b16 %v3057, %v3049
        %v3858 = vpack.c.b16 %v3058, %v3050
        %v3859 = vpack.c.b16 %v3059, %v3051
        %v3860 = vpack.c.b16 %v3060, %v3052
        %v3861 = vpack.c.b16 %v3061, %v3053
        %v3862 = vpack.c.b16 %v3062, %v3054
        %v3863 = vpack.c.b16 %v3063, %v3055
        %v3864 = vpack.c.b16 %v3064, %v3056
        %v3865 = vpack.c.b16 %v3073, %v3065
        %v3866 = vpack.c.b16 %v3074, %v3066
        %v3867 = vpack.c.b16 %v3075, %v3067
        %v3868 = vpack.c.b16 %v3076, %v3068
        %v3869 = vpack.c.b16 %v3077, %v3069
        %v3870 = vpack.c.b16 %v3078, %v3070
        %v3871 = vpack.c.b16 %v3079, %v3071
        %v3872 = vpack.c.b16 %v3080, %v3072
        %v3873 = vpack.c.b16 %v3089, %v3081
        %v3874 = vpack.c.b16 %v3090, %v3082
        %v3875 = vpack.c.b16 %v3091, %v3083
        %v3876 = vpack.c.b16 %v3092, %v3084
        %v3877 = vpack.c.b16 %v3093, %v3085
        %v3878 = vpack.c.b16 %v3094, %v3086
        %v3879 = vpack.c.b16 %v3095, %v3087
        %v3880 = vpack.c.b16 %v3096, %v3088
        %v3881 = vpack.c.b16 %v3105, %v3097
        %v3882 = vpack.c.b16 %v3106, %v3098
        %v3883 = vpack.c.b16 %v3107, %v3099
        %v3884 = vpack.c.b16 %v3108, %v3100
        %v3885 = vpack.c.b16 %v3109, %v3101
        %v3886 = vpack.c.b16 %v3110, %v3102
        %v3887 = vpack.c.b16 %v3111, %v3103
        %v3888 = vpack.c.b16 %v3112, %v3104
        %v3889 = vpack.c.b16 %v3121, %v3113
        %v3890 = vpack.c.b16 %v3122, %v3114
        %v3891 = vpack.c.b16 %v3123, %v3115
        %v3892 = vpack.c.b16 %v3124, %v3116
        %v3893 = vpack.c.b16 %v3125, %v3117
        %v3894 = vpack.c.b16 %v3126, %v3118
        %v3895 = vpack.c.b16 %v3127, %v3119
        %v3896 = vpack.c.b16 %v3128, %v3120
        %v3897 = vpack.c.b16 %v3137, %v3129
        %v3898 = vpack.c.b16 %v3138, %v3130
        %v3899 = vpack.c.b16 %v3139, %v3131
        %v3900 = vpack.c.b16 %v3140, %v3132
        %v3901 = vpack.c.b16 %v3141, %v3133
        %v3902 = vpack.c.b16 %v3142, %v3134
        %v3903 = vpack.c.b16 %v3143, %v3135
        %v3904 = vpack.c.b16 %v3144, %v3136
        %v3905 = vpack.c.b16 %v3153, %v3145
        %v3906 = vpack.c.b16 %v3154, %v3146
        %v3907 = vpack.c.b16 %v3155, %v3147
        %v3908 = vpack.c.b16 %v3156, %v3148
        %v3909 = vpack.c.b16 %v3157, %v3149
        %v3910 = vpack.c.b16 %v3158, %v3150
        %v3911 = vpack.c.b16 %v3159, %v3151
        %v3912 = vpack.c.b16 %v3160, %v3152
        %v3913 = vpack.c.b16 %v3169, %v3161
        %v3914 = vpack.c.b16 %v3170, %v3162
        %v3915 = vpack.c.b16 %v3171, %v3163
        %v3916 = vpack.c.b16 %v3172, %v3164
        %v3917 = vpack.c.b16 %v3173, %v3165
        %v3918 = vpack.c.b16 %v3174, %v3166
        %v3919 = vpack.c.b16 %v3175, %v3167
        %v3920 = vpack.c.b16 %v3176, %v3168
        %v3921 = vpack.c.b16 %v3185, %v3177
        %v3922 = vpack.c.b16 %v3186, %v3178
        %v3923 = vpack.c.b16 %v3187, %v3179
        %v3924 = vpack.c.b16 %v3188, %v3180
        %v3925 = vpack.c.b16 %v3189, %v3181
        %v3926 = vpack.c.b16 %v3190, %v3182
        %v3927 = vpack.c.b16 %v3191, %v3183
        %v3928 = vpack.c.b16 %v3192, %v3184
        %v3929 = vpack.c.b16 %v3201, %v3193
        %v3930 = vpack.c.b16 %v3202, %v3194
        %v3931 = vpack.c.b16 %v3203, %v3195
        %v3932 = vpack.c.b16 %v3204, %v3196
        %v3933 = vpack.c.b16 %v3205, %v3197
        %v3934 = vpack.c.b16 %v3206, %v3198
        %v3935 = vpack.c.b16 %v3207, %v3199
        %v3936 = vpack.c.b16 %v3208, %v3200
        %v3937 = vpack.c.b16 %v3217, %v3209
        %v3938 = vpack.c.b16 %v3218, %v3210
        %v3939 = vpack.c.b16 %v3219, %v3211
        %v3940 = vpack.c.b16 %v3220, %v3212
        %v3941 = vpack.c.b16 %v3221, %v3213
        %v3942 = vpack.c.b16 %v3222, %v3214
        %v3943 = vpack.c.b16 %v3223, %v3215
        %v3944 = vpack.c.b16 %v3224, %v3216
        %v3945 = vpack.c.b16 %v3225, %v3225
        %v3946 = vpack.c.b16 %v3226, %v3226
        %v3947 = vpack.c.b16 %v3227, %v3227
        %v3948 = vpack.c.b16 %v3228, %v3228
        %v3949 = vpack.c.b16 %v3229, %v3229
        %v3950 = vpack.c.b16 %v3230, %v3230
        %v3951 = vpack.c.b16 %v3231, %v3231
        %v3952 = vpack.c.b16 %v3232, %v3232
        %vm4665 = vcmask 179200
        %v4667 = vsel %vm4665, %v1073, 0
        %vm4669 = vcmask 1042432
        %v4671 = vsel %vm4669, %v3945, 0
        %v4674 = vsel %vm4669, %v3946, 0
        %v4677 = vsel %vm4669, %v3947, 0
        %v4680 = vsel %vm4669, %v3948, 0
        %v4683 = vsel %vm4669, %v3949, 0
        %v4686 = vsel %vm4669, %v3950, 0
        %v4689 = vsel %vm4669, %v3951, 0
        %v4692 = vsel %vm4669, %v3952, 0
        %4694 = vmatprep.subr.bf16.mxu0 %v3290
        %4695 = vmatpush1.bf16.msra.mxu0 %v3289
        %4696 = vmatprep.subr.bf16.mxu0 %v3282
        %4697 = vmatpush1.bf16.msra.mxu0 %v3281
        %4698 = vmatprep.subr.bf16.mxu0 %v3274
        %4699 = vmatpush1.bf16.msra.mxu0 %v3273
        %4700 = vmatprep.subr.bf16.mxu0 %v3266
        %4701 = vmatpush1.bf16.msra.mxu0 %v3265
        %4702 = vmatprep.subr.bf16.mxu0 %v3258
        %4703 = vmatpush1.bf16.msra.mxu0 %v3257
        %4704 = vmatprep.subr.bf16.mxu0 %v3250
        %4705 = vmatpush1.bf16.msra.mxu0 %v3249
        %4706 = vmatprep.subr.bf16.mxu0 %v3242
        %4707 = vmatpush1.bf16.msra.mxu0 %v3241
        %4708 = vmatprep.subr.bf16.mxu0 %v3234
        %4709 = vmatpush1.bf16.msra.mxu0 %v3233
        %4710 = vmatprep.subr.bf16.mxu0 %v3354
        %4711 = vmatpush2.bf16.msra.mxu0 %v3353
        %4712 = vmatprep.subr.bf16.mxu0 %v3346
        %4713 = vmatpush2.bf16.msra.mxu0 %v3345
        %4714 = vmatprep.subr.bf16.mxu0 %v3338
        %4715 = vmatpush2.bf16.msra.mxu0 %v3337
        %4716 = vmatprep.subr.bf16.mxu0 %v3330
        %4717 = vmatpush2.bf16.msra.mxu0 %v3329
        %4718 = vmatprep.subr.bf16.mxu0 %v3322
        %4719 = vmatpush2.bf16.msra.mxu0 %v3321
        %4720 = vmatprep.subr.bf16.mxu0 %v3314
        %4721 = vmatpush2.bf16.msra.mxu0 %v3313
        %4722 = vmatprep.subr.bf16.mxu0 %v3306
        %4723 = vmatpush2.bf16.msra.mxu0 %v3305
        %4724 = vmatprep.subr.bf16.mxu0 %v3298
        %4725 = vmatpush2.bf16.msra.mxu0 %v3297
        %4726 = vmatprep.mubr.bf16.mxu0 %v1063
        %4727 = vmatmul.mubr.bf16.gmra.mxu0 %v1062
        %v4728 = vpop.f32.mrf.mxu0
        %v4729 = vadd.f32 0.0, %v4728
        %v4730 = vpop.f32.mrf.mxu0
        %v4731 = vadd.f32 0.0, %v4730
        %v4732 = vpop.f32.mrf.mxu0
        %v4733 = vadd.f32 0.0, %v4732
        %v4734 = vpop.f32.mrf.mxu0
        %v4735 = vadd.f32 0.0, %v4734
        %4736 = vdwg.mxu0
        %4737 = vmatprep.subr.bf16.mxu0 %v3418
        %4738 = vmatpush1.bf16.msra.mxu0 %v3417
        %4739 = vmatprep.subr.bf16.mxu0 %v3410
        %4740 = vmatpush1.bf16.msra.mxu0 %v3409
        %4741 = vmatprep.subr.bf16.mxu0 %v3402
        %4742 = vmatpush1.bf16.msra.mxu0 %v3401
        %4743 = vmatprep.subr.bf16.mxu0 %v3394
        %4744 = vmatpush1.bf16.msra.mxu0 %v3393
        %4745 = vmatprep.subr.bf16.mxu0 %v3386
        %4746 = vmatpush1.bf16.msra.mxu0 %v3385
        %4747 = vmatprep.subr.bf16.mxu0 %v3378
        %4748 = vmatpush1.bf16.msra.mxu0 %v3377
        %4749 = vmatprep.subr.bf16.mxu0 %v3370
        %4750 = vmatpush1.bf16.msra.mxu0 %v3369
        %4751 = vmatprep.subr.bf16.mxu0 %v3362
        %4752 = vmatpush1.bf16.msra.mxu0 %v3361
        %4753 = vmatprep.subr.bf16.mxu0 %v3482
        %4754 = vmatpush2.bf16.msra.mxu0 %v3481
        %4755 = vmatprep.subr.bf16.mxu0 %v3474
        %4756 = vmatpush2.bf16.msra.mxu0 %v3473
        %4757 = vmatprep.subr.bf16.mxu0 %v3466
        %4758 = vmatpush2.bf16.msra.mxu0 %v3465
        %4759 = vmatprep.subr.bf16.mxu0 %v3458
        %4760 = vmatpush2.bf16.msra.mxu0 %v3457
        %4761 = vmatprep.subr.bf16.mxu0 %v3450
        %4762 = vmatpush2.bf16.msra.mxu0 %v3449
        %4763 = vmatprep.subr.bf16.mxu0 %v3442
        %4764 = vmatpush2.bf16.msra.mxu0 %v3441
        %4765 = vmatprep.subr.bf16.mxu0 %v3434
        %4766 = vmatpush2.bf16.msra.mxu0 %v3433
        %4767 = vmatprep.subr.bf16.mxu0 %v3426
        %4768 = vmatpush2.bf16.msra.mxu0 %v3425
        %4769 = vmatprep.mubr.bf16.mxu0 %v1065
        %4770 = vmatmul.mubr.bf16.gmra.mxu0 %v1064
        %v4771 = vpop.f32.mrf.mxu0
        %v4772 = vadd.f32 %v4729, %v4771
        %v4773 = vpop.f32.mrf.mxu0
        %v4774 = vadd.f32 %v4731, %v4773
        %v4775 = vpop.f32.mrf.mxu0
        %v4776 = vadd.f32 %v4733, %v4775
        %v4777 = vpop.f32.mrf.mxu0
        %v4778 = vadd.f32 %v4735, %v4777
        %4779 = vdwg.mxu0
        %4780 = vmatprep.subr.bf16.mxu0 %v3546
        %4781 = vmatpush1.bf16.msra.mxu0 %v3545
        %4782 = vmatprep.subr.bf16.mxu0 %v3538
        %4783 = vmatpush1.bf16.msra.mxu0 %v3537
        %4784 = vmatprep.subr.bf16.mxu0 %v3530
        %4785 = vmatpush1.bf16.msra.mxu0 %v3529
        %4786 = vmatprep.subr.bf16.mxu0 %v3522
        %4787 = vmatpush1.bf16.msra.mxu0 %v3521
        %4788 = vmatprep.subr.bf16.mxu0 %v3514
        %4789 = vmatpush1.bf16.msra.mxu0 %v3513
        %4790 = vmatprep.subr.bf16.mxu0 %v3506
        %4791 = vmatpush1.bf16.msra.mxu0 %v3505
        %4792 = vmatprep.subr.bf16.mxu0 %v3498
        %4793 = vmatpush1.bf16.msra.mxu0 %v3497
        %4794 = vmatprep.subr.bf16.mxu0 %v3490
        %4795 = vmatpush1.bf16.msra.mxu0 %v3489
        %4796 = vmatprep.subr.bf16.mxu0 %v3610
        %4797 = vmatpush2.bf16.msra.mxu0 %v3609
        %4798 = vmatprep.subr.bf16.mxu0 %v3602
        %4799 = vmatpush2.bf16.msra.mxu0 %v3601
        %4800 = vmatprep.subr.bf16.mxu0 %v3594
        %4801 = vmatpush2.bf16.msra.mxu0 %v3593
        %4802 = vmatprep.subr.bf16.mxu0 %v3586
        %4803 = vmatpush2.bf16.msra.mxu0 %v3585
        %4804 = vmatprep.subr.bf16.mxu0 %v3578
        %4805 = vmatpush2.bf16.msra.mxu0 %v3577
        %4806 = vmatprep.subr.bf16.mxu0 %v3570
        %4807 = vmatpush2.bf16.msra.mxu0 %v3569
        %4808 = vmatprep.subr.bf16.mxu0 %v3562
        %4809 = vmatpush2.bf16.msra.mxu0 %v3561
        %4810 = vmatprep.subr.bf16.mxu0 %v3554
        %4811 = vmatpush2.bf16.msra.mxu0 %v3553
        %4812 = vmatprep.mubr.bf16.mxu0 %v1067
        %4813 = vmatmul.mubr.bf16.gmra.mxu0 %v1066
        %v4814 = vpop.f32.mrf.mxu0
        %v4815 = vadd.f32 %v4772, %v4814
        %v4816 = vpop.f32.mrf.mxu0
        %v4817 = vadd.f32 %v4774, %v4816
        %v4818 = vpop.f32.mrf.mxu0
        %v4819 = vadd.f32 %v4776, %v4818
        %v4820 = vpop.f32.mrf.mxu0
        %v4821 = vadd.f32 %v4778, %v4820
        %4822 = vdwg.mxu0
        %4823 = vmatprep.subr.bf16.mxu0 %v3674
        %4824 = vmatpush1.bf16.msra.mxu0 %v3673
        %4825 = vmatprep.subr.bf16.mxu0 %v3666
        %4826 = vmatpush1.bf16.msra.mxu0 %v3665
        %4827 = vmatprep.subr.bf16.mxu0 %v3658
        %4828 = vmatpush1.bf16.msra.mxu0 %v3657
        %4829 = vmatprep.subr.bf16.mxu0 %v3650
        %4830 = vmatpush1.bf16.msra.mxu0 %v3649
        %4831 = vmatprep.subr.bf16.mxu0 %v3642
        %4832 = vmatpush1.bf16.msra.mxu0 %v3641
        %4833 = vmatprep.subr.bf16.mxu0 %v3634
        %4834 = vmatpush1.bf16.msra.mxu0 %v3633
        %4835 = vmatprep.subr.bf16.mxu0 %v3626
        %4836 = vmatpush1.bf16.msra.mxu0 %v3625
        %4837 = vmatprep.subr.bf16.mxu0 %v3618
        %4838 = vmatpush1.bf16.msra.mxu0 %v3617
        %4839 = vmatprep.subr.bf16.mxu0 %v3738
        %4840 = vmatpush2.bf16.msra.mxu0 %v3737
        %4841 = vmatprep.subr.bf16.mxu0 %v3730
        %4842 = vmatpush2.bf16.msra.mxu0 %v3729
        %4843 = vmatprep.subr.bf16.mxu0 %v3722
        %4844 = vmatpush2.bf16.msra.mxu0 %v3721
        %4845 = vmatprep.subr.bf16.mxu0 %v3714
        %4846 = vmatpush2.bf16.msra.mxu0 %v3713
        %4847 = vmatprep.subr.bf16.mxu0 %v3706
        %4848 = vmatpush2.bf16.msra.mxu0 %v3705
        %4849 = vmatprep.subr.bf16.mxu0 %v3698
        %4850 = vmatpush2.bf16.msra.mxu0 %v3697
        %4851 = vmatprep.subr.bf16.mxu0 %v3690
        %4852 = vmatpush2.bf16.msra.mxu0 %v3689
        %4853 = vmatprep.subr.bf16.mxu0 %v3682
        %4854 = vmatpush2.bf16.msra.mxu0 %v3681
        %4855 = vmatprep.mubr.bf16.mxu0 %v1069
        %4856 = vmatmul.mubr.bf16.gmra.mxu0 %v1068
        %v4857 = vpop.f32.mrf.mxu0
        %v4858 = vadd.f32 %v4815, %v4857
        %v4859 = vpop.f32.mrf.mxu0
        %v4860 = vadd.f32 %v4817, %v4859
        %v4861 = vpop.f32.mrf.mxu0
        %v4862 = vadd.f32 %v4819, %v4861
        %v4863 = vpop.f32.mrf.mxu0
        %v4864 = vadd.f32 %v4821, %v4863
        %4865 = vdwg.mxu0
        %4866 = vmatprep.subr.bf16.mxu0 %v3802
        %4867 = vmatpush1.bf16.msra.mxu0 %v3801
        %4868 = vmatprep.subr.bf16.mxu0 %v3794
        %4869 = vmatpush1.bf16.msra.mxu0 %v3793
        %4870 = vmatprep.subr.bf16.mxu0 %v3786
        %4871 = vmatpush1.bf16.msra.mxu0 %v3785
        %4872 = vmatprep.subr.bf16.mxu0 %v3778
        %4873 = vmatpush1.bf16.msra.mxu0 %v3777
        %4874 = vmatprep.subr.bf16.mxu0 %v3770
        %4875 = vmatpush1.bf16.msra.mxu0 %v3769
        %4876 = vmatprep.subr.bf16.mxu0 %v3762
        %4877 = vmatpush1.bf16.msra.mxu0 %v3761
        %4878 = vmatprep.subr.bf16.mxu0 %v3754
        %4879 = vmatpush1.bf16.msra.mxu0 %v3753
        %4880 = vmatprep.subr.bf16.mxu0 %v3746
        %4881 = vmatpush1.bf16.msra.mxu0 %v3745
        %4882 = vmatprep.subr.bf16.mxu0 %v3866
        %4883 = vmatpush2.bf16.msra.mxu0 %v3865
        %4884 = vmatprep.subr.bf16.mxu0 %v3858
        %4885 = vmatpush2.bf16.msra.mxu0 %v3857
        %4886 = vmatprep.subr.bf16.mxu0 %v3850
        %4887 = vmatpush2.bf16.msra.mxu0 %v3849
        %4888 = vmatprep.subr.bf16.mxu0 %v3842
        %4889 = vmatpush2.bf16.msra.mxu0 %v3841
        %4890 = vmatprep.subr.bf16.mxu0 %v3834
        %4891 = vmatpush2.bf16.msra.mxu0 %v3833
        %4892 = vmatprep.subr.bf16.mxu0 %v3826
        %4893 = vmatpush2.bf16.msra.mxu0 %v3825
        %4894 = vmatprep.subr.bf16.mxu0 %v3818
        %4895 = vmatpush2.bf16.msra.mxu0 %v3817
        %4896 = vmatprep.subr.bf16.mxu0 %v3810
        %4897 = vmatpush2.bf16.msra.mxu0 %v3809
        %4898 = vmatprep.mubr.bf16.mxu0 %v1071
        %4899 = vmatmul.mubr.bf16.gmra.mxu0 %v1070
        %v4900 = vpop.f32.mrf.mxu0
        %v4901 = vadd.f32 %v4858, %v4900
        %v4902 = vpop.f32.mrf.mxu0
        %v4903 = vadd.f32 %v4860, %v4902
        %v4904 = vpop.f32.mrf.mxu0
        %v4905 = vadd.f32 %v4862, %v4904
        %v4906 = vpop.f32.mrf.mxu0
        %v4907 = vadd.f32 %v4864, %v4906
        %4908 = vdwg.mxu0
        %4909 = vmatprep.subr.bf16.mxu0 %v3930
        %4910 = vmatpush1.bf16.msra.mxu0 %v3929
        %4911 = vmatprep.subr.bf16.mxu0 %v3922
        %4912 = vmatpush1.bf16.msra.mxu0 %v3921
        %4913 = vmatprep.subr.bf16.mxu0 %v3914
        %4914 = vmatpush1.bf16.msra.mxu0 %v3913
        %4915 = vmatprep.subr.bf16.mxu0 %v3906
        %4916 = vmatpush1.bf16.msra.mxu0 %v3905
        %4917 = vmatprep.subr.bf16.mxu0 %v3898
        %4918 = vmatpush1.bf16.msra.mxu0 %v3897
        %4919 = vmatprep.subr.bf16.mxu0 %v3890
        %4920 = vmatpush1.bf16.msra.mxu0 %v3889
        %4921 = vmatprep.subr.bf16.mxu0 %v3882
        %4922 = vmatpush1.bf16.msra.mxu0 %v3881
        %4923 = vmatprep.subr.bf16.mxu0 %v3874
        %4924 = vmatpush1.bf16.msra.mxu0 %v3873
        %4925 = vmatprep.subr.bf16.mxu0 0
        %4926 = vmatpush2.bf16.msra.mxu0 0
        %4927 = vmatprep.subr.bf16.mxu0 0
        %4928 = vmatpush2.bf16.msra.mxu0 0
        %4929 = vmatprep.subr.bf16.mxu0 0
        %4930 = vmatpush2.bf16.msra.mxu0 0
        %4931 = vmatprep.subr.bf16.mxu0 0
        %4932 = vmatpush2.bf16.msra.mxu0 0
        %4933 = vmatprep.subr.bf16.mxu0 0
        %4934 = vmatpush2.bf16.msra.mxu0 0
        %4935 = vmatprep.subr.bf16.mxu0 0
        %4936 = vmatpush2.bf16.msra.mxu0 0
        %4937 = vmatprep.subr.bf16.mxu0 %v4674
        %4938 = vmatpush2.bf16.msra.mxu0 %v4671
        %4939 = vmatprep.subr.bf16.mxu0 %v3938
        %4940 = vmatpush2.bf16.msra.mxu0 %v3937
        %4941 = vmatprep.mubr.bf16.mxu0 %v4667
        %4942 = vmatmul.mubr.bf16.gmra.mxu0 %v1072
        %v4943 = vpop.f32.mrf.mxu0
        %v4944 = vadd.f32 %v4901, %v4943
        %v4945 = vpop.f32.mrf.mxu0
        %v4946 = vadd.f32 %v4903, %v4945
        %v4947 = vpop.f32.mrf.mxu0
        %v4948 = vadd.f32 %v4905, %v4947
        %v4949 = vpop.f32.mrf.mxu0
        %v4950 = vadd.f32 %v4907, %v4949
        %4951 = vdwg.mxu0
        %4952 = vmatprep.subr.bf16.mxu0 %v3292
        %4953 = vmatpush1.bf16.msra.mxu0 %v3291
        %4954 = vmatprep.subr.bf16.mxu0 %v3284
        %4955 = vmatpush1.bf16.msra.mxu0 %v3283
        %4956 = vmatprep.subr.bf16.mxu0 %v3276
        %4957 = vmatpush1.bf16.msra.mxu0 %v3275
        %4958 = vmatprep.subr.bf16.mxu0 %v3268
        %4959 = vmatpush1.bf16.msra.mxu0 %v3267
        %4960 = vmatprep.subr.bf16.mxu0 %v3260
        %4961 = vmatpush1.bf16.msra.mxu0 %v3259
        %4962 = vmatprep.subr.bf16.mxu0 %v3252
        %4963 = vmatpush1.bf16.msra.mxu0 %v3251
        %4964 = vmatprep.subr.bf16.mxu0 %v3244
        %4965 = vmatpush1.bf16.msra.mxu0 %v3243
        %4966 = vmatprep.subr.bf16.mxu0 %v3236
        %4967 = vmatpush1.bf16.msra.mxu0 %v3235
        %4968 = vmatprep.subr.bf16.mxu0 %v3356
        %4969 = vmatpush2.bf16.msra.mxu0 %v3355
        %4970 = vmatprep.subr.bf16.mxu0 %v3348
        %4971 = vmatpush2.bf16.msra.mxu0 %v3347
        %4972 = vmatprep.subr.bf16.mxu0 %v3340
        %4973 = vmatpush2.bf16.msra.mxu0 %v3339
        %4974 = vmatprep.subr.bf16.mxu0 %v3332
        %4975 = vmatpush2.bf16.msra.mxu0 %v3331
        %4976 = vmatprep.subr.bf16.mxu0 %v3324
        %4977 = vmatpush2.bf16.msra.mxu0 %v3323
        %4978 = vmatprep.subr.bf16.mxu0 %v3316
        %4979 = vmatpush2.bf16.msra.mxu0 %v3315
        %4980 = vmatprep.subr.bf16.mxu0 %v3308
        %4981 = vmatpush2.bf16.msra.mxu0 %v3307
        %4982 = vmatprep.subr.bf16.mxu0 %v3300
        %4983 = vmatpush2.bf16.msra.mxu0 %v3299
        %4984 = vmatprep.mubr.bf16.mxu0 %v1063
        %4985 = vmatmul.mubr.bf16.gmra.mxu0 %v1062
        %v4986 = vpop.f32.mrf.mxu0
        %v4987 = vadd.f32 0.0, %v4986
        %v4988 = vpop.f32.mrf.mxu0
        %v4989 = vadd.f32 0.0, %v4988
        %v4990 = vpop.f32.mrf.mxu0
        %v4991 = vadd.f32 0.0, %v4990
        %v4992 = vpop.f32.mrf.mxu0
        %v4993 = vadd.f32 0.0, %v4992
        %4994 = vdwg.mxu0
        %4995 = vmatprep.subr.bf16.mxu0 %v3420
        %4996 = vmatpush1.bf16.msra.mxu0 %v3419
        %4997 = vmatprep.subr.bf16.mxu0 %v3412
        %4998 = vmatpush1.bf16.msra.mxu0 %v3411
        %4999 = vmatprep.subr.bf16.mxu0 %v3404
        %5000 = vmatpush1.bf16.msra.mxu0 %v3403
        %5001 = vmatprep.subr.bf16.mxu0 %v3396
        %5002 = vmatpush1.bf16.msra.mxu0 %v3395
        %5003 = vmatprep.subr.bf16.mxu0 %v3388
        %5004 = vmatpush1.bf16.msra.mxu0 %v3387
        %5005 = vmatprep.subr.bf16.mxu0 %v3380
        %5006 = vmatpush1.bf16.msra.mxu0 %v3379
        %5007 = vmatprep.subr.bf16.mxu0 %v3372
        %5008 = vmatpush1.bf16.msra.mxu0 %v3371
        %5009 = vmatprep.subr.bf16.mxu0 %v3364
        %5010 = vmatpush1.bf16.msra.mxu0 %v3363
        %5011 = vmatprep.subr.bf16.mxu0 %v3484
        %5012 = vmatpush2.bf16.msra.mxu0 %v3483
        %5013 = vmatprep.subr.bf16.mxu0 %v3476
        %5014 = vmatpush2.bf16.msra.mxu0 %v3475
        %5015 = vmatprep.subr.bf16.mxu0 %v3468
        %5016 = vmatpush2.bf16.msra.mxu0 %v3467
        %5017 = vmatprep.subr.bf16.mxu0 %v3460
        %5018 = vmatpush2.bf16.msra.mxu0 %v3459
        %5019 = vmatprep.subr.bf16.mxu0 %v3452
        %5020 = vmatpush2.bf16.msra.mxu0 %v3451
        %5021 = vmatprep.subr.bf16.mxu0 %v3444
        %5022 = vmatpush2.bf16.msra.mxu0 %v3443
        %5023 = vmatprep.subr.bf16.mxu0 %v3436
        %5024 = vmatpush2.bf16.msra.mxu0 %v3435
        %5025 = vmatprep.subr.bf16.mxu0 %v3428
        %5026 = vmatpush2.bf16.msra.mxu0 %v3427
        %5027 = vmatprep.mubr.bf16.mxu0 %v1065
        %5028 = vmatmul.mubr.bf16.gmra.mxu0 %v1064
        %v5029 = vpop.f32.mrf.mxu0
        %v5030 = vadd.f32 %v4987, %v5029
        %v5031 = vpop.f32.mrf.mxu0
        %v5032 = vadd.f32 %v4989, %v5031
        %v5033 = vpop.f32.mrf.mxu0
        %v5034 = vadd.f32 %v4991, %v5033
        %v5035 = vpop.f32.mrf.mxu0
        %v5036 = vadd.f32 %v4993, %v5035
        %5037 = vdwg.mxu0
        %5038 = vmatprep.subr.bf16.mxu0 %v3548
        %5039 = vmatpush1.bf16.msra.mxu0 %v3547
        %5040 = vmatprep.subr.bf16.mxu0 %v3540
        %5041 = vmatpush1.bf16.msra.mxu0 %v3539
        %5042 = vmatprep.subr.bf16.mxu0 %v3532
        %5043 = vmatpush1.bf16.msra.mxu0 %v3531
        %5044 = vmatprep.subr.bf16.mxu0 %v3524
        %5045 = vmatpush1.bf16.msra.mxu0 %v3523
        %5046 = vmatprep.subr.bf16.mxu0 %v3516
        %5047 = vmatpush1.bf16.msra.mxu0 %v3515
        %5048 = vmatprep.subr.bf16.mxu0 %v3508
        %5049 = vmatpush1.bf16.msra.mxu0 %v3507
        %5050 = vmatprep.subr.bf16.mxu0 %v3500
        %5051 = vmatpush1.bf16.msra.mxu0 %v3499
        %5052 = vmatprep.subr.bf16.mxu0 %v3492
        %5053 = vmatpush1.bf16.msra.mxu0 %v3491
        %5054 = vmatprep.subr.bf16.mxu0 %v3612
        %5055 = vmatpush2.bf16.msra.mxu0 %v3611
        %5056 = vmatprep.subr.bf16.mxu0 %v3604
        %5057 = vmatpush2.bf16.msra.mxu0 %v3603
        %5058 = vmatprep.subr.bf16.mxu0 %v3596
        %5059 = vmatpush2.bf16.msra.mxu0 %v3595
        %5060 = vmatprep.subr.bf16.mxu0 %v3588
        %5061 = vmatpush2.bf16.msra.mxu0 %v3587
        %5062 = vmatprep.subr.bf16.mxu0 %v3580
        %5063 = vmatpush2.bf16.msra.mxu0 %v3579
        %5064 = vmatprep.subr.bf16.mxu0 %v3572
        %5065 = vmatpush2.bf16.msra.mxu0 %v3571
        %5066 = vmatprep.subr.bf16.mxu0 %v3564
        %5067 = vmatpush2.bf16.msra.mxu0 %v3563
        %5068 = vmatprep.subr.bf16.mxu0 %v3556
        %5069 = vmatpush2.bf16.msra.mxu0 %v3555
        %5070 = vmatprep.mubr.bf16.mxu0 %v1067
        %5071 = vmatmul.mubr.bf16.gmra.mxu0 %v1066
        %v5072 = vpop.f32.mrf.mxu0
        %v5073 = vadd.f32 %v5030, %v5072
        %v5074 = vpop.f32.mrf.mxu0
        %v5075 = vadd.f32 %v5032, %v5074
        %v5076 = vpop.f32.mrf.mxu0
        %v5077 = vadd.f32 %v5034, %v5076
        %v5078 = vpop.f32.mrf.mxu0
        %v5079 = vadd.f32 %v5036, %v5078
        %5080 = vdwg.mxu0
        %5081 = vmatprep.subr.bf16.mxu0 %v3676
        %5082 = vmatpush1.bf16.msra.mxu0 %v3675
        %5083 = vmatprep.subr.bf16.mxu0 %v3668
        %5084 = vmatpush1.bf16.msra.mxu0 %v3667
        %5085 = vmatprep.subr.bf16.mxu0 %v3660
        %5086 = vmatpush1.bf16.msra.mxu0 %v3659
        %5087 = vmatprep.subr.bf16.mxu0 %v3652
        %5088 = vmatpush1.bf16.msra.mxu0 %v3651
        %5089 = vmatprep.subr.bf16.mxu0 %v3644
        %5090 = vmatpush1.bf16.msra.mxu0 %v3643
        %5091 = vmatprep.subr.bf16.mxu0 %v3636
        %5092 = vmatpush1.bf16.msra.mxu0 %v3635
        %5093 = vmatprep.subr.bf16.mxu0 %v3628
        %5094 = vmatpush1.bf16.msra.mxu0 %v3627
        %5095 = vmatprep.subr.bf16.mxu0 %v3620
        %5096 = vmatpush1.bf16.msra.mxu0 %v3619
        %5097 = vmatprep.subr.bf16.mxu0 %v3740
        %5098 = vmatpush2.bf16.msra.mxu0 %v3739
        %5099 = vmatprep.subr.bf16.mxu0 %v3732
        %5100 = vmatpush2.bf16.msra.mxu0 %v3731
        %5101 = vmatprep.subr.bf16.mxu0 %v3724
        %5102 = vmatpush2.bf16.msra.mxu0 %v3723
        %5103 = vmatprep.subr.bf16.mxu0 %v3716
        %5104 = vmatpush2.bf16.msra.mxu0 %v3715
        %5105 = vmatprep.subr.bf16.mxu0 %v3708
        %5106 = vmatpush2.bf16.msra.mxu0 %v3707
        %5107 = vmatprep.subr.bf16.mxu0 %v3700
        %5108 = vmatpush2.bf16.msra.mxu0 %v3699
        %5109 = vmatprep.subr.bf16.mxu0 %v3692
        %5110 = vmatpush2.bf16.msra.mxu0 %v3691
        %5111 = vmatprep.subr.bf16.mxu0 %v3684
        %5112 = vmatpush2.bf16.msra.mxu0 %v3683
        %5113 = vmatprep.mubr.bf16.mxu0 %v1069
        %5114 = vmatmul.mubr.bf16.gmra.mxu0 %v1068
        %v5115 = vpop.f32.mrf.mxu0
        %v5116 = vadd.f32 %v5073, %v5115
        %v5117 = vpop.f32.mrf.mxu0
        %v5118 = vadd.f32 %v5075, %v5117
        %v5119 = vpop.f32.mrf.mxu0
        %v5120 = vadd.f32 %v5077, %v5119
        %v5121 = vpop.f32.mrf.mxu0
        %v5122 = vadd.f32 %v5079, %v5121
        %5123 = vdwg.mxu0
        %5124 = vmatprep.subr.bf16.mxu0 %v3804
        %5125 = vmatpush1.bf16.msra.mxu0 %v3803
        %5126 = vmatprep.subr.bf16.mxu0 %v3796
        %5127 = vmatpush1.bf16.msra.mxu0 %v3795
        %5128 = vmatprep.subr.bf16.mxu0 %v3788
        %5129 = vmatpush1.bf16.msra.mxu0 %v3787
        %5130 = vmatprep.subr.bf16.mxu0 %v3780
        %5131 = vmatpush1.bf16.msra.mxu0 %v3779
        %5132 = vmatprep.subr.bf16.mxu0 %v3772
        %5133 = vmatpush1.bf16.msra.mxu0 %v3771
        %5134 = vmatprep.subr.bf16.mxu0 %v3764
        %5135 = vmatpush1.bf16.msra.mxu0 %v3763
        %5136 = vmatprep.subr.bf16.mxu0 %v3756
        %5137 = vmatpush1.bf16.msra.mxu0 %v3755
        %5138 = vmatprep.subr.bf16.mxu0 %v3748
        %5139 = vmatpush1.bf16.msra.mxu0 %v3747
        %5140 = vmatprep.subr.bf16.mxu0 %v3868
        %5141 = vmatpush2.bf16.msra.mxu0 %v3867
        %5142 = vmatprep.subr.bf16.mxu0 %v3860
        %5143 = vmatpush2.bf16.msra.mxu0 %v3859
        %5144 = vmatprep.subr.bf16.mxu0 %v3852
        %5145 = vmatpush2.bf16.msra.mxu0 %v3851
        %5146 = vmatprep.subr.bf16.mxu0 %v3844
        %5147 = vmatpush2.bf16.msra.mxu0 %v3843
        %5148 = vmatprep.subr.bf16.mxu0 %v3836
        %5149 = vmatpush2.bf16.msra.mxu0 %v3835
        %5150 = vmatprep.subr.bf16.mxu0 %v3828
        %5151 = vmatpush2.bf16.msra.mxu0 %v3827
        %5152 = vmatprep.subr.bf16.mxu0 %v3820
        %5153 = vmatpush2.bf16.msra.mxu0 %v3819
        %5154 = vmatprep.subr.bf16.mxu0 %v3812
        %5155 = vmatpush2.bf16.msra.mxu0 %v3811
        %5156 = vmatprep.mubr.bf16.mxu0 %v1071
        %5157 = vmatmul.mubr.bf16.gmra.mxu0 %v1070
        %v5158 = vpop.f32.mrf.mxu0
        %v5159 = vadd.f32 %v5116, %v5158
        %v5160 = vpop.f32.mrf.mxu0
        %v5161 = vadd.f32 %v5118, %v5160
        %v5162 = vpop.f32.mrf.mxu0
        %v5163 = vadd.f32 %v5120, %v5162
        %v5164 = vpop.f32.mrf.mxu0
        %v5165 = vadd.f32 %v5122, %v5164
        %5166 = vdwg.mxu0
        %5167 = vmatprep.subr.bf16.mxu0 %v3932
        %5168 = vmatpush1.bf16.msra.mxu0 %v3931
        %5169 = vmatprep.subr.bf16.mxu0 %v3924
        %5170 = vmatpush1.bf16.msra.mxu0 %v3923
        %5171 = vmatprep.subr.bf16.mxu0 %v3916
        %5172 = vmatpush1.bf16.msra.mxu0 %v3915
        %5173 = vmatprep.subr.bf16.mxu0 %v3908
        %5174 = vmatpush1.bf16.msra.mxu0 %v3907
        %5175 = vmatprep.subr.bf16.mxu0 %v3900
        %5176 = vmatpush1.bf16.msra.mxu0 %v3899
        %5177 = vmatprep.subr.bf16.mxu0 %v3892
        %5178 = vmatpush1.bf16.msra.mxu0 %v3891
        %5179 = vmatprep.subr.bf16.mxu0 %v3884
        %5180 = vmatpush1.bf16.msra.mxu0 %v3883
        %5181 = vmatprep.subr.bf16.mxu0 %v3876
        %5182 = vmatpush1.bf16.msra.mxu0 %v3875
        %5183 = vmatprep.subr.bf16.mxu0 0
        %5184 = vmatpush2.bf16.msra.mxu0 0
        %5185 = vmatprep.subr.bf16.mxu0 0
        %5186 = vmatpush2.bf16.msra.mxu0 0
        %5187 = vmatprep.subr.bf16.mxu0 0
        %5188 = vmatpush2.bf16.msra.mxu0 0
        %5189 = vmatprep.subr.bf16.mxu0 0
        %5190 = vmatpush2.bf16.msra.mxu0 0
        %5191 = vmatprep.subr.bf16.mxu0 0
        %5192 = vmatpush2.bf16.msra.mxu0 0
        %5193 = vmatprep.subr.bf16.mxu0 0
        %5194 = vmatpush2.bf16.msra.mxu0 0
        %5195 = vmatprep.subr.bf16.mxu0 %v4680
        %5196 = vmatpush2.bf16.msra.mxu0 %v4677
        %5197 = vmatprep.subr.bf16.mxu0 %v3940
        %5198 = vmatpush2.bf16.msra.mxu0 %v3939
        %5199 = vmatprep.mubr.bf16.mxu0 %v4667
        %5200 = vmatmul.mubr.bf16.gmra.mxu0 %v1072
        %v5201 = vpop.f32.mrf.mxu0
        %v5202 = vadd.f32 %v5159, %v5201
        %v5203 = vpop.f32.mrf.mxu0
        %v5204 = vadd.f32 %v5161, %v5203
        %v5205 = vpop.f32.mrf.mxu0
        %v5206 = vadd.f32 %v5163, %v5205
        %v5207 = vpop.f32.mrf.mxu0
        %v5208 = vadd.f32 %v5165, %v5207
        %5209 = vdwg.mxu0
        %5210 = vmatprep.subr.bf16.mxu0 %v3294
        %5211 = vmatpush1.bf16.msra.mxu0 %v3293
        %5212 = vmatprep.subr.bf16.mxu0 %v3286
        %5213 = vmatpush1.bf16.msra.mxu0 %v3285
        %5214 = vmatprep.subr.bf16.mxu0 %v3278
        %5215 = vmatpush1.bf16.msra.mxu0 %v3277
        %5216 = vmatprep.subr.bf16.mxu0 %v3270
        %5217 = vmatpush1.bf16.msra.mxu0 %v3269
        %5218 = vmatprep.subr.bf16.mxu0 %v3262
        %5219 = vmatpush1.bf16.msra.mxu0 %v3261
        %5220 = vmatprep.subr.bf16.mxu0 %v3254
        %5221 = vmatpush1.bf16.msra.mxu0 %v3253
        %5222 = vmatprep.subr.bf16.mxu0 %v3246
        %5223 = vmatpush1.bf16.msra.mxu0 %v3245
        %5224 = vmatprep.subr.bf16.mxu0 %v3238
        %5225 = vmatpush1.bf16.msra.mxu0 %v3237
        %5226 = vmatprep.subr.bf16.mxu0 %v3358
        %5227 = vmatpush2.bf16.msra.mxu0 %v3357
        %5228 = vmatprep.subr.bf16.mxu0 %v3350
        %5229 = vmatpush2.bf16.msra.mxu0 %v3349
        %5230 = vmatprep.subr.bf16.mxu0 %v3342
        %5231 = vmatpush2.bf16.msra.mxu0 %v3341
        %5232 = vmatprep.subr.bf16.mxu0 %v3334
        %5233 = vmatpush2.bf16.msra.mxu0 %v3333
        %5234 = vmatprep.subr.bf16.mxu0 %v3326
        %5235 = vmatpush2.bf16.msra.mxu0 %v3325
        %5236 = vmatprep.subr.bf16.mxu0 %v3318
        %5237 = vmatpush2.bf16.msra.mxu0 %v3317
        %5238 = vmatprep.subr.bf16.mxu0 %v3310
        %5239 = vmatpush2.bf16.msra.mxu0 %v3309
        %5240 = vmatprep.subr.bf16.mxu0 %v3302
        %5241 = vmatpush2.bf16.msra.mxu0 %v3301
        %5242 = vmatprep.mubr.bf16.mxu0 %v1063
        %5243 = vmatmul.mubr.bf16.gmra.mxu0 %v1062
        %v5244 = vpop.f32.mrf.mxu0
        %v5245 = vadd.f32 0.0, %v5244
        %v5246 = vpop.f32.mrf.mxu0
        %v5247 = vadd.f32 0.0, %v5246
        %v5248 = vpop.f32.mrf.mxu0
        %v5249 = vadd.f32 0.0, %v5248
        %v5250 = vpop.f32.mrf.mxu0
        %v5251 = vadd.f32 0.0, %v5250
        %5252 = vdwg.mxu0
        %5253 = vmatprep.subr.bf16.mxu0 %v3422
        %5254 = vmatpush1.bf16.msra.mxu0 %v3421
        %5255 = vmatprep.subr.bf16.mxu0 %v3414
        %5256 = vmatpush1.bf16.msra.mxu0 %v3413
        %5257 = vmatprep.subr.bf16.mxu0 %v3406
        %5258 = vmatpush1.bf16.msra.mxu0 %v3405
        %5259 = vmatprep.subr.bf16.mxu0 %v3398
        %5260 = vmatpush1.bf16.msra.mxu0 %v3397
        %5261 = vmatprep.subr.bf16.mxu0 %v3390
        %5262 = vmatpush1.bf16.msra.mxu0 %v3389
        %5263 = vmatprep.subr.bf16.mxu0 %v3382
        %5264 = vmatpush1.bf16.msra.mxu0 %v3381
        %5265 = vmatprep.subr.bf16.mxu0 %v3374
        %5266 = vmatpush1.bf16.msra.mxu0 %v3373
        %5267 = vmatprep.subr.bf16.mxu0 %v3366
        %5268 = vmatpush1.bf16.msra.mxu0 %v3365
        %5269 = vmatprep.subr.bf16.mxu0 %v3486
        %5270 = vmatpush2.bf16.msra.mxu0 %v3485
        %5271 = vmatprep.subr.bf16.mxu0 %v3478
        %5272 = vmatpush2.bf16.msra.mxu0 %v3477
        %5273 = vmatprep.subr.bf16.mxu0 %v3470
        %5274 = vmatpush2.bf16.msra.mxu0 %v3469
        %5275 = vmatprep.subr.bf16.mxu0 %v3462
        %5276 = vmatpush2.bf16.msra.mxu0 %v3461
        %5277 = vmatprep.subr.bf16.mxu0 %v3454
        %5278 = vmatpush2.bf16.msra.mxu0 %v3453
        %5279 = vmatprep.subr.bf16.mxu0 %v3446
        %5280 = vmatpush2.bf16.msra.mxu0 %v3445
        %5281 = vmatprep.subr.bf16.mxu0 %v3438
        %5282 = vmatpush2.bf16.msra.mxu0 %v3437
        %5283 = vmatprep.subr.bf16.mxu0 %v3430
        %5284 = vmatpush2.bf16.msra.mxu0 %v3429
        %5285 = vmatprep.mubr.bf16.mxu0 %v1065
        %5286 = vmatmul.mubr.bf16.gmra.mxu0 %v1064
        %v5287 = vpop.f32.mrf.mxu0
        %v5288 = vadd.f32 %v5245, %v5287
        %v5289 = vpop.f32.mrf.mxu0
        %v5290 = vadd.f32 %v5247, %v5289
        %v5291 = vpop.f32.mrf.mxu0
        %v5292 = vadd.f32 %v5249, %v5291
        %v5293 = vpop.f32.mrf.mxu0
        %v5294 = vadd.f32 %v5251, %v5293
        %5295 = vdwg.mxu0
        %5296 = vmatprep.subr.bf16.mxu0 %v3550
        %5297 = vmatpush1.bf16.msra.mxu0 %v3549
        %5298 = vmatprep.subr.bf16.mxu0 %v3542
        %5299 = vmatpush1.bf16.msra.mxu0 %v3541
        %5300 = vmatprep.subr.bf16.mxu0 %v3534
        %5301 = vmatpush1.bf16.msra.mxu0 %v3533
        %5302 = vmatprep.subr.bf16.mxu0 %v3526
        %5303 = vmatpush1.bf16.msra.mxu0 %v3525
        %5304 = vmatprep.subr.bf16.mxu0 %v3518
        %5305 = vmatpush1.bf16.msra.mxu0 %v3517
        %5306 = vmatprep.subr.bf16.mxu0 %v3510
        %5307 = vmatpush1.bf16.msra.mxu0 %v3509
        %5308 = vmatprep.subr.bf16.mxu0 %v3502
        %5309 = vmatpush1.bf16.msra.mxu0 %v3501
        %5310 = vmatprep.subr.bf16.mxu0 %v3494
        %5311 = vmatpush1.bf16.msra.mxu0 %v3493
        %5312 = vmatprep.subr.bf16.mxu0 %v3614
        %5313 = vmatpush2.bf16.msra.mxu0 %v3613
        %5314 = vmatprep.subr.bf16.mxu0 %v3606
        %5315 = vmatpush2.bf16.msra.mxu0 %v3605
        %5316 = vmatprep.subr.bf16.mxu0 %v3598
        %5317 = vmatpush2.bf16.msra.mxu0 %v3597
        %5318 = vmatprep.subr.bf16.mxu0 %v3590
        %5319 = vmatpush2.bf16.msra.mxu0 %v3589
        %5320 = vmatprep.subr.bf16.mxu0 %v3582
        %5321 = vmatpush2.bf16.msra.mxu0 %v3581
        %5322 = vmatprep.subr.bf16.mxu0 %v3574
        %5323 = vmatpush2.bf16.msra.mxu0 %v3573
        %5324 = vmatprep.subr.bf16.mxu0 %v3566
        %5325 = vmatpush2.bf16.msra.mxu0 %v3565
        %5326 = vmatprep.subr.bf16.mxu0 %v3558
        %5327 = vmatpush2.bf16.msra.mxu0 %v3557
        %5328 = vmatprep.mubr.bf16.mxu0 %v1067
        %5329 = vmatmul.mubr.bf16.gmra.mxu0 %v1066
        %v5330 = vpop.f32.mrf.mxu0
        %v5331 = vadd.f32 %v5288, %v5330
        %v5332 = vpop.f32.mrf.mxu0
        %v5333 = vadd.f32 %v5290, %v5332
        %v5334 = vpop.f32.mrf.mxu0
        %v5335 = vadd.f32 %v5292, %v5334
        %v5336 = vpop.f32.mrf.mxu0
        %v5337 = vadd.f32 %v5294, %v5336
        %5338 = vdwg.mxu0
        %5339 = vmatprep.subr.bf16.mxu0 %v3678
        %5340 = vmatpush1.bf16.msra.mxu0 %v3677
        %5341 = vmatprep.subr.bf16.mxu0 %v3670
        %5342 = vmatpush1.bf16.msra.mxu0 %v3669
        %5343 = vmatprep.subr.bf16.mxu0 %v3662
        %5344 = vmatpush1.bf16.msra.mxu0 %v3661
        %5345 = vmatprep.subr.bf16.mxu0 %v3654
        %5346 = vmatpush1.bf16.msra.mxu0 %v3653
        %5347 = vmatprep.subr.bf16.mxu0 %v3646
        %5348 = vmatpush1.bf16.msra.mxu0 %v3645
        %5349 = vmatprep.subr.bf16.mxu0 %v3638
        %5350 = vmatpush1.bf16.msra.mxu0 %v3637
        %5351 = vmatprep.subr.bf16.mxu0 %v3630
        %5352 = vmatpush1.bf16.msra.mxu0 %v3629
        %5353 = vmatprep.subr.bf16.mxu0 %v3622
        %5354 = vmatpush1.bf16.msra.mxu0 %v3621
        %5355 = vmatprep.subr.bf16.mxu0 %v3742
        %5356 = vmatpush2.bf16.msra.mxu0 %v3741
        %5357 = vmatprep.subr.bf16.mxu0 %v3734
        %5358 = vmatpush2.bf16.msra.mxu0 %v3733
        %5359 = vmatprep.subr.bf16.mxu0 %v3726
        %5360 = vmatpush2.bf16.msra.mxu0 %v3725
        %5361 = vmatprep.subr.bf16.mxu0 %v3718
        %5362 = vmatpush2.bf16.msra.mxu0 %v3717
        %5363 = vmatprep.subr.bf16.mxu0 %v3710
        %5364 = vmatpush2.bf16.msra.mxu0 %v3709
        %5365 = vmatprep.subr.bf16.mxu0 %v3702
        %5366 = vmatpush2.bf16.msra.mxu0 %v3701
        %5367 = vmatprep.subr.bf16.mxu0 %v3694
        %5368 = vmatpush2.bf16.msra.mxu0 %v3693
        %5369 = vmatprep.subr.bf16.mxu0 %v3686
        %5370 = vmatpush2.bf16.msra.mxu0 %v3685
        %5371 = vmatprep.mubr.bf16.mxu0 %v1069
        %5372 = vmatmul.mubr.bf16.gmra.mxu0 %v1068
        %v5373 = vpop.f32.mrf.mxu0
        %v5374 = vadd.f32 %v5331, %v5373
        %v5375 = vpop.f32.mrf.mxu0
        %v5376 = vadd.f32 %v5333, %v5375
        %v5377 = vpop.f32.mrf.mxu0
        %v5378 = vadd.f32 %v5335, %v5377
        %v5379 = vpop.f32.mrf.mxu0
        %v5380 = vadd.f32 %v5337, %v5379
        %5381 = vdwg.mxu0
        %5382 = vmatprep.subr.bf16.mxu0 %v3806
        %5383 = vmatpush1.bf16.msra.mxu0 %v3805
        %5384 = vmatprep.subr.bf16.mxu0 %v3798
        %5385 = vmatpush1.bf16.msra.mxu0 %v3797
        %5386 = vmatprep.subr.bf16.mxu0 %v3790
        %5387 = vmatpush1.bf16.msra.mxu0 %v3789
        %5388 = vmatprep.subr.bf16.mxu0 %v3782
        %5389 = vmatpush1.bf16.msra.mxu0 %v3781
        %5390 = vmatprep.subr.bf16.mxu0 %v3774
        %5391 = vmatpush1.bf16.msra.mxu0 %v3773
        %5392 = vmatprep.subr.bf16.mxu0 %v3766
        %5393 = vmatpush1.bf16.msra.mxu0 %v3765
        %5394 = vmatprep.subr.bf16.mxu0 %v3758
        %5395 = vmatpush1.bf16.msra.mxu0 %v3757
        %5396 = vmatprep.subr.bf16.mxu0 %v3750
        %5397 = vmatpush1.bf16.msra.mxu0 %v3749
        %5398 = vmatprep.subr.bf16.mxu0 %v3870
        %5399 = vmatpush2.bf16.msra.mxu0 %v3869
        %5400 = vmatprep.subr.bf16.mxu0 %v3862
        %5401 = vmatpush2.bf16.msra.mxu0 %v3861
        %5402 = vmatprep.subr.bf16.mxu0 %v3854
        %5403 = vmatpush2.bf16.msra.mxu0 %v3853
        %5404 = vmatprep.subr.bf16.mxu0 %v3846
        %5405 = vmatpush2.bf16.msra.mxu0 %v3845
        %5406 = vmatprep.subr.bf16.mxu0 %v3838
        %5407 = vmatpush2.bf16.msra.mxu0 %v3837
        %5408 = vmatprep.subr.bf16.mxu0 %v3830
        %5409 = vmatpush2.bf16.msra.mxu0 %v3829
        %5410 = vmatprep.subr.bf16.mxu0 %v3822
        %5411 = vmatpush2.bf16.msra.mxu0 %v3821
        %5412 = vmatprep.subr.bf16.mxu0 %v3814
        %5413 = vmatpush2.bf16.msra.mxu0 %v3813
        %5414 = vmatprep.mubr.bf16.mxu0 %v1071
        %5415 = vmatmul.mubr.bf16.gmra.mxu0 %v1070
        %v5416 = vpop.f32.mrf.mxu0
        %v5417 = vadd.f32 %v5374, %v5416
        %v5418 = vpop.f32.mrf.mxu0
        %v5419 = vadd.f32 %v5376, %v5418
        %v5420 = vpop.f32.mrf.mxu0
        %v5421 = vadd.f32 %v5378, %v5420
        %v5422 = vpop.f32.mrf.mxu0
        %v5423 = vadd.f32 %v5380, %v5422
        %5424 = vdwg.mxu0
        %5425 = vmatprep.subr.bf16.mxu0 %v3934
        %5426 = vmatpush1.bf16.msra.mxu0 %v3933
        %5427 = vmatprep.subr.bf16.mxu0 %v3926
        %5428 = vmatpush1.bf16.msra.mxu0 %v3925
        %5429 = vmatprep.subr.bf16.mxu0 %v3918
        %5430 = vmatpush1.bf16.msra.mxu0 %v3917
        %5431 = vmatprep.subr.bf16.mxu0 %v3910
        %5432 = vmatpush1.bf16.msra.mxu0 %v3909
        %5433 = vmatprep.subr.bf16.mxu0 %v3902
        %5434 = vmatpush1.bf16.msra.mxu0 %v3901
        %5435 = vmatprep.subr.bf16.mxu0 %v3894
        %5436 = vmatpush1.bf16.msra.mxu0 %v3893
        %5437 = vmatprep.subr.bf16.mxu0 %v3886
        %5438 = vmatpush1.bf16.msra.mxu0 %v3885
        %5439 = vmatprep.subr.bf16.mxu0 %v3878
        %5440 = vmatpush1.bf16.msra.mxu0 %v3877
        %5441 = vmatprep.subr.bf16.mxu0 0
        %5442 = vmatpush2.bf16.msra.mxu0 0
        %5443 = vmatprep.subr.bf16.mxu0 0
        %5444 = vmatpush2.bf16.msra.mxu0 0
        %5445 = vmatprep.subr.bf16.mxu0 0
        %5446 = vmatpush2.bf16.msra.mxu0 0
        %5447 = vmatprep.subr.bf16.mxu0 0
        %5448 = vmatpush2.bf16.msra.mxu0 0
        %5449 = vmatprep.subr.bf16.mxu0 0
        %5450 = vmatpush2.bf16.msra.mxu0 0
        %5451 = vmatprep.subr.bf16.mxu0 0
        %5452 = vmatpush2.bf16.msra.mxu0 0
        %5453 = vmatprep.subr.bf16.mxu0 %v4686
        %5454 = vmatpush2.bf16.msra.mxu0 %v4683
        %5455 = vmatprep.subr.bf16.mxu0 %v3942
        %5456 = vmatpush2.bf16.msra.mxu0 %v3941
        %5457 = vmatprep.mubr.bf16.mxu0 %v4667
        %5458 = vmatmul.mubr.bf16.gmra.mxu0 %v1072
        %v5459 = vpop.f32.mrf.mxu0
        %v5460 = vadd.f32 %v5417, %v5459
        %v5461 = vpop.f32.mrf.mxu0
        %v5462 = vadd.f32 %v5419, %v5461
        %v5463 = vpop.f32.mrf.mxu0
        %v5464 = vadd.f32 %v5421, %v5463
        %v5465 = vpop.f32.mrf.mxu0
        %v5466 = vadd.f32 %v5423, %v5465
        %5467 = vdwg.mxu0
        %5468 = vmatprep.subr.bf16.mxu0 %v3296
        %5469 = vmatpush1.bf16.msra.mxu0 %v3295
        %5470 = vmatprep.subr.bf16.mxu0 %v3288
        %5471 = vmatpush1.bf16.msra.mxu0 %v3287
        %5472 = vmatprep.subr.bf16.mxu0 %v3280
        %5473 = vmatpush1.bf16.msra.mxu0 %v3279
        %5474 = vmatprep.subr.bf16.mxu0 %v3272
        %5475 = vmatpush1.bf16.msra.mxu0 %v3271
        %5476 = vmatprep.subr.bf16.mxu0 %v3264
        %5477 = vmatpush1.bf16.msra.mxu0 %v3263
        %5478 = vmatprep.subr.bf16.mxu0 %v3256
        %5479 = vmatpush1.bf16.msra.mxu0 %v3255
        %5480 = vmatprep.subr.bf16.mxu0 %v3248
        %5481 = vmatpush1.bf16.msra.mxu0 %v3247
        %5482 = vmatprep.subr.bf16.mxu0 %v3240
        %5483 = vmatpush1.bf16.msra.mxu0 %v3239
        %5484 = vmatprep.subr.bf16.mxu0 %v3360
        %5485 = vmatpush2.bf16.msra.mxu0 %v3359
        %5486 = vmatprep.subr.bf16.mxu0 %v3352
        %5487 = vmatpush2.bf16.msra.mxu0 %v3351
        %5488 = vmatprep.subr.bf16.mxu0 %v3344
        %5489 = vmatpush2.bf16.msra.mxu0 %v3343
        %5490 = vmatprep.subr.bf16.mxu0 %v3336
        %5491 = vmatpush2.bf16.msra.mxu0 %v3335
        %5492 = vmatprep.subr.bf16.mxu0 %v3328
        %5493 = vmatpush2.bf16.msra.mxu0 %v3327
        %5494 = vmatprep.subr.bf16.mxu0 %v3320
        %5495 = vmatpush2.bf16.msra.mxu0 %v3319
        %5496 = vmatprep.subr.bf16.mxu0 %v3312
        %5497 = vmatpush2.bf16.msra.mxu0 %v3311
        %5498 = vmatprep.subr.bf16.mxu0 %v3304
        %5499 = vmatpush2.bf16.msra.mxu0 %v3303
        %5500 = vmatprep.mubr.bf16.mxu0 %v1063
        %5501 = vmatmul.mubr.bf16.gmra.mxu0 %v1062
        %v5502 = vpop.f32.mrf.mxu0
        %v5503 = vadd.f32 0.0, %v5502
        %v5504 = vpop.f32.mrf.mxu0
        %v5505 = vadd.f32 0.0, %v5504
        %v5506 = vpop.f32.mrf.mxu0
        %v5507 = vadd.f32 0.0, %v5506
        %v5508 = vpop.f32.mrf.mxu0
        %v5509 = vadd.f32 0.0, %v5508
        %5510 = vdwg.mxu0
        %5511 = vmatprep.subr.bf16.mxu0 %v3424
        %5512 = vmatpush1.bf16.msra.mxu0 %v3423
        %5513 = vmatprep.subr.bf16.mxu0 %v3416
        %5514 = vmatpush1.bf16.msra.mxu0 %v3415
        %5515 = vmatprep.subr.bf16.mxu0 %v3408
        %5516 = vmatpush1.bf16.msra.mxu0 %v3407
        %5517 = vmatprep.subr.bf16.mxu0 %v3400
        %5518 = vmatpush1.bf16.msra.mxu0 %v3399
        %5519 = vmatprep.subr.bf16.mxu0 %v3392
        %5520 = vmatpush1.bf16.msra.mxu0 %v3391
        %5521 = vmatprep.subr.bf16.mxu0 %v3384
        %5522 = vmatpush1.bf16.msra.mxu0 %v3383
        %5523 = vmatprep.subr.bf16.mxu0 %v3376
        %5524 = vmatpush1.bf16.msra.mxu0 %v3375
        %5525 = vmatprep.subr.bf16.mxu0 %v3368
        %5526 = vmatpush1.bf16.msra.mxu0 %v3367
        %5527 = vmatprep.subr.bf16.mxu0 %v3488
        %5528 = vmatpush2.bf16.msra.mxu0 %v3487
        %5529 = vmatprep.subr.bf16.mxu0 %v3480
        %5530 = vmatpush2.bf16.msra.mxu0 %v3479
        %5531 = vmatprep.subr.bf16.mxu0 %v3472
        %5532 = vmatpush2.bf16.msra.mxu0 %v3471
        %5533 = vmatprep.subr.bf16.mxu0 %v3464
        %5534 = vmatpush2.bf16.msra.mxu0 %v3463
        %5535 = vmatprep.subr.bf16.mxu0 %v3456
        %5536 = vmatpush2.bf16.msra.mxu0 %v3455
        %5537 = vmatprep.subr.bf16.mxu0 %v3448
        %5538 = vmatpush2.bf16.msra.mxu0 %v3447
        %5539 = vmatprep.subr.bf16.mxu0 %v3440
        %5540 = vmatpush2.bf16.msra.mxu0 %v3439
        %5541 = vmatprep.subr.bf16.mxu0 %v3432
        %5542 = vmatpush2.bf16.msra.mxu0 %v3431
        %5543 = vmatprep.mubr.bf16.mxu0 %v1065
        %5544 = vmatmul.mubr.bf16.gmra.mxu0 %v1064
        %v5545 = vpop.f32.mrf.mxu0
        %v5546 = vadd.f32 %v5503, %v5545
        %v5547 = vpop.f32.mrf.mxu0
        %v5548 = vadd.f32 %v5505, %v5547
        %v5549 = vpop.f32.mrf.mxu0
        %v5550 = vadd.f32 %v5507, %v5549
        %v5551 = vpop.f32.mrf.mxu0
        %v5552 = vadd.f32 %v5509, %v5551
        %5553 = vdwg.mxu0
        %5554 = vmatprep.subr.bf16.mxu0 %v3552
        %5555 = vmatpush1.bf16.msra.mxu0 %v3551
        %5556 = vmatprep.subr.bf16.mxu0 %v3544
        %5557 = vmatpush1.bf16.msra.mxu0 %v3543
        %5558 = vmatprep.subr.bf16.mxu0 %v3536
        %5559 = vmatpush1.bf16.msra.mxu0 %v3535
        %5560 = vmatprep.subr.bf16.mxu0 %v3528
        %5561 = vmatpush1.bf16.msra.mxu0 %v3527
        %5562 = vmatprep.subr.bf16.mxu0 %v3520
        %5563 = vmatpush1.bf16.msra.mxu0 %v3519
        %5564 = vmatprep.subr.bf16.mxu0 %v3512
        %5565 = vmatpush1.bf16.msra.mxu0 %v3511
        %5566 = vmatprep.subr.bf16.mxu0 %v3504
        %5567 = vmatpush1.bf16.msra.mxu0 %v3503
        %5568 = vmatprep.subr.bf16.mxu0 %v3496
        %5569 = vmatpush1.bf16.msra.mxu0 %v3495
        %5570 = vmatprep.subr.bf16.mxu0 %v3616
        %5571 = vmatpush2.bf16.msra.mxu0 %v3615
        %5572 = vmatprep.subr.bf16.mxu0 %v3608
        %5573 = vmatpush2.bf16.msra.mxu0 %v3607
        %5574 = vmatprep.subr.bf16.mxu0 %v3600
        %5575 = vmatpush2.bf16.msra.mxu0 %v3599
        %5576 = vmatprep.subr.bf16.mxu0 %v3592
        %5577 = vmatpush2.bf16.msra.mxu0 %v3591
        %5578 = vmatprep.subr.bf16.mxu0 %v3584
        %5579 = vmatpush2.bf16.msra.mxu0 %v3583
        %5580 = vmatprep.subr.bf16.mxu0 %v3576
        %5581 = vmatpush2.bf16.msra.mxu0 %v3575
        %5582 = vmatprep.subr.bf16.mxu0 %v3568
        %5583 = vmatpush2.bf16.msra.mxu0 %v3567
        %5584 = vmatprep.subr.bf16.mxu0 %v3560
        %5585 = vmatpush2.bf16.msra.mxu0 %v3559
        %5586 = vmatprep.mubr.bf16.mxu0 %v1067
        %5587 = vmatmul.mubr.bf16.gmra.mxu0 %v1066
        %v5588 = vpop.f32.mrf.mxu0
        %v5589 = vadd.f32 %v5546, %v5588
        %v5590 = vpop.f32.mrf.mxu0
        %v5591 = vadd.f32 %v5548, %v5590
        %v5592 = vpop.f32.mrf.mxu0
        %v5593 = vadd.f32 %v5550, %v5592
        %v5594 = vpop.f32.mrf.mxu0
        %v5595 = vadd.f32 %v5552, %v5594
        %5596 = vdwg.mxu0
        %5597 = vmatprep.subr.bf16.mxu0 %v3680
        %5598 = vmatpush1.bf16.msra.mxu0 %v3679
        %5599 = vmatprep.subr.bf16.mxu0 %v3672
        %5600 = vmatpush1.bf16.msra.mxu0 %v3671
        %5601 = vmatprep.subr.bf16.mxu0 %v3664
        %5602 = vmatpush1.bf16.msra.mxu0 %v3663
        %5603 = vmatprep.subr.bf16.mxu0 %v3656
        %5604 = vmatpush1.bf16.msra.mxu0 %v3655
        %5605 = vmatprep.subr.bf16.mxu0 %v3648
        %5606 = vmatpush1.bf16.msra.mxu0 %v3647
        %5607 = vmatprep.subr.bf16.mxu0 %v3640
        %5608 = vmatpush1.bf16.msra.mxu0 %v3639
        %5609 = vmatprep.subr.bf16.mxu0 %v3632
        %5610 = vmatpush1.bf16.msra.mxu0 %v3631
        %5611 = vmatprep.subr.bf16.mxu0 %v3624
        %5612 = vmatpush1.bf16.msra.mxu0 %v3623
        %5613 = vmatprep.subr.bf16.mxu0 %v3744
        %5614 = vmatpush2.bf16.msra.mxu0 %v3743
        %5615 = vmatprep.subr.bf16.mxu0 %v3736
        %5616 = vmatpush2.bf16.msra.mxu0 %v3735
        %5617 = vmatprep.subr.bf16.mxu0 %v3728
        %5618 = vmatpush2.bf16.msra.mxu0 %v3727
        %5619 = vmatprep.subr.bf16.mxu0 %v3720
        %5620 = vmatpush2.bf16.msra.mxu0 %v3719
        %5621 = vmatprep.subr.bf16.mxu0 %v3712
        %5622 = vmatpush2.bf16.msra.mxu0 %v3711
        %5623 = vmatprep.subr.bf16.mxu0 %v3704
        %5624 = vmatpush2.bf16.msra.mxu0 %v3703
        %5625 = vmatprep.subr.bf16.mxu0 %v3696
        %5626 = vmatpush2.bf16.msra.mxu0 %v3695
        %5627 = vmatprep.subr.bf16.mxu0 %v3688
        %5628 = vmatpush2.bf16.msra.mxu0 %v3687
        %5629 = vmatprep.mubr.bf16.mxu0 %v1069
        %5630 = vmatmul.mubr.bf16.gmra.mxu0 %v1068
        %v5631 = vpop.f32.mrf.mxu0
        %v5632 = vadd.f32 %v5589, %v5631
        %v5633 = vpop.f32.mrf.mxu0
        %v5634 = vadd.f32 %v5591, %v5633
        %v5635 = vpop.f32.mrf.mxu0
        %v5636 = vadd.f32 %v5593, %v5635
        %v5637 = vpop.f32.mrf.mxu0
        %v5638 = vadd.f32 %v5595, %v5637
        %5639 = vdwg.mxu0
        %5640 = vmatprep.subr.bf16.mxu0 %v3808
        %5641 = vmatpush1.bf16.msra.mxu0 %v3807
        %5642 = vmatprep.subr.bf16.mxu0 %v3800
        %5643 = vmatpush1.bf16.msra.mxu0 %v3799
        %5644 = vmatprep.subr.bf16.mxu0 %v3792
        %5645 = vmatpush1.bf16.msra.mxu0 %v3791
        %5646 = vmatprep.subr.bf16.mxu0 %v3784
        %5647 = vmatpush1.bf16.msra.mxu0 %v3783
        %5648 = vmatprep.subr.bf16.mxu0 %v3776
        %5649 = vmatpush1.bf16.msra.mxu0 %v3775
        %5650 = vmatprep.subr.bf16.mxu0 %v3768
        %5651 = vmatpush1.bf16.msra.mxu0 %v3767
        %5652 = vmatprep.subr.bf16.mxu0 %v3760
        %5653 = vmatpush1.bf16.msra.mxu0 %v3759
        %5654 = vmatprep.subr.bf16.mxu0 %v3752
        %5655 = vmatpush1.bf16.msra.mxu0 %v3751
        %5656 = vmatprep.subr.bf16.mxu0 %v3872
        %5657 = vmatpush2.bf16.msra.mxu0 %v3871
        %5658 = vmatprep.subr.bf16.mxu0 %v3864
        %5659 = vmatpush2.bf16.msra.mxu0 %v3863
        %5660 = vmatprep.subr.bf16.mxu0 %v3856
        %5661 = vmatpush2.bf16.msra.mxu0 %v3855
        %5662 = vmatprep.subr.bf16.mxu0 %v3848
        %5663 = vmatpush2.bf16.msra.mxu0 %v3847
        %5664 = vmatprep.subr.bf16.mxu0 %v3840
        %5665 = vmatpush2.bf16.msra.mxu0 %v3839
        %5666 = vmatprep.subr.bf16.mxu0 %v3832
        %5667 = vmatpush2.bf16.msra.mxu0 %v3831
        %5668 = vmatprep.subr.bf16.mxu0 %v3824
        %5669 = vmatpush2.bf16.msra.mxu0 %v3823
        %5670 = vmatprep.subr.bf16.mxu0 %v3816
        %5671 = vmatpush2.bf16.msra.mxu0 %v3815
        %5672 = vmatprep.mubr.bf16.mxu0 %v1071
        %5673 = vmatmul.mubr.bf16.gmra.mxu0 %v1070
        %v5674 = vpop.f32.mrf.mxu0
        %v5675 = vadd.f32 %v5632, %v5674
        %v5676 = vpop.f32.mrf.mxu0
        %v5677 = vadd.f32 %v5634, %v5676
        %v5678 = vpop.f32.mrf.mxu0
        %v5679 = vadd.f32 %v5636, %v5678
        %v5680 = vpop.f32.mrf.mxu0
        %v5681 = vadd.f32 %v5638, %v5680
        %5682 = vdwg.mxu0
        %5683 = vmatprep.subr.bf16.mxu0 %v3936
        %5684 = vmatpush1.bf16.msra.mxu0 %v3935
        %5685 = vmatprep.subr.bf16.mxu0 %v3928
        %5686 = vmatpush1.bf16.msra.mxu0 %v3927
        %5687 = vmatprep.subr.bf16.mxu0 %v3920
        %5688 = vmatpush1.bf16.msra.mxu0 %v3919
        %5689 = vmatprep.subr.bf16.mxu0 %v3912
        %5690 = vmatpush1.bf16.msra.mxu0 %v3911
        %5691 = vmatprep.subr.bf16.mxu0 %v3904
        %5692 = vmatpush1.bf16.msra.mxu0 %v3903
        %5693 = vmatprep.subr.bf16.mxu0 %v3896
        %5694 = vmatpush1.bf16.msra.mxu0 %v3895
        %5695 = vmatprep.subr.bf16.mxu0 %v3888
        %5696 = vmatpush1.bf16.msra.mxu0 %v3887
        %5697 = vmatprep.subr.bf16.mxu0 %v3880
        %5698 = vmatpush1.bf16.msra.mxu0 %v3879
        %5699 = vmatprep.subr.bf16.mxu0 0
        %5700 = vmatpush2.bf16.msra.mxu0 0
        %5701 = vmatprep.subr.bf16.mxu0 0
        %5702 = vmatpush2.bf16.msra.mxu0 0
        %5703 = vmatprep.subr.bf16.mxu0 0
        %5704 = vmatpush2.bf16.msra.mxu0 0
        %5705 = vmatprep.subr.bf16.mxu0 0
        %5706 = vmatpush2.bf16.msra.mxu0 0
        %5707 = vmatprep.subr.bf16.mxu0 0
        %5708 = vmatpush2.bf16.msra.mxu0 0
        %5709 = vmatprep.subr.bf16.mxu0 0
        %5710 = vmatpush2.bf16.msra.mxu0 0
        %5711 = vmatprep.subr.bf16.mxu0 %v4692
        %5712 = vmatpush2.bf16.msra.mxu0 %v4689
        %5713 = vmatprep.subr.bf16.mxu0 %v3944
        %5714 = vmatpush2.bf16.msra.mxu0 %v3943
        %5715 = vmatprep.mubr.bf16.mxu0 %v4667
        %5716 = vmatmul.mubr.bf16.gmra.mxu0 %v1072
        %v5717 = vpop.f32.mrf.mxu0
        %v5718 = vadd.f32 %v5675, %v5717
        %v5719 = vpop.f32.mrf.mxu0
        %v5720 = vadd.f32 %v5677, %v5719
        %v5721 = vpop.f32.mrf.mxu0
        %v5722 = vadd.f32 %v5679, %v5721
        %v5723 = vpop.f32.mrf.mxu0
        %v5724 = vadd.f32 %v5681, %v5723
        %5725 = vdwg.mxu0
        %v5726 = vadd.f32 %v4944, %v4948
        %v5727 = vrot.slane %v5726, 4
        %v5728 = vadd.f32 %v5726, %v5727
        %v5729 = vrot.slane %v5728, 2
        %v5730 = vadd.f32 %v5728, %v5729
        %v5731 = vrot.slane %v5730, 1
        %v5732 = vadd.f32 %v5730, %v5731
        %v5733 = vadd.f32 %v4946, %v4950
        %v5734 = vrot.slane %v5733, 4
        %v5735 = vadd.f32 %v5733, %v5734
        %v5736 = vrot.slane %v5735, 2
        %v5737 = vadd.f32 %v5735, %v5736
        %v5738 = vrot.slane %v5737, 1
        %v5739 = vadd.f32 %v5737, %v5738
        %v5740 = vadd.f32 %v5202, %v5206
        %v5741 = vrot.slane %v5740, 4
        %v5742 = vadd.f32 %v5740, %v5741
        %v5743 = vrot.slane %v5742, 2
        %v5744 = vadd.f32 %v5742, %v5743
        %v5745 = vrot.slane %v5744, 1
        %v5746 = vadd.f32 %v5744, %v5745
        %v5747 = vadd.f32 %v5204, %v5208
        %v5748 = vrot.slane %v5747, 4
        %v5749 = vadd.f32 %v5747, %v5748
        %v5750 = vrot.slane %v5749, 2
        %v5751 = vadd.f32 %v5749, %v5750
        %v5752 = vrot.slane %v5751, 1
        %v5753 = vadd.f32 %v5751, %v5752
        %v5754 = vadd.f32 %v5460, %v5464
        %v5755 = vrot.slane %v5754, 4
        %v5756 = vadd.f32 %v5754, %v5755
        %v5757 = vrot.slane %v5756, 2
        %v5758 = vadd.f32 %v5756, %v5757
        %v5759 = vrot.slane %v5758, 1
        %v5760 = vadd.f32 %v5758, %v5759
        %v5761 = vadd.f32 %v5462, %v5466
        %v5762 = vrot.slane %v5761, 4
        %v5763 = vadd.f32 %v5761, %v5762
        %v5764 = vrot.slane %v5763, 2
        %v5765 = vadd.f32 %v5763, %v5764
        %v5766 = vrot.slane %v5765, 1
        %v5767 = vadd.f32 %v5765, %v5766
        %v5768 = vadd.f32 %v5718, %v5722
        %v5769 = vrot.slane %v5768, 4
        %v5770 = vadd.f32 %v5768, %v5769
        %v5771 = vrot.slane %v5770, 2
        %v5772 = vadd.f32 %v5770, %v5771
        %v5773 = vrot.slane %v5772, 1
        %v5774 = vadd.f32 %v5772, %v5773
        %v5775 = vadd.f32 %v5720, %v5724
        %v5776 = vrot.slane %v5775, 4
        %v5777 = vadd.f32 %v5775, %v5776
        %v5778 = vrot.slane %v5777, 2
        %v5779 = vadd.f32 %v5777, %v5778
        %v5780 = vrot.slane %v5779, 1
        %v5781 = vadd.f32 %v5779, %v5780
        %v5782 = vld [vmem:[#allocation7] sm:$0xff]
        %v5783 = vld [vmem:[#allocation7 + $0x8] sm:$0xff]
        %v5784 = vld [vmem:[#allocation7 + $0x10] sm:$0xff]
        %v5785 = vld [vmem:[#allocation7 + $0x18] sm:$0xff]
        %v5786 = vld [vmem:[#allocation7 + $0x20] sm:$0xff]
        %v5787 = vld [vmem:[#allocation7 + $0x28] sm:$0xff]
        %v5788 = vld [vmem:[#allocation7 + $0x30] sm:$0xff]
        %v5789 = vld [vmem:[#allocation7 + $0x38] sm:$0xff]
        %v5790 = vld [vmem:[#allocation7 + $0x40] sm:$0xff]
        %v5791 = vld [vmem:[#allocation7 + $0x48] sm:$0xff]
        %v5792 = vld [vmem:[#allocation7 + $0x50] sm:$0xff]
        %v5793 = vld [vmem:[#allocation7 + $0x58] sm:$0xff]
        %v5794 = vld [vmem:[#allocation7 + $0x60] sm:$0xff]
        %v5795 = vld [vmem:[#allocation7 + $0x68] sm:$0xff]
        %v5796 = vld [vmem:[#allocation7 + $0x70] sm:$0xff]
        %v5797 = vld [vmem:[#allocation7 + $0x78] sm:$0xff]
        %v5798 = vld [vmem:[#allocation7 + $0x80] sm:$0xff]
        %v5799 = vld [vmem:[#allocation7 + $0x88] sm:$0xff]
        %v5800 = vld [vmem:[#allocation7 + $0x90] sm:$0xff]
        %v5801 = vld [vmem:[#allocation7 + $0x98] sm:$0xff]
        %v5802 = vld [vmem:[#allocation7 + $0xa0] sm:$0xff]
        %v5803 = vld [vmem:[#allocation7 + $0xa8] sm:$0xff]
        %v5804 = vld [vmem:[#allocation7 + $0xb0] sm:$0xff]
        %v5805 = vld [vmem:[#allocation7 + $0xb8] sm:$0xff]
        %v5806 = vld [vmem:[#allocation7 + $0xc0] sm:$0xff]
        %v5807 = vld [vmem:[#allocation7 + $0xc8] sm:$0xff]
        %v5808 = vld [vmem:[#allocation7 + $0xd0] sm:$0xff]
        %v5809 = vld [vmem:[#allocation7 + $0xd8] sm:$0xff]
        %v5810 = vld [vmem:[#allocation7 + $0xe0] sm:$0xff]
        %v5811 = vld [vmem:[#allocation7 + $0xe8] sm:$0xff]
        %v5812 = vld [vmem:[#allocation7 + $0xf0] sm:$0xff]
        %v5813 = vld [vmem:[#allocation7 + $0xf8] sm:$0xff]
        %v5814 = vld [vmem:[#allocation7 + $0x100] sm:$0xff]
        %v5815 = vld [vmem:[#allocation7 + $0x108] sm:$0xff]
        %v5816 = vld [vmem:[#allocation7 + $0x110] sm:$0xff]
        %v5817 = vld [vmem:[#allocation7 + $0x118] sm:$0xff]
        %v5818 = vld [vmem:[#allocation7 + $0x120] sm:$0xff]
        %v5819 = vld [vmem:[#allocation7 + $0x128] sm:$0xff]
        %v5820 = vld [vmem:[#allocation7 + $0x130] sm:$0xff]
        %v5821 = vld [vmem:[#allocation7 + $0x138] sm:$0xff]
        %v5822 = vld [vmem:[#allocation7 + $0x140] sm:$0xff]
        %v5823 = vld [vmem:[#allocation7 + $0x148] sm:$0xff]
        %v5824 = vld [vmem:[#allocation7 + $0x150] sm:$0xff]
        %v5825 = vld [vmem:[#allocation7 + $0x158] sm:$0xff]
        %v5826 = vld [vmem:[#allocation7 + $0x160] sm:$0xff]
        %v5827 = vld [vmem:[#allocation7 + $0x168] sm:$0xff]
        %v5828 = vld [vmem:[#allocation7 + $0x170] sm:$0xff]
        %v5829 = vld [vmem:[#allocation7 + $0x178] sm:$0xff]
        %v5830 = vld [vmem:[#allocation7 + $0x180] sm:$0xff]
        %v5831 = vld [vmem:[#allocation7 + $0x188] sm:$0xff]
        %v5832 = vld [vmem:[#allocation7 + $0x190] sm:$0xff]
        %v5833 = vld [vmem:[#allocation7 + $0x198] sm:$0xff]
        %v5834 = vld [vmem:[#allocation7 + $0x1a0] sm:$0xff]
        %v5835 = vld [vmem:[#allocation7 + $0x1a8] sm:$0xff]
        %v5836 = vld [vmem:[#allocation7 + $0x1b0] sm:$0xff]
        %v5837 = vld [vmem:[#allocation7 + $0x1b8] sm:$0xff]
        %v5838 = vld [vmem:[#allocation7 + $0x1c0] sm:$0xff]
        %v5839 = vld [vmem:[#allocation7 + $0x1c8] sm:$0xff]
        %v5840 = vld [vmem:[#allocation7 + $0x1d0] sm:$0xff]
        %v5841 = vld [vmem:[#allocation7 + $0x1d8] sm:$0xff]
        %v5842 = vld [vmem:[#allocation7 + $0x1e0] sm:$0xff]
        %v5843 = vld [vmem:[#allocation7 + $0x1e8] sm:$0xff]
        %v5844 = vld [vmem:[#allocation7 + $0x1f0] sm:$0xff]
        %v5845 = vld [vmem:[#allocation7 + $0x1f8] sm:$0xff]
        %v5846 = vld [vmem:[#allocation7 + $0x200] sm:$0xff]
        %v5847 = vld [vmem:[#allocation7 + $0x208] sm:$0xff]
        %v5848 = vld [vmem:[#allocation7 + $0x210] sm:$0xff]
        %v5849 = vld [vmem:[#allocation7 + $0x218] sm:$0xff]
        %v5850 = vld [vmem:[#allocation7 + $0x220] sm:$0xff]
        %v5851 = vld [vmem:[#allocation7 + $0x228] sm:$0xff]
        %v5852 = vld [vmem:[#allocation7 + $0x230] sm:$0xff]
        %v5853 = vld [vmem:[#allocation7 + $0x238] sm:$0xff]
        %v5854 = vld [vmem:[#allocation7 + $0x240] sm:$0xff]
        %v5855 = vld [vmem:[#allocation7 + $0x248] sm:$0xff]
        %v5856 = vld [vmem:[#allocation7 + $0x250] sm:$0xff]
        %v5857 = vld [vmem:[#allocation7 + $0x258] sm:$0xff]
        %v5858 = vld [vmem:[#allocation7 + $0x260] sm:$0xff]
        %v5859 = vld [vmem:[#allocation7 + $0x268] sm:$0xff]
        %v5860 = vld [vmem:[#allocation7 + $0x270] sm:$0xff]
        %v5861 = vld [vmem:[#allocation7 + $0x278] sm:$0xff]
        %v5862 = vld [vmem:[#allocation7 + $0x280] sm:$0xff]
        %v5863 = vld [vmem:[#allocation7 + $0x288] sm:$0xff]
        %v5864 = vld [vmem:[#allocation7 + $0x290] sm:$0xff]
        %v5865 = vld [vmem:[#allocation7 + $0x298] sm:$0xff]
        %v5866 = vld [vmem:[#allocation7 + $0x2a0] sm:$0xff]
        %v5867 = vld [vmem:[#allocation7 + $0x2a8] sm:$0xff]
        %v5868 = vld [vmem:[#allocation7 + $0x2b0] sm:$0xff]
        %v5869 = vld [vmem:[#allocation7 + $0x2b8] sm:$0xff]
        %v5870 = vld [vmem:[#allocation7 + $0x2c0] sm:$0xff]
        %v5871 = vld [vmem:[#allocation7 + $0x2c8] sm:$0xff]
        %v5872 = vld [vmem:[#allocation7 + $0x2d0] sm:$0xff]
        %v5873 = vld [vmem:[#allocation7 + $0x2d8] sm:$0xff]
        %v5874 = vld [vmem:[#allocation7 + $0x2e0] sm:$0xff]
        %v5875 = vld [vmem:[#allocation7 + $0x2e8] sm:$0xff]
        %v5876 = vld [vmem:[#allocation7 + $0x2f0] sm:$0xff]
        %v5877 = vld [vmem:[#allocation7 + $0x2f8] sm:$0xff]
        %v5878 = vld [vmem:[#allocation7 + $0x300] sm:$0xff]
        %v5879 = vld [vmem:[#allocation7 + $0x308] sm:$0xff]
        %v5880 = vld [vmem:[#allocation7 + $0x310] sm:$0xff]
        %v5881 = vld [vmem:[#allocation7 + $0x318] sm:$0xff]
        %v5882 = vld [vmem:[#allocation7 + $0x320] sm:$0xff]
        %v5883 = vld [vmem:[#allocation7 + $0x328] sm:$0xff]
        %v5884 = vld [vmem:[#allocation7 + $0x330] sm:$0xff]
        %v5885 = vld [vmem:[#allocation7 + $0x338] sm:$0xff]
        %v5886 = vld [vmem:[#allocation7 + $0x340] sm:$0xff]
        %v5887 = vld [vmem:[#allocation7 + $0x348] sm:$0xff]
        %v5888 = vld [vmem:[#allocation7 + $0x350] sm:$0xff]
        %v5889 = vld [vmem:[#allocation7 + $0x358] sm:$0xff]
        %v5890 = vld [vmem:[#allocation7 + $0x360] sm:$0xff]
        %v5891 = vld [vmem:[#allocation7 + $0x368] sm:$0xff]
        %v5892 = vld [vmem:[#allocation7 + $0x370] sm:$0xff]
        %v5893 = vld [vmem:[#allocation7 + $0x378] sm:$0xff]
        %v5894 = vld [vmem:[#allocation7 + $0x380] sm:$0xff]
        %v5895 = vld [vmem:[#allocation7 + $0x388] sm:$0xff]
        %v5896 = vld [vmem:[#allocation7 + $0x390] sm:$0xff]
        %v5897 = vld [vmem:[#allocation7 + $0x398] sm:$0xff]
        %v5898 = vld [vmem:[#allocation7 + $0x3a0] sm:$0xff]
        %v5899 = vld [vmem:[#allocation7 + $0x3a8] sm:$0xff]
        %v5900 = vld [vmem:[#allocation7 + $0x3b0] sm:$0xff]
        %v5901 = vld [vmem:[#allocation7 + $0x3b8] sm:$0xff]
        %v5902 = vld [vmem:[#allocation7 + $0x3c0] sm:$0xff]
        %v5903 = vld [vmem:[#allocation7 + $0x3c8] sm:$0xff]
        %v5904 = vld [vmem:[#allocation7 + $0x3d0] sm:$0xff]
        %v5905 = vld [vmem:[#allocation7 + $0x3d8] sm:$0xff]
        %v5906 = vld [vmem:[#allocation7 + $0x3e0] sm:$0xff]
        %v5907 = vld [vmem:[#allocation7 + $0x3e8] sm:$0xff]
        %v5908 = vld [vmem:[#allocation7 + $0x3f0] sm:$0xff]
        %v5909 = vld [vmem:[#allocation7 + $0x3f8] sm:$0xff]
        %v5910 = vld [vmem:[#allocation7 + $0x400] sm:$0xff]
        %v5911 = vld [vmem:[#allocation7 + $0x408] sm:$0xff]
        %v5912 = vld [vmem:[#allocation7 + $0x410] sm:$0xff]
        %v5913 = vld [vmem:[#allocation7 + $0x418] sm:$0xff]
        %v5914 = vld [vmem:[#allocation7 + $0x420] sm:$0xff]
        %v5915 = vld [vmem:[#allocation7 + $0x428] sm:$0xff]
        %v5916 = vld [vmem:[#allocation7 + $0x430] sm:$0xff]
        %v5917 = vld [vmem:[#allocation7 + $0x438] sm:$0xff]
        %v5918 = vld [vmem:[#allocation7 + $0x440] sm:$0xff]
        %v5919 = vld [vmem:[#allocation7 + $0x448] sm:$0xff]
        %v5920 = vld [vmem:[#allocation7 + $0x450] sm:$0xff]
        %v5921 = vld [vmem:[#allocation7 + $0x458] sm:$0xff]
        %v5922 = vld [vmem:[#allocation7 + $0x460] sm:$0xff]
        %v5923 = vld [vmem:[#allocation7 + $0x468] sm:$0xff]
        %v5924 = vld [vmem:[#allocation7 + $0x470] sm:$0xff]
        %v5925 = vld [vmem:[#allocation7 + $0x478] sm:$0xff]
        %v5926 = vld [vmem:[#allocation7 + $0x480] sm:$0xff]
        %v5927 = vld [vmem:[#allocation7 + $0x488] sm:$0xff]
        %v5928 = vld [vmem:[#allocation7 + $0x490] sm:$0xff]
        %v5929 = vld [vmem:[#allocation7 + $0x498] sm:$0xff]
        %v5930 = vld [vmem:[#allocation7 + $0x4a0] sm:$0xff]
        %v5931 = vld [vmem:[#allocation7 + $0x4a8] sm:$0xff]
        %v5932 = vld [vmem:[#allocation7 + $0x4b0] sm:$0xff]
        %v5933 = vld [vmem:[#allocation7 + $0x4b8] sm:$0xff]
        %v5934 = vld [vmem:[#allocation7 + $0x4c0] sm:$0xff]
        %v5935 = vld [vmem:[#allocation7 + $0x4c8] sm:$0xff]
        %v5936 = vld [vmem:[#allocation7 + $0x4d0] sm:$0xff]
        %v5937 = vld [vmem:[#allocation7 + $0x4d8] sm:$0xff]
        %v5938 = vld [vmem:[#allocation7 + $0x4e0] sm:$0xff]
        %v5939 = vld [vmem:[#allocation7 + $0x4e8] sm:$0xff]
        %v5940 = vld [vmem:[#allocation7 + $0x4f0] sm:$0xff]
        %v5941 = vld [vmem:[#allocation7 + $0x4f8] sm:$0xff]
        %v5942 = vld [vmem:[#allocation7 + $0x500] sm:$0xff]
        %v5943 = vld [vmem:[#allocation7 + $0x508] sm:$0xff]
        %v5944 = vld [vmem:[#allocation7 + $0x510] sm:$0xff]
        %v5945 = vld [vmem:[#allocation7 + $0x518] sm:$0xff]
        %v5946 = vld [vmem:[#allocation7 + $0x520] sm:$0xff]
        %v5947 = vld [vmem:[#allocation7 + $0x528] sm:$0xff]
        %v5948 = vld [vmem:[#allocation7 + $0x530] sm:$0xff]
        %v5949 = vld [vmem:[#allocation7 + $0x538] sm:$0xff]
        %v5950 = vld [vmem:[#allocation7 + $0x540] sm:$0xff]
        %v5951 = vld [vmem:[#allocation7 + $0x548] sm:$0xff]
        %v5952 = vld [vmem:[#allocation7 + $0x550] sm:$0xff]
        %v5953 = vld [vmem:[#allocation7 + $0x558] sm:$0xff]
        %v5954 = vld [vmem:[#allocation7 + $0x560] sm:$0xff]
        %v5955 = vld [vmem:[#allocation7 + $0x568] sm:$0xff]
        %v5956 = vld [vmem:[#allocation7 + $0x570] sm:$0xff]
        %v5957 = vld [vmem:[#allocation7 + $0x578] sm:$0xff]
        %v5958 = vld [vmem:[#allocation7 + $0x580] sm:$0xff]
        %v5959 = vld [vmem:[#allocation7 + $0x588] sm:$0xff]
        %v5960 = vld [vmem:[#allocation7 + $0x590] sm:$0xff]
        %v5961 = vld [vmem:[#allocation7 + $0x598] sm:$0xff]
        %v5962 = vld [vmem:[#allocation7 + $0x5a0] sm:$0xff]
        %v5963 = vld [vmem:[#allocation7 + $0x5a8] sm:$0xff]
        %v5964 = vld [vmem:[#allocation7 + $0x5b0] sm:$0xff]
        %v5965 = vld [vmem:[#allocation7 + $0x5b8] sm:$0xff]
        %v5966 = vld [vmem:[#allocation7 + $0x5c0] sm:$0xff]
        %v5967 = vld [vmem:[#allocation7 + $0x5c8] sm:$0xff]
        %v5968 = vld [vmem:[#allocation7 + $0x5d0] sm:$0xff]
        %v5969 = vld [vmem:[#allocation7 + $0x5d8] sm:$0xff]
        %v5970 = vld [vmem:[#allocation7 + $0x5e0] sm:$0xff]
        %v5971 = vld [vmem:[#allocation7 + $0x5e8] sm:$0xff]
        %v5972 = vld [vmem:[#allocation7 + $0x5f0] sm:$0xff]
        %v5973 = vld [vmem:[#allocation7 + $0x5f8] sm:$0xff]
        %v5974 = vld [vmem:[#allocation7 + $0x600] sm:$0xff]
        %v5975 = vld [vmem:[#allocation7 + $0x608] sm:$0xff]
        %v5976 = vld [vmem:[#allocation7 + $0x610] sm:$0xff]
        %v5977 = vld [vmem:[#allocation7 + $0x618] sm:$0xff]
        %v5978 = vld [vmem:[#allocation7 + $0x620] sm:$0xff]
        %v5979 = vld [vmem:[#allocation7 + $0x628] sm:$0xff]
        %v5980 = vld [vmem:[#allocation7 + $0x630] sm:$0xff]
        %v5981 = vld [vmem:[#allocation7 + $0x638] sm:$0xff]
        %v5982 = vld [vmem:[#allocation7 + $0x640] sm:$0xff]
        %v5983 = vld [vmem:[#allocation7 + $0x648] sm:$0xff]
        %v5984 = vld [vmem:[#allocation7 + $0x650] sm:$0xff]
        %v5985 = vld [vmem:[#allocation7 + $0x658] sm:$0xff]
        %v5986 = vld [vmem:[#allocation7 + $0x660] sm:$0xff]
        %v5987 = vld [vmem:[#allocation7 + $0x668] sm:$0xff]
        %v5988 = vld [vmem:[#allocation7 + $0x670] sm:$0xff]
        %v5989 = vld [vmem:[#allocation7 + $0x678] sm:$0xff]
        %v5990 = vld [vmem:[#allocation7 + $0x680] sm:$0xff]
        %v5991 = vld [vmem:[#allocation7 + $0x688] sm:$0xff]
        %v5992 = vld [vmem:[#allocation7 + $0x690] sm:$0xff]
        %v5993 = vld [vmem:[#allocation7 + $0x698] sm:$0xff]
        %v5994 = vld [vmem:[#allocation7 + $0x6a0] sm:$0xff]
        %v5995 = vld [vmem:[#allocation7 + $0x6a8] sm:$0xff]
        %v5996 = vld [vmem:[#allocation7 + $0x6b0] sm:$0xff]
        %v5997 = vld [vmem:[#allocation7 + $0x6b8] sm:$0xff]
        %v5998 = vld [vmem:[#allocation7 + $0x6c0] sm:$0xff]
        %v5999 = vld [vmem:[#allocation7 + $0x6c8] sm:$0xff]
        %v6000 = vld [vmem:[#allocation7 + $0x6d0] sm:$0xff]
        %v6001 = vld [vmem:[#allocation7 + $0x6d8] sm:$0xff]
        %v6002 = vld [vmem:[#allocation7 + $0x6e0] sm:$0xff]
        %v6003 = vld [vmem:[#allocation7 + $0x6e8] sm:$0xff]
        %v6004 = vld [vmem:[#allocation7 + $0x6f0] sm:$0xff]
        %v6005 = vld [vmem:[#allocation7 + $0x6f8] sm:$0xff]
        %v6006 = vld [vmem:[#allocation7 + $0x700] sm:$0xff]
        %v6007 = vld [vmem:[#allocation7 + $0x708] sm:$0xff]
        %v6008 = vld [vmem:[#allocation7 + $0x710] sm:$0xff]
        %v6009 = vld [vmem:[#allocation7 + $0x718] sm:$0xff]
        %v6010 = vld [vmem:[#allocation7 + $0x720] sm:$0xff]
        %v6011 = vld [vmem:[#allocation7 + $0x728] sm:$0xff]
        %v6012 = vld [vmem:[#allocation7 + $0x730] sm:$0xff]
        %v6013 = vld [vmem:[#allocation7 + $0x738] sm:$0xff]
        %v6014 = vld [vmem:[#allocation7 + $0x740] sm:$0xff]
        %v6015 = vld [vmem:[#allocation7 + $0x748] sm:$0xff]
        %v6016 = vld [vmem:[#allocation7 + $0x750] sm:$0xff]
        %v6017 = vld [vmem:[#allocation7 + $0x758] sm:$0xff]
        %v6018 = vld [vmem:[#allocation7 + $0x760] sm:$0xff]
        %v6019 = vld [vmem:[#allocation7 + $0x768] sm:$0xff]
        %v6020 = vld [vmem:[#allocation7 + $0x770] sm:$0xff]
        %v6021 = vld [vmem:[#allocation7 + $0x778] sm:$0xff]
        %v6022 = vld [vmem:[#allocation7 + $0x780] sm:$0xff]
        %v6023 = vld [vmem:[#allocation7 + $0x788] sm:$0xff]
        %v6024 = vld [vmem:[#allocation7 + $0x790] sm:$0xff]
        %v6025 = vld [vmem:[#allocation7 + $0x798] sm:$0xff]
        %v6026 = vld [vmem:[#allocation7 + $0x7a0] sm:$0xff]
        %v6027 = vld [vmem:[#allocation7 + $0x7a8] sm:$0xff]
        %v6028 = vld [vmem:[#allocation7 + $0x7b0] sm:$0xff]
        %v6029 = vld [vmem:[#allocation7 + $0x7b8] sm:$0xff]
        %v6030 = vld [vmem:[#allocation7 + $0x7c0] sm:$0xff]
        %v6031 = vld [vmem:[#allocation7 + $0x7c8] sm:$0xff]
        %v6032 = vld [vmem:[#allocation7 + $0x7d0] sm:$0xff]
        %v6033 = vld [vmem:[#allocation7 + $0x7d8] sm:$0xff]
        %v6034 = vld [vmem:[#allocation7 + $0x7e0] sm:$0xff]
        %v6035 = vld [vmem:[#allocation7 + $0x7e8] sm:$0xff]
        %v6036 = vld [vmem:[#allocation7 + $0x7f0] sm:$0xff]
        %v6037 = vld [vmem:[#allocation7 + $0x7f8] sm:$0xff]
        %v6038 = vld [vmem:[#allocation7 + $0x800] sm:$0xff]
        %v6039 = vld [vmem:[#allocation7 + $0x808] sm:$0xff]
        %v6040 = vld [vmem:[#allocation7 + $0x810] sm:$0xff]
        %v6041 = vld [vmem:[#allocation7 + $0x818] sm:$0xff]
        %v6042 = vld [vmem:[#allocation7 + $0x820] sm:$0xff]
        %v6043 = vld [vmem:[#allocation7 + $0x828] sm:$0xff]
        %v6044 = vld [vmem:[#allocation7 + $0x830] sm:$0xff]
        %v6045 = vld [vmem:[#allocation7 + $0x838] sm:$0xff]
        %v6046 = vld [vmem:[#allocation7 + $0x840] sm:$0xff]
        %v6047 = vld [vmem:[#allocation7 + $0x848] sm:$0xff]
        %v6048 = vld [vmem:[#allocation7 + $0x850] sm:$0xff]
        %v6049 = vld [vmem:[#allocation7 + $0x858] sm:$0xff]
        %v6050 = vld [vmem:[#allocation7 + $0x860] sm:$0xff]
        %v6051 = vld [vmem:[#allocation7 + $0x868] sm:$0xff]
        %v6052 = vld [vmem:[#allocation7 + $0x870] sm:$0xff]
        %v6053 = vld [vmem:[#allocation7 + $0x878] sm:$0xff]
        %v6054 = vld [vmem:[#allocation7 + $0x880] sm:$0xff]
        %v6055 = vld [vmem:[#allocation7 + $0x888] sm:$0xff]
        %v6056 = vld [vmem:[#allocation7 + $0x890] sm:$0xff]
        %v6057 = vld [vmem:[#allocation7 + $0x898] sm:$0xff]
        %v6058 = vld [vmem:[#allocation7 + $0x8a0] sm:$0xff]
        %v6059 = vld [vmem:[#allocation7 + $0x8a8] sm:$0xff]
        %v6060 = vld [vmem:[#allocation7 + $0x8b0] sm:$0xff]
        %v6061 = vld [vmem:[#allocation7 + $0x8b8] sm:$0xff]
        %v6062 = vld [vmem:[#allocation7 + $0x8c0] sm:$0xff]
        %v6063 = vld [vmem:[#allocation7 + $0x8c8] sm:$0xff]
        %v6064 = vld [vmem:[#allocation7 + $0x8d0] sm:$0xff]
        %v6065 = vld [vmem:[#allocation7 + $0x8d8] sm:$0xff]
        %v6066 = vld [vmem:[#allocation7 + $0x8e0] sm:$0xff]
        %v6067 = vld [vmem:[#allocation7 + $0x8e8] sm:$0xff]
        %v6068 = vld [vmem:[#allocation7 + $0x8f0] sm:$0xff]
        %v6069 = vld [vmem:[#allocation7 + $0x8f8] sm:$0xff]
        %v6070 = vld [vmem:[#allocation7 + $0x900] sm:$0xff]
        %v6071 = vld [vmem:[#allocation7 + $0x908] sm:$0xff]
        %v6072 = vld [vmem:[#allocation7 + $0x910] sm:$0xff]
        %v6073 = vld [vmem:[#allocation7 + $0x918] sm:$0xff]
        %v6074 = vld [vmem:[#allocation7 + $0x920] sm:$0xff]
        %v6075 = vld [vmem:[#allocation7 + $0x928] sm:$0xff]
        %v6076 = vld [vmem:[#allocation7 + $0x930] sm:$0xff]
        %v6077 = vld [vmem:[#allocation7 + $0x938] sm:$0xff]
        %v6078 = vld [vmem:[#allocation7 + $0x940] sm:$0xff]
        %v6079 = vld [vmem:[#allocation7 + $0x948] sm:$0xff]
        %v6080 = vld [vmem:[#allocation7 + $0x950] sm:$0xff]
        %v6081 = vld [vmem:[#allocation7 + $0x958] sm:$0xff]
        %v6082 = vld [vmem:[#allocation7 + $0x960] sm:$0xff]
        %v6083 = vld [vmem:[#allocation7 + $0x968] sm:$0xff]
        %v6084 = vld [vmem:[#allocation7 + $0x970] sm:$0xff]
        %v6085 = vld [vmem:[#allocation7 + $0x978] sm:$0xff]
        %v6086 = vld [vmem:[#allocation7 + $0x980] sm:$0xff]
        %v6087 = vld [vmem:[#allocation7 + $0x988] sm:$0xff]
        %v6088 = vld [vmem:[#allocation7 + $0x990] sm:$0xff]
        %v6089 = vld [vmem:[#allocation7 + $0x998] sm:$0xff]
        %v6090 = vld [vmem:[#allocation7 + $0x9a0] sm:$0xff]
        %v6091 = vld [vmem:[#allocation7 + $0x9a8] sm:$0xff]
        %v6092 = vld [vmem:[#allocation7 + $0x9b0] sm:$0xff]
        %v6093 = vld [vmem:[#allocation7 + $0x9b8] sm:$0xff]
        %v6094 = vld [vmem:[#allocation7 + $0x9c0] sm:$0xff]
        %v6095 = vld [vmem:[#allocation7 + $0x9c8] sm:$0xff]
        %v6096 = vld [vmem:[#allocation7 + $0x9d0] sm:$0xff]
        %v6097 = vld [vmem:[#allocation7 + $0x9d8] sm:$0xff]
        %v6098 = vld [vmem:[#allocation7 + $0x9e0] sm:$0xff]
        %v6099 = vld [vmem:[#allocation7 + $0x9e8] sm:$0xff]
        %v6100 = vld [vmem:[#allocation7 + $0x9f0] sm:$0xff]
        %v6101 = vld [vmem:[#allocation7 + $0x9f8] sm:$0xff]
        %v6102 = vld [vmem:[#allocation7 + $0xa00] sm:$0xff]
        %v6103 = vld [vmem:[#allocation7 + $0xa08] sm:$0xff]
        %v6104 = vld [vmem:[#allocation7 + $0xa10] sm:$0xff]
        %v6105 = vld [vmem:[#allocation7 + $0xa18] sm:$0xff]
        %v6106 = vld [vmem:[#allocation7 + $0xa20] sm:$0xff]
        %v6107 = vld [vmem:[#allocation7 + $0xa28] sm:$0xff]
        %v6108 = vld [vmem:[#allocation7 + $0xa30] sm:$0xff]
        %v6109 = vld [vmem:[#allocation7 + $0xa38] sm:$0xff]
        %v6110 = vld [vmem:[#allocation7 + $0xa40] sm:$0xff]
        %v6111 = vld [vmem:[#allocation7 + $0xa48] sm:$0xff]
        %v6112 = vld [vmem:[#allocation7 + $0xa50] sm:$0xff]
        %v6113 = vld [vmem:[#allocation7 + $0xa58] sm:$0xff]
        %v6114 = vld [vmem:[#allocation7 + $0xa60] sm:$0xff]
        %v6115 = vld [vmem:[#allocation7 + $0xa68] sm:$0xff]
        %v6116 = vld [vmem:[#allocation7 + $0xa70] sm:$0xff]
        %v6117 = vld [vmem:[#allocation7 + $0xa78] sm:$0xff]
        %v6118 = vld [vmem:[#allocation7 + $0xa80] sm:$0xff]
        %v6119 = vld [vmem:[#allocation7 + $0xa88] sm:$0xff]
        %v6120 = vld [vmem:[#allocation7 + $0xa90] sm:$0xff]
        %v6121 = vld [vmem:[#allocation7 + $0xa98] sm:$0xff]
        %v6122 = vld [vmem:[#allocation7 + $0xaa0] sm:$0xff]
        %v6123 = vld [vmem:[#allocation7 + $0xaa8] sm:$0xff]
        %v6124 = vld [vmem:[#allocation7 + $0xab0] sm:$0xff]
        %v6125 = vld [vmem:[#allocation7 + $0xab8] sm:$0xff]
        %v6126 = vld [vmem:[#allocation7 + $0xac0] sm:$0xff]
        %v6127 = vld [vmem:[#allocation7 + $0xac8] sm:$0xff]
        %v6128 = vld [vmem:[#allocation7 + $0xad0] sm:$0xff]
        %v6129 = vld [vmem:[#allocation7 + $0xad8] sm:$0xff]
        %v6130 = vld [vmem:[#allocation7 + $0xae0] sm:$0xff]
        %v6131 = vld [vmem:[#allocation7 + $0xae8] sm:$0xff]
        %v6132 = vld [vmem:[#allocation7 + $0xaf0] sm:$0xff]
        %v6133 = vld [vmem:[#allocation7 + $0xaf8] sm:$0xff]
        %v6134 = vld [vmem:[#allocation7 + $0xb00] sm:$0xff]
        %v6135 = vld [vmem:[#allocation7 + $0xb08] sm:$0xff]
        %v6136 = vld [vmem:[#allocation7 + $0xb10] sm:$0xff]
        %v6137 = vld [vmem:[#allocation7 + $0xb18] sm:$0xff]
        %v6138 = vld [vmem:[#allocation7 + $0xb20] sm:$0xff]
        %v6139 = vld [vmem:[#allocation7 + $0xb28] sm:$0xff]
        %v6140 = vld [vmem:[#allocation7 + $0xb30] sm:$0xff]
        %v6141 = vld [vmem:[#allocation7 + $0xb38] sm:$0xff]
        %v6142 = vld [vmem:[#allocation7 + $0xb40] sm:$0xff]
        %v6143 = vld [vmem:[#allocation7 + $0xb48] sm:$0xff]
        %v6144 = vld [vmem:[#allocation7 + $0xb50] sm:$0xff]
        %v6145 = vld [vmem:[#allocation7 + $0xb58] sm:$0xff]
        %v6146 = vld [vmem:[#allocation7 + $0xb60] sm:$0xff]
        %v6147 = vld [vmem:[#allocation7 + $0xb68] sm:$0xff]
        %v6148 = vld [vmem:[#allocation7 + $0xb70] sm:$0xff]
        %v6149 = vld [vmem:[#allocation7 + $0xb78] sm:$0xff]
        %v6150 = vld [vmem:[#allocation7 + $0xb80] sm:$0xff]
        %v6151 = vld [vmem:[#allocation7 + $0xb88] sm:$0xff]
        %v6152 = vld [vmem:[#allocation7 + $0xb90] sm:$0xff]
        %v6153 = vld [vmem:[#allocation7 + $0xb98] sm:$0xff]
        %v6154 = vld [vmem:[#allocation7 + $0xba0] sm:$0xff]
        %v6155 = vld [vmem:[#allocation7 + $0xba8] sm:$0xff]
        %v6156 = vld [vmem:[#allocation7 + $0xbb0] sm:$0xff]
        %v6157 = vld [vmem:[#allocation7 + $0xbb8] sm:$0xff]
        %v6158 = vld [vmem:[#allocation7 + $0xbc0] sm:$0xff]
        %v6159 = vld [vmem:[#allocation7 + $0xbc8] sm:$0xff]
        %v6160 = vld [vmem:[#allocation7 + $0xbd0] sm:$0xff]
        %v6161 = vld [vmem:[#allocation7 + $0xbd8] sm:$0xff]
        %v6162 = vld [vmem:[#allocation7 + $0xbe0] sm:$0xff]
        %v6163 = vld [vmem:[#allocation7 + $0xbe8] sm:$0xff]
        %v6164 = vld [vmem:[#allocation7 + $0xbf0] sm:$0xff]
        %v6165 = vld [vmem:[#allocation7 + $0xbf8] sm:$0xff]
        %v6166 = vld [vmem:[#allocation7 + $0xc00] sm:$0xff]
        %v6167 = vld [vmem:[#allocation7 + $0xc08] sm:$0xff]
        %v6168 = vld [vmem:[#allocation7 + $0xc10] sm:$0xff]
        %v6169 = vld [vmem:[#allocation7 + $0xc18] sm:$0xff]
        %v6170 = vld [vmem:[#allocation7 + $0xc20] sm:$0xff]
        %v6171 = vld [vmem:[#allocation7 + $0xc28] sm:$0xff]
        %v6172 = vld [vmem:[#allocation7 + $0xc30] sm:$0xff]
        %v6173 = vld [vmem:[#allocation7 + $0xc38] sm:$0xff]
        %v6174 = vld [vmem:[#allocation7 + $0xc40] sm:$0xff]
        %v6175 = vld [vmem:[#allocation7 + $0xc48] sm:$0xff]
        %v6176 = vld [vmem:[#allocation7 + $0xc50] sm:$0xff]
        %v6177 = vld [vmem:[#allocation7 + $0xc58] sm:$0xff]
        %v6178 = vld [vmem:[#allocation7 + $0xc60] sm:$0xff]
        %v6179 = vld [vmem:[#allocation7 + $0xc68] sm:$0xff]
        %v6180 = vld [vmem:[#allocation7 + $0xc70] sm:$0xff]
        %v6181 = vld [vmem:[#allocation7 + $0xc78] sm:$0xff]
        %v6182 = vld [vmem:[#allocation7 + $0xc80] sm:$0xff]
        %v6183 = vld [vmem:[#allocation7 + $0xc88] sm:$0xff]
        %v6184 = vld [vmem:[#allocation7 + $0xc90] sm:$0xff]
        %v6185 = vld [vmem:[#allocation7 + $0xc98] sm:$0xff]
        %v6186 = vld [vmem:[#allocation7 + $0xca0] sm:$0xff]
        %v6187 = vld [vmem:[#allocation7 + $0xca8] sm:$0xff]
        %v6188 = vld [vmem:[#allocation7 + $0xcb0] sm:$0xff]
        %v6189 = vld [vmem:[#allocation7 + $0xcb8] sm:$0xff]
        %v6190 = vld [vmem:[#allocation7 + $0xcc0] sm:$0xff]
        %v6191 = vld [vmem:[#allocation7 + $0xcc8] sm:$0xff]
        %v6192 = vld [vmem:[#allocation7 + $0xcd0] sm:$0xff]
        %v6193 = vld [vmem:[#allocation7 + $0xcd8] sm:$0xff]
        %v6194 = vld [vmem:[#allocation7 + $0xce0] sm:$0xff]
        %v6195 = vld [vmem:[#allocation7 + $0xce8] sm:$0xff]
        %v6196 = vld [vmem:[#allocation7 + $0xcf0] sm:$0xff]
        %v6197 = vld [vmem:[#allocation7 + $0xcf8] sm:$0xff]
        %v6198 = vld [vmem:[#allocation7 + $0xd00] sm:$0xff]
        %v6199 = vld [vmem:[#allocation7 + $0xd08] sm:$0xff]
        %v6200 = vld [vmem:[#allocation7 + $0xd10] sm:$0xff]
        %v6201 = vld [vmem:[#allocation7 + $0xd18] sm:$0xff]
        %v6202 = vld [vmem:[#allocation7 + $0xd20] sm:$0xff]
        %v6203 = vld [vmem:[#allocation7 + $0xd28] sm:$0xff]
        %v6204 = vld [vmem:[#allocation7 + $0xd30] sm:$0xff]
        %v6205 = vld [vmem:[#allocation7 + $0xd38] sm:$0xff]
        %v6206 = vld [vmem:[#allocation7 + $0xd40] sm:$0xff]
        %v6207 = vld [vmem:[#allocation7 + $0xd48] sm:$0xff]
        %v6208 = vld [vmem:[#allocation7 + $0xd50] sm:$0xff]
        %v6209 = vld [vmem:[#allocation7 + $0xd58] sm:$0xff]
        %v6210 = vld [vmem:[#allocation7 + $0xd60] sm:$0xff]
        %v6211 = vld [vmem:[#allocation7 + $0xd68] sm:$0xff]
        %v6212 = vld [vmem:[#allocation7 + $0xd70] sm:$0xff]
        %v6213 = vld [vmem:[#allocation7 + $0xd78] sm:$0xff]
        %v6214 = vld [vmem:[#allocation7 + $0xd80] sm:$0xff]
        %v6215 = vld [vmem:[#allocation7 + $0xd88] sm:$0xff]
        %v6216 = vld [vmem:[#allocation7 + $0xd90] sm:$0xff]
        %v6217 = vld [vmem:[#allocation7 + $0xd98] sm:$0xff]
        %v6218 = vld [vmem:[#allocation7 + $0xda0] sm:$0xff]
        %v6219 = vld [vmem:[#allocation7 + $0xda8] sm:$0xff]
        %v6220 = vld [vmem:[#allocation7 + $0xdb0] sm:$0xff]
        %v6221 = vld [vmem:[#allocation7 + $0xdb8] sm:$0xff]
        %v6222 = vld [vmem:[#allocation7 + $0xdc0] sm:$0xff]
        %v6223 = vld [vmem:[#allocation7 + $0xdc8] sm:$0xff]
        %v6224 = vld [vmem:[#allocation7 + $0xdd0] sm:$0xff]
        %v6225 = vld [vmem:[#allocation7 + $0xdd8] sm:$0xff]
        %v6226 = vld [vmem:[#allocation7 + $0xde0] sm:$0xff]
        %v6227 = vld [vmem:[#allocation7 + $0xde8] sm:$0xff]
        %v6228 = vld [vmem:[#allocation7 + $0xdf0] sm:$0xff]
        %v6229 = vld [vmem:[#allocation7 + $0xdf8] sm:$0xff]
        %v6230 = vld [vmem:[#allocation7 + $0xe00] sm:$0xff]
        %v6231 = vld [vmem:[#allocation7 + $0xe08] sm:$0xff]
        %v6232 = vld [vmem:[#allocation7 + $0xe10] sm:$0xff]
        %v6233 = vld [vmem:[#allocation7 + $0xe18] sm:$0xff]
        %v6234 = vld [vmem:[#allocation7 + $0xe20] sm:$0xff]
        %v6235 = vld [vmem:[#allocation7 + $0xe28] sm:$0xff]
        %v6236 = vld [vmem:[#allocation7 + $0xe30] sm:$0xff]
        %v6237 = vld [vmem:[#allocation7 + $0xe38] sm:$0xff]
        %v6238 = vld [vmem:[#allocation7 + $0xe40] sm:$0xff]
        %v6239 = vld [vmem:[#allocation7 + $0xe48] sm:$0xff]
        %v6240 = vld [vmem:[#allocation7 + $0xe50] sm:$0xff]
        %v6241 = vld [vmem:[#allocation7 + $0xe58] sm:$0xff]
        %v6242 = vld [vmem:[#allocation7 + $0xe60] sm:$0xff]
        %v6243 = vld [vmem:[#allocation7 + $0xe68] sm:$0xff]
        %v6244 = vld [vmem:[#allocation7 + $0xe70] sm:$0xff]
        %v6245 = vld [vmem:[#allocation7 + $0xe78] sm:$0xff]
        %v6246 = vld [vmem:[#allocation7 + $0xe80] sm:$0xff]
        %v6247 = vld [vmem:[#allocation7 + $0xe88] sm:$0xff]
        %v6248 = vld [vmem:[#allocation7 + $0xe90] sm:$0xff]
        %v6249 = vld [vmem:[#allocation7 + $0xe98] sm:$0xff]
        %v6250 = vld [vmem:[#allocation7 + $0xea0] sm:$0xff]
        %v6251 = vld [vmem:[#allocation7 + $0xea8] sm:$0xff]
        %v6252 = vld [vmem:[#allocation7 + $0xeb0] sm:$0xff]
        %v6253 = vld [vmem:[#allocation7 + $0xeb8] sm:$0xff]
        %v6254 = vld [vmem:[#allocation7 + $0xec0] sm:$0xff]
        %v6255 = vld [vmem:[#allocation7 + $0xec8] sm:$0xff]
        %v6256 = vld [vmem:[#allocation7 + $0xed0] sm:$0xff]
        %v6257 = vld [vmem:[#allocation7 + $0xed8] sm:$0xff]
        %v6258 = vld [vmem:[#allocation7 + $0xee0] sm:$0xff]
        %v6259 = vld [vmem:[#allocation7 + $0xee8] sm:$0xff]
        %v6260 = vld [vmem:[#allocation7 + $0xef0] sm:$0xff]
        %v6261 = vld [vmem:[#allocation7 + $0xef8] sm:$0xff]
        %v6262 = vld [vmem:[#allocation7 + $0xf00] sm:$0xff]
        %v6263 = vld [vmem:[#allocation7 + $0xf08] sm:$0xff]
        %v6264 = vld [vmem:[#allocation7 + $0xf10] sm:$0xff]
        %v6265 = vld [vmem:[#allocation7 + $0xf18] sm:$0xff]
        %v6266 = vld [vmem:[#allocation7 + $0xf20] sm:$0xff]
        %v6267 = vld [vmem:[#allocation7 + $0xf28] sm:$0xff]
        %v6268 = vld [vmem:[#allocation7 + $0xf30] sm:$0xff]
        %v6269 = vld [vmem:[#allocation7 + $0xf38] sm:$0xff]
        %v6270 = vld [vmem:[#allocation7 + $0xf40] sm:$0xff]
        %v6271 = vld [vmem:[#allocation7 + $0xf48] sm:$0xff]
        %v6272 = vld [vmem:[#allocation7 + $0xf50] sm:$0xff]
        %v6273 = vld [vmem:[#allocation7 + $0xf58] sm:$0xff]
        %v6274 = vld [vmem:[#allocation7 + $0xf60] sm:$0xff]
        %v6275 = vld [vmem:[#allocation7 + $0xf68] sm:$0xff]
        %v6276 = vld [vmem:[#allocation7 + $0xf70] sm:$0xff]
        %v6277 = vld [vmem:[#allocation7 + $0xf78] sm:$0xff]
        %v6278 = vld [vmem:[#allocation7 + $0xf80] sm:$0xff]
        %v6279 = vld [vmem:[#allocation7 + $0xf88] sm:$0xff]
        %v6280 = vld [vmem:[#allocation7 + $0xf90] sm:$0xff]
        %v6281 = vld [vmem:[#allocation7 + $0xf98] sm:$0xff]
        %v6282 = vld [vmem:[#allocation7 + $0xfa0] sm:$0xff]
        %v6283 = vld [vmem:[#allocation7 + $0xfa8] sm:$0xff]
        %v6284 = vld [vmem:[#allocation7 + $0xfb0] sm:$0xff]
        %v6285 = vld [vmem:[#allocation7 + $0xfb8] sm:$0xff]
        %v6286 = vld [vmem:[#allocation7 + $0xfc0] sm:$0xff]
        %v6287 = vld [vmem:[#allocation7 + $0xfc8] sm:$0xff]
        %v6288 = vld [vmem:[#allocation7 + $0xfd0] sm:$0xff]
        %v6289 = vld [vmem:[#allocation7 + $0xfd8] sm:$0xff]
        %v6290 = vld [vmem:[#allocation7 + $0xfe0] sm:$0xff]
        %v6291 = vld [vmem:[#allocation7 + $0xfe8] sm:$0xff]
        %v6292 = vld [vmem:[#allocation7 + $0xff0] sm:$0xff]
        %v6293 = vld [vmem:[#allocation7 + $0xff8] sm:$0xff]
        %v6294 = vld [vmem:[#allocation7 + $0x1000] sm:$0xff]
        %v6295 = vld [vmem:[#allocation7 + $0x1008] sm:$0xff]
        %v6296 = vld [vmem:[#allocation7 + $0x1010] sm:$0xff]
        %v6297 = vld [vmem:[#allocation7 + $0x1018] sm:$0xff]
        %v6298 = vld [vmem:[#allocation7 + $0x1020] sm:$0xff]
        %v6299 = vld [vmem:[#allocation7 + $0x1028] sm:$0xff]
        %v6300 = vld [vmem:[#allocation7 + $0x1030] sm:$0xff]
        %v6301 = vld [vmem:[#allocation7 + $0x1038] sm:$0xff]
        %v6302 = vld [vmem:[#allocation7 + $0x1040] sm:$0xff]
        %v6303 = vld [vmem:[#allocation7 + $0x1048] sm:$0xff]
        %v6304 = vld [vmem:[#allocation7 + $0x1050] sm:$0xff]
        %v6305 = vld [vmem:[#allocation7 + $0x1058] sm:$0xff]
        %v6306 = vld [vmem:[#allocation7 + $0x1060] sm:$0xff]
        %v6307 = vld [vmem:[#allocation7 + $0x1068] sm:$0xff]
        %v6308 = vld [vmem:[#allocation7 + $0x1070] sm:$0xff]
        %v6309 = vld [vmem:[#allocation7 + $0x1078] sm:$0xff]
        %v6310 = vld [vmem:[#allocation7 + $0x1080] sm:$0xff]
        %v6311 = vld [vmem:[#allocation7 + $0x1088] sm:$0xff]
        %v6312 = vld [vmem:[#allocation7 + $0x1090] sm:$0xff]
        %v6313 = vld [vmem:[#allocation7 + $0x1098] sm:$0xff]
        %v6314 = vld [vmem:[#allocation7 + $0x10a0] sm:$0xff]
        %v6315 = vld [vmem:[#allocation7 + $0x10a8] sm:$0xff]
        %v6316 = vld [vmem:[#allocation7 + $0x10b0] sm:$0xff]
        %v6317 = vld [vmem:[#allocation7 + $0x10b8] sm:$0xff]
        %v6318 = vld [vmem:[#allocation7 + $0x10c0] sm:$0xff]
        %v6319 = vld [vmem:[#allocation7 + $0x10c8] sm:$0xff]
        %v6320 = vld [vmem:[#allocation7 + $0x10d0] sm:$0xff]
        %v6321 = vld [vmem:[#allocation7 + $0x10d8] sm:$0xff]
        %v6322 = vld [vmem:[#allocation7 + $0x10e0] sm:$0xff]
        %v6323 = vld [vmem:[#allocation7 + $0x10e8] sm:$0xff]
        %v6324 = vld [vmem:[#allocation7 + $0x10f0] sm:$0xff]
        %v6325 = vld [vmem:[#allocation7 + $0x10f8] sm:$0xff]
        %v6326 = vld [vmem:[#allocation7 + $0x1100] sm:$0xff]
        %v6327 = vld [vmem:[#allocation7 + $0x1108] sm:$0xff]
        %v6328 = vld [vmem:[#allocation7 + $0x1110] sm:$0xff]
        %v6329 = vld [vmem:[#allocation7 + $0x1118] sm:$0xff]
        %v6330 = vld [vmem:[#allocation7 + $0x1120] sm:$0xff]
        %v6331 = vld [vmem:[#allocation7 + $0x1128] sm:$0xff]
        %v6332 = vld [vmem:[#allocation7 + $0x1130] sm:$0xff]
        %v6333 = vld [vmem:[#allocation7 + $0x1138] sm:$0xff]
        %v6334 = vld [vmem:[#allocation7 + $0x1140] sm:$0xff]
        %v6335 = vld [vmem:[#allocation7 + $0x1148] sm:$0xff]
        %v6336 = vld [vmem:[#allocation7 + $0x1150] sm:$0xff]
        %v6337 = vld [vmem:[#allocation7 + $0x1158] sm:$0xff]
        %v6338 = vld [vmem:[#allocation7 + $0x1160] sm:$0xff]
        %v6339 = vld [vmem:[#allocation7 + $0x1168] sm:$0xff]
        %v6340 = vld [vmem:[#allocation7 + $0x1170] sm:$0xff]
        %v6341 = vld [vmem:[#allocation7 + $0x1178] sm:$0xff]
        %v6342 = vld [vmem:[#allocation7 + $0x1180] sm:$0xff]
        %v6343 = vld [vmem:[#allocation7 + $0x1188] sm:$0xff]
        %v6344 = vld [vmem:[#allocation7 + $0x1190] sm:$0xff]
        %v6345 = vld [vmem:[#allocation7 + $0x1198] sm:$0xff]
        %v6346 = vld [vmem:[#allocation7 + $0x11a0] sm:$0xff]
        %v6347 = vld [vmem:[#allocation7 + $0x11a8] sm:$0xff]
        %v6348 = vld [vmem:[#allocation7 + $0x11b0] sm:$0xff]
        %v6349 = vld [vmem:[#allocation7 + $0x11b8] sm:$0xff]
        %v6350 = vld [vmem:[#allocation7 + $0x11c0] sm:$0xff]
        %v6351 = vld [vmem:[#allocation7 + $0x11c8] sm:$0xff]
        %v6352 = vld [vmem:[#allocation7 + $0x11d0] sm:$0xff]
        %v6353 = vld [vmem:[#allocation7 + $0x11d8] sm:$0xff]
        %v6354 = vld [vmem:[#allocation7 + $0x11e0] sm:$0xff]
        %v6355 = vld [vmem:[#allocation7 + $0x11e8] sm:$0xff]
        %v6356 = vld [vmem:[#allocation7 + $0x11f0] sm:$0xff]
        %v6357 = vld [vmem:[#allocation7 + $0x11f8] sm:$0xff]
        %v6358 = vld [vmem:[#allocation7 + $0x1200] sm:$0xff]
        %v6359 = vld [vmem:[#allocation7 + $0x1208] sm:$0xff]
        %v6360 = vld [vmem:[#allocation7 + $0x1210] sm:$0xff]
        %v6361 = vld [vmem:[#allocation7 + $0x1218] sm:$0xff]
        %v6362 = vld [vmem:[#allocation7 + $0x1220] sm:$0xff]
        %v6363 = vld [vmem:[#allocation7 + $0x1228] sm:$0xff]
        %v6364 = vld [vmem:[#allocation7 + $0x1230] sm:$0xff]
        %v6365 = vld [vmem:[#allocation7 + $0x1238] sm:$0xff]
        %v6366 = vld [vmem:[#allocation7 + $0x1240] sm:$0xff]
        %v6367 = vld [vmem:[#allocation7 + $0x1248] sm:$0xff]
        %v6368 = vld [vmem:[#allocation7 + $0x1250] sm:$0xff]
        %v6369 = vld [vmem:[#allocation7 + $0x1258] sm:$0xff]
        %v6370 = vld [vmem:[#allocation7 + $0x1260] sm:$0xff]
        %v6371 = vld [vmem:[#allocation7 + $0x1268] sm:$0xff]
        %v6372 = vld [vmem:[#allocation7 + $0x1270] sm:$0xff]
        %v6373 = vld [vmem:[#allocation7 + $0x1278] sm:$0xff]
        %v6374 = vld [vmem:[#allocation7 + $0x1280] sm:$0xff]
        %v6375 = vld [vmem:[#allocation7 + $0x1288] sm:$0xff]
        %v6376 = vld [vmem:[#allocation7 + $0x1290] sm:$0xff]
        %v6377 = vld [vmem:[#allocation7 + $0x1298] sm:$0xff]
        %v6378 = vld [vmem:[#allocation7 + $0x12a0] sm:$0xff]
        %v6379 = vld [vmem:[#allocation7 + $0x12a8] sm:$0xff]
        %v6380 = vld [vmem:[#allocation7 + $0x12b0] sm:$0xff]
        %v6381 = vld [vmem:[#allocation7 + $0x12b8] sm:$0xff]
        %v6382 = vld [vmem:[#allocation7 + $0x12c0] sm:$0xff]
        %v6383 = vld [vmem:[#allocation7 + $0x12c8] sm:$0xff]
        %v6384 = vld [vmem:[#allocation7 + $0x12d0] sm:$0xff]
        %v6385 = vld [vmem:[#allocation7 + $0x12d8] sm:$0xff]
        %v6386 = vld [vmem:[#allocation7 + $0x12e0] sm:$0xff]
        %v6387 = vld [vmem:[#allocation7 + $0x12e8] sm:$0xff]
        %v6388 = vld [vmem:[#allocation7 + $0x12f0] sm:$0xff]
        %v6389 = vld [vmem:[#allocation7 + $0x12f8] sm:$0xff]
        %v6390 = vld [vmem:[#allocation7 + $0x1300] sm:$0xff]
        %v6391 = vld [vmem:[#allocation7 + $0x1308] sm:$0xff]
        %v6392 = vld [vmem:[#allocation7 + $0x1310] sm:$0xff]
        %v6393 = vld [vmem:[#allocation7 + $0x1318] sm:$0xff]
        %v6394 = vld [vmem:[#allocation7 + $0x1320] sm:$0xff]
        %v6395 = vld [vmem:[#allocation7 + $0x1328] sm:$0xff]
        %v6396 = vld [vmem:[#allocation7 + $0x1330] sm:$0xff]
        %v6397 = vld [vmem:[#allocation7 + $0x1338] sm:$0xff]
        %v6398 = vld [vmem:[#allocation7 + $0x1340] sm:$0xff]
        %v6399 = vld [vmem:[#allocation7 + $0x1348] sm:$0xff]
        %v6400 = vld [vmem:[#allocation7 + $0x1350] sm:$0xff]
        %v6401 = vld [vmem:[#allocation7 + $0x1358] sm:$0xff]
        %v6402 = vld [vmem:[#allocation7 + $0x1360] sm:$0xff]
        %v6403 = vld [vmem:[#allocation7 + $0x1368] sm:$0xff]
        %v6404 = vld [vmem:[#allocation7 + $0x1370] sm:$0xff]
        %v6405 = vld [vmem:[#allocation7 + $0x1378] sm:$0xff]
        %v6406 = vld [vmem:[#allocation7 + $0x1380] sm:$0xff]
        %v6407 = vld [vmem:[#allocation7 + $0x1388] sm:$0xff]
        %v6408 = vld [vmem:[#allocation7 + $0x1390] sm:$0xff]
        %v6409 = vld [vmem:[#allocation7 + $0x1398] sm:$0xff]
        %v6410 = vld [vmem:[#allocation7 + $0x13a0] sm:$0xff]
        %v6411 = vld [vmem:[#allocation7 + $0x13a8] sm:$0xff]
        %v6412 = vld [vmem:[#allocation7 + $0x13b0] sm:$0xff]
        %v6413 = vld [vmem:[#allocation7 + $0x13b8] sm:$0xff]
        %v6414 = vld [vmem:[#allocation7 + $0x13c0] sm:$0xff]
        %v6415 = vld [vmem:[#allocation7 + $0x13c8] sm:$0xff]
        %v6416 = vld [vmem:[#allocation7 + $0x13d0] sm:$0xff]
        %v6417 = vld [vmem:[#allocation7 + $0x13d8] sm:$0xff]
        %v6418 = vld [vmem:[#allocation7 + $0x13e0] sm:$0xff]
        %v6419 = vld [vmem:[#allocation7 + $0x13e8] sm:$0xff]
        %v6420 = vld [vmem:[#allocation7 + $0x13f0] sm:$0xff]
        %v6421 = vld [vmem:[#allocation7 + $0x13f8] sm:$0xff]
        %v6422 = vld [vmem:[#allocation7 + $0x1400] sm:$0xff]
        %v6423 = vld [vmem:[#allocation7 + $0x1408] sm:$0xff]
        %v6424 = vld [vmem:[#allocation7 + $0x1410] sm:$0xff]
        %v6425 = vld [vmem:[#allocation7 + $0x1418] sm:$0xff]
        %v6426 = vld [vmem:[#allocation7 + $0x1420] sm:$0xff]
        %v6427 = vld [vmem:[#allocation7 + $0x1428] sm:$0xff]
        %v6428 = vld [vmem:[#allocation7 + $0x1430] sm:$0xff]
        %v6429 = vld [vmem:[#allocation7 + $0x1438] sm:$0xff]
        %v6430 = vld [vmem:[#allocation7 + $0x1440] sm:$0xff]
        %v6431 = vld [vmem:[#allocation7 + $0x1448] sm:$0xff]
        %v6432 = vld [vmem:[#allocation7 + $0x1450] sm:$0xff]
        %v6433 = vld [vmem:[#allocation7 + $0x1458] sm:$0xff]
        %v6434 = vld [vmem:[#allocation7 + $0x1460] sm:$0xff]
        %v6435 = vld [vmem:[#allocation7 + $0x1468] sm:$0xff]
        %v6436 = vld [vmem:[#allocation7 + $0x1470] sm:$0xff]
        %v6437 = vld [vmem:[#allocation7 + $0x1478] sm:$0xff]
        %v6438 = vld [vmem:[#allocation7 + $0x1480] sm:$0xff]
        %v6439 = vld [vmem:[#allocation7 + $0x1488] sm:$0xff]
        %v6440 = vld [vmem:[#allocation7 + $0x1490] sm:$0xff]
        %v6441 = vld [vmem:[#allocation7 + $0x1498] sm:$0xff]
        %v6442 = vld [vmem:[#allocation7 + $0x14a0] sm:$0xff]
        %v6443 = vld [vmem:[#allocation7 + $0x14a8] sm:$0xff]
        %v6444 = vld [vmem:[#allocation7 + $0x14b0] sm:$0xff]
        %v6445 = vld [vmem:[#allocation7 + $0x14b8] sm:$0xff]
        %v6446 = vld [vmem:[#allocation7 + $0x14c0] sm:$0xff]
        %v6447 = vld [vmem:[#allocation7 + $0x14c8] sm:$0xff]
        %v6448 = vld [vmem:[#allocation7 + $0x14d0] sm:$0xff]
        %v6449 = vld [vmem:[#allocation7 + $0x14d8] sm:$0xff]
        %v6450 = vld [vmem:[#allocation7 + $0x14e0] sm:$0xff]
        %v6451 = vld [vmem:[#allocation7 + $0x14e8] sm:$0xff]
        %v6452 = vld [vmem:[#allocation7 + $0x14f0] sm:$0xff]
        %v6453 = vld [vmem:[#allocation7 + $0x14f8] sm:$0xff]
        %v6454 = vld [vmem:[#allocation7 + $0x1500] sm:$0xff]
        %v6455 = vld [vmem:[#allocation7 + $0x1508] sm:$0xff]
        %v6456 = vld [vmem:[#allocation7 + $0x1510] sm:$0xff]
        %v6457 = vld [vmem:[#allocation7 + $0x1518] sm:$0xff]
        %v6458 = vld [vmem:[#allocation7 + $0x1520] sm:$0xff]
        %v6459 = vld [vmem:[#allocation7 + $0x1528] sm:$0xff]
        %v6460 = vld [vmem:[#allocation7 + $0x1530] sm:$0xff]
        %v6461 = vld [vmem:[#allocation7 + $0x1538] sm:$0xff]
        %v6462 = vld [vmem:[#allocation7 + $0x1540] sm:$0xff]
        %v6463 = vld [vmem:[#allocation7 + $0x1548] sm:$0xff]
        %v6464 = vld [vmem:[#allocation7 + $0x1550] sm:$0xff]
        %v6465 = vld [vmem:[#allocation7 + $0x1558] sm:$0xff]
        %v6466 = vld [vmem:[#allocation7 + $0x1560] sm:$0xff]
        %v6467 = vld [vmem:[#allocation7 + $0x1568] sm:$0xff]
        %v6468 = vld [vmem:[#allocation7 + $0x1570] sm:$0xff]
        %v6469 = vld [vmem:[#allocation7 + $0x1578] sm:$0xff]
        %v6470 = vld [vmem:[#allocation7 + $0x1580] sm:$0xff]
        %v6471 = vld [vmem:[#allocation7 + $0x1588] sm:$0xff]
        %v6472 = vld [vmem:[#allocation7 + $0x1590] sm:$0xff]
        %v6473 = vld [vmem:[#allocation7 + $0x1598] sm:$0xff]
        %v6474 = vld [vmem:[#allocation7 + $0x15a0] sm:$0xff]
        %v6475 = vld [vmem:[#allocation7 + $0x15a8] sm:$0xff]
        %v6476 = vld [vmem:[#allocation7 + $0x15b0] sm:$0xff]
        %v6477 = vld [vmem:[#allocation7 + $0x15b8] sm:$0xff]
        %v6478 = vld [vmem:[#allocation7 + $0x15c0] sm:$0xff]
        %v6479 = vld [vmem:[#allocation7 + $0x15c8] sm:$0xff]
        %v6480 = vld [vmem:[#allocation7 + $0x15d0] sm:$0xff]
        %v6481 = vld [vmem:[#allocation7 + $0x15d8] sm:$0xff]
        %v6482 = vld [vmem:[#allocation7 + $0x15e0] sm:$0xff]
        %v6483 = vld [vmem:[#allocation7 + $0x15e8] sm:$0xff]
        %v6484 = vld [vmem:[#allocation7 + $0x15f0] sm:$0xff]
        %v6485 = vld [vmem:[#allocation7 + $0x15f8] sm:$0xff]
        %v6486 = vld [vmem:[#allocation7 + $0x1600] sm:$0xff]
        %v6487 = vld [vmem:[#allocation7 + $0x1608] sm:$0xff]
        %v6488 = vld [vmem:[#allocation7 + $0x1610] sm:$0xff]
        %v6489 = vld [vmem:[#allocation7 + $0x1618] sm:$0xff]
        %v6490 = vld [vmem:[#allocation7 + $0x1620] sm:$0xff]
        %v6491 = vld [vmem:[#allocation7 + $0x1628] sm:$0xff]
        %v6492 = vld [vmem:[#allocation7 + $0x1630] sm:$0xff]
        %v6493 = vld [vmem:[#allocation7 + $0x1638] sm:$0xff]
        %v6494 = vld [vmem:[#allocation7 + $0x1640] sm:$0xff]
        %v6495 = vld [vmem:[#allocation7 + $0x1648] sm:$0xff]
        %v6496 = vld [vmem:[#allocation7 + $0x1650] sm:$0xff]
        %v6497 = vld [vmem:[#allocation7 + $0x1658] sm:$0xff]
        %v6498 = vld [vmem:[#allocation7 + $0x1660] sm:$0xff]
        %v6499 = vld [vmem:[#allocation7 + $0x1668] sm:$0xff]
        %v6500 = vld [vmem:[#allocation7 + $0x1670] sm:$0xff]
        %v6501 = vld [vmem:[#allocation7 + $0x1678] sm:$0xff]
        %v6502 = vld [vmem:[#allocation7 + $0x1680] sm:$0xff]
        %v6503 = vld [vmem:[#allocation7 + $0x1688] sm:$0xff]
        %v6504 = vld [vmem:[#allocation7 + $0x1690] sm:$0xff]
        %v6505 = vld [vmem:[#allocation7 + $0x1698] sm:$0xff]
        %v6506 = vld [vmem:[#allocation7 + $0x16a0] sm:$0xff]
        %v6507 = vld [vmem:[#allocation7 + $0x16a8] sm:$0xff]
        %v6508 = vld [vmem:[#allocation7 + $0x16b0] sm:$0xff]
        %v6509 = vld [vmem:[#allocation7 + $0x16b8] sm:$0xff]
        %v6510 = vld [vmem:[#allocation7 + $0x16c0] sm:$0xff]
        %v6511 = vld [vmem:[#allocation7 + $0x16c8] sm:$0xff]
        %v6512 = vld [vmem:[#allocation7 + $0x16d0] sm:$0xff]
        %v6513 = vld [vmem:[#allocation7 + $0x16d8] sm:$0xff]
        %v6514 = vld [vmem:[#allocation7 + $0x16e0] sm:$0xff]
        %v6515 = vld [vmem:[#allocation7 + $0x16e8] sm:$0xff]
        %v6516 = vld [vmem:[#allocation7 + $0x16f0] sm:$0xff]
        %v6517 = vld [vmem:[#allocation7 + $0x16f8] sm:$0xff]
        %v6518 = vld [vmem:[#allocation7 + $0x1700] sm:$0xff]
        %v6519 = vld [vmem:[#allocation7 + $0x1708] sm:$0xff]
        %v6520 = vld [vmem:[#allocation7 + $0x1710] sm:$0xff]
        %v6521 = vld [vmem:[#allocation7 + $0x1718] sm:$0xff]
        %v6522 = vld [vmem:[#allocation7 + $0x1720] sm:$0xff]
        %v6523 = vld [vmem:[#allocation7 + $0x1728] sm:$0xff]
        %v6524 = vld [vmem:[#allocation7 + $0x1730] sm:$0xff]
        %v6525 = vld [vmem:[#allocation7 + $0x1738] sm:$0xff]
        %v6526 = vld [vmem:[#allocation7 + $0x1740] sm:$0xff]
        %v6527 = vld [vmem:[#allocation7 + $0x1748] sm:$0xff]
        %v6528 = vld [vmem:[#allocation7 + $0x1750] sm:$0xff]
        %v6529 = vld [vmem:[#allocation7 + $0x1758] sm:$0xff]
        %v6530 = vld [vmem:[#allocation7 + $0x1760] sm:$0xff]
        %v6531 = vld [vmem:[#allocation7 + $0x1768] sm:$0xff]
        %v6532 = vld [vmem:[#allocation7 + $0x1770] sm:$0xff]
        %v6533 = vld [vmem:[#allocation7 + $0x1778] sm:$0xff]
        %v6534 = vld [vmem:[#allocation7 + $0x1780] sm:$0xff]
        %v6535 = vld [vmem:[#allocation7 + $0x1788] sm:$0xff]
        %v6536 = vld [vmem:[#allocation7 + $0x1790] sm:$0xff]
        %v6537 = vld [vmem:[#allocation7 + $0x1798] sm:$0xff]
        %v6538 = vld [vmem:[#allocation7 + $0x17a0] sm:$0xff]
        %v6539 = vld [vmem:[#allocation7 + $0x17a8] sm:$0xff]
        %v6540 = vld [vmem:[#allocation7 + $0x17b0] sm:$0xff]
        %v6541 = vld [vmem:[#allocation7 + $0x17b8] sm:$0xff]
        %v6542 = vld [vmem:[#allocation7 + $0x17c0] sm:$0xff]
        %v6543 = vld [vmem:[#allocation7 + $0x17c8] sm:$0xff]
        %v6544 = vld [vmem:[#allocation7 + $0x17d0] sm:$0xff]
        %v6545 = vld [vmem:[#allocation7 + $0x17d8] sm:$0xff]
        %v6546 = vld [vmem:[#allocation7 + $0x17e0] sm:$0xff]
        %v6547 = vld [vmem:[#allocation7 + $0x17e8] sm:$0xff]
        %v6548 = vld [vmem:[#allocation7 + $0x17f0] sm:$0xff]
        %v6549 = vld [vmem:[#allocation7 + $0x17f8] sm:$0xff]
        %v6550 = vld [vmem:[#allocation7 + $0x1800] sm:$0xff]
        %v6551 = vld [vmem:[#allocation7 + $0x1808] sm:$0xff]
        %v6552 = vld [vmem:[#allocation7 + $0x1810] sm:$0xff]
        %v6553 = vld [vmem:[#allocation7 + $0x1818] sm:$0xff]
        %v6554 = vld [vmem:[#allocation7 + $0x1820] sm:$0xff]
        %v6555 = vld [vmem:[#allocation7 + $0x1828] sm:$0xff]
        %v6556 = vld [vmem:[#allocation7 + $0x1830] sm:$0xff]
        %v6557 = vld [vmem:[#allocation7 + $0x1838] sm:$0xff]
        %v6558 = vld [vmem:[#allocation7 + $0x1840] sm:$0xff]
        %v6559 = vld [vmem:[#allocation7 + $0x1848] sm:$0xff]
        %v6560 = vld [vmem:[#allocation7 + $0x1850] sm:$0xff]
        %v6561 = vld [vmem:[#allocation7 + $0x1858] sm:$0xff]
        %v6562 = vld [vmem:[#allocation7 + $0x1860] sm:$0xff]
        %v6563 = vld [vmem:[#allocation7 + $0x1868] sm:$0xff]
        %v6564 = vld [vmem:[#allocation7 + $0x1870] sm:$0xff]
        %v6565 = vld [vmem:[#allocation7 + $0x1878] sm:$0xff]
        %v6566 = vld [vmem:[#allocation7 + $0x1880] sm:$0xff]
        %v6567 = vld [vmem:[#allocation7 + $0x1888] sm:$0xff]
        %v6568 = vld [vmem:[#allocation7 + $0x1890] sm:$0xff]
        %v6569 = vld [vmem:[#allocation7 + $0x1898] sm:$0xff]
        %v6570 = vld [vmem:[#allocation7 + $0x18a0] sm:$0xff]
        %v6571 = vld [vmem:[#allocation7 + $0x18a8] sm:$0xff]
        %v6572 = vld [vmem:[#allocation7 + $0x18b0] sm:$0xff]
        %v6573 = vld [vmem:[#allocation7 + $0x18b8] sm:$0xff]
        %v6574 = vld [vmem:[#allocation7 + $0x18c0] sm:$0xff]
        %v6575 = vld [vmem:[#allocation7 + $0x18c8] sm:$0xff]
        %v6576 = vld [vmem:[#allocation7 + $0x18d0] sm:$0xff]
        %v6577 = vld [vmem:[#allocation7 + $0x18d8] sm:$0xff]
        %v6578 = vld [vmem:[#allocation7 + $0x18e0] sm:$0xff]
        %v6579 = vld [vmem:[#allocation7 + $0x18e8] sm:$0xff]
        %v6580 = vld [vmem:[#allocation7 + $0x18f0] sm:$0xff]
        %v6581 = vld [vmem:[#allocation7 + $0x18f8] sm:$0xff]
        %v6582 = vld [vmem:[#allocation7 + $0x1900] sm:$0xff]
        %v6583 = vld [vmem:[#allocation7 + $0x1908] sm:$0xff]
        %v6584 = vld [vmem:[#allocation7 + $0x1910] sm:$0xff]
        %v6585 = vld [vmem:[#allocation7 + $0x1918] sm:$0xff]
        %v6586 = vld [vmem:[#allocation7 + $0x1920] sm:$0xff]
        %v6587 = vld [vmem:[#allocation7 + $0x1928] sm:$0xff]
        %v6588 = vld [vmem:[#allocation7 + $0x1930] sm:$0xff]
        %v6589 = vld [vmem:[#allocation7 + $0x1938] sm:$0xff]
        %v6590 = vld [vmem:[#allocation7 + $0x1940] sm:$0xff]
        %v6591 = vld [vmem:[#allocation7 + $0x1948] sm:$0xff]
        %v6592 = vld [vmem:[#allocation7 + $0x1950] sm:$0xff]
        %v6593 = vld [vmem:[#allocation7 + $0x1958] sm:$0xff]
        %v6594 = vld [vmem:[#allocation7 + $0x1960] sm:$0xff]
        %v6595 = vld [vmem:[#allocation7 + $0x1968] sm:$0xff]
        %v6596 = vld [vmem:[#allocation7 + $0x1970] sm:$0xff]
        %v6597 = vld [vmem:[#allocation7 + $0x1978] sm:$0xff]
        %v6598 = vld [vmem:[#allocation7 + $0x1980] sm:$0xff]
        %v6599 = vld [vmem:[#allocation7 + $0x1988] sm:$0xff]
        %v6600 = vld [vmem:[#allocation7 + $0x1990] sm:$0xff]
        %v6601 = vld [vmem:[#allocation7 + $0x1998] sm:$0xff]
        %v6602 = vld [vmem:[#allocation7 + $0x19a0] sm:$0xff]
        %v6603 = vld [vmem:[#allocation7 + $0x19a8] sm:$0xff]
        %v6604 = vld [vmem:[#allocation7 + $0x19b0] sm:$0xff]
        %v6605 = vld [vmem:[#allocation7 + $0x19b8] sm:$0xff]
        %v6606 = vld [vmem:[#allocation7 + $0x19c0] sm:$0xff]
        %v6607 = vld [vmem:[#allocation7 + $0x19c8] sm:$0xff]
        %v6608 = vld [vmem:[#allocation7 + $0x19d0] sm:$0xff]
        %v6609 = vld [vmem:[#allocation7 + $0x19d8] sm:$0xff]
        %v6610 = vld [vmem:[#allocation7 + $0x19e0] sm:$0xff]
        %v6611 = vld [vmem:[#allocation7 + $0x19e8] sm:$0xff]
        %v6612 = vld [vmem:[#allocation7 + $0x19f0] sm:$0xff]
        %v6613 = vld [vmem:[#allocation7 + $0x19f8] sm:$0xff]
        %v6614 = vld [vmem:[#allocation7 + $0x1a00] sm:$0xff]
        %v6615 = vld [vmem:[#allocation7 + $0x1a08] sm:$0xff]
        %v6616 = vld [vmem:[#allocation7 + $0x1a10] sm:$0xff]
        %v6617 = vld [vmem:[#allocation7 + $0x1a18] sm:$0xff]
        %v6618 = vld [vmem:[#allocation7 + $0x1a20] sm:$0xff]
        %v6619 = vld [vmem:[#allocation7 + $0x1a28] sm:$0xff]
        %v6620 = vld [vmem:[#allocation7 + $0x1a30] sm:$0xff]
        %v6621 = vld [vmem:[#allocation7 + $0x1a38] sm:$0xff]
        %v6622 = vld [vmem:[#allocation7 + $0x1a40] sm:$0xff]
        %v6623 = vld [vmem:[#allocation7 + $0x1a48] sm:$0xff]
        %v6624 = vld [vmem:[#allocation7 + $0x1a50] sm:$0xff]
        %v6625 = vld [vmem:[#allocation7 + $0x1a58] sm:$0xff]
        %v6626 = vld [vmem:[#allocation7 + $0x1a60] sm:$0xff]
        %v6627 = vld [vmem:[#allocation7 + $0x1a68] sm:$0xff]
        %v6628 = vld [vmem:[#allocation7 + $0x1a70] sm:$0xff]
        %v6629 = vld [vmem:[#allocation7 + $0x1a78] sm:$0xff]
        %v6630 = vld [vmem:[#allocation7 + $0x1a80] sm:$0xff]
        %v6631 = vld [vmem:[#allocation7 + $0x1a88] sm:$0xff]
        %v6632 = vld [vmem:[#allocation7 + $0x1a90] sm:$0xff]
        %v6633 = vld [vmem:[#allocation7 + $0x1a98] sm:$0xff]
        %v6634 = vld [vmem:[#allocation7 + $0x1aa0] sm:$0xff]
        %v6635 = vld [vmem:[#allocation7 + $0x1aa8] sm:$0xff]
        %v6636 = vld [vmem:[#allocation7 + $0x1ab0] sm:$0xff]
        %v6637 = vld [vmem:[#allocation7 + $0x1ab8] sm:$0xff]
        %v6638 = vld [vmem:[#allocation7 + $0x1ac0] sm:$0xff]
        %v6639 = vld [vmem:[#allocation7 + $0x1ac8] sm:$0xff]
        %v6640 = vld [vmem:[#allocation7 + $0x1ad0] sm:$0xff]
        %v6641 = vld [vmem:[#allocation7 + $0x1ad8] sm:$0xff]
        %v6642 = vld [vmem:[#allocation7 + $0x1ae0] sm:$0xff]
        %v6643 = vld [vmem:[#allocation7 + $0x1ae8] sm:$0xff]
        %v6644 = vld [vmem:[#allocation7 + $0x1af0] sm:$0xff]
        %v6645 = vld [vmem:[#allocation7 + $0x1af8] sm:$0xff]
        %v6646 = vld [vmem:[#allocation7 + $0x1b00] sm:$0xff]
        %v6647 = vld [vmem:[#allocation7 + $0x1b08] sm:$0xff]
        %v6648 = vld [vmem:[#allocation7 + $0x1b10] sm:$0xff]
        %v6649 = vld [vmem:[#allocation7 + $0x1b18] sm:$0xff]
        %v6650 = vld [vmem:[#allocation7 + $0x1b20] sm:$0xff]
        %v6651 = vld [vmem:[#allocation7 + $0x1b28] sm:$0xff]
        %v6652 = vld [vmem:[#allocation7 + $0x1b30] sm:$0xff]
        %v6653 = vld [vmem:[#allocation7 + $0x1b38] sm:$0xff]
        %v6654 = vld [vmem:[#allocation7 + $0x1b40] sm:$0xff]
        %v6655 = vld [vmem:[#allocation7 + $0x1b48] sm:$0xff]
        %v6656 = vld [vmem:[#allocation7 + $0x1b50] sm:$0xff]
        %v6657 = vld [vmem:[#allocation7 + $0x1b58] sm:$0xff]
        %v6658 = vld [vmem:[#allocation7 + $0x1b60] sm:$0xff]
        %v6659 = vld [vmem:[#allocation7 + $0x1b68] sm:$0xff]
        %v6660 = vld [vmem:[#allocation7 + $0x1b70] sm:$0xff]
        %v6661 = vld [vmem:[#allocation7 + $0x1b78] sm:$0xff]
        %v6662 = vld [vmem:[#allocation7 + $0x1b80] sm:$0xff]
        %v6663 = vld [vmem:[#allocation7 + $0x1b88] sm:$0xff]
        %v6664 = vld [vmem:[#allocation7 + $0x1b90] sm:$0xff]
        %v6665 = vld [vmem:[#allocation7 + $0x1b98] sm:$0xff]
        %v6666 = vld [vmem:[#allocation7 + $0x1ba0] sm:$0xff]
        %v6667 = vld [vmem:[#allocation7 + $0x1ba8] sm:$0xff]
        %v6668 = vld [vmem:[#allocation7 + $0x1bb0] sm:$0xff]
        %v6669 = vld [vmem:[#allocation7 + $0x1bb8] sm:$0xff]
        %v6670 = vld [vmem:[#allocation7 + $0x1bc0] sm:$0xff]
        %v6671 = vld [vmem:[#allocation7 + $0x1bc8] sm:$0xff]
        %v6672 = vld [vmem:[#allocation7 + $0x1bd0] sm:$0xff]
        %v6673 = vld [vmem:[#allocation7 + $0x1bd8] sm:$0xff]
        %v6674 = vld [vmem:[#allocation7 + $0x1be0] sm:$0xff]
        %v6675 = vld [vmem:[#allocation7 + $0x1be8] sm:$0xff]
        %v6676 = vld [vmem:[#allocation7 + $0x1bf0] sm:$0xff]
        %v6677 = vld [vmem:[#allocation7 + $0x1bf8] sm:$0xff]
        %v6678 = vld [vmem:[#allocation7 + $0x1c00] sm:$0xff]
        %v6679 = vld [vmem:[#allocation7 + $0x1c08] sm:$0xff]
        %v6680 = vld [vmem:[#allocation7 + $0x1c10] sm:$0xff]
        %v6681 = vld [vmem:[#allocation7 + $0x1c18] sm:$0xff]
        %v6682 = vld [vmem:[#allocation7 + $0x1c20] sm:$0xff]
        %v6683 = vld [vmem:[#allocation7 + $0x1c28] sm:$0xff]
        %v6684 = vld [vmem:[#allocation7 + $0x1c30] sm:$0xff]
        %v6685 = vld [vmem:[#allocation7 + $0x1c38] sm:$0xff]
        %v6686 = vld [vmem:[#allocation7 + $0x1c40] sm:$0xff]
        %v6687 = vld [vmem:[#allocation7 + $0x1c48] sm:$0xff]
        %v6688 = vld [vmem:[#allocation7 + $0x1c50] sm:$0xff]
        %v6689 = vld [vmem:[#allocation7 + $0x1c58] sm:$0xff]
        %v6690 = vld [vmem:[#allocation7 + $0x1c60] sm:$0xff]
        %v6691 = vld [vmem:[#allocation7 + $0x1c68] sm:$0xff]
        %v6692 = vld [vmem:[#allocation7 + $0x1c70] sm:$0xff]
        %v6693 = vld [vmem:[#allocation7 + $0x1c78] sm:$0xff]
        %v6694 = vld [vmem:[#allocation7 + $0x1c80] sm:$0xff]
        %v6695 = vld [vmem:[#allocation7 + $0x1c88] sm:$0xff]
        %v6696 = vld [vmem:[#allocation7 + $0x1c90] sm:$0xff]
        %v6697 = vld [vmem:[#allocation7 + $0x1c98] sm:$0xff]
        %v6698 = vld [vmem:[#allocation7 + $0x1ca0] sm:$0xff]
        %v6699 = vld [vmem:[#allocation7 + $0x1ca8] sm:$0xff]
        %v6700 = vld [vmem:[#allocation7 + $0x1cb0] sm:$0xff]
        %v6701 = vld [vmem:[#allocation7 + $0x1cb8] sm:$0xff]
        %v6702 = vld [vmem:[#allocation7 + $0x1cc0] sm:$0xff]
        %v6703 = vld [vmem:[#allocation7 + $0x1cc8] sm:$0xff]
        %v6704 = vld [vmem:[#allocation7 + $0x1cd0] sm:$0xff]
        %v6705 = vld [vmem:[#allocation7 + $0x1cd8] sm:$0xff]
        %v6706 = vld [vmem:[#allocation7 + $0x1ce0] sm:$0xff]
        %v6707 = vld [vmem:[#allocation7 + $0x1ce8] sm:$0xff]
        %v6708 = vld [vmem:[#allocation7 + $0x1cf0] sm:$0xff]
        %v6709 = vld [vmem:[#allocation7 + $0x1cf8] sm:$0xff]
        %v6710 = vld [vmem:[#allocation7 + $0x1d00] sm:$0xff]
        %v6711 = vld [vmem:[#allocation7 + $0x1d08] sm:$0xff]
        %v6712 = vld [vmem:[#allocation7 + $0x1d10] sm:$0xff]
        %v6713 = vld [vmem:[#allocation7 + $0x1d18] sm:$0xff]
        %v6714 = vld [vmem:[#allocation7 + $0x1d20] sm:$0xff]
        %v6715 = vld [vmem:[#allocation7 + $0x1d28] sm:$0xff]
        %v6716 = vld [vmem:[#allocation7 + $0x1d30] sm:$0xff]
        %v6717 = vld [vmem:[#allocation7 + $0x1d38] sm:$0xff]
        %v6718 = vld [vmem:[#allocation7 + $0x1d40] sm:$0xff]
        %v6719 = vld [vmem:[#allocation7 + $0x1d48] sm:$0xff]
        %v6720 = vld [vmem:[#allocation7 + $0x1d50] sm:$0xff]
        %v6721 = vld [vmem:[#allocation7 + $0x1d58] sm:$0xff]
        %v6722 = vld [vmem:[#allocation7 + $0x1d60] sm:$0xff]
        %v6723 = vld [vmem:[#allocation7 + $0x1d68] sm:$0xff]
        %v6724 = vld [vmem:[#allocation7 + $0x1d70] sm:$0xff]
        %v6725 = vld [vmem:[#allocation7 + $0x1d78] sm:$0xff]
        %v6726 = vld [vmem:[#allocation7 + $0x1d80] sm:$0xff]
        %v6727 = vld [vmem:[#allocation7 + $0x1d88] sm:$0xff]
        %v6728 = vld [vmem:[#allocation7 + $0x1d90] sm:$0xff]
        %v6729 = vld [vmem:[#allocation7 + $0x1d98] sm:$0xff]
        %v6730 = vld [vmem:[#allocation7 + $0x1da0] sm:$0xff]
        %v6731 = vld [vmem:[#allocation7 + $0x1da8] sm:$0xff]
        %v6732 = vld [vmem:[#allocation7 + $0x1db0] sm:$0xff]
        %v6733 = vld [vmem:[#allocation7 + $0x1db8] sm:$0xff]
        %v6734 = vld [vmem:[#allocation7 + $0x1dc0] sm:$0xff]
        %v6735 = vld [vmem:[#allocation7 + $0x1dc8] sm:$0xff]
        %v6736 = vld [vmem:[#allocation7 + $0x1dd0] sm:$0xff]
        %v6737 = vld [vmem:[#allocation7 + $0x1dd8] sm:$0xff]
        %v6738 = vld [vmem:[#allocation7 + $0x1de0] sm:$0xff]
        %v6739 = vld [vmem:[#allocation7 + $0x1de8] sm:$0xff]
        %v6740 = vld [vmem:[#allocation7 + $0x1df0] sm:$0xff]
        %v6741 = vld [vmem:[#allocation7 + $0x1df8] sm:$0xff]
        %v6742 = vld [vmem:[#allocation7 + $0x1e00] sm:$0xff]
        %v6743 = vld [vmem:[#allocation7 + $0x1e08] sm:$0xff]
        %v6744 = vld [vmem:[#allocation7 + $0x1e10] sm:$0xff]
        %v6745 = vld [vmem:[#allocation7 + $0x1e18] sm:$0xff]
        %v6746 = vld [vmem:[#allocation7 + $0x1e20] sm:$0xff]
        %v6747 = vld [vmem:[#allocation7 + $0x1e28] sm:$0xff]
        %v6748 = vld [vmem:[#allocation7 + $0x1e30] sm:$0xff]
        %v6749 = vld [vmem:[#allocation7 + $0x1e38] sm:$0xff]
        %v6750 = vld [vmem:[#allocation7 + $0x1e40] sm:$0xff]
        %v6751 = vld [vmem:[#allocation7 + $0x1e48] sm:$0xff]
        %v6752 = vld [vmem:[#allocation7 + $0x1e50] sm:$0xff]
        %v6753 = vld [vmem:[#allocation7 + $0x1e58] sm:$0xff]
        %v6754 = vld [vmem:[#allocation7 + $0x1e60] sm:$0xff]
        %v6755 = vld [vmem:[#allocation7 + $0x1e68] sm:$0xff]
        %v6756 = vld [vmem:[#allocation7 + $0x1e70] sm:$0xff]
        %v6757 = vld [vmem:[#allocation7 + $0x1e78] sm:$0xff]
        %v6758 = vld [vmem:[#allocation7 + $0x1e80] sm:$0xff]
        %v6759 = vld [vmem:[#allocation7 + $0x1e88] sm:$0xff]
        %v6760 = vld [vmem:[#allocation7 + $0x1e90] sm:$0xff]
        %v6761 = vld [vmem:[#allocation7 + $0x1e98] sm:$0xff]
        %v6762 = vld [vmem:[#allocation7 + $0x1ea0] sm:$0xff]
        %v6763 = vld [vmem:[#allocation7 + $0x1ea8] sm:$0xff]
        %v6764 = vld [vmem:[#allocation7 + $0x1eb0] sm:$0xff]
        %v6765 = vld [vmem:[#allocation7 + $0x1eb8] sm:$0xff]
        %v6766 = vld [vmem:[#allocation7 + $0x1ec0] sm:$0xff]
        %v6767 = vld [vmem:[#allocation7 + $0x1ec8] sm:$0xff]
        %v6768 = vld [vmem:[#allocation7 + $0x1ed0] sm:$0xff]
        %v6769 = vld [vmem:[#allocation7 + $0x1ed8] sm:$0xff]
        %v6770 = vld [vmem:[#allocation7 + $0x1ee0] sm:$0xff]
        %v6771 = vld [vmem:[#allocation7 + $0x1ee8] sm:$0xff]
        %v6772 = vld [vmem:[#allocation7 + $0x1ef0] sm:$0xff]
        %v6773 = vld [vmem:[#allocation7 + $0x1ef8] sm:$0xff]
        %v6774 = vld [vmem:[#allocation7 + $0x1f00] sm:$0xff]
        %v6775 = vld [vmem:[#allocation7 + $0x1f08] sm:$0xff]
        %v6776 = vld [vmem:[#allocation7 + $0x1f10] sm:$0xff]
        %v6777 = vld [vmem:[#allocation7 + $0x1f18] sm:$0xff]
        %v6778 = vld [vmem:[#allocation7 + $0x1f20] sm:$0xff]
        %v6779 = vld [vmem:[#allocation7 + $0x1f28] sm:$0xff]
        %v6780 = vld [vmem:[#allocation7 + $0x1f30] sm:$0xff]
        %v6781 = vld [vmem:[#allocation7 + $0x1f38] sm:$0xff]
        %v6782 = vld [vmem:[#allocation7 + $0x1f40] sm:$0xff]
        %v6783 = vld [vmem:[#allocation7 + $0x1f48] sm:$0xff]
        %v6784 = vld [vmem:[#allocation7 + $0x1f50] sm:$0xff]
        %v6785 = vld [vmem:[#allocation7 + $0x1f58] sm:$0xff]
        %v6786 = vld [vmem:[#allocation7 + $0x1f60] sm:$0xff]
        %v6787 = vld [vmem:[#allocation7 + $0x1f68] sm:$0xff]
        %v6788 = vld [vmem:[#allocation7 + $0x1f70] sm:$0xff]
        %v6789 = vld [vmem:[#allocation7 + $0x1f78] sm:$0xff]
        %v6790 = vld [vmem:[#allocation7 + $0x1f80] sm:$0xff]
        %v6791 = vld [vmem:[#allocation7 + $0x1f88] sm:$0xff]
        %v6792 = vld [vmem:[#allocation7 + $0x1f90] sm:$0xff]
        %v6793 = vld [vmem:[#allocation7 + $0x1f98] sm:$0xff]
        %v6794 = vld [vmem:[#allocation7 + $0x1fa0] sm:$0xff]
        %v6795 = vld [vmem:[#allocation7 + $0x1fa8] sm:$0xff]
        %v6796 = vld [vmem:[#allocation7 + $0x1fb0] sm:$0xff]
        %v6797 = vld [vmem:[#allocation7 + $0x1fb8] sm:$0xff]
        %v6798 = vld [vmem:[#allocation7 + $0x1fc0] sm:$0xff]
        %v6799 = vld [vmem:[#allocation7 + $0x1fc8] sm:$0xff]
        %v6800 = vld [vmem:[#allocation7 + $0x1fd0] sm:$0xff]
        %v6801 = vld [vmem:[#allocation7 + $0x1fd8] sm:$0xff]
        %v6802 = vld [vmem:[#allocation7 + $0x1fe0] sm:$0xff]
        %v6803 = vld [vmem:[#allocation7 + $0x1fe8] sm:$0xff]
        %v6804 = vld [vmem:[#allocation7 + $0x1ff0] sm:$0xff]
        %v6805 = vld [vmem:[#allocation7 + $0x1ff8] sm:$0xff]
        %6806 = vmatprep.subr.mxu0 %v5903
        %6807 = vmatpush1.msra.mxu0 %v5902
        %6808 = vmatprep.subr.mxu0 %v5895
        %6809 = vmatpush1.msra.mxu0 %v5894
        %6810 = vmatprep.subr.mxu0 %v5887
        %6811 = vmatpush1.msra.mxu0 %v5886
        %6812 = vmatprep.subr.mxu0 %v5879
        %6813 = vmatpush1.msra.mxu0 %v5878
        %6814 = vmatprep.subr.mxu0 %v5871
        %6815 = vmatpush1.msra.mxu0 %v5870
        %6816 = vmatprep.subr.mxu0 %v5863
        %6817 = vmatpush1.msra.mxu0 %v5862
        %6818 = vmatprep.subr.mxu0 %v5855
        %6819 = vmatpush1.msra.mxu0 %v5854
        %6820 = vmatprep.subr.mxu0 %v5847
        %6821 = vmatpush1.msra.mxu0 %v5846
        %6822 = vmatprep.subr.mxu0 %v5839
        %6823 = vmatpush1.msra.mxu0 %v5838
        %6824 = vmatprep.subr.mxu0 %v5831
        %6825 = vmatpush1.msra.mxu0 %v5830
        %6826 = vmatprep.subr.mxu0 %v5823
        %6827 = vmatpush1.msra.mxu0 %v5822
        %6828 = vmatprep.subr.mxu0 %v5815
        %6829 = vmatpush1.msra.mxu0 %v5814
        %6830 = vmatprep.subr.mxu0 %v5807
        %6831 = vmatpush1.msra.mxu0 %v5806
        %6832 = vmatprep.subr.mxu0 %v5799
        %6833 = vmatpush1.msra.mxu0 %v5798
        %6834 = vmatprep.subr.mxu0 %v5791
        %6835 = vmatpush1.msra.mxu0 %v5790
        %6836 = vmatprep.subr.mxu0 %v5783
        %6837 = vmatpush1.msra.mxu0 %v5782
        %6838 = vmatprep.subr.mxu0 %v6031
        %6839 = vmatpush2.msra.mxu0 %v6030
        %6840 = vmatprep.subr.mxu0 %v6023
        %6841 = vmatpush2.msra.mxu0 %v6022
        %6842 = vmatprep.subr.mxu0 %v6015
        %6843 = vmatpush2.msra.mxu0 %v6014
        %6844 = vmatprep.subr.mxu0 %v6007
        %6845 = vmatpush2.msra.mxu0 %v6006
        %6846 = vmatprep.subr.mxu0 %v5999
        %6847 = vmatpush2.msra.mxu0 %v5998
        %6848 = vmatprep.subr.mxu0 %v5991
        %6849 = vmatpush2.msra.mxu0 %v5990
        %6850 = vmatprep.subr.mxu0 %v5983
        %6851 = vmatpush2.msra.mxu0 %v5982
        %6852 = vmatprep.subr.mxu0 %v5975
        %6853 = vmatpush2.msra.mxu0 %v5974
        %6854 = vmatprep.subr.mxu0 %v5967
        %6855 = vmatpush2.msra.mxu0 %v5966
        %6856 = vmatprep.subr.mxu0 %v5959
        %6857 = vmatpush2.msra.mxu0 %v5958
        %6858 = vmatprep.subr.mxu0 %v5951
        %6859 = vmatpush2.msra.mxu0 %v5950
        %6860 = vmatprep.subr.mxu0 %v5943
        %6861 = vmatpush2.msra.mxu0 %v5942
        %6862 = vmatprep.subr.mxu0 %v5935
        %6863 = vmatpush2.msra.mxu0 %v5934
        %6864 = vmatprep.subr.mxu0 %v5927
        %6865 = vmatpush2.msra.mxu0 %v5926
        %6866 = vmatprep.subr.mxu0 %v5919
        %6867 = vmatpush2.msra.mxu0 %v5918
        %6868 = vmatprep.subr.mxu0 %v5911
        %6869 = vmatpush2.msra.mxu0 %v5910
        %6870 = vmatprep.mubr.f32.mxu0 %v5739
        %6871 = vmatmul.mubr.f32.gmra.mxu0 %v5732
        %v6872 = vpop.f32.mrf.mxu0
        %v6873 = vadd.f32 0.0, %v6872
        %v6874 = vpop.f32.mrf.mxu0
        %v6875 = vadd.f32 0.0, %v6874
        %6876 = vdwg.mxu0
        %6877 = vmatprep.subr.mxu0 %v6159
        %6878 = vmatpush1.msra.mxu0 %v6158
        %6879 = vmatprep.subr.mxu0 %v6151
        %6880 = vmatpush1.msra.mxu0 %v6150
        %6881 = vmatprep.subr.mxu0 %v6143
        %6882 = vmatpush1.msra.mxu0 %v6142
        %6883 = vmatprep.subr.mxu0 %v6135
        %6884 = vmatpush1.msra.mxu0 %v6134
        %6885 = vmatprep.subr.mxu0 %v6127
        %6886 = vmatpush1.msra.mxu0 %v6126
        %6887 = vmatprep.subr.mxu0 %v6119
        %6888 = vmatpush1.msra.mxu0 %v6118
        %6889 = vmatprep.subr.mxu0 %v6111
        %6890 = vmatpush1.msra.mxu0 %v6110
        %6891 = vmatprep.subr.mxu0 %v6103
        %6892 = vmatpush1.msra.mxu0 %v6102
        %6893 = vmatprep.subr.mxu0 %v6095
        %6894 = vmatpush1.msra.mxu0 %v6094
        %6895 = vmatprep.subr.mxu0 %v6087
        %6896 = vmatpush1.msra.mxu0 %v6086
        %6897 = vmatprep.subr.mxu0 %v6079
        %6898 = vmatpush1.msra.mxu0 %v6078
        %6899 = vmatprep.subr.mxu0 %v6071
        %6900 = vmatpush1.msra.mxu0 %v6070
        %6901 = vmatprep.subr.mxu0 %v6063
        %6902 = vmatpush1.msra.mxu0 %v6062
        %6903 = vmatprep.subr.mxu0 %v6055
        %6904 = vmatpush1.msra.mxu0 %v6054
        %6905 = vmatprep.subr.mxu0 %v6047
        %6906 = vmatpush1.msra.mxu0 %v6046
        %6907 = vmatprep.subr.mxu0 %v6039
        %6908 = vmatpush1.msra.mxu0 %v6038
        %6909 = vmatprep.subr.mxu0 %v6287
        %6910 = vmatpush2.msra.mxu0 %v6286
        %6911 = vmatprep.subr.mxu0 %v6279
        %6912 = vmatpush2.msra.mxu0 %v6278
        %6913 = vmatprep.subr.mxu0 %v6271
        %6914 = vmatpush2.msra.mxu0 %v6270
        %6915 = vmatprep.subr.mxu0 %v6263
        %6916 = vmatpush2.msra.mxu0 %v6262
        %6917 = vmatprep.subr.mxu0 %v6255
        %6918 = vmatpush2.msra.mxu0 %v6254
        %6919 = vmatprep.subr.mxu0 %v6247
        %6920 = vmatpush2.msra.mxu0 %v6246
        %6921 = vmatprep.subr.mxu0 %v6239
        %6922 = vmatpush2.msra.mxu0 %v6238
        %6923 = vmatprep.subr.mxu0 %v6231
        %6924 = vmatpush2.msra.mxu0 %v6230
        %6925 = vmatprep.subr.mxu0 %v6223
        %6926 = vmatpush2.msra.mxu0 %v6222
        %6927 = vmatprep.subr.mxu0 %v6215
        %6928 = vmatpush2.msra.mxu0 %v6214
        %6929 = vmatprep.subr.mxu0 %v6207
        %6930 = vmatpush2.msra.mxu0 %v6206
        %6931 = vmatprep.subr.mxu0 %v6199
        %6932 = vmatpush2.msra.mxu0 %v6198
        %6933 = vmatprep.subr.mxu0 %v6191
        %6934 = vmatpush2.msra.mxu0 %v6190
        %6935 = vmatprep.subr.mxu0 %v6183
        %6936 = vmatpush2.msra.mxu0 %v6182
        %6937 = vmatprep.subr.mxu0 %v6175
        %6938 = vmatpush2.msra.mxu0 %v6174
        %6939 = vmatprep.subr.mxu0 %v6167
        %6940 = vmatpush2.msra.mxu0 %v6166
        %6941 = vmatprep.mubr.f32.mxu0 %v5753
        %6942 = vmatmul.mubr.f32.gmra.mxu0 %v5746
        %v6943 = vpop.f32.mrf.mxu0
        %v6944 = vadd.f32 %v6873, %v6943
        %v6945 = vpop.f32.mrf.mxu0
        %v6946 = vadd.f32 %v6875, %v6945
        %6947 = vdwg.mxu0
        %6948 = vmatprep.subr.mxu0 %v6415
        %6949 = vmatpush1.msra.mxu0 %v6414
        %6950 = vmatprep.subr.mxu0 %v6407
        %6951 = vmatpush1.msra.mxu0 %v6406
        %6952 = vmatprep.subr.mxu0 %v6399
        %6953 = vmatpush1.msra.mxu0 %v6398
        %6954 = vmatprep.subr.mxu0 %v6391
        %6955 = vmatpush1.msra.mxu0 %v6390
        %6956 = vmatprep.subr.mxu0 %v6383
        %6957 = vmatpush1.msra.mxu0 %v6382
        %6958 = vmatprep.subr.mxu0 %v6375
        %6959 = vmatpush1.msra.mxu0 %v6374
        %6960 = vmatprep.subr.mxu0 %v6367
        %6961 = vmatpush1.msra.mxu0 %v6366
        %6962 = vmatprep.subr.mxu0 %v6359
        %6963 = vmatpush1.msra.mxu0 %v6358
        %6964 = vmatprep.subr.mxu0 %v6351
        %6965 = vmatpush1.msra.mxu0 %v6350
        %6966 = vmatprep.subr.mxu0 %v6343
        %6967 = vmatpush1.msra.mxu0 %v6342
        %6968 = vmatprep.subr.mxu0 %v6335
        %6969 = vmatpush1.msra.mxu0 %v6334
        %6970 = vmatprep.subr.mxu0 %v6327
        %6971 = vmatpush1.msra.mxu0 %v6326
        %6972 = vmatprep.subr.mxu0 %v6319
        %6973 = vmatpush1.msra.mxu0 %v6318
        %6974 = vmatprep.subr.mxu0 %v6311
        %6975 = vmatpush1.msra.mxu0 %v6310
        %6976 = vmatprep.subr.mxu0 %v6303
        %6977 = vmatpush1.msra.mxu0 %v6302
        %6978 = vmatprep.subr.mxu0 %v6295
        %6979 = vmatpush1.msra.mxu0 %v6294
        %6980 = vmatprep.subr.mxu0 %v6543
        %6981 = vmatpush2.msra.mxu0 %v6542
        %6982 = vmatprep.subr.mxu0 %v6535
        %6983 = vmatpush2.msra.mxu0 %v6534
        %6984 = vmatprep.subr.mxu0 %v6527
        %6985 = vmatpush2.msra.mxu0 %v6526
        %6986 = vmatprep.subr.mxu0 %v6519
        %6987 = vmatpush2.msra.mxu0 %v6518
        %6988 = vmatprep.subr.mxu0 %v6511
        %6989 = vmatpush2.msra.mxu0 %v6510
        %6990 = vmatprep.subr.mxu0 %v6503
        %6991 = vmatpush2.msra.mxu0 %v6502
        %6992 = vmatprep.subr.mxu0 %v6495
        %6993 = vmatpush2.msra.mxu0 %v6494
        %6994 = vmatprep.subr.mxu0 %v6487
        %6995 = vmatpush2.msra.mxu0 %v6486
        %6996 = vmatprep.subr.mxu0 %v6479
        %6997 = vmatpush2.msra.mxu0 %v6478
        %6998 = vmatprep.subr.mxu0 %v6471
        %6999 = vmatpush2.msra.mxu0 %v6470
        %7000 = vmatprep.subr.mxu0 %v6463
        %7001 = vmatpush2.msra.mxu0 %v6462
        %7002 = vmatprep.subr.mxu0 %v6455
        %7003 = vmatpush2.msra.mxu0 %v6454
        %7004 = vmatprep.subr.mxu0 %v6447
        %7005 = vmatpush2.msra.mxu0 %v6446
        %7006 = vmatprep.subr.mxu0 %v6439
        %7007 = vmatpush2.msra.mxu0 %v6438
        %7008 = vmatprep.subr.mxu0 %v6431
        %7009 = vmatpush2.msra.mxu0 %v6430
        %7010 = vmatprep.subr.mxu0 %v6423
        %7011 = vmatpush2.msra.mxu0 %v6422
        %7012 = vmatprep.mubr.f32.mxu0 %v5767
        %7013 = vmatmul.mubr.f32.gmra.mxu0 %v5760
        %v7014 = vpop.f32.mrf.mxu0
        %v7015 = vadd.f32 %v6944, %v7014
        %v7016 = vpop.f32.mrf.mxu0
        %v7017 = vadd.f32 %v6946, %v7016
        %7018 = vdwg.mxu0
        %7019 = vmatprep.subr.mxu0 %v6671
        %7020 = vmatpush1.msra.mxu0 %v6670
        %7021 = vmatprep.subr.mxu0 %v6663
        %7022 = vmatpush1.msra.mxu0 %v6662
        %7023 = vmatprep.subr.mxu0 %v6655
        %7024 = vmatpush1.msra.mxu0 %v6654
        %7025 = vmatprep.subr.mxu0 %v6647
        %7026 = vmatpush1.msra.mxu0 %v6646
        %7027 = vmatprep.subr.mxu0 %v6639
        %7028 = vmatpush1.msra.mxu0 %v6638
        %7029 = vmatprep.subr.mxu0 %v6631
        %7030 = vmatpush1.msra.mxu0 %v6630
        %7031 = vmatprep.subr.mxu0 %v6623
        %7032 = vmatpush1.msra.mxu0 %v6622
        %7033 = vmatprep.subr.mxu0 %v6615
        %7034 = vmatpush1.msra.mxu0 %v6614
        %7035 = vmatprep.subr.mxu0 %v6607
        %7036 = vmatpush1.msra.mxu0 %v6606
        %7037 = vmatprep.subr.mxu0 %v6599
        %7038 = vmatpush1.msra.mxu0 %v6598
        %7039 = vmatprep.subr.mxu0 %v6591
        %7040 = vmatpush1.msra.mxu0 %v6590
        %7041 = vmatprep.subr.mxu0 %v6583
        %7042 = vmatpush1.msra.mxu0 %v6582
        %7043 = vmatprep.subr.mxu0 %v6575
        %7044 = vmatpush1.msra.mxu0 %v6574
        %7045 = vmatprep.subr.mxu0 %v6567
        %7046 = vmatpush1.msra.mxu0 %v6566
        %7047 = vmatprep.subr.mxu0 %v6559
        %7048 = vmatpush1.msra.mxu0 %v6558
        %7049 = vmatprep.subr.mxu0 %v6551
        %7050 = vmatpush1.msra.mxu0 %v6550
        %7051 = vmatprep.subr.mxu0 %v6799
        %7052 = vmatpush2.msra.mxu0 %v6798
        %7053 = vmatprep.subr.mxu0 %v6791
        %7054 = vmatpush2.msra.mxu0 %v6790
        %7055 = vmatprep.subr.mxu0 %v6783
        %7056 = vmatpush2.msra.mxu0 %v6782
        %7057 = vmatprep.subr.mxu0 %v6775
        %7058 = vmatpush2.msra.mxu0 %v6774
        %7059 = vmatprep.subr.mxu0 %v6767
        %7060 = vmatpush2.msra.mxu0 %v6766
        %7061 = vmatprep.subr.mxu0 %v6759
        %7062 = vmatpush2.msra.mxu0 %v6758
        %7063 = vmatprep.subr.mxu0 %v6751
        %7064 = vmatpush2.msra.mxu0 %v6750
        %7065 = vmatprep.subr.mxu0 %v6743
        %7066 = vmatpush2.msra.mxu0 %v6742
        %7067 = vmatprep.subr.mxu0 %v6735
        %7068 = vmatpush2.msra.mxu0 %v6734
        %7069 = vmatprep.subr.mxu0 %v6727
        %7070 = vmatpush2.msra.mxu0 %v6726
        %7071 = vmatprep.subr.mxu0 %v6719
        %7072 = vmatpush2.msra.mxu0 %v6718
        %7073 = vmatprep.subr.mxu0 %v6711
        %7074 = vmatpush2.msra.mxu0 %v6710
        %7075 = vmatprep.subr.mxu0 %v6703
        %7076 = vmatpush2.msra.mxu0 %v6702
        %7077 = vmatprep.subr.mxu0 %v6695
        %7078 = vmatpush2.msra.mxu0 %v6694
        %7079 = vmatprep.subr.mxu0 %v6687
        %7080 = vmatpush2.msra.mxu0 %v6686
        %7081 = vmatprep.subr.mxu0 %v6679
        %7082 = vmatpush2.msra.mxu0 %v6678
        %7083 = vmatprep.mubr.f32.mxu0 %v5781
        %7084 = vmatmul.mubr.f32.gmra.mxu0 %v5774
        %v7085 = vpop.f32.mrf.mxu0
        %v7086 = vadd.f32 %v7015, %v7085
        %v7087 = vpop.f32.mrf.mxu0
        %v7088 = vadd.f32 %v7017, %v7087
        %7089 = vdwg.mxu0
        %7090 = vmatprep.subr.mxu0 %v5905
        %7091 = vmatpush1.msra.mxu0 %v5904
        %7092 = vmatprep.subr.mxu0 %v5897
        %7093 = vmatpush1.msra.mxu0 %v5896
        %7094 = vmatprep.subr.mxu0 %v5889
        %7095 = vmatpush1.msra.mxu0 %v5888
        %7096 = vmatprep.subr.mxu0 %v5881
        %7097 = vmatpush1.msra.mxu0 %v5880
        %7098 = vmatprep.subr.mxu0 %v5873
        %7099 = vmatpush1.msra.mxu0 %v5872
        %7100 = vmatprep.subr.mxu0 %v5865
        %7101 = vmatpush1.msra.mxu0 %v5864
        %7102 = vmatprep.subr.mxu0 %v5857
        %7103 = vmatpush1.msra.mxu0 %v5856
        %7104 = vmatprep.subr.mxu0 %v5849
        %7105 = vmatpush1.msra.mxu0 %v5848
        %7106 = vmatprep.subr.mxu0 %v5841
        %7107 = vmatpush1.msra.mxu0 %v5840
        %7108 = vmatprep.subr.mxu0 %v5833
        %7109 = vmatpush1.msra.mxu0 %v5832
        %7110 = vmatprep.subr.mxu0 %v5825
        %7111 = vmatpush1.msra.mxu0 %v5824
        %7112 = vmatprep.subr.mxu0 %v5817
        %7113 = vmatpush1.msra.mxu0 %v5816
        %7114 = vmatprep.subr.mxu0 %v5809
        %7115 = vmatpush1.msra.mxu0 %v5808
        %7116 = vmatprep.subr.mxu0 %v5801
        %7117 = vmatpush1.msra.mxu0 %v5800
        %7118 = vmatprep.subr.mxu0 %v5793
        %7119 = vmatpush1.msra.mxu0 %v5792
        %7120 = vmatprep.subr.mxu0 %v5785
        %7121 = vmatpush1.msra.mxu0 %v5784
        %7122 = vmatprep.subr.mxu0 %v6033
        %7123 = vmatpush2.msra.mxu0 %v6032
        %7124 = vmatprep.subr.mxu0 %v6025
        %7125 = vmatpush2.msra.mxu0 %v6024
        %7126 = vmatprep.subr.mxu0 %v6017
        %7127 = vmatpush2.msra.mxu0 %v6016
        %7128 = vmatprep.subr.mxu0 %v6009
        %7129 = vmatpush2.msra.mxu0 %v6008
        %7130 = vmatprep.subr.mxu0 %v6001
        %7131 = vmatpush2.msra.mxu0 %v6000
        %7132 = vmatprep.subr.mxu0 %v5993
        %7133 = vmatpush2.msra.mxu0 %v5992
        %7134 = vmatprep.subr.mxu0 %v5985
        %7135 = vmatpush2.msra.mxu0 %v5984
        %7136 = vmatprep.subr.mxu0 %v5977
        %7137 = vmatpush2.msra.mxu0 %v5976
        %7138 = vmatprep.subr.mxu0 %v5969
        %7139 = vmatpush2.msra.mxu0 %v5968
        %7140 = vmatprep.subr.mxu0 %v5961
        %7141 = vmatpush2.msra.mxu0 %v5960
        %7142 = vmatprep.subr.mxu0 %v5953
        %7143 = vmatpush2.msra.mxu0 %v5952
        %7144 = vmatprep.subr.mxu0 %v5945
        %7145 = vmatpush2.msra.mxu0 %v5944
        %7146 = vmatprep.subr.mxu0 %v5937
        %7147 = vmatpush2.msra.mxu0 %v5936
        %7148 = vmatprep.subr.mxu0 %v5929
        %7149 = vmatpush2.msra.mxu0 %v5928
        %7150 = vmatprep.subr.mxu0 %v5921
        %7151 = vmatpush2.msra.mxu0 %v5920
        %7152 = vmatprep.subr.mxu0 %v5913
        %7153 = vmatpush2.msra.mxu0 %v5912
        %7154 = vmatprep.mubr.f32.mxu0 %v5739
        %7155 = vmatmul.mubr.f32.gmra.mxu0 %v5732
        %v7156 = vpop.f32.mrf.mxu0
        %v7157 = vadd.f32 0.0, %v7156
        %v7158 = vpop.f32.mrf.mxu0
        %v7159 = vadd.f32 0.0, %v7158
        %7160 = vdwg.mxu0
        %7161 = vmatprep.subr.mxu0 %v6161
        %7162 = vmatpush1.msra.mxu0 %v6160
        %7163 = vmatprep.subr.mxu0 %v6153
        %7164 = vmatpush1.msra.mxu0 %v6152
        %7165 = vmatprep.subr.mxu0 %v6145
        %7166 = vmatpush1.msra.mxu0 %v6144
        %7167 = vmatprep.subr.mxu0 %v6137
        %7168 = vmatpush1.msra.mxu0 %v6136
        %7169 = vmatprep.subr.mxu0 %v6129
        %7170 = vmatpush1.msra.mxu0 %v6128
        %7171 = vmatprep.subr.mxu0 %v6121
        %7172 = vmatpush1.msra.mxu0 %v6120
        %7173 = vmatprep.subr.mxu0 %v6113
        %7174 = vmatpush1.msra.mxu0 %v6112
        %7175 = vmatprep.subr.mxu0 %v6105
        %7176 = vmatpush1.msra.mxu0 %v6104
        %7177 = vmatprep.subr.mxu0 %v6097
        %7178 = vmatpush1.msra.mxu0 %v6096
        %7179 = vmatprep.subr.mxu0 %v6089
        %7180 = vmatpush1.msra.mxu0 %v6088
        %7181 = vmatprep.subr.mxu0 %v6081
        %7182 = vmatpush1.msra.mxu0 %v6080
        %7183 = vmatprep.subr.mxu0 %v6073
        %7184 = vmatpush1.msra.mxu0 %v6072
        %7185 = vmatprep.subr.mxu0 %v6065
        %7186 = vmatpush1.msra.mxu0 %v6064
        %7187 = vmatprep.subr.mxu0 %v6057
        %7188 = vmatpush1.msra.mxu0 %v6056
        %7189 = vmatprep.subr.mxu0 %v6049
        %7190 = vmatpush1.msra.mxu0 %v6048
        %7191 = vmatprep.subr.mxu0 %v6041
        %7192 = vmatpush1.msra.mxu0 %v6040
        %7193 = vmatprep.subr.mxu0 %v6289
        %7194 = vmatpush2.msra.mxu0 %v6288
        %7195 = vmatprep.subr.mxu0 %v6281
        %7196 = vmatpush2.msra.mxu0 %v6280
        %7197 = vmatprep.subr.mxu0 %v6273
        %7198 = vmatpush2.msra.mxu0 %v6272
        %7199 = vmatprep.subr.mxu0 %v6265
        %7200 = vmatpush2.msra.mxu0 %v6264
        %7201 = vmatprep.subr.mxu0 %v6257
        %7202 = vmatpush2.msra.mxu0 %v6256
        %7203 = vmatprep.subr.mxu0 %v6249
        %7204 = vmatpush2.msra.mxu0 %v6248
        %7205 = vmatprep.subr.mxu0 %v6241
        %7206 = vmatpush2.msra.mxu0 %v6240
        %7207 = vmatprep.subr.mxu0 %v6233
        %7208 = vmatpush2.msra.mxu0 %v6232
        %7209 = vmatprep.subr.mxu0 %v6225
        %7210 = vmatpush2.msra.mxu0 %v6224
        %7211 = vmatprep.subr.mxu0 %v6217
        %7212 = vmatpush2.msra.mxu0 %v6216
        %7213 = vmatprep.subr.mxu0 %v6209
        %7214 = vmatpush2.msra.mxu0 %v6208
        %7215 = vmatprep.subr.mxu0 %v6201
        %7216 = vmatpush2.msra.mxu0 %v6200
        %7217 = vmatprep.subr.mxu0 %v6193
        %7218 = vmatpush2.msra.mxu0 %v6192
        %7219 = vmatprep.subr.mxu0 %v6185
        %7220 = vmatpush2.msra.mxu0 %v6184
        %7221 = vmatprep.subr.mxu0 %v6177
        %7222 = vmatpush2.msra.mxu0 %v6176
        %7223 = vmatprep.subr.mxu0 %v6169
        %7224 = vmatpush2.msra.mxu0 %v6168
        %7225 = vmatprep.mubr.f32.mxu0 %v5753
        %7226 = vmatmul.mubr.f32.gmra.mxu0 %v5746
        %v7227 = vpop.f32.mrf.mxu0
        %v7228 = vadd.f32 %v7157, %v7227
        %v7229 = vpop.f32.mrf.mxu0
        %v7230 = vadd.f32 %v7159, %v7229
        %7231 = vdwg.mxu0
        %7232 = vmatprep.subr.mxu0 %v6417
        %7233 = vmatpush1.msra.mxu0 %v6416
        %7234 = vmatprep.subr.mxu0 %v6409
        %7235 = vmatpush1.msra.mxu0 %v6408
        %7236 = vmatprep.subr.mxu0 %v6401
        %7237 = vmatpush1.msra.mxu0 %v6400
        %7238 = vmatprep.subr.mxu0 %v6393
        %7239 = vmatpush1.msra.mxu0 %v6392
        %7240 = vmatprep.subr.mxu0 %v6385
        %7241 = vmatpush1.msra.mxu0 %v6384
        %7242 = vmatprep.subr.mxu0 %v6377
        %7243 = vmatpush1.msra.mxu0 %v6376
        %7244 = vmatprep.subr.mxu0 %v6369
        %7245 = vmatpush1.msra.mxu0 %v6368
        %7246 = vmatprep.subr.mxu0 %v6361
        %7247 = vmatpush1.msra.mxu0 %v6360
        %7248 = vmatprep.subr.mxu0 %v6353
        %7249 = vmatpush1.msra.mxu0 %v6352
        %7250 = vmatprep.subr.mxu0 %v6345
        %7251 = vmatpush1.msra.mxu0 %v6344
        %7252 = vmatprep.subr.mxu0 %v6337
        %7253 = vmatpush1.msra.mxu0 %v6336
        %7254 = vmatprep.subr.mxu0 %v6329
        %7255 = vmatpush1.msra.mxu0 %v6328
        %7256 = vmatprep.subr.mxu0 %v6321
        %7257 = vmatpush1.msra.mxu0 %v6320
        %7258 = vmatprep.subr.mxu0 %v6313
        %7259 = vmatpush1.msra.mxu0 %v6312
        %7260 = vmatprep.subr.mxu0 %v6305
        %7261 = vmatpush1.msra.mxu0 %v6304
        %7262 = vmatprep.subr.mxu0 %v6297
        %7263 = vmatpush1.msra.mxu0 %v6296
        %7264 = vmatprep.subr.mxu0 %v6545
        %7265 = vmatpush2.msra.mxu0 %v6544
        %7266 = vmatprep.subr.mxu0 %v6537
        %7267 = vmatpush2.msra.mxu0 %v6536
        %7268 = vmatprep.subr.mxu0 %v6529
        %7269 = vmatpush2.msra.mxu0 %v6528
        %7270 = vmatprep.subr.mxu0 %v6521
        %7271 = vmatpush2.msra.mxu0 %v6520
        %7272 = vmatprep.subr.mxu0 %v6513
        %7273 = vmatpush2.msra.mxu0 %v6512
        %7274 = vmatprep.subr.mxu0 %v6505
        %7275 = vmatpush2.msra.mxu0 %v6504
        %7276 = vmatprep.subr.mxu0 %v6497
        %7277 = vmatpush2.msra.mxu0 %v6496
        %7278 = vmatprep.subr.mxu0 %v6489
        %7279 = vmatpush2.msra.mxu0 %v6488
        %7280 = vmatprep.subr.mxu0 %v6481
        %7281 = vmatpush2.msra.mxu0 %v6480
        %7282 = vmatprep.subr.mxu0 %v6473
        %7283 = vmatpush2.msra.mxu0 %v6472
        %7284 = vmatprep.subr.mxu0 %v6465
        %7285 = vmatpush2.msra.mxu0 %v6464
        %7286 = vmatprep.subr.mxu0 %v6457
        %7287 = vmatpush2.msra.mxu0 %v6456
        %7288 = vmatprep.subr.mxu0 %v6449
        %7289 = vmatpush2.msra.mxu0 %v6448
        %7290 = vmatprep.subr.mxu0 %v6441
        %7291 = vmatpush2.msra.mxu0 %v6440
        %7292 = vmatprep.subr.mxu0 %v6433
        %7293 = vmatpush2.msra.mxu0 %v6432
        %7294 = vmatprep.subr.mxu0 %v6425
        %7295 = vmatpush2.msra.mxu0 %v6424
        %7296 = vmatprep.mubr.f32.mxu0 %v5767
        %7297 = vmatmul.mubr.f32.gmra.mxu0 %v5760
        %v7298 = vpop.f32.mrf.mxu0
        %v7299 = vadd.f32 %v7228, %v7298
        %v7300 = vpop.f32.mrf.mxu0
        %v7301 = vadd.f32 %v7230, %v7300
        %7302 = vdwg.mxu0
        %7303 = vmatprep.subr.mxu0 %v6673
        %7304 = vmatpush1.msra.mxu0 %v6672
        %7305 = vmatprep.subr.mxu0 %v6665
        %7306 = vmatpush1.msra.mxu0 %v6664
        %7307 = vmatprep.subr.mxu0 %v6657
        %7308 = vmatpush1.msra.mxu0 %v6656
        %7309 = vmatprep.subr.mxu0 %v6649
        %7310 = vmatpush1.msra.mxu0 %v6648
        %7311 = vmatprep.subr.mxu0 %v6641
        %7312 = vmatpush1.msra.mxu0 %v6640
        %7313 = vmatprep.subr.mxu0 %v6633
        %7314 = vmatpush1.msra.mxu0 %v6632
        %7315 = vmatprep.subr.mxu0 %v6625
        %7316 = vmatpush1.msra.mxu0 %v6624
        %7317 = vmatprep.subr.mxu0 %v6617
        %7318 = vmatpush1.msra.mxu0 %v6616
        %7319 = vmatprep.subr.mxu0 %v6609
        %7320 = vmatpush1.msra.mxu0 %v6608
        %7321 = vmatprep.subr.mxu0 %v6601
        %7322 = vmatpush1.msra.mxu0 %v6600
        %7323 = vmatprep.subr.mxu0 %v6593
        %7324 = vmatpush1.msra.mxu0 %v6592
        %7325 = vmatprep.subr.mxu0 %v6585
        %7326 = vmatpush1.msra.mxu0 %v6584
        %7327 = vmatprep.subr.mxu0 %v6577
        %7328 = vmatpush1.msra.mxu0 %v6576
        %7329 = vmatprep.subr.mxu0 %v6569
        %7330 = vmatpush1.msra.mxu0 %v6568
        %7331 = vmatprep.subr.mxu0 %v6561
        %7332 = vmatpush1.msra.mxu0 %v6560
        %7333 = vmatprep.subr.mxu0 %v6553
        %7334 = vmatpush1.msra.mxu0 %v6552
        %7335 = vmatprep.subr.mxu0 %v6801
        %7336 = vmatpush2.msra.mxu0 %v6800
        %7337 = vmatprep.subr.mxu0 %v6793
        %7338 = vmatpush2.msra.mxu0 %v6792
        %7339 = vmatprep.subr.mxu0 %v6785
        %7340 = vmatpush2.msra.mxu0 %v6784
        %7341 = vmatprep.subr.mxu0 %v6777
        %7342 = vmatpush2.msra.mxu0 %v6776
        %7343 = vmatprep.subr.mxu0 %v6769
        %7344 = vmatpush2.msra.mxu0 %v6768
        %7345 = vmatprep.subr.mxu0 %v6761
        %7346 = vmatpush2.msra.mxu0 %v6760
        %7347 = vmatprep.subr.mxu0 %v6753
        %7348 = vmatpush2.msra.mxu0 %v6752
        %7349 = vmatprep.subr.mxu0 %v6745
        %7350 = vmatpush2.msra.mxu0 %v6744
        %7351 = vmatprep.subr.mxu0 %v6737
        %7352 = vmatpush2.msra.mxu0 %v6736
        %7353 = vmatprep.subr.mxu0 %v6729
        %7354 = vmatpush2.msra.mxu0 %v6728
        %7355 = vmatprep.subr.mxu0 %v6721
        %7356 = vmatpush2.msra.mxu0 %v6720
        %7357 = vmatprep.subr.mxu0 %v6713
        %7358 = vmatpush2.msra.mxu0 %v6712
        %7359 = vmatprep.subr.mxu0 %v6705
        %7360 = vmatpush2.msra.mxu0 %v6704
        %7361 = vmatprep.subr.mxu0 %v6697
        %7362 = vmatpush2.msra.mxu0 %v6696
        %7363 = vmatprep.subr.mxu0 %v6689
        %7364 = vmatpush2.msra.mxu0 %v6688
        %7365 = vmatprep.subr.mxu0 %v6681
        %7366 = vmatpush2.msra.mxu0 %v6680
        %7367 = vmatprep.mubr.f32.mxu0 %v5781
        %7368 = vmatmul.mubr.f32.gmra.mxu0 %v5774
        %v7369 = vpop.f32.mrf.mxu0
        %v7370 = vadd.f32 %v7299, %v7369
        %v7371 = vpop.f32.mrf.mxu0
        %v7372 = vadd.f32 %v7301, %v7371
        %7373 = vdwg.mxu0
        %7374 = vmatprep.subr.mxu0 %v5907
        %7375 = vmatpush1.msra.mxu0 %v5906
        %7376 = vmatprep.subr.mxu0 %v5899
        %7377 = vmatpush1.msra.mxu0 %v5898
        %7378 = vmatprep.subr.mxu0 %v5891
        %7379 = vmatpush1.msra.mxu0 %v5890
        %7380 = vmatprep.subr.mxu0 %v5883
        %7381 = vmatpush1.msra.mxu0 %v5882
        %7382 = vmatprep.subr.mxu0 %v5875
        %7383 = vmatpush1.msra.mxu0 %v5874
        %7384 = vmatprep.subr.mxu0 %v5867
        %7385 = vmatpush1.msra.mxu0 %v5866
        %7386 = vmatprep.subr.mxu0 %v5859
        %7387 = vmatpush1.msra.mxu0 %v5858
        %7388 = vmatprep.subr.mxu0 %v5851
        %7389 = vmatpush1.msra.mxu0 %v5850
        %7390 = vmatprep.subr.mxu0 %v5843
        %7391 = vmatpush1.msra.mxu0 %v5842
        %7392 = vmatprep.subr.mxu0 %v5835
        %7393 = vmatpush1.msra.mxu0 %v5834
        %7394 = vmatprep.subr.mxu0 %v5827
        %7395 = vmatpush1.msra.mxu0 %v5826
        %7396 = vmatprep.subr.mxu0 %v5819
        %7397 = vmatpush1.msra.mxu0 %v5818
        %7398 = vmatprep.subr.mxu0 %v5811
        %7399 = vmatpush1.msra.mxu0 %v5810
        %7400 = vmatprep.subr.mxu0 %v5803
        %7401 = vmatpush1.msra.mxu0 %v5802
        %7402 = vmatprep.subr.mxu0 %v5795
        %7403 = vmatpush1.msra.mxu0 %v5794
        %7404 = vmatprep.subr.mxu0 %v5787
        %7405 = vmatpush1.msra.mxu0 %v5786
        %7406 = vmatprep.subr.mxu0 %v6035
        %7407 = vmatpush2.msra.mxu0 %v6034
        %7408 = vmatprep.subr.mxu0 %v6027
        %7409 = vmatpush2.msra.mxu0 %v6026
        %7410 = vmatprep.subr.mxu0 %v6019
        %7411 = vmatpush2.msra.mxu0 %v6018
        %7412 = vmatprep.subr.mxu0 %v6011
        %7413 = vmatpush2.msra.mxu0 %v6010
        %7414 = vmatprep.subr.mxu0 %v6003
        %7415 = vmatpush2.msra.mxu0 %v6002
        %7416 = vmatprep.subr.mxu0 %v5995
        %7417 = vmatpush2.msra.mxu0 %v5994
        %7418 = vmatprep.subr.mxu0 %v5987
        %7419 = vmatpush2.msra.mxu0 %v5986
        %7420 = vmatprep.subr.mxu0 %v5979
        %7421 = vmatpush2.msra.mxu0 %v5978
        %7422 = vmatprep.subr.mxu0 %v5971
        %7423 = vmatpush2.msra.mxu0 %v5970
        %7424 = vmatprep.subr.mxu0 %v5963
        %7425 = vmatpush2.msra.mxu0 %v5962
        %7426 = vmatprep.subr.mxu0 %v5955
        %7427 = vmatpush2.msra.mxu0 %v5954
        %7428 = vmatprep.subr.mxu0 %v5947
        %7429 = vmatpush2.msra.mxu0 %v5946
        %7430 = vmatprep.subr.mxu0 %v5939
        %7431 = vmatpush2.msra.mxu0 %v5938
        %7432 = vmatprep.subr.mxu0 %v5931
        %7433 = vmatpush2.msra.mxu0 %v5930
        %7434 = vmatprep.subr.mxu0 %v5923
        %7435 = vmatpush2.msra.mxu0 %v5922
        %7436 = vmatprep.subr.mxu0 %v5915
        %7437 = vmatpush2.msra.mxu0 %v5914
        %7438 = vmatprep.mubr.f32.mxu0 %v5739
        %7439 = vmatmul.mubr.f32.gmra.mxu0 %v5732
        %v7440 = vpop.f32.mrf.mxu0
        %v7441 = vadd.f32 0.0, %v7440
        %v7442 = vpop.f32.mrf.mxu0
        %v7443 = vadd.f32 0.0, %v7442
        %7444 = vdwg.mxu0
        %7445 = vmatprep.subr.mxu0 %v6163
        %7446 = vmatpush1.msra.mxu0 %v6162
        %7447 = vmatprep.subr.mxu0 %v6155
        %7448 = vmatpush1.msra.mxu0 %v6154
        %7449 = vmatprep.subr.mxu0 %v6147
        %7450 = vmatpush1.msra.mxu0 %v6146
        %7451 = vmatprep.subr.mxu0 %v6139
        %7452 = vmatpush1.msra.mxu0 %v6138
        %7453 = vmatprep.subr.mxu0 %v6131
        %7454 = vmatpush1.msra.mxu0 %v6130
        %7455 = vmatprep.subr.mxu0 %v6123
        %7456 = vmatpush1.msra.mxu0 %v6122
        %7457 = vmatprep.subr.mxu0 %v6115
        %7458 = vmatpush1.msra.mxu0 %v6114
        %7459 = vmatprep.subr.mxu0 %v6107
        %7460 = vmatpush1.msra.mxu0 %v6106
        %7461 = vmatprep.subr.mxu0 %v6099
        %7462 = vmatpush1.msra.mxu0 %v6098
        %7463 = vmatprep.subr.mxu0 %v6091
        %7464 = vmatpush1.msra.mxu0 %v6090
        %7465 = vmatprep.subr.mxu0 %v6083
        %7466 = vmatpush1.msra.mxu0 %v6082
        %7467 = vmatprep.subr.mxu0 %v6075
        %7468 = vmatpush1.msra.mxu0 %v6074
        %7469 = vmatprep.subr.mxu0 %v6067
        %7470 = vmatpush1.msra.mxu0 %v6066
        %7471 = vmatprep.subr.mxu0 %v6059
        %7472 = vmatpush1.msra.mxu0 %v6058
        %7473 = vmatprep.subr.mxu0 %v6051
        %7474 = vmatpush1.msra.mxu0 %v6050
        %7475 = vmatprep.subr.mxu0 %v6043
        %7476 = vmatpush1.msra.mxu0 %v6042
        %7477 = vmatprep.subr.mxu0 %v6291
        %7478 = vmatpush2.msra.mxu0 %v6290
        %7479 = vmatprep.subr.mxu0 %v6283
        %7480 = vmatpush2.msra.mxu0 %v6282
        %7481 = vmatprep.subr.mxu0 %v6275
        %7482 = vmatpush2.msra.mxu0 %v6274
        %7483 = vmatprep.subr.mxu0 %v6267
        %7484 = vmatpush2.msra.mxu0 %v6266
        %7485 = vmatprep.subr.mxu0 %v6259
        %7486 = vmatpush2.msra.mxu0 %v6258
        %7487 = vmatprep.subr.mxu0 %v6251
        %7488 = vmatpush2.msra.mxu0 %v6250
        %7489 = vmatprep.subr.mxu0 %v6243
        %7490 = vmatpush2.msra.mxu0 %v6242
        %7491 = vmatprep.subr.mxu0 %v6235
        %7492 = vmatpush2.msra.mxu0 %v6234
        %7493 = vmatprep.subr.mxu0 %v6227
        %7494 = vmatpush2.msra.mxu0 %v6226
        %7495 = vmatprep.subr.mxu0 %v6219
        %7496 = vmatpush2.msra.mxu0 %v6218
        %7497 = vmatprep.subr.mxu0 %v6211
        %7498 = vmatpush2.msra.mxu0 %v6210
        %7499 = vmatprep.subr.mxu0 %v6203
        %7500 = vmatpush2.msra.mxu0 %v6202
        %7501 = vmatprep.subr.mxu0 %v6195
        %7502 = vmatpush2.msra.mxu0 %v6194
        %7503 = vmatprep.subr.mxu0 %v6187
        %7504 = vmatpush2.msra.mxu0 %v6186
        %7505 = vmatprep.subr.mxu0 %v6179
        %7506 = vmatpush2.msra.mxu0 %v6178
        %7507 = vmatprep.subr.mxu0 %v6171
        %7508 = vmatpush2.msra.mxu0 %v6170
        %7509 = vmatprep.mubr.f32.mxu0 %v5753
        %7510 = vmatmul.mubr.f32.gmra.mxu0 %v5746
        %v7511 = vpop.f32.mrf.mxu0
        %v7512 = vadd.f32 %v7441, %v7511
        %v7513 = vpop.f32.mrf.mxu0
        %v7514 = vadd.f32 %v7443, %v7513
        %7515 = vdwg.mxu0
        %7516 = vmatprep.subr.mxu0 %v6419
        %7517 = vmatpush1.msra.mxu0 %v6418
        %7518 = vmatprep.subr.mxu0 %v6411
        %7519 = vmatpush1.msra.mxu0 %v6410
        %7520 = vmatprep.subr.mxu0 %v6403
        %7521 = vmatpush1.msra.mxu0 %v6402
        %7522 = vmatprep.subr.mxu0 %v6395
        %7523 = vmatpush1.msra.mxu0 %v6394
        %7524 = vmatprep.subr.mxu0 %v6387
        %7525 = vmatpush1.msra.mxu0 %v6386
        %7526 = vmatprep.subr.mxu0 %v6379
        %7527 = vmatpush1.msra.mxu0 %v6378
        %7528 = vmatprep.subr.mxu0 %v6371
        %7529 = vmatpush1.msra.mxu0 %v6370
        %7530 = vmatprep.subr.mxu0 %v6363
        %7531 = vmatpush1.msra.mxu0 %v6362
        %7532 = vmatprep.subr.mxu0 %v6355
        %7533 = vmatpush1.msra.mxu0 %v6354
        %7534 = vmatprep.subr.mxu0 %v6347
        %7535 = vmatpush1.msra.mxu0 %v6346
        %7536 = vmatprep.subr.mxu0 %v6339
        %7537 = vmatpush1.msra.mxu0 %v6338
        %7538 = vmatprep.subr.mxu0 %v6331
        %7539 = vmatpush1.msra.mxu0 %v6330
        %7540 = vmatprep.subr.mxu0 %v6323
        %7541 = vmatpush1.msra.mxu0 %v6322
        %7542 = vmatprep.subr.mxu0 %v6315
        %7543 = vmatpush1.msra.mxu0 %v6314
        %7544 = vmatprep.subr.mxu0 %v6307
        %7545 = vmatpush1.msra.mxu0 %v6306
        %7546 = vmatprep.subr.mxu0 %v6299
        %7547 = vmatpush1.msra.mxu0 %v6298
        %7548 = vmatprep.subr.mxu0 %v6547
        %7549 = vmatpush2.msra.mxu0 %v6546
        %7550 = vmatprep.subr.mxu0 %v6539
        %7551 = vmatpush2.msra.mxu0 %v6538
        %7552 = vmatprep.subr.mxu0 %v6531
        %7553 = vmatpush2.msra.mxu0 %v6530
        %7554 = vmatprep.subr.mxu0 %v6523
        %7555 = vmatpush2.msra.mxu0 %v6522
        %7556 = vmatprep.subr.mxu0 %v6515
        %7557 = vmatpush2.msra.mxu0 %v6514
        %7558 = vmatprep.subr.mxu0 %v6507
        %7559 = vmatpush2.msra.mxu0 %v6506
        %7560 = vmatprep.subr.mxu0 %v6499
        %7561 = vmatpush2.msra.mxu0 %v6498
        %7562 = vmatprep.subr.mxu0 %v6491
        %7563 = vmatpush2.msra.mxu0 %v6490
        %7564 = vmatprep.subr.mxu0 %v6483
        %7565 = vmatpush2.msra.mxu0 %v6482
        %7566 = vmatprep.subr.mxu0 %v6475
        %7567 = vmatpush2.msra.mxu0 %v6474
        %7568 = vmatprep.subr.mxu0 %v6467
        %7569 = vmatpush2.msra.mxu0 %v6466
        %7570 = vmatprep.subr.mxu0 %v6459
        %7571 = vmatpush2.msra.mxu0 %v6458
        %7572 = vmatprep.subr.mxu0 %v6451
        %7573 = vmatpush2.msra.mxu0 %v6450
        %7574 = vmatprep.subr.mxu0 %v6443
        %7575 = vmatpush2.msra.mxu0 %v6442
        %7576 = vmatprep.subr.mxu0 %v6435
        %7577 = vmatpush2.msra.mxu0 %v6434
        %7578 = vmatprep.subr.mxu0 %v6427
        %7579 = vmatpush2.msra.mxu0 %v6426
        %7580 = vmatprep.mubr.f32.mxu0 %v5767
        %7581 = vmatmul.mubr.f32.gmra.mxu0 %v5760
        %v7582 = vpop.f32.mrf.mxu0
        %v7583 = vadd.f32 %v7512, %v7582
        %v7584 = vpop.f32.mrf.mxu0
        %v7585 = vadd.f32 %v7514, %v7584
        %7586 = vdwg.mxu0
        %7587 = vmatprep.subr.mxu0 %v6675
        %7588 = vmatpush1.msra.mxu0 %v6674
        %7589 = vmatprep.subr.mxu0 %v6667
        %7590 = vmatpush1.msra.mxu0 %v6666
        %7591 = vmatprep.subr.mxu0 %v6659
        %7592 = vmatpush1.msra.mxu0 %v6658
        %7593 = vmatprep.subr.mxu0 %v6651
        %7594 = vmatpush1.msra.mxu0 %v6650
        %7595 = vmatprep.subr.mxu0 %v6643
        %7596 = vmatpush1.msra.mxu0 %v6642
        %7597 = vmatprep.subr.mxu0 %v6635
        %7598 = vmatpush1.msra.mxu0 %v6634
        %7599 = vmatprep.subr.mxu0 %v6627
        %7600 = vmatpush1.msra.mxu0 %v6626
        %7601 = vmatprep.subr.mxu0 %v6619
        %7602 = vmatpush1.msra.mxu0 %v6618
        %7603 = vmatprep.subr.mxu0 %v6611
        %7604 = vmatpush1.msra.mxu0 %v6610
        %7605 = vmatprep.subr.mxu0 %v6603
        %7606 = vmatpush1.msra.mxu0 %v6602
        %7607 = vmatprep.subr.mxu0 %v6595
        %7608 = vmatpush1.msra.mxu0 %v6594
        %7609 = vmatprep.subr.mxu0 %v6587
        %7610 = vmatpush1.msra.mxu0 %v6586
        %7611 = vmatprep.subr.mxu0 %v6579
        %7612 = vmatpush1.msra.mxu0 %v6578
        %7613 = vmatprep.subr.mxu0 %v6571
        %7614 = vmatpush1.msra.mxu0 %v6570
        %7615 = vmatprep.subr.mxu0 %v6563
        %7616 = vmatpush1.msra.mxu0 %v6562
        %7617 = vmatprep.subr.mxu0 %v6555
        %7618 = vmatpush1.msra.mxu0 %v6554
        %7619 = vmatprep.subr.mxu0 %v6803
        %7620 = vmatpush2.msra.mxu0 %v6802
        %7621 = vmatprep.subr.mxu0 %v6795
        %7622 = vmatpush2.msra.mxu0 %v6794
        %7623 = vmatprep.subr.mxu0 %v6787
        %7624 = vmatpush2.msra.mxu0 %v6786
        %7625 = vmatprep.subr.mxu0 %v6779
        %7626 = vmatpush2.msra.mxu0 %v6778
        %7627 = vmatprep.subr.mxu0 %v6771
        %7628 = vmatpush2.msra.mxu0 %v6770
        %7629 = vmatprep.subr.mxu0 %v6763
        %7630 = vmatpush2.msra.mxu0 %v6762
        %7631 = vmatprep.subr.mxu0 %v6755
        %7632 = vmatpush2.msra.mxu0 %v6754
        %7633 = vmatprep.subr.mxu0 %v6747
        %7634 = vmatpush2.msra.mxu0 %v6746
        %7635 = vmatprep.subr.mxu0 %v6739
        %7636 = vmatpush2.msra.mxu0 %v6738
        %7637 = vmatprep.subr.mxu0 %v6731
        %7638 = vmatpush2.msra.mxu0 %v6730
        %7639 = vmatprep.subr.mxu0 %v6723
        %7640 = vmatpush2.msra.mxu0 %v6722
        %7641 = vmatprep.subr.mxu0 %v6715
        %7642 = vmatpush2.msra.mxu0 %v6714
        %7643 = vmatprep.subr.mxu0 %v6707
        %7644 = vmatpush2.msra.mxu0 %v6706
        %7645 = vmatprep.subr.mxu0 %v6699
        %7646 = vmatpush2.msra.mxu0 %v6698
        %7647 = vmatprep.subr.mxu0 %v6691
        %7648 = vmatpush2.msra.mxu0 %v6690
        %7649 = vmatprep.subr.mxu0 %v6683
        %7650 = vmatpush2.msra.mxu0 %v6682
        %7651 = vmatprep.mubr.f32.mxu0 %v5781
        %7652 = vmatmul.mubr.f32.gmra.mxu0 %v5774
        %v7653 = vpop.f32.mrf.mxu0
        %v7654 = vadd.f32 %v7583, %v7653
        %v7655 = vpop.f32.mrf.mxu0
        %v7656 = vadd.f32 %v7585, %v7655
        %7657 = vdwg.mxu0
        %7658 = vmatprep.subr.mxu0 %v5909
        %7659 = vmatpush1.msra.mxu0 %v5908
        %7660 = vmatprep.subr.mxu0 %v5901
        %7661 = vmatpush1.msra.mxu0 %v5900
        %7662 = vmatprep.subr.mxu0 %v5893
        %7663 = vmatpush1.msra.mxu0 %v5892
        %7664 = vmatprep.subr.mxu0 %v5885
        %7665 = vmatpush1.msra.mxu0 %v5884
        %7666 = vmatprep.subr.mxu0 %v5877
        %7667 = vmatpush1.msra.mxu0 %v5876
        %7668 = vmatprep.subr.mxu0 %v5869
        %7669 = vmatpush1.msra.mxu0 %v5868
        %7670 = vmatprep.subr.mxu0 %v5861
        %7671 = vmatpush1.msra.mxu0 %v5860
        %7672 = vmatprep.subr.mxu0 %v5853
        %7673 = vmatpush1.msra.mxu0 %v5852
        %7674 = vmatprep.subr.mxu0 %v5845
        %7675 = vmatpush1.msra.mxu0 %v5844
        %7676 = vmatprep.subr.mxu0 %v5837
        %7677 = vmatpush1.msra.mxu0 %v5836
        %7678 = vmatprep.subr.mxu0 %v5829
        %7679 = vmatpush1.msra.mxu0 %v5828
        %7680 = vmatprep.subr.mxu0 %v5821
        %7681 = vmatpush1.msra.mxu0 %v5820
        %7682 = vmatprep.subr.mxu0 %v5813
        %7683 = vmatpush1.msra.mxu0 %v5812
        %7684 = vmatprep.subr.mxu0 %v5805
        %7685 = vmatpush1.msra.mxu0 %v5804
        %7686 = vmatprep.subr.mxu0 %v5797
        %7687 = vmatpush1.msra.mxu0 %v5796
        %7688 = vmatprep.subr.mxu0 %v5789
        %7689 = vmatpush1.msra.mxu0 %v5788
        %7690 = vmatprep.subr.mxu0 %v6037
        %7691 = vmatpush2.msra.mxu0 %v6036
        %7692 = vmatprep.subr.mxu0 %v6029
        %7693 = vmatpush2.msra.mxu0 %v6028
        %7694 = vmatprep.subr.mxu0 %v6021
        %7695 = vmatpush2.msra.mxu0 %v6020
        %7696 = vmatprep.subr.mxu0 %v6013
        %7697 = vmatpush2.msra.mxu0 %v6012
        %7698 = vmatprep.subr.mxu0 %v6005
        %7699 = vmatpush2.msra.mxu0 %v6004
        %7700 = vmatprep.subr.mxu0 %v5997
        %7701 = vmatpush2.msra.mxu0 %v5996
        %7702 = vmatprep.subr.mxu0 %v5989
        %7703 = vmatpush2.msra.mxu0 %v5988
        %7704 = vmatprep.subr.mxu0 %v5981
        %7705 = vmatpush2.msra.mxu0 %v5980
        %7706 = vmatprep.subr.mxu0 %v5973
        %7707 = vmatpush2.msra.mxu0 %v5972
        %7708 = vmatprep.subr.mxu0 %v5965
        %7709 = vmatpush2.msra.mxu0 %v5964
        %7710 = vmatprep.subr.mxu0 %v5957
        %7711 = vmatpush2.msra.mxu0 %v5956
        %7712 = vmatprep.subr.mxu0 %v5949
        %7713 = vmatpush2.msra.mxu0 %v5948
        %7714 = vmatprep.subr.mxu0 %v5941
        %7715 = vmatpush2.msra.mxu0 %v5940
        %7716 = vmatprep.subr.mxu0 %v5933
        %7717 = vmatpush2.msra.mxu0 %v5932
        %7718 = vmatprep.subr.mxu0 %v5925
        %7719 = vmatpush2.msra.mxu0 %v5924
        %7720 = vmatprep.subr.mxu0 %v5917
        %7721 = vmatpush2.msra.mxu0 %v5916
        %7722 = vmatprep.mubr.f32.mxu0 %v5739
        %7723 = vmatmul.mubr.f32.gmra.mxu0 %v5732
        %v7724 = vpop.f32.mrf.mxu0
        %v7725 = vadd.f32 0.0, %v7724
        %v7726 = vpop.f32.mrf.mxu0
        %v7727 = vadd.f32 0.0, %v7726
        %7728 = vdwg.mxu0
        %7729 = vmatprep.subr.mxu0 %v6165
        %7730 = vmatpush1.msra.mxu0 %v6164
        %7731 = vmatprep.subr.mxu0 %v6157
        %7732 = vmatpush1.msra.mxu0 %v6156
        %7733 = vmatprep.subr.mxu0 %v6149
        %7734 = vmatpush1.msra.mxu0 %v6148
        %7735 = vmatprep.subr.mxu0 %v6141
        %7736 = vmatpush1.msra.mxu0 %v6140
        %7737 = vmatprep.subr.mxu0 %v6133
        %7738 = vmatpush1.msra.mxu0 %v6132
        %7739 = vmatprep.subr.mxu0 %v6125
        %7740 = vmatpush1.msra.mxu0 %v6124
        %7741 = vmatprep.subr.mxu0 %v6117
        %7742 = vmatpush1.msra.mxu0 %v6116
        %7743 = vmatprep.subr.mxu0 %v6109
        %7744 = vmatpush1.msra.mxu0 %v6108
        %7745 = vmatprep.subr.mxu0 %v6101
        %7746 = vmatpush1.msra.mxu0 %v6100
        %7747 = vmatprep.subr.mxu0 %v6093
        %7748 = vmatpush1.msra.mxu0 %v6092
        %7749 = vmatprep.subr.mxu0 %v6085
        %7750 = vmatpush1.msra.mxu0 %v6084
        %7751 = vmatprep.subr.mxu0 %v6077
        %7752 = vmatpush1.msra.mxu0 %v6076
        %7753 = vmatprep.subr.mxu0 %v6069
        %7754 = vmatpush1.msra.mxu0 %v6068
        %7755 = vmatprep.subr.mxu0 %v6061
        %7756 = vmatpush1.msra.mxu0 %v6060
        %7757 = vmatprep.subr.mxu0 %v6053
        %7758 = vmatpush1.msra.mxu0 %v6052
        %7759 = vmatprep.subr.mxu0 %v6045
        %7760 = vmatpush1.msra.mxu0 %v6044
        %7761 = vmatprep.subr.mxu0 %v6293
        %7762 = vmatpush2.msra.mxu0 %v6292
        %7763 = vmatprep.subr.mxu0 %v6285
        %7764 = vmatpush2.msra.mxu0 %v6284
        %7765 = vmatprep.subr.mxu0 %v6277
        %7766 = vmatpush2.msra.mxu0 %v6276
        %7767 = vmatprep.subr.mxu0 %v6269
        %7768 = vmatpush2.msra.mxu0 %v6268
        %7769 = vmatprep.subr.mxu0 %v6261
        %7770 = vmatpush2.msra.mxu0 %v6260
        %7771 = vmatprep.subr.mxu0 %v6253
        %7772 = vmatpush2.msra.mxu0 %v6252
        %7773 = vmatprep.subr.mxu0 %v6245
        %7774 = vmatpush2.msra.mxu0 %v6244
        %7775 = vmatprep.subr.mxu0 %v6237
        %7776 = vmatpush2.msra.mxu0 %v6236
        %7777 = vmatprep.subr.mxu0 %v6229
        %7778 = vmatpush2.msra.mxu0 %v6228
        %7779 = vmatprep.subr.mxu0 %v6221
        %7780 = vmatpush2.msra.mxu0 %v6220
        %7781 = vmatprep.subr.mxu0 %v6213
        %7782 = vmatpush2.msra.mxu0 %v6212
        %7783 = vmatprep.subr.mxu0 %v6205
        %7784 = vmatpush2.msra.mxu0 %v6204
        %7785 = vmatprep.subr.mxu0 %v6197
        %7786 = vmatpush2.msra.mxu0 %v6196
        %7787 = vmatprep.subr.mxu0 %v6189
        %7788 = vmatpush2.msra.mxu0 %v6188
        %7789 = vmatprep.subr.mxu0 %v6181
        %7790 = vmatpush2.msra.mxu0 %v6180
        %7791 = vmatprep.subr.mxu0 %v6173
        %7792 = vmatpush2.msra.mxu0 %v6172
        %7793 = vmatprep.mubr.f32.mxu0 %v5753
        %7794 = vmatmul.mubr.f32.gmra.mxu0 %v5746
        %v7795 = vpop.f32.mrf.mxu0
        %v7796 = vadd.f32 %v7725, %v7795
        %v7797 = vpop.f32.mrf.mxu0
        %v7798 = vadd.f32 %v7727, %v7797
        %7799 = vdwg.mxu0
        %7800 = vmatprep.subr.mxu0 %v6421
        %7801 = vmatpush1.msra.mxu0 %v6420
        %7802 = vmatprep.subr.mxu0 %v6413
        %7803 = vmatpush1.msra.mxu0 %v6412
        %7804 = vmatprep.subr.mxu0 %v6405
        %7805 = vmatpush1.msra.mxu0 %v6404
        %7806 = vmatprep.subr.mxu0 %v6397
        %7807 = vmatpush1.msra.mxu0 %v6396
        %7808 = vmatprep.subr.mxu0 %v6389
        %7809 = vmatpush1.msra.mxu0 %v6388
        %7810 = vmatprep.subr.mxu0 %v6381
        %7811 = vmatpush1.msra.mxu0 %v6380
        %7812 = vmatprep.subr.mxu0 %v6373
        %7813 = vmatpush1.msra.mxu0 %v6372
        %7814 = vmatprep.subr.mxu0 %v6365
        %7815 = vmatpush1.msra.mxu0 %v6364
        %7816 = vmatprep.subr.mxu0 %v6357
        %7817 = vmatpush1.msra.mxu0 %v6356
        %7818 = vmatprep.subr.mxu0 %v6349
        %7819 = vmatpush1.msra.mxu0 %v6348
        %7820 = vmatprep.subr.mxu0 %v6341
        %7821 = vmatpush1.msra.mxu0 %v6340
        %7822 = vmatprep.subr.mxu0 %v6333
        %7823 = vmatpush1.msra.mxu0 %v6332
        %7824 = vmatprep.subr.mxu0 %v6325
        %7825 = vmatpush1.msra.mxu0 %v6324
        %7826 = vmatprep.subr.mxu0 %v6317
        %7827 = vmatpush1.msra.mxu0 %v6316
        %7828 = vmatprep.subr.mxu0 %v6309
        %7829 = vmatpush1.msra.mxu0 %v6308
        %7830 = vmatprep.subr.mxu0 %v6301
        %7831 = vmatpush1.msra.mxu0 %v6300
        %7832 = vmatprep.subr.mxu0 %v6549
        %7833 = vmatpush2.msra.mxu0 %v6548
        %7834 = vmatprep.subr.mxu0 %v6541
        %7835 = vmatpush2.msra.mxu0 %v6540
        %7836 = vmatprep.subr.mxu0 %v6533
        %7837 = vmatpush2.msra.mxu0 %v6532
        %7838 = vmatprep.subr.mxu0 %v6525
        %7839 = vmatpush2.msra.mxu0 %v6524
        %7840 = vmatprep.subr.mxu0 %v6517
        %7841 = vmatpush2.msra.mxu0 %v6516
        %7842 = vmatprep.subr.mxu0 %v6509
        %7843 = vmatpush2.msra.mxu0 %v6508
        %7844 = vmatprep.subr.mxu0 %v6501
        %7845 = vmatpush2.msra.mxu0 %v6500
        %7846 = vmatprep.subr.mxu0 %v6493
        %7847 = vmatpush2.msra.mxu0 %v6492
        %7848 = vmatprep.subr.mxu0 %v6485
        %7849 = vmatpush2.msra.mxu0 %v6484
        %7850 = vmatprep.subr.mxu0 %v6477
        %7851 = vmatpush2.msra.mxu0 %v6476
        %7852 = vmatprep.subr.mxu0 %v6469
        %7853 = vmatpush2.msra.mxu0 %v6468
        %7854 = vmatprep.subr.mxu0 %v6461
        %7855 = vmatpush2.msra.mxu0 %v6460
        %7856 = vmatprep.subr.mxu0 %v6453
        %7857 = vmatpush2.msra.mxu0 %v6452
        %7858 = vmatprep.subr.mxu0 %v6445
        %7859 = vmatpush2.msra.mxu0 %v6444
        %7860 = vmatprep.subr.mxu0 %v6437
        %7861 = vmatpush2.msra.mxu0 %v6436
        %7862 = vmatprep.subr.mxu0 %v6429
        %7863 = vmatpush2.msra.mxu0 %v6428
        %7864 = vmatprep.mubr.f32.mxu0 %v5767
        %7865 = vmatmul.mubr.f32.gmra.mxu0 %v5760
        %v7866 = vpop.f32.mrf.mxu0
        %v7867 = vadd.f32 %v7796, %v7866
        %v7868 = vpop.f32.mrf.mxu0
        %v7869 = vadd.f32 %v7798, %v7868
        %7870 = vdwg.mxu0
        %7871 = vmatprep.subr.mxu0 %v6677
        %7872 = vmatpush1.msra.mxu0 %v6676
        %7873 = vmatprep.subr.mxu0 %v6669
        %7874 = vmatpush1.msra.mxu0 %v6668
        %7875 = vmatprep.subr.mxu0 %v6661
        %7876 = vmatpush1.msra.mxu0 %v6660
        %7877 = vmatprep.subr.mxu0 %v6653
        %7878 = vmatpush1.msra.mxu0 %v6652
        %7879 = vmatprep.subr.mxu0 %v6645
        %7880 = vmatpush1.msra.mxu0 %v6644
        %7881 = vmatprep.subr.mxu0 %v6637
        %7882 = vmatpush1.msra.mxu0 %v6636
        %7883 = vmatprep.subr.mxu0 %v6629
        %7884 = vmatpush1.msra.mxu0 %v6628
        %7885 = vmatprep.subr.mxu0 %v6621
        %7886 = vmatpush1.msra.mxu0 %v6620
        %7887 = vmatprep.subr.mxu0 %v6613
        %7888 = vmatpush1.msra.mxu0 %v6612
        %7889 = vmatprep.subr.mxu0 %v6605
        %7890 = vmatpush1.msra.mxu0 %v6604
        %7891 = vmatprep.subr.mxu0 %v6597
        %7892 = vmatpush1.msra.mxu0 %v6596
        %7893 = vmatprep.subr.mxu0 %v6589
        %7894 = vmatpush1.msra.mxu0 %v6588
        %7895 = vmatprep.subr.mxu0 %v6581
        %7896 = vmatpush1.msra.mxu0 %v6580
        %7897 = vmatprep.subr.mxu0 %v6573
        %7898 = vmatpush1.msra.mxu0 %v6572
        %7899 = vmatprep.subr.mxu0 %v6565
        %7900 = vmatpush1.msra.mxu0 %v6564
        %7901 = vmatprep.subr.mxu0 %v6557
        %7902 = vmatpush1.msra.mxu0 %v6556
        %7903 = vmatprep.subr.mxu0 %v6805
        %7904 = vmatpush2.msra.mxu0 %v6804
        %7905 = vmatprep.subr.mxu0 %v6797
        %7906 = vmatpush2.msra.mxu0 %v6796
        %7907 = vmatprep.subr.mxu0 %v6789
        %7908 = vmatpush2.msra.mxu0 %v6788
        %7909 = vmatprep.subr.mxu0 %v6781
        %7910 = vmatpush2.msra.mxu0 %v6780
        %7911 = vmatprep.subr.mxu0 %v6773
        %7912 = vmatpush2.msra.mxu0 %v6772
        %7913 = vmatprep.subr.mxu0 %v6765
        %7914 = vmatpush2.msra.mxu0 %v6764
        %7915 = vmatprep.subr.mxu0 %v6757
        %7916 = vmatpush2.msra.mxu0 %v6756
        %7917 = vmatprep.subr.mxu0 %v6749
        %7918 = vmatpush2.msra.mxu0 %v6748
        %7919 = vmatprep.subr.mxu0 %v6741
        %7920 = vmatpush2.msra.mxu0 %v6740
        %7921 = vmatprep.subr.mxu0 %v6733
        %7922 = vmatpush2.msra.mxu0 %v6732
        %7923 = vmatprep.subr.mxu0 %v6725
        %7924 = vmatpush2.msra.mxu0 %v6724
        %7925 = vmatprep.subr.mxu0 %v6717
        %7926 = vmatpush2.msra.mxu0 %v6716
        %7927 = vmatprep.subr.mxu0 %v6709
        %7928 = vmatpush2.msra.mxu0 %v6708
        %7929 = vmatprep.subr.mxu0 %v6701
        %7930 = vmatpush2.msra.mxu0 %v6700
        %7931 = vmatprep.subr.mxu0 %v6693
        %7932 = vmatpush2.msra.mxu0 %v6692
        %7933 = vmatprep.subr.mxu0 %v6685
        %7934 = vmatpush2.msra.mxu0 %v6684
        %7935 = vmatprep.mubr.f32.mxu0 %v5781
        %7936 = vmatmul.mubr.f32.gmra.mxu0 %v5774
        %v7937 = vpop.f32.mrf.mxu0
        %v7938 = vadd.f32 %v7867, %v7937
        %v7939 = vpop.f32.mrf.mxu0
        %v7940 = vadd.f32 %v7869, %v7939
        %7941 = vdwg.mxu0
        %v7942 = vlaneseq
        %v7943 = vshrl.u32 %v7942, 7
        %v7944 = vsub.s32 0, %v7943
        %v7945 = vrot.slane %v7086, %v7944
        %v7946 = vlaneseq
        %v7947 = vshrl.u32 %v7946, 7
        %v7948 = vsub.s32 0, %v7947
        %v7949 = vrot.slane %v7088, %v7948
        %v7950 = vlaneseq
        %v7951 = vshrl.u32 %v7950, 7
        %v7952 = vsub.s32 0, %v7951
        %v7953 = vrot.slane %v7370, %v7952
        %v7954 = vlaneseq
        %v7955 = vshrl.u32 %v7954, 7
        %v7956 = vsub.s32 0, %v7955
        %v7957 = vrot.slane %v7372, %v7956
        %v7958 = vlaneseq
        %v7959 = vshrl.u32 %v7958, 7
        %v7960 = vsub.s32 0, %v7959
        %v7961 = vrot.slane %v7654, %v7960
        %v7962 = vlaneseq
        %v7963 = vshrl.u32 %v7962, 7
        %v7964 = vsub.s32 0, %v7963
        %v7965 = vrot.slane %v7656, %v7964
        %v7966 = vlaneseq
        %v7967 = vshrl.u32 %v7966, 7
        %v7968 = vsub.s32 0, %v7967
        %v7969 = vrot.slane %v7938, %v7968
        %v7970 = vlaneseq
        %v7971 = vshrl.u32 %v7970, 7
        %v7972 = vsub.s32 0, %v7971
        %v7973 = vrot.slane %v7940, %v7972
        %v7974 = vsub.f32 %v4944, %v7945
        %v7975 = vsub.f32 %v4946, %v7949
        %v7976 = vsub.f32 %v5202, %v7953
        %v7977 = vsub.f32 %v5204, %v7957
        %v7978 = vsub.f32 %v5460, %v7961
        %v7979 = vsub.f32 %v5462, %v7965
        %v7980 = vsub.f32 %v5718, %v7969
        %v7981 = vsub.f32 %v5720, %v7973
        %v7982 = vsub.f32 %v4948, %v7945
        %v7983 = vsub.f32 %v4950, %v7949
        %v7984 = vsub.f32 %v5206, %v7953
        %v7985 = vsub.f32 %v5208, %v7957
        %v7986 = vsub.f32 %v5464, %v7961
        %v7987 = vsub.f32 %v5466, %v7965
        %v7988 = vsub.f32 %v5722, %v7969
        %v7989 = vsub.f32 %v5724, %v7973
        %v7990 = vmul.f32 %v7974, %v7974
        %v7991 = vmul.f32 %v7975, %v7975
        %v7992 = vmul.f32 %v7976, %v7976
        %v7993 = vmul.f32 %v7977, %v7977
        %v7994 = vmul.f32 %v7978, %v7978
        %v7995 = vmul.f32 %v7979, %v7979
        %v7996 = vmul.f32 %v7980, %v7980
        %v7997 = vmul.f32 %v7981, %v7981
        %v7998 = vmul.f32 %v7982, %v7982
        %v7999 = vmul.f32 %v7983, %v7983
        %v8000 = vmul.f32 %v7984, %v7984
        %v8001 = vmul.f32 %v7985, %v7985
        %v8002 = vmul.f32 %v7986, %v7986
        %v8003 = vmul.f32 %v7987, %v7987
        %v8004 = vmul.f32 %v7988, %v7988
        %v8005 = vmul.f32 %v7989, %v7989
        %v8006 = vadd.f32 %v7990, %v7998
        %v8007 = vrot.slane %v8006, 4
        %v8008 = vadd.f32 %v8006, %v8007
        %v8009 = vrot.slane %v8008, 2
        %v8010 = vadd.f32 %v8008, %v8009
        %v8011 = vrot.slane %v8010, 1
        %v8012 = vadd.f32 %v8010, %v8011
        %v8013 = vadd.f32 %v7991, %v7999
        %v8014 = vrot.slane %v8013, 4
        %v8015 = vadd.f32 %v8013, %v8014
        %v8016 = vrot.slane %v8015, 2
        %v8017 = vadd.f32 %v8015, %v8016
        %v8018 = vrot.slane %v8017, 1
        %v8019 = vadd.f32 %v8017, %v8018
        %v8020 = vadd.f32 %v7992, %v8000
        %v8021 = vrot.slane %v8020, 4
        %v8022 = vadd.f32 %v8020, %v8021
        %v8023 = vrot.slane %v8022, 2
        %v8024 = vadd.f32 %v8022, %v8023
        %v8025 = vrot.slane %v8024, 1
        %v8026 = vadd.f32 %v8024, %v8025
        %v8027 = vadd.f32 %v7993, %v8001
        %v8028 = vrot.slane %v8027, 4
        %v8029 = vadd.f32 %v8027, %v8028
        %v8030 = vrot.slane %v8029, 2
        %v8031 = vadd.f32 %v8029, %v8030
        %v8032 = vrot.slane %v8031, 1
        %v8033 = vadd.f32 %v8031, %v8032
        %v8034 = vadd.f32 %v7994, %v8002
        %v8035 = vrot.slane %v8034, 4
        %v8036 = vadd.f32 %v8034, %v8035
        %v8037 = vrot.slane %v8036, 2
        %v8038 = vadd.f32 %v8036, %v8037
        %v8039 = vrot.slane %v8038, 1
        %v8040 = vadd.f32 %v8038, %v8039
        %v8041 = vadd.f32 %v7995, %v8003
        %v8042 = vrot.slane %v8041, 4
        %v8043 = vadd.f32 %v8041, %v8042
        %v8044 = vrot.slane %v8043, 2
        %v8045 = vadd.f32 %v8043, %v8044
        %v8046 = vrot.slane %v8045, 1
        %v8047 = vadd.f32 %v8045, %v8046
        %v8048 = vadd.f32 %v7996, %v8004
        %v8049 = vrot.slane %v8048, 4
        %v8050 = vadd.f32 %v8048, %v8049
        %v8051 = vrot.slane %v8050, 2
        %v8052 = vadd.f32 %v8050, %v8051
        %v8053 = vrot.slane %v8052, 1
        %v8054 = vadd.f32 %v8052, %v8053
        %v8055 = vadd.f32 %v7997, %v8005
        %v8056 = vrot.slane %v8055, 4
        %v8057 = vadd.f32 %v8055, %v8056
        %v8058 = vrot.slane %v8057, 2
        %v8059 = vadd.f32 %v8057, %v8058
        %v8060 = vrot.slane %v8059, 1
        %v8061 = vadd.f32 %v8059, %v8060
        %8062 = vmatprep.subr.mxu0 %v5903
        %8063 = vmatpush1.msra.mxu0 %v5902
        %8064 = vmatprep.subr.mxu0 %v5895
        %8065 = vmatpush1.msra.mxu0 %v5894
        %8066 = vmatprep.subr.mxu0 %v5887
        %8067 = vmatpush1.msra.mxu0 %v5886
        %8068 = vmatprep.subr.mxu0 %v5879
        %8069 = vmatpush1.msra.mxu0 %v5878
        %8070 = vmatprep.subr.mxu0 %v5871
        %8071 = vmatpush1.msra.mxu0 %v5870
        %8072 = vmatprep.subr.mxu0 %v5863
        %8073 = vmatpush1.msra.mxu0 %v5862
        %8074 = vmatprep.subr.mxu0 %v5855
        %8075 = vmatpush1.msra.mxu0 %v5854
        %8076 = vmatprep.subr.mxu0 %v5847
        %8077 = vmatpush1.msra.mxu0 %v5846
        %8078 = vmatprep.subr.mxu0 %v5839
        %8079 = vmatpush1.msra.mxu0 %v5838
        %8080 = vmatprep.subr.mxu0 %v5831
        %8081 = vmatpush1.msra.mxu0 %v5830
        %8082 = vmatprep.subr.mxu0 %v5823
        %8083 = vmatpush1.msra.mxu0 %v5822
        %8084 = vmatprep.subr.mxu0 %v5815
        %8085 = vmatpush1.msra.mxu0 %v5814
        %8086 = vmatprep.subr.mxu0 %v5807
        %8087 = vmatpush1.msra.mxu0 %v5806
        %8088 = vmatprep.subr.mxu0 %v5799
        %8089 = vmatpush1.msra.mxu0 %v5798
        %8090 = vmatprep.subr.mxu0 %v5791
        %8091 = vmatpush1.msra.mxu0 %v5790
        %8092 = vmatprep.subr.mxu0 %v5783
        %8093 = vmatpush1.msra.mxu0 %v5782
        %8094 = vmatprep.subr.mxu0 %v6031
        %8095 = vmatpush2.msra.mxu0 %v6030
        %8096 = vmatprep.subr.mxu0 %v6023
        %8097 = vmatpush2.msra.mxu0 %v6022
        %8098 = vmatprep.subr.mxu0 %v6015
        %8099 = vmatpush2.msra.mxu0 %v6014
        %8100 = vmatprep.subr.mxu0 %v6007
        %8101 = vmatpush2.msra.mxu0 %v6006
        %8102 = vmatprep.subr.mxu0 %v5999
        %8103 = vmatpush2.msra.mxu0 %v5998
        %8104 = vmatprep.subr.mxu0 %v5991
        %8105 = vmatpush2.msra.mxu0 %v5990
        %8106 = vmatprep.subr.mxu0 %v5983
        %8107 = vmatpush2.msra.mxu0 %v5982
        %8108 = vmatprep.subr.mxu0 %v5975
        %8109 = vmatpush2.msra.mxu0 %v5974
        %8110 = vmatprep.subr.mxu0 %v5967
        %8111 = vmatpush2.msra.mxu0 %v5966
        %8112 = vmatprep.subr.mxu0 %v5959
        %8113 = vmatpush2.msra.mxu0 %v5958
        %8114 = vmatprep.subr.mxu0 %v5951
        %8115 = vmatpush2.msra.mxu0 %v5950
        %8116 = vmatprep.subr.mxu0 %v5943
        %8117 = vmatpush2.msra.mxu0 %v5942
        %8118 = vmatprep.subr.mxu0 %v5935
        %8119 = vmatpush2.msra.mxu0 %v5934
        %8120 = vmatprep.subr.mxu0 %v5927
        %8121 = vmatpush2.msra.mxu0 %v5926
        %8122 = vmatprep.subr.mxu0 %v5919
        %8123 = vmatpush2.msra.mxu0 %v5918
        %8124 = vmatprep.subr.mxu0 %v5911
        %8125 = vmatpush2.msra.mxu0 %v5910
        %8126 = vmatprep.mubr.f32.mxu0 %v8019
        %8127 = vmatmul.mubr.f32.gmra.mxu0 %v8012
        %v8128 = vpop.f32.mrf.mxu0
        %v8129 = vadd.f32 1e-05, %v8128
        %v8130 = vpop.f32.mrf.mxu0
        %v8131 = vadd.f32 1e-05, %v8130
        %8132 = vdwg.mxu0
        %8133 = vmatprep.subr.mxu0 %v6159
        %8134 = vmatpush1.msra.mxu0 %v6158
        %8135 = vmatprep.subr.mxu0 %v6151
        %8136 = vmatpush1.msra.mxu0 %v6150
        %8137 = vmatprep.subr.mxu0 %v6143
        %8138 = vmatpush1.msra.mxu0 %v6142
        %8139 = vmatprep.subr.mxu0 %v6135
        %8140 = vmatpush1.msra.mxu0 %v6134
        %8141 = vmatprep.subr.mxu0 %v6127
        %8142 = vmatpush1.msra.mxu0 %v6126
        %8143 = vmatprep.subr.mxu0 %v6119
        %8144 = vmatpush1.msra.mxu0 %v6118
        %8145 = vmatprep.subr.mxu0 %v6111
        %8146 = vmatpush1.msra.mxu0 %v6110
        %8147 = vmatprep.subr.mxu0 %v6103
        %8148 = vmatpush1.msra.mxu0 %v6102
        %8149 = vmatprep.subr.mxu0 %v6095
        %8150 = vmatpush1.msra.mxu0 %v6094
        %8151 = vmatprep.subr.mxu0 %v6087
        %8152 = vmatpush1.msra.mxu0 %v6086
        %8153 = vmatprep.subr.mxu0 %v6079
        %8154 = vmatpush1.msra.mxu0 %v6078
        %8155 = vmatprep.subr.mxu0 %v6071
        %8156 = vmatpush1.msra.mxu0 %v6070
        %8157 = vmatprep.subr.mxu0 %v6063
        %8158 = vmatpush1.msra.mxu0 %v6062
        %8159 = vmatprep.subr.mxu0 %v6055
        %8160 = vmatpush1.msra.mxu0 %v6054
        %8161 = vmatprep.subr.mxu0 %v6047
        %8162 = vmatpush1.msra.mxu0 %v6046
        %8163 = vmatprep.subr.mxu0 %v6039
        %8164 = vmatpush1.msra.mxu0 %v6038
        %8165 = vmatprep.subr.mxu0 %v6287
        %8166 = vmatpush2.msra.mxu0 %v6286
        %8167 = vmatprep.subr.mxu0 %v6279
        %8168 = vmatpush2.msra.mxu0 %v6278
        %8169 = vmatprep.subr.mxu0 %v6271
        %8170 = vmatpush2.msra.mxu0 %v6270
        %8171 = vmatprep.subr.mxu0 %v6263
        %8172 = vmatpush2.msra.mxu0 %v6262
        %8173 = vmatprep.subr.mxu0 %v6255
        %8174 = vmatpush2.msra.mxu0 %v6254
        %8175 = vmatprep.subr.mxu0 %v6247
        %8176 = vmatpush2.msra.mxu0 %v6246
        %8177 = vmatprep.subr.mxu0 %v6239
        %8178 = vmatpush2.msra.mxu0 %v6238
        %8179 = vmatprep.subr.mxu0 %v6231
        %8180 = vmatpush2.msra.mxu0 %v6230
        %8181 = vmatprep.subr.mxu0 %v6223
        %8182 = vmatpush2.msra.mxu0 %v6222
        %8183 = vmatprep.subr.mxu0 %v6215
        %8184 = vmatpush2.msra.mxu0 %v6214
        %8185 = vmatprep.subr.mxu0 %v6207
        %8186 = vmatpush2.msra.mxu0 %v6206
        %8187 = vmatprep.subr.mxu0 %v6199
        %8188 = vmatpush2.msra.mxu0 %v6198
        %8189 = vmatprep.subr.mxu0 %v6191
        %8190 = vmatpush2.msra.mxu0 %v6190
        %8191 = vmatprep.subr.mxu0 %v6183
        %8192 = vmatpush2.msra.mxu0 %v6182
        %8193 = vmatprep.subr.mxu0 %v6175
        %8194 = vmatpush2.msra.mxu0 %v6174
        %8195 = vmatprep.subr.mxu0 %v6167
        %8196 = vmatpush2.msra.mxu0 %v6166
        %8197 = vmatprep.mubr.f32.mxu0 %v8033
        %8198 = vmatmul.mubr.f32.gmra.mxu0 %v8026
        %v8199 = vpop.f32.mrf.mxu0
        %v8200 = vadd.f32 %v8129, %v8199
        %v8201 = vpop.f32.mrf.mxu0
        %v8202 = vadd.f32 %v8131, %v8201
        %8203 = vdwg.mxu0
        %8204 = vmatprep.subr.mxu0 %v6415
        %8205 = vmatpush1.msra.mxu0 %v6414
        %8206 = vmatprep.subr.mxu0 %v6407
        %8207 = vmatpush1.msra.mxu0 %v6406
        %8208 = vmatprep.subr.mxu0 %v6399
        %8209 = vmatpush1.msra.mxu0 %v6398
        %8210 = vmatprep.subr.mxu0 %v6391
        %8211 = vmatpush1.msra.mxu0 %v6390
        %8212 = vmatprep.subr.mxu0 %v6383
        %8213 = vmatpush1.msra.mxu0 %v6382
        %8214 = vmatprep.subr.mxu0 %v6375
        %8215 = vmatpush1.msra.mxu0 %v6374
        %8216 = vmatprep.subr.mxu0 %v6367
        %8217 = vmatpush1.msra.mxu0 %v6366
        %8218 = vmatprep.subr.mxu0 %v6359
        %8219 = vmatpush1.msra.mxu0 %v6358
        %8220 = vmatprep.subr.mxu0 %v6351
        %8221 = vmatpush1.msra.mxu0 %v6350
        %8222 = vmatprep.subr.mxu0 %v6343
        %8223 = vmatpush1.msra.mxu0 %v6342
        %8224 = vmatprep.subr.mxu0 %v6335
        %8225 = vmatpush1.msra.mxu0 %v6334
        %8226 = vmatprep.subr.mxu0 %v6327
        %8227 = vmatpush1.msra.mxu0 %v6326
        %8228 = vmatprep.subr.mxu0 %v6319
        %8229 = vmatpush1.msra.mxu0 %v6318
        %8230 = vmatprep.subr.mxu0 %v6311
        %8231 = vmatpush1.msra.mxu0 %v6310
        %8232 = vmatprep.subr.mxu0 %v6303
        %8233 = vmatpush1.msra.mxu0 %v6302
        %8234 = vmatprep.subr.mxu0 %v6295
        %8235 = vmatpush1.msra.mxu0 %v6294
        %8236 = vmatprep.subr.mxu0 %v6543
        %8237 = vmatpush2.msra.mxu0 %v6542
        %8238 = vmatprep.subr.mxu0 %v6535
        %8239 = vmatpush2.msra.mxu0 %v6534
        %8240 = vmatprep.subr.mxu0 %v6527
        %8241 = vmatpush2.msra.mxu0 %v6526
        %8242 = vmatprep.subr.mxu0 %v6519
        %8243 = vmatpush2.msra.mxu0 %v6518
        %8244 = vmatprep.subr.mxu0 %v6511
        %8245 = vmatpush2.msra.mxu0 %v6510
        %8246 = vmatprep.subr.mxu0 %v6503
        %8247 = vmatpush2.msra.mxu0 %v6502
        %8248 = vmatprep.subr.mxu0 %v6495
        %8249 = vmatpush2.msra.mxu0 %v6494
        %8250 = vmatprep.subr.mxu0 %v6487
        %8251 = vmatpush2.msra.mxu0 %v6486
        %8252 = vmatprep.subr.mxu0 %v6479
        %8253 = vmatpush2.msra.mxu0 %v6478
        %8254 = vmatprep.subr.mxu0 %v6471
        %8255 = vmatpush2.msra.mxu0 %v6470
        %8256 = vmatprep.subr.mxu0 %v6463
        %8257 = vmatpush2.msra.mxu0 %v6462
        %8258 = vmatprep.subr.mxu0 %v6455
        %8259 = vmatpush2.msra.mxu0 %v6454
        %8260 = vmatprep.subr.mxu0 %v6447
        %8261 = vmatpush2.msra.mxu0 %v6446
        %8262 = vmatprep.subr.mxu0 %v6439
        %8263 = vmatpush2.msra.mxu0 %v6438
        %8264 = vmatprep.subr.mxu0 %v6431
        %8265 = vmatpush2.msra.mxu0 %v6430
        %8266 = vmatprep.subr.mxu0 %v6423
        %8267 = vmatpush2.msra.mxu0 %v6422
        %8268 = vmatprep.mubr.f32.mxu0 %v8047
        %8269 = vmatmul.mubr.f32.gmra.mxu0 %v8040
        %v8270 = vpop.f32.mrf.mxu0
        %v8271 = vadd.f32 %v8200, %v8270
        %v8272 = vpop.f32.mrf.mxu0
        %v8273 = vadd.f32 %v8202, %v8272
        %8274 = vdwg.mxu0
        %8275 = vmatprep.subr.mxu0 %v6671
        %8276 = vmatpush1.msra.mxu0 %v6670
        %8277 = vmatprep.subr.mxu0 %v6663
        %8278 = vmatpush1.msra.mxu0 %v6662
        %8279 = vmatprep.subr.mxu0 %v6655
        %8280 = vmatpush1.msra.mxu0 %v6654
        %8281 = vmatprep.subr.mxu0 %v6647
        %8282 = vmatpush1.msra.mxu0 %v6646
        %8283 = vmatprep.subr.mxu0 %v6639
        %8284 = vmatpush1.msra.mxu0 %v6638
        %8285 = vmatprep.subr.mxu0 %v6631
        %8286 = vmatpush1.msra.mxu0 %v6630
        %8287 = vmatprep.subr.mxu0 %v6623
        %8288 = vmatpush1.msra.mxu0 %v6622
        %8289 = vmatprep.subr.mxu0 %v6615
        %8290 = vmatpush1.msra.mxu0 %v6614
        %8291 = vmatprep.subr.mxu0 %v6607
        %8292 = vmatpush1.msra.mxu0 %v6606
        %8293 = vmatprep.subr.mxu0 %v6599
        %8294 = vmatpush1.msra.mxu0 %v6598
        %8295 = vmatprep.subr.mxu0 %v6591
        %8296 = vmatpush1.msra.mxu0 %v6590
        %8297 = vmatprep.subr.mxu0 %v6583
        %8298 = vmatpush1.msra.mxu0 %v6582
        %8299 = vmatprep.subr.mxu0 %v6575
        %8300 = vmatpush1.msra.mxu0 %v6574
        %8301 = vmatprep.subr.mxu0 %v6567
        %8302 = vmatpush1.msra.mxu0 %v6566
        %8303 = vmatprep.subr.mxu0 %v6559
        %8304 = vmatpush1.msra.mxu0 %v6558
        %8305 = vmatprep.subr.mxu0 %v6551
        %8306 = vmatpush1.msra.mxu0 %v6550
        %8307 = vmatprep.subr.mxu0 %v6799
        %8308 = vmatpush2.msra.mxu0 %v6798
        %8309 = vmatprep.subr.mxu0 %v6791
        %8310 = vmatpush2.msra.mxu0 %v6790
        %8311 = vmatprep.subr.mxu0 %v6783
        %8312 = vmatpush2.msra.mxu0 %v6782
        %8313 = vmatprep.subr.mxu0 %v6775
        %8314 = vmatpush2.msra.mxu0 %v6774
        %8315 = vmatprep.subr.mxu0 %v6767
        %8316 = vmatpush2.msra.mxu0 %v6766
        %8317 = vmatprep.subr.mxu0 %v6759
        %8318 = vmatpush2.msra.mxu0 %v6758
        %8319 = vmatprep.subr.mxu0 %v6751
        %8320 = vmatpush2.msra.mxu0 %v6750
        %8321 = vmatprep.subr.mxu0 %v6743
        %8322 = vmatpush2.msra.mxu0 %v6742
        %8323 = vmatprep.subr.mxu0 %v6735
        %8324 = vmatpush2.msra.mxu0 %v6734
        %8325 = vmatprep.subr.mxu0 %v6727
        %8326 = vmatpush2.msra.mxu0 %v6726
        %8327 = vmatprep.subr.mxu0 %v6719
        %8328 = vmatpush2.msra.mxu0 %v6718
        %8329 = vmatprep.subr.mxu0 %v6711
        %8330 = vmatpush2.msra.mxu0 %v6710
        %8331 = vmatprep.subr.mxu0 %v6703
        %8332 = vmatpush2.msra.mxu0 %v6702
        %8333 = vmatprep.subr.mxu0 %v6695
        %8334 = vmatpush2.msra.mxu0 %v6694
        %8335 = vmatprep.subr.mxu0 %v6687
        %8336 = vmatpush2.msra.mxu0 %v6686
        %8337 = vmatprep.subr.mxu0 %v6679
        %8338 = vmatpush2.msra.mxu0 %v6678
        %8339 = vmatprep.mubr.f32.mxu0 %v8061
        %8340 = vmatmul.mubr.f32.gmra.mxu0 %v8054
        %v8341 = vpop.f32.mrf.mxu0
        %v8342 = vadd.f32 %v8271, %v8341
        %v8343 = vpop.f32.mrf.mxu0
        %v8344 = vadd.f32 %v8273, %v8343
        %8345 = vdwg.mxu0
        %8346 = vmatprep.subr.mxu0 %v5905
        %8347 = vmatpush1.msra.mxu0 %v5904
        %8348 = vmatprep.subr.mxu0 %v5897
        %8349 = vmatpush1.msra.mxu0 %v5896
        %8350 = vmatprep.subr.mxu0 %v5889
        %8351 = vmatpush1.msra.mxu0 %v5888
        %8352 = vmatprep.subr.mxu0 %v5881
        %8353 = vmatpush1.msra.mxu0 %v5880
        %8354 = vmatprep.subr.mxu0 %v5873
        %8355 = vmatpush1.msra.mxu0 %v5872
        %8356 = vmatprep.subr.mxu0 %v5865
        %8357 = vmatpush1.msra.mxu0 %v5864
        %8358 = vmatprep.subr.mxu0 %v5857
        %8359 = vmatpush1.msra.mxu0 %v5856
        %8360 = vmatprep.subr.mxu0 %v5849
        %8361 = vmatpush1.msra.mxu0 %v5848
        %8362 = vmatprep.subr.mxu0 %v5841
        %8363 = vmatpush1.msra.mxu0 %v5840
        %8364 = vmatprep.subr.mxu0 %v5833
        %8365 = vmatpush1.msra.mxu0 %v5832
        %8366 = vmatprep.subr.mxu0 %v5825
        %8367 = vmatpush1.msra.mxu0 %v5824
        %8368 = vmatprep.subr.mxu0 %v5817
        %8369 = vmatpush1.msra.mxu0 %v5816
        %8370 = vmatprep.subr.mxu0 %v5809
        %8371 = vmatpush1.msra.mxu0 %v5808
        %8372 = vmatprep.subr.mxu0 %v5801
        %8373 = vmatpush1.msra.mxu0 %v5800
        %8374 = vmatprep.subr.mxu0 %v5793
        %8375 = vmatpush1.msra.mxu0 %v5792
        %8376 = vmatprep.subr.mxu0 %v5785
        %8377 = vmatpush1.msra.mxu0 %v5784
        %8378 = vmatprep.subr.mxu0 %v6033
        %8379 = vmatpush2.msra.mxu0 %v6032
        %8380 = vmatprep.subr.mxu0 %v6025
        %8381 = vmatpush2.msra.mxu0 %v6024
        %8382 = vmatprep.subr.mxu0 %v6017
        %8383 = vmatpush2.msra.mxu0 %v6016
        %8384 = vmatprep.subr.mxu0 %v6009
        %8385 = vmatpush2.msra.mxu0 %v6008
        %8386 = vmatprep.subr.mxu0 %v6001
        %8387 = vmatpush2.msra.mxu0 %v6000
        %8388 = vmatprep.subr.mxu0 %v5993
        %8389 = vmatpush2.msra.mxu0 %v5992
        %8390 = vmatprep.subr.mxu0 %v5985
        %8391 = vmatpush2.msra.mxu0 %v5984
        %8392 = vmatprep.subr.mxu0 %v5977
        %8393 = vmatpush2.msra.mxu0 %v5976
        %8394 = vmatprep.subr.mxu0 %v5969
        %8395 = vmatpush2.msra.mxu0 %v5968
        %8396 = vmatprep.subr.mxu0 %v5961
        %8397 = vmatpush2.msra.mxu0 %v5960
        %8398 = vmatprep.subr.mxu0 %v5953
        %8399 = vmatpush2.msra.mxu0 %v5952
        %8400 = vmatprep.subr.mxu0 %v5945
        %8401 = vmatpush2.msra.mxu0 %v5944
        %8402 = vmatprep.subr.mxu0 %v5937
        %8403 = vmatpush2.msra.mxu0 %v5936
        %8404 = vmatprep.subr.mxu0 %v5929
        %8405 = vmatpush2.msra.mxu0 %v5928
        %8406 = vmatprep.subr.mxu0 %v5921
        %8407 = vmatpush2.msra.mxu0 %v5920
        %8408 = vmatprep.subr.mxu0 %v5913
        %8409 = vmatpush2.msra.mxu0 %v5912
        %8410 = vmatprep.mubr.f32.mxu0 %v8019
        %8411 = vmatmul.mubr.f32.gmra.mxu0 %v8012
        %v8412 = vpop.f32.mrf.mxu0
        %v8413 = vadd.f32 1e-05, %v8412
        %v8414 = vpop.f32.mrf.mxu0
        %v8415 = vadd.f32 1e-05, %v8414
        %8416 = vdwg.mxu0
        %8417 = vmatprep.subr.mxu0 %v6161
        %8418 = vmatpush1.msra.mxu0 %v6160
        %8419 = vmatprep.subr.mxu0 %v6153
        %8420 = vmatpush1.msra.mxu0 %v6152
        %8421 = vmatprep.subr.mxu0 %v6145
        %8422 = vmatpush1.msra.mxu0 %v6144
        %8423 = vmatprep.subr.mxu0 %v6137
        %8424 = vmatpush1.msra.mxu0 %v6136
        %8425 = vmatprep.subr.mxu0 %v6129
        %8426 = vmatpush1.msra.mxu0 %v6128
        %8427 = vmatprep.subr.mxu0 %v6121
        %8428 = vmatpush1.msra.mxu0 %v6120
        %8429 = vmatprep.subr.mxu0 %v6113
        %8430 = vmatpush1.msra.mxu0 %v6112
        %8431 = vmatprep.subr.mxu0 %v6105
        %8432 = vmatpush1.msra.mxu0 %v6104
        %8433 = vmatprep.subr.mxu0 %v6097
        %8434 = vmatpush1.msra.mxu0 %v6096
        %8435 = vmatprep.subr.mxu0 %v6089
        %8436 = vmatpush1.msra.mxu0 %v6088
        %8437 = vmatprep.subr.mxu0 %v6081
        %8438 = vmatpush1.msra.mxu0 %v6080
        %8439 = vmatprep.subr.mxu0 %v6073
        %8440 = vmatpush1.msra.mxu0 %v6072
        %8441 = vmatprep.subr.mxu0 %v6065
        %8442 = vmatpush1.msra.mxu0 %v6064
        %8443 = vmatprep.subr.mxu0 %v6057
        %8444 = vmatpush1.msra.mxu0 %v6056
        %8445 = vmatprep.subr.mxu0 %v6049
        %8446 = vmatpush1.msra.mxu0 %v6048
        %8447 = vmatprep.subr.mxu0 %v6041
        %8448 = vmatpush1.msra.mxu0 %v6040
        %8449 = vmatprep.subr.mxu0 %v6289
        %8450 = vmatpush2.msra.mxu0 %v6288
        %8451 = vmatprep.subr.mxu0 %v6281
        %8452 = vmatpush2.msra.mxu0 %v6280
        %8453 = vmatprep.subr.mxu0 %v6273
        %8454 = vmatpush2.msra.mxu0 %v6272
        %8455 = vmatprep.subr.mxu0 %v6265
        %8456 = vmatpush2.msra.mxu0 %v6264
        %8457 = vmatprep.subr.mxu0 %v6257
        %8458 = vmatpush2.msra.mxu0 %v6256
        %8459 = vmatprep.subr.mxu0 %v6249
        %8460 = vmatpush2.msra.mxu0 %v6248
        %8461 = vmatprep.subr.mxu0 %v6241
        %8462 = vmatpush2.msra.mxu0 %v6240
        %8463 = vmatprep.subr.mxu0 %v6233
        %8464 = vmatpush2.msra.mxu0 %v6232
        %8465 = vmatprep.subr.mxu0 %v6225
        %8466 = vmatpush2.msra.mxu0 %v6224
        %8467 = vmatprep.subr.mxu0 %v6217
        %8468 = vmatpush2.msra.mxu0 %v6216
        %8469 = vmatprep.subr.mxu0 %v6209
        %8470 = vmatpush2.msra.mxu0 %v6208
        %8471 = vmatprep.subr.mxu0 %v6201
        %8472 = vmatpush2.msra.mxu0 %v6200
        %8473 = vmatprep.subr.mxu0 %v6193
        %8474 = vmatpush2.msra.mxu0 %v6192
        %8475 = vmatprep.subr.mxu0 %v6185
        %8476 = vmatpush2.msra.mxu0 %v6184
        %8477 = vmatprep.subr.mxu0 %v6177
        %8478 = vmatpush2.msra.mxu0 %v6176
        %8479 = vmatprep.subr.mxu0 %v6169
        %8480 = vmatpush2.msra.mxu0 %v6168
        %8481 = vmatprep.mubr.f32.mxu0 %v8033
        %8482 = vmatmul.mubr.f32.gmra.mxu0 %v8026
        %v8483 = vpop.f32.mrf.mxu0
        %v8484 = vadd.f32 %v8413, %v8483
        %v8485 = vpop.f32.mrf.mxu0
        %v8486 = vadd.f32 %v8415, %v8485
        %8487 = vdwg.mxu0
        %8488 = vmatprep.subr.mxu0 %v6417
        %8489 = vmatpush1.msra.mxu0 %v6416
        %8490 = vmatprep.subr.mxu0 %v6409
        %8491 = vmatpush1.msra.mxu0 %v6408
        %8492 = vmatprep.subr.mxu0 %v6401
        %8493 = vmatpush1.msra.mxu0 %v6400
        %8494 = vmatprep.subr.mxu0 %v6393
        %8495 = vmatpush1.msra.mxu0 %v6392
        %8496 = vmatprep.subr.mxu0 %v6385
        %8497 = vmatpush1.msra.mxu0 %v6384
        %8498 = vmatprep.subr.mxu0 %v6377
        %8499 = vmatpush1.msra.mxu0 %v6376
        %8500 = vmatprep.subr.mxu0 %v6369
        %8501 = vmatpush1.msra.mxu0 %v6368
        %8502 = vmatprep.subr.mxu0 %v6361
        %8503 = vmatpush1.msra.mxu0 %v6360
        %8504 = vmatprep.subr.mxu0 %v6353
        %8505 = vmatpush1.msra.mxu0 %v6352
        %8506 = vmatprep.subr.mxu0 %v6345
        %8507 = vmatpush1.msra.mxu0 %v6344
        %8508 = vmatprep.subr.mxu0 %v6337
        %8509 = vmatpush1.msra.mxu0 %v6336
        %8510 = vmatprep.subr.mxu0 %v6329
        %8511 = vmatpush1.msra.mxu0 %v6328
        %8512 = vmatprep.subr.mxu0 %v6321
        %8513 = vmatpush1.msra.mxu0 %v6320
        %8514 = vmatprep.subr.mxu0 %v6313
        %8515 = vmatpush1.msra.mxu0 %v6312
        %8516 = vmatprep.subr.mxu0 %v6305
        %8517 = vmatpush1.msra.mxu0 %v6304
        %8518 = vmatprep.subr.mxu0 %v6297
        %8519 = vmatpush1.msra.mxu0 %v6296
        %8520 = vmatprep.subr.mxu0 %v6545
        %8521 = vmatpush2.msra.mxu0 %v6544
        %8522 = vmatprep.subr.mxu0 %v6537
        %8523 = vmatpush2.msra.mxu0 %v6536
        %8524 = vmatprep.subr.mxu0 %v6529
        %8525 = vmatpush2.msra.mxu0 %v6528
        %8526 = vmatprep.subr.mxu0 %v6521
        %8527 = vmatpush2.msra.mxu0 %v6520
        %8528 = vmatprep.subr.mxu0 %v6513
        %8529 = vmatpush2.msra.mxu0 %v6512
        %8530 = vmatprep.subr.mxu0 %v6505
        %8531 = vmatpush2.msra.mxu0 %v6504
        %8532 = vmatprep.subr.mxu0 %v6497
        %8533 = vmatpush2.msra.mxu0 %v6496
        %8534 = vmatprep.subr.mxu0 %v6489
        %8535 = vmatpush2.msra.mxu0 %v6488
        %8536 = vmatprep.subr.mxu0 %v6481
        %8537 = vmatpush2.msra.mxu0 %v6480
        %8538 = vmatprep.subr.mxu0 %v6473
        %8539 = vmatpush2.msra.mxu0 %v6472
        %8540 = vmatprep.subr.mxu0 %v6465
        %8541 = vmatpush2.msra.mxu0 %v6464
        %8542 = vmatprep.subr.mxu0 %v6457
        %8543 = vmatpush2.msra.mxu0 %v6456
        %8544 = vmatprep.subr.mxu0 %v6449
        %8545 = vmatpush2.msra.mxu0 %v6448
        %8546 = vmatprep.subr.mxu0 %v6441
        %8547 = vmatpush2.msra.mxu0 %v6440
        %8548 = vmatprep.subr.mxu0 %v6433
        %8549 = vmatpush2.msra.mxu0 %v6432
        %8550 = vmatprep.subr.mxu0 %v6425
        %8551 = vmatpush2.msra.mxu0 %v6424
        %8552 = vmatprep.mubr.f32.mxu0 %v8047
        %8553 = vmatmul.mubr.f32.gmra.mxu0 %v8040
        %v8554 = vpop.f32.mrf.mxu0
        %v8555 = vadd.f32 %v8484, %v8554
        %v8556 = vpop.f32.mrf.mxu0
        %v8557 = vadd.f32 %v8486, %v8556
        %8558 = vdwg.mxu0
        %8559 = vmatprep.subr.mxu0 %v6673
        %8560 = vmatpush1.msra.mxu0 %v6672
        %8561 = vmatprep.subr.mxu0 %v6665
        %8562 = vmatpush1.msra.mxu0 %v6664
        %8563 = vmatprep.subr.mxu0 %v6657
        %8564 = vmatpush1.msra.mxu0 %v6656
        %8565 = vmatprep.subr.mxu0 %v6649
        %8566 = vmatpush1.msra.mxu0 %v6648
        %8567 = vmatprep.subr.mxu0 %v6641
        %8568 = vmatpush1.msra.mxu0 %v6640
        %8569 = vmatprep.subr.mxu0 %v6633
        %8570 = vmatpush1.msra.mxu0 %v6632
        %8571 = vmatprep.subr.mxu0 %v6625
        %8572 = vmatpush1.msra.mxu0 %v6624
        %8573 = vmatprep.subr.mxu0 %v6617
        %8574 = vmatpush1.msra.mxu0 %v6616
        %8575 = vmatprep.subr.mxu0 %v6609
        %8576 = vmatpush1.msra.mxu0 %v6608
        %8577 = vmatprep.subr.mxu0 %v6601
        %8578 = vmatpush1.msra.mxu0 %v6600
        %8579 = vmatprep.subr.mxu0 %v6593
        %8580 = vmatpush1.msra.mxu0 %v6592
        %8581 = vmatprep.subr.mxu0 %v6585
        %8582 = vmatpush1.msra.mxu0 %v6584
        %8583 = vmatprep.subr.mxu0 %v6577
        %8584 = vmatpush1.msra.mxu0 %v6576
        %8585 = vmatprep.subr.mxu0 %v6569
        %8586 = vmatpush1.msra.mxu0 %v6568
        %8587 = vmatprep.subr.mxu0 %v6561
        %8588 = vmatpush1.msra.mxu0 %v6560
        %8589 = vmatprep.subr.mxu0 %v6553
        %8590 = vmatpush1.msra.mxu0 %v6552
        %8591 = vmatprep.subr.mxu0 %v6801
        %8592 = vmatpush2.msra.mxu0 %v6800
        %8593 = vmatprep.subr.mxu0 %v6793
        %8594 = vmatpush2.msra.mxu0 %v6792
        %8595 = vmatprep.subr.mxu0 %v6785
        %8596 = vmatpush2.msra.mxu0 %v6784
        %8597 = vmatprep.subr.mxu0 %v6777
        %8598 = vmatpush2.msra.mxu0 %v6776
        %8599 = vmatprep.subr.mxu0 %v6769
        %8600 = vmatpush2.msra.mxu0 %v6768
        %8601 = vmatprep.subr.mxu0 %v6761
        %8602 = vmatpush2.msra.mxu0 %v6760
        %8603 = vmatprep.subr.mxu0 %v6753
        %8604 = vmatpush2.msra.mxu0 %v6752
        %8605 = vmatprep.subr.mxu0 %v6745
        %8606 = vmatpush2.msra.mxu0 %v6744
        %8607 = vmatprep.subr.mxu0 %v6737
        %8608 = vmatpush2.msra.mxu0 %v6736
        %8609 = vmatprep.subr.mxu0 %v6729
        %8610 = vmatpush2.msra.mxu0 %v6728
        %8611 = vmatprep.subr.mxu0 %v6721
        %8612 = vmatpush2.msra.mxu0 %v6720
        %8613 = vmatprep.subr.mxu0 %v6713
        %8614 = vmatpush2.msra.mxu0 %v6712
        %8615 = vmatprep.subr.mxu0 %v6705
        %8616 = vmatpush2.msra.mxu0 %v6704
        %8617 = vmatprep.subr.mxu0 %v6697
        %8618 = vmatpush2.msra.mxu0 %v6696
        %8619 = vmatprep.subr.mxu0 %v6689
        %8620 = vmatpush2.msra.mxu0 %v6688
        %8621 = vmatprep.subr.mxu0 %v6681
        %8622 = vmatpush2.msra.mxu0 %v6680
        %8623 = vmatprep.mubr.f32.mxu0 %v8061
        %8624 = vmatmul.mubr.f32.gmra.mxu0 %v8054
        %v8625 = vpop.f32.mrf.mxu0
        %v8626 = vadd.f32 %v8555, %v8625
        %v8627 = vpop.f32.mrf.mxu0
        %v8628 = vadd.f32 %v8557, %v8627
        %8629 = vdwg.mxu0
        %8630 = vmatprep.subr.mxu0 %v5907
        %8631 = vmatpush1.msra.mxu0 %v5906
        %8632 = vmatprep.subr.mxu0 %v5899
        %8633 = vmatpush1.msra.mxu0 %v5898
        %8634 = vmatprep.subr.mxu0 %v5891
        %8635 = vmatpush1.msra.mxu0 %v5890
        %8636 = vmatprep.subr.mxu0 %v5883
        %8637 = vmatpush1.msra.mxu0 %v5882
        %8638 = vmatprep.subr.mxu0 %v5875
        %8639 = vmatpush1.msra.mxu0 %v5874
        %8640 = vmatprep.subr.mxu0 %v5867
        %8641 = vmatpush1.msra.mxu0 %v5866
        %8642 = vmatprep.subr.mxu0 %v5859
        %8643 = vmatpush1.msra.mxu0 %v5858
        %8644 = vmatprep.subr.mxu0 %v5851
        %8645 = vmatpush1.msra.mxu0 %v5850
        %8646 = vmatprep.subr.mxu0 %v5843
        %8647 = vmatpush1.msra.mxu0 %v5842
        %8648 = vmatprep.subr.mxu0 %v5835
        %8649 = vmatpush1.msra.mxu0 %v5834
        %8650 = vmatprep.subr.mxu0 %v5827
        %8651 = vmatpush1.msra.mxu0 %v5826
        %8652 = vmatprep.subr.mxu0 %v5819
        %8653 = vmatpush1.msra.mxu0 %v5818
        %8654 = vmatprep.subr.mxu0 %v5811
        %8655 = vmatpush1.msra.mxu0 %v5810
        %8656 = vmatprep.subr.mxu0 %v5803
        %8657 = vmatpush1.msra.mxu0 %v5802
        %8658 = vmatprep.subr.mxu0 %v5795
        %8659 = vmatpush1.msra.mxu0 %v5794
        %8660 = vmatprep.subr.mxu0 %v5787
        %8661 = vmatpush1.msra.mxu0 %v5786
        %8662 = vmatprep.subr.mxu0 %v6035
        %8663 = vmatpush2.msra.mxu0 %v6034
        %8664 = vmatprep.subr.mxu0 %v6027
        %8665 = vmatpush2.msra.mxu0 %v6026
        %8666 = vmatprep.subr.mxu0 %v6019
        %8667 = vmatpush2.msra.mxu0 %v6018
        %8668 = vmatprep.subr.mxu0 %v6011
        %8669 = vmatpush2.msra.mxu0 %v6010
        %8670 = vmatprep.subr.mxu0 %v6003
        %8671 = vmatpush2.msra.mxu0 %v6002
        %8672 = vmatprep.subr.mxu0 %v5995
        %8673 = vmatpush2.msra.mxu0 %v5994
        %8674 = vmatprep.subr.mxu0 %v5987
        %8675 = vmatpush2.msra.mxu0 %v5986
        %8676 = vmatprep.subr.mxu0 %v5979
        %8677 = vmatpush2.msra.mxu0 %v5978
        %8678 = vmatprep.subr.mxu0 %v5971
        %8679 = vmatpush2.msra.mxu0 %v5970
        %8680 = vmatprep.subr.mxu0 %v5963
        %8681 = vmatpush2.msra.mxu0 %v5962
        %8682 = vmatprep.subr.mxu0 %v5955
        %8683 = vmatpush2.msra.mxu0 %v5954
        %8684 = vmatprep.subr.mxu0 %v5947
        %8685 = vmatpush2.msra.mxu0 %v5946
        %8686 = vmatprep.subr.mxu0 %v5939
        %8687 = vmatpush2.msra.mxu0 %v5938
        %8688 = vmatprep.subr.mxu0 %v5931
        %8689 = vmatpush2.msra.mxu0 %v5930
        %8690 = vmatprep.subr.mxu0 %v5923
        %8691 = vmatpush2.msra.mxu0 %v5922
        %8692 = vmatprep.subr.mxu0 %v5915
        %8693 = vmatpush2.msra.mxu0 %v5914
        %8694 = vmatprep.mubr.f32.mxu0 %v8019
        %8695 = vmatmul.mubr.f32.gmra.mxu0 %v8012
        %v8696 = vpop.f32.mrf.mxu0
        %v8697 = vadd.f32 1e-05, %v8696
        %v8698 = vpop.f32.mrf.mxu0
        %v8699 = vadd.f32 1e-05, %v8698
        %8700 = vdwg.mxu0
        %8701 = vmatprep.subr.mxu0 %v6163
        %8702 = vmatpush1.msra.mxu0 %v6162
        %8703 = vmatprep.subr.mxu0 %v6155
        %8704 = vmatpush1.msra.mxu0 %v6154
        %8705 = vmatprep.subr.mxu0 %v6147
        %8706 = vmatpush1.msra.mxu0 %v6146
        %8707 = vmatprep.subr.mxu0 %v6139
        %8708 = vmatpush1.msra.mxu0 %v6138
        %8709 = vmatprep.subr.mxu0 %v6131
        %8710 = vmatpush1.msra.mxu0 %v6130
        %8711 = vmatprep.subr.mxu0 %v6123
        %8712 = vmatpush1.msra.mxu0 %v6122
        %8713 = vmatprep.subr.mxu0 %v6115
        %8714 = vmatpush1.msra.mxu0 %v6114
        %8715 = vmatprep.subr.mxu0 %v6107
        %8716 = vmatpush1.msra.mxu0 %v6106
        %8717 = vmatprep.subr.mxu0 %v6099
        %8718 = vmatpush1.msra.mxu0 %v6098
        %8719 = vmatprep.subr.mxu0 %v6091
        %8720 = vmatpush1.msra.mxu0 %v6090
        %8721 = vmatprep.subr.mxu0 %v6083
        %8722 = vmatpush1.msra.mxu0 %v6082
        %8723 = vmatprep.subr.mxu0 %v6075
        %8724 = vmatpush1.msra.mxu0 %v6074
        %8725 = vmatprep.subr.mxu0 %v6067
        %8726 = vmatpush1.msra.mxu0 %v6066
        %8727 = vmatprep.subr.mxu0 %v6059
        %8728 = vmatpush1.msra.mxu0 %v6058
        %8729 = vmatprep.subr.mxu0 %v6051
        %8730 = vmatpush1.msra.mxu0 %v6050
        %8731 = vmatprep.subr.mxu0 %v6043
        %8732 = vmatpush1.msra.mxu0 %v6042
        %8733 = vmatprep.subr.mxu0 %v6291
        %8734 = vmatpush2.msra.mxu0 %v6290
        %8735 = vmatprep.subr.mxu0 %v6283
        %8736 = vmatpush2.msra.mxu0 %v6282
        %8737 = vmatprep.subr.mxu0 %v6275
        %8738 = vmatpush2.msra.mxu0 %v6274
        %8739 = vmatprep.subr.mxu0 %v6267
        %8740 = vmatpush2.msra.mxu0 %v6266
        %8741 = vmatprep.subr.mxu0 %v6259
        %8742 = vmatpush2.msra.mxu0 %v6258
        %8743 = vmatprep.subr.mxu0 %v6251
        %8744 = vmatpush2.msra.mxu0 %v6250
        %8745 = vmatprep.subr.mxu0 %v6243
        %8746 = vmatpush2.msra.mxu0 %v6242
        %8747 = vmatprep.subr.mxu0 %v6235
        %8748 = vmatpush2.msra.mxu0 %v6234
        %8749 = vmatprep.subr.mxu0 %v6227
        %8750 = vmatpush2.msra.mxu0 %v6226
        %8751 = vmatprep.subr.mxu0 %v6219
        %8752 = vmatpush2.msra.mxu0 %v6218
        %8753 = vmatprep.subr.mxu0 %v6211
        %8754 = vmatpush2.msra.mxu0 %v6210
        %8755 = vmatprep.subr.mxu0 %v6203
        %8756 = vmatpush2.msra.mxu0 %v6202
        %8757 = vmatprep.subr.mxu0 %v6195
        %8758 = vmatpush2.msra.mxu0 %v6194
        %8759 = vmatprep.subr.mxu0 %v6187
        %8760 = vmatpush2.msra.mxu0 %v6186
        %8761 = vmatprep.subr.mxu0 %v6179
        %8762 = vmatpush2.msra.mxu0 %v6178
        %8763 = vmatprep.subr.mxu0 %v6171
        %8764 = vmatpush2.msra.mxu0 %v6170
        %8765 = vmatprep.mubr.f32.mxu0 %v8033
        %8766 = vmatmul.mubr.f32.gmra.mxu0 %v8026
        %v8767 = vpop.f32.mrf.mxu0
        %v8768 = vadd.f32 %v8697, %v8767
        %v8769 = vpop.f32.mrf.mxu0
        %v8770 = vadd.f32 %v8699, %v8769
        %8771 = vdwg.mxu0
        %8772 = vmatprep.subr.mxu0 %v6419
        %8773 = vmatpush1.msra.mxu0 %v6418
        %8774 = vmatprep.subr.mxu0 %v6411
        %8775 = vmatpush1.msra.mxu0 %v6410
        %8776 = vmatprep.subr.mxu0 %v6403
        %8777 = vmatpush1.msra.mxu0 %v6402
        %8778 = vmatprep.subr.mxu0 %v6395
        %8779 = vmatpush1.msra.mxu0 %v6394
        %8780 = vmatprep.subr.mxu0 %v6387
        %8781 = vmatpush1.msra.mxu0 %v6386
        %8782 = vmatprep.subr.mxu0 %v6379
        %8783 = vmatpush1.msra.mxu0 %v6378
        %8784 = vmatprep.subr.mxu0 %v6371
        %8785 = vmatpush1.msra.mxu0 %v6370
        %8786 = vmatprep.subr.mxu0 %v6363
        %8787 = vmatpush1.msra.mxu0 %v6362
        %8788 = vmatprep.subr.mxu0 %v6355
        %8789 = vmatpush1.msra.mxu0 %v6354
        %8790 = vmatprep.subr.mxu0 %v6347
        %8791 = vmatpush1.msra.mxu0 %v6346
        %8792 = vmatprep.subr.mxu0 %v6339
        %8793 = vmatpush1.msra.mxu0 %v6338
        %8794 = vmatprep.subr.mxu0 %v6331
        %8795 = vmatpush1.msra.mxu0 %v6330
        %8796 = vmatprep.subr.mxu0 %v6323
        %8797 = vmatpush1.msra.mxu0 %v6322
        %8798 = vmatprep.subr.mxu0 %v6315
        %8799 = vmatpush1.msra.mxu0 %v6314
        %8800 = vmatprep.subr.mxu0 %v6307
        %8801 = vmatpush1.msra.mxu0 %v6306
        %8802 = vmatprep.subr.mxu0 %v6299
        %8803 = vmatpush1.msra.mxu0 %v6298
        %8804 = vmatprep.subr.mxu0 %v6547
        %8805 = vmatpush2.msra.mxu0 %v6546
        %8806 = vmatprep.subr.mxu0 %v6539
        %8807 = vmatpush2.msra.mxu0 %v6538
        %8808 = vmatprep.subr.mxu0 %v6531
        %8809 = vmatpush2.msra.mxu0 %v6530
        %8810 = vmatprep.subr.mxu0 %v6523
        %8811 = vmatpush2.msra.mxu0 %v6522
        %8812 = vmatprep.subr.mxu0 %v6515
        %8813 = vmatpush2.msra.mxu0 %v6514
        %8814 = vmatprep.subr.mxu0 %v6507
        %8815 = vmatpush2.msra.mxu0 %v6506
        %8816 = vmatprep.subr.mxu0 %v6499
        %8817 = vmatpush2.msra.mxu0 %v6498
        %8818 = vmatprep.subr.mxu0 %v6491
        %8819 = vmatpush2.msra.mxu0 %v6490
        %8820 = vmatprep.subr.mxu0 %v6483
        %8821 = vmatpush2.msra.mxu0 %v6482
        %8822 = vmatprep.subr.mxu0 %v6475
        %8823 = vmatpush2.msra.mxu0 %v6474
        %8824 = vmatprep.subr.mxu0 %v6467
        %8825 = vmatpush2.msra.mxu0 %v6466
        %8826 = vmatprep.subr.mxu0 %v6459
        %8827 = vmatpush2.msra.mxu0 %v6458
        %8828 = vmatprep.subr.mxu0 %v6451
        %8829 = vmatpush2.msra.mxu0 %v6450
        %8830 = vmatprep.subr.mxu0 %v6443
        %8831 = vmatpush2.msra.mxu0 %v6442
        %8832 = vmatprep.subr.mxu0 %v6435
        %8833 = vmatpush2.msra.mxu0 %v6434
        %8834 = vmatprep.subr.mxu0 %v6427
        %8835 = vmatpush2.msra.mxu0 %v6426
        %8836 = vmatprep.mubr.f32.mxu0 %v8047
        %8837 = vmatmul.mubr.f32.gmra.mxu0 %v8040
        %v8838 = vpop.f32.mrf.mxu0
        %v8839 = vadd.f32 %v8768, %v8838
        %v8840 = vpop.f32.mrf.mxu0
        %v8841 = vadd.f32 %v8770, %v8840
        %8842 = vdwg.mxu0
        %8843 = vmatprep.subr.mxu0 %v6675
        %8844 = vmatpush1.msra.mxu0 %v6674
        %8845 = vmatprep.subr.mxu0 %v6667
        %8846 = vmatpush1.msra.mxu0 %v6666
        %8847 = vmatprep.subr.mxu0 %v6659
        %8848 = vmatpush1.msra.mxu0 %v6658
        %8849 = vmatprep.subr.mxu0 %v6651
        %8850 = vmatpush1.msra.mxu0 %v6650
        %8851 = vmatprep.subr.mxu0 %v6643
        %8852 = vmatpush1.msra.mxu0 %v6642
        %8853 = vmatprep.subr.mxu0 %v6635
        %8854 = vmatpush1.msra.mxu0 %v6634
        %8855 = vmatprep.subr.mxu0 %v6627
        %8856 = vmatpush1.msra.mxu0 %v6626
        %8857 = vmatprep.subr.mxu0 %v6619
        %8858 = vmatpush1.msra.mxu0 %v6618
        %8859 = vmatprep.subr.mxu0 %v6611
        %8860 = vmatpush1.msra.mxu0 %v6610
        %8861 = vmatprep.subr.mxu0 %v6603
        %8862 = vmatpush1.msra.mxu0 %v6602
        %8863 = vmatprep.subr.mxu0 %v6595
        %8864 = vmatpush1.msra.mxu0 %v6594
        %8865 = vmatprep.subr.mxu0 %v6587
        %8866 = vmatpush1.msra.mxu0 %v6586
        %8867 = vmatprep.subr.mxu0 %v6579
        %8868 = vmatpush1.msra.mxu0 %v6578
        %8869 = vmatprep.subr.mxu0 %v6571
        %8870 = vmatpush1.msra.mxu0 %v6570
        %8871 = vmatprep.subr.mxu0 %v6563
        %8872 = vmatpush1.msra.mxu0 %v6562
        %8873 = vmatprep.subr.mxu0 %v6555
        %8874 = vmatpush1.msra.mxu0 %v6554
        %8875 = vmatprep.subr.mxu0 %v6803
        %8876 = vmatpush2.msra.mxu0 %v6802
        %8877 = vmatprep.subr.mxu0 %v6795
        %8878 = vmatpush2.msra.mxu0 %v6794
        %8879 = vmatprep.subr.mxu0 %v6787
        %8880 = vmatpush2.msra.mxu0 %v6786
        %8881 = vmatprep.subr.mxu0 %v6779
        %8882 = vmatpush2.msra.mxu0 %v6778
        %8883 = vmatprep.subr.mxu0 %v6771
        %8884 = vmatpush2.msra.mxu0 %v6770
        %8885 = vmatprep.subr.mxu0 %v6763
        %8886 = vmatpush2.msra.mxu0 %v6762
        %8887 = vmatprep.subr.mxu0 %v6755
        %8888 = vmatpush2.msra.mxu0 %v6754
        %8889 = vmatprep.subr.mxu0 %v6747
        %8890 = vmatpush2.msra.mxu0 %v6746
        %8891 = vmatprep.subr.mxu0 %v6739
        %8892 = vmatpush2.msra.mxu0 %v6738
        %8893 = vmatprep.subr.mxu0 %v6731
        %8894 = vmatpush2.msra.mxu0 %v6730
        %8895 = vmatprep.subr.mxu0 %v6723
        %8896 = vmatpush2.msra.mxu0 %v6722
        %8897 = vmatprep.subr.mxu0 %v6715
        %8898 = vmatpush2.msra.mxu0 %v6714
        %8899 = vmatprep.subr.mxu0 %v6707
        %8900 = vmatpush2.msra.mxu0 %v6706
        %8901 = vmatprep.subr.mxu0 %v6699
        %8902 = vmatpush2.msra.mxu0 %v6698
        %8903 = vmatprep.subr.mxu0 %v6691
        %8904 = vmatpush2.msra.mxu0 %v6690
        %8905 = vmatprep.subr.mxu0 %v6683
        %8906 = vmatpush2.msra.mxu0 %v6682
        %8907 = vmatprep.mubr.f32.mxu0 %v8061
        %8908 = vmatmul.mubr.f32.gmra.mxu0 %v8054
        %v8909 = vpop.f32.mrf.mxu0
        %v8910 = vadd.f32 %v8839, %v8909
        %v8911 = vpop.f32.mrf.mxu0
        %v8912 = vadd.f32 %v8841, %v8911
        %8913 = vdwg.mxu0
        %8914 = vmatprep.subr.mxu0 %v5909
        %8915 = vmatpush1.msra.mxu0 %v5908
        %8916 = vmatprep.subr.mxu0 %v5901
        %8917 = vmatpush1.msra.mxu0 %v5900
        %8918 = vmatprep.subr.mxu0 %v5893
        %8919 = vmatpush1.msra.mxu0 %v5892
        %8920 = vmatprep.subr.mxu0 %v5885
        %8921 = vmatpush1.msra.mxu0 %v5884
        %8922 = vmatprep.subr.mxu0 %v5877
        %8923 = vmatpush1.msra.mxu0 %v5876
        %8924 = vmatprep.subr.mxu0 %v5869
        %8925 = vmatpush1.msra.mxu0 %v5868
        %8926 = vmatprep.subr.mxu0 %v5861
        %8927 = vmatpush1.msra.mxu0 %v5860
        %8928 = vmatprep.subr.mxu0 %v5853
        %8929 = vmatpush1.msra.mxu0 %v5852
        %8930 = vmatprep.subr.mxu0 %v5845
        %8931 = vmatpush1.msra.mxu0 %v5844
        %8932 = vmatprep.subr.mxu0 %v5837
        %8933 = vmatpush1.msra.mxu0 %v5836
        %8934 = vmatprep.subr.mxu0 %v5829
        %8935 = vmatpush1.msra.mxu0 %v5828
        %8936 = vmatprep.subr.mxu0 %v5821
        %8937 = vmatpush1.msra.mxu0 %v5820
        %8938 = vmatprep.subr.mxu0 %v5813
        %8939 = vmatpush1.msra.mxu0 %v5812
        %8940 = vmatprep.subr.mxu0 %v5805
        %8941 = vmatpush1.msra.mxu0 %v5804
        %8942 = vmatprep.subr.mxu0 %v5797
        %8943 = vmatpush1.msra.mxu0 %v5796
        %8944 = vmatprep.subr.mxu0 %v5789
        %8945 = vmatpush1.msra.mxu0 %v5788
        %8946 = vmatprep.subr.mxu0 %v6037
        %8947 = vmatpush2.msra.mxu0 %v6036
        %8948 = vmatprep.subr.mxu0 %v6029
        %8949 = vmatpush2.msra.mxu0 %v6028
        %8950 = vmatprep.subr.mxu0 %v6021
        %8951 = vmatpush2.msra.mxu0 %v6020
        %8952 = vmatprep.subr.mxu0 %v6013
        %8953 = vmatpush2.msra.mxu0 %v6012
        %8954 = vmatprep.subr.mxu0 %v6005
        %8955 = vmatpush2.msra.mxu0 %v6004
        %8956 = vmatprep.subr.mxu0 %v5997
        %8957 = vmatpush2.msra.mxu0 %v5996
        %8958 = vmatprep.subr.mxu0 %v5989
        %8959 = vmatpush2.msra.mxu0 %v5988
        %8960 = vmatprep.subr.mxu0 %v5981
        %8961 = vmatpush2.msra.mxu0 %v5980
        %8962 = vmatprep.subr.mxu0 %v5973
        %8963 = vmatpush2.msra.mxu0 %v5972
        %8964 = vmatprep.subr.mxu0 %v5965
        %8965 = vmatpush2.msra.mxu0 %v5964
        %8966 = vmatprep.subr.mxu0 %v5957
        %8967 = vmatpush2.msra.mxu0 %v5956
        %8968 = vmatprep.subr.mxu0 %v5949
        %8969 = vmatpush2.msra.mxu0 %v5948
        %8970 = vmatprep.subr.mxu0 %v5941
        %8971 = vmatpush2.msra.mxu0 %v5940
        %8972 = vmatprep.subr.mxu0 %v5933
        %8973 = vmatpush2.msra.mxu0 %v5932
        %8974 = vmatprep.subr.mxu0 %v5925
        %8975 = vmatpush2.msra.mxu0 %v5924
        %8976 = vmatprep.subr.mxu0 %v5917
        %8977 = vmatpush2.msra.mxu0 %v5916
        %8978 = vmatprep.mubr.f32.mxu0 %v8019
        %8979 = vmatmul.mubr.f32.gmra.mxu0 %v8012
        %v8980 = vpop.f32.mrf.mxu0
        %v8981 = vadd.f32 1e-05, %v8980
        %v8982 = vpop.f32.mrf.mxu0
        %v8983 = vadd.f32 1e-05, %v8982
        %8984 = vdwg.mxu0
        %8985 = vmatprep.subr.mxu0 %v6165
        %8986 = vmatpush1.msra.mxu0 %v6164
        %8987 = vmatprep.subr.mxu0 %v6157
        %8988 = vmatpush1.msra.mxu0 %v6156
        %8989 = vmatprep.subr.mxu0 %v6149
        %8990 = vmatpush1.msra.mxu0 %v6148
        %8991 = vmatprep.subr.mxu0 %v6141
        %8992 = vmatpush1.msra.mxu0 %v6140
        %8993 = vmatprep.subr.mxu0 %v6133
        %8994 = vmatpush1.msra.mxu0 %v6132
        %8995 = vmatprep.subr.mxu0 %v6125
        %8996 = vmatpush1.msra.mxu0 %v6124
        %8997 = vmatprep.subr.mxu0 %v6117
        %8998 = vmatpush1.msra.mxu0 %v6116
        %8999 = vmatprep.subr.mxu0 %v6109
        %9000 = vmatpush1.msra.mxu0 %v6108
        %9001 = vmatprep.subr.mxu0 %v6101
        %9002 = vmatpush1.msra.mxu0 %v6100
        %9003 = vmatprep.subr.mxu0 %v6093
        %9004 = vmatpush1.msra.mxu0 %v6092
        %9005 = vmatprep.subr.mxu0 %v6085
        %9006 = vmatpush1.msra.mxu0 %v6084
        %9007 = vmatprep.subr.mxu0 %v6077
        %9008 = vmatpush1.msra.mxu0 %v6076
        %9009 = vmatprep.subr.mxu0 %v6069
        %9010 = vmatpush1.msra.mxu0 %v6068
        %9011 = vmatprep.subr.mxu0 %v6061
        %9012 = vmatpush1.msra.mxu0 %v6060
        %9013 = vmatprep.subr.mxu0 %v6053
        %9014 = vmatpush1.msra.mxu0 %v6052
        %9015 = vmatprep.subr.mxu0 %v6045
        %9016 = vmatpush1.msra.mxu0 %v6044
        %9017 = vmatprep.subr.mxu0 %v6293
        %9018 = vmatpush2.msra.mxu0 %v6292
        %9019 = vmatprep.subr.mxu0 %v6285
        %9020 = vmatpush2.msra.mxu0 %v6284
        %9021 = vmatprep.subr.mxu0 %v6277
        %9022 = vmatpush2.msra.mxu0 %v6276
        %9023 = vmatprep.subr.mxu0 %v6269
        %9024 = vmatpush2.msra.mxu0 %v6268
        %9025 = vmatprep.subr.mxu0 %v6261
        %9026 = vmatpush2.msra.mxu0 %v6260
        %9027 = vmatprep.subr.mxu0 %v6253
        %9028 = vmatpush2.msra.mxu0 %v6252
        %9029 = vmatprep.subr.mxu0 %v6245
        %9030 = vmatpush2.msra.mxu0 %v6244
        %9031 = vmatprep.subr.mxu0 %v6237
        %9032 = vmatpush2.msra.mxu0 %v6236
        %9033 = vmatprep.subr.mxu0 %v6229
        %9034 = vmatpush2.msra.mxu0 %v6228
        %9035 = vmatprep.subr.mxu0 %v6221
        %9036 = vmatpush2.msra.mxu0 %v6220
        %9037 = vmatprep.subr.mxu0 %v6213
        %9038 = vmatpush2.msra.mxu0 %v6212
        %9039 = vmatprep.subr.mxu0 %v6205
        %9040 = vmatpush2.msra.mxu0 %v6204
        %9041 = vmatprep.subr.mxu0 %v6197
        %9042 = vmatpush2.msra.mxu0 %v6196
        %9043 = vmatprep.subr.mxu0 %v6189
        %9044 = vmatpush2.msra.mxu0 %v6188
        %9045 = vmatprep.subr.mxu0 %v6181
        %9046 = vmatpush2.msra.mxu0 %v6180
        %9047 = vmatprep.subr.mxu0 %v6173
        %9048 = vmatpush2.msra.mxu0 %v6172
        %9049 = vmatprep.mubr.f32.mxu0 %v8033
        %9050 = vmatmul.mubr.f32.gmra.mxu0 %v8026
        %v9051 = vpop.f32.mrf.mxu0
        %v9052 = vadd.f32 %v8981, %v9051
        %v9053 = vpop.f32.mrf.mxu0
        %v9054 = vadd.f32 %v8983, %v9053
        %9055 = vdwg.mxu0
        %9056 = vmatprep.subr.mxu0 %v6421
        %9057 = vmatpush1.msra.mxu0 %v6420
        %9058 = vmatprep.subr.mxu0 %v6413
        %9059 = vmatpush1.msra.mxu0 %v6412
        %9060 = vmatprep.subr.mxu0 %v6405
        %9061 = vmatpush1.msra.mxu0 %v6404
        %9062 = vmatprep.subr.mxu0 %v6397
        %9063 = vmatpush1.msra.mxu0 %v6396
        %9064 = vmatprep.subr.mxu0 %v6389
        %9065 = vmatpush1.msra.mxu0 %v6388
        %9066 = vmatprep.subr.mxu0 %v6381
        %9067 = vmatpush1.msra.mxu0 %v6380
        %9068 = vmatprep.subr.mxu0 %v6373
        %9069 = vmatpush1.msra.mxu0 %v6372
        %9070 = vmatprep.subr.mxu0 %v6365
        %9071 = vmatpush1.msra.mxu0 %v6364
        %9072 = vmatprep.subr.mxu0 %v6357
        %9073 = vmatpush1.msra.mxu0 %v6356
        %9074 = vmatprep.subr.mxu0 %v6349
        %9075 = vmatpush1.msra.mxu0 %v6348
        %9076 = vmatprep.subr.mxu0 %v6341
        %9077 = vmatpush1.msra.mxu0 %v6340
        %9078 = vmatprep.subr.mxu0 %v6333
        %9079 = vmatpush1.msra.mxu0 %v6332
        %9080 = vmatprep.subr.mxu0 %v6325
        %9081 = vmatpush1.msra.mxu0 %v6324
        %9082 = vmatprep.subr.mxu0 %v6317
        %9083 = vmatpush1.msra.mxu0 %v6316
        %9084 = vmatprep.subr.mxu0 %v6309
        %9085 = vmatpush1.msra.mxu0 %v6308
        %9086 = vmatprep.subr.mxu0 %v6301
        %9087 = vmatpush1.msra.mxu0 %v6300
        %9088 = vmatprep.subr.mxu0 %v6549
        %9089 = vmatpush2.msra.mxu0 %v6548
        %9090 = vmatprep.subr.mxu0 %v6541
        %9091 = vmatpush2.msra.mxu0 %v6540
        %9092 = vmatprep.subr.mxu0 %v6533
        %9093 = vmatpush2.msra.mxu0 %v6532
        %9094 = vmatprep.subr.mxu0 %v6525
        %9095 = vmatpush2.msra.mxu0 %v6524
        %9096 = vmatprep.subr.mxu0 %v6517
        %9097 = vmatpush2.msra.mxu0 %v6516
        %9098 = vmatprep.subr.mxu0 %v6509
        %9099 = vmatpush2.msra.mxu0 %v6508
        %9100 = vmatprep.subr.mxu0 %v6501
        %9101 = vmatpush2.msra.mxu0 %v6500
        %9102 = vmatprep.subr.mxu0 %v6493
        %9103 = vmatpush2.msra.mxu0 %v6492
        %9104 = vmatprep.subr.mxu0 %v6485
        %9105 = vmatpush2.msra.mxu0 %v6484
        %9106 = vmatprep.subr.mxu0 %v6477
        %9107 = vmatpush2.msra.mxu0 %v6476
        %9108 = vmatprep.subr.mxu0 %v6469
        %9109 = vmatpush2.msra.mxu0 %v6468
        %9110 = vmatprep.subr.mxu0 %v6461
        %9111 = vmatpush2.msra.mxu0 %v6460
        %9112 = vmatprep.subr.mxu0 %v6453
        %9113 = vmatpush2.msra.mxu0 %v6452
        %9114 = vmatprep.subr.mxu0 %v6445
        %9115 = vmatpush2.msra.mxu0 %v6444
        %9116 = vmatprep.subr.mxu0 %v6437
        %9117 = vmatpush2.msra.mxu0 %v6436
        %9118 = vmatprep.subr.mxu0 %v6429
        %9119 = vmatpush2.msra.mxu0 %v6428
        %9120 = vmatprep.mubr.f32.mxu0 %v8047
        %9121 = vmatmul.mubr.f32.gmra.mxu0 %v8040
        %v9122 = vpop.f32.mrf.mxu0
        %v9123 = vadd.f32 %v9052, %v9122
        %v9124 = vpop.f32.mrf.mxu0
        %v9125 = vadd.f32 %v9054, %v9124
        %9126 = vdwg.mxu0
        %9127 = vmatprep.subr.mxu0 %v6677
        %9128 = vmatpush1.msra.mxu0 %v6676
        %9129 = vmatprep.subr.mxu0 %v6669
        %9130 = vmatpush1.msra.mxu0 %v6668
        %9131 = vmatprep.subr.mxu0 %v6661
        %9132 = vmatpush1.msra.mxu0 %v6660
        %9133 = vmatprep.subr.mxu0 %v6653
        %9134 = vmatpush1.msra.mxu0 %v6652
        %9135 = vmatprep.subr.mxu0 %v6645
        %9136 = vmatpush1.msra.mxu0 %v6644
        %9137 = vmatprep.subr.mxu0 %v6637
        %9138 = vmatpush1.msra.mxu0 %v6636
        %9139 = vmatprep.subr.mxu0 %v6629
        %9140 = vmatpush1.msra.mxu0 %v6628
        %9141 = vmatprep.subr.mxu0 %v6621
        %9142 = vmatpush1.msra.mxu0 %v6620
        %9143 = vmatprep.subr.mxu0 %v6613
        %9144 = vmatpush1.msra.mxu0 %v6612
        %9145 = vmatprep.subr.mxu0 %v6605
        %9146 = vmatpush1.msra.mxu0 %v6604
        %9147 = vmatprep.subr.mxu0 %v6597
        %9148 = vmatpush1.msra.mxu0 %v6596
        %9149 = vmatprep.subr.mxu0 %v6589
        %9150 = vmatpush1.msra.mxu0 %v6588
        %9151 = vmatprep.subr.mxu0 %v6581
        %9152 = vmatpush1.msra.mxu0 %v6580
        %9153 = vmatprep.subr.mxu0 %v6573
        %9154 = vmatpush1.msra.mxu0 %v6572
        %9155 = vmatprep.subr.mxu0 %v6565
        %9156 = vmatpush1.msra.mxu0 %v6564
        %9157 = vmatprep.subr.mxu0 %v6557
        %9158 = vmatpush1.msra.mxu0 %v6556
        %9159 = vmatprep.subr.mxu0 %v6805
        %9160 = vmatpush2.msra.mxu0 %v6804
        %9161 = vmatprep.subr.mxu0 %v6797
        %9162 = vmatpush2.msra.mxu0 %v6796
        %9163 = vmatprep.subr.mxu0 %v6789
        %9164 = vmatpush2.msra.mxu0 %v6788
        %9165 = vmatprep.subr.mxu0 %v6781
        %9166 = vmatpush2.msra.mxu0 %v6780
        %9167 = vmatprep.subr.mxu0 %v6773
        %9168 = vmatpush2.msra.mxu0 %v6772
        %9169 = vmatprep.subr.mxu0 %v6765
        %9170 = vmatpush2.msra.mxu0 %v6764
        %9171 = vmatprep.subr.mxu0 %v6757
        %9172 = vmatpush2.msra.mxu0 %v6756
        %9173 = vmatprep.subr.mxu0 %v6749
        %9174 = vmatpush2.msra.mxu0 %v6748
        %9175 = vmatprep.subr.mxu0 %v6741
        %9176 = vmatpush2.msra.mxu0 %v6740
        %9177 = vmatprep.subr.mxu0 %v6733
        %9178 = vmatpush2.msra.mxu0 %v6732
        %9179 = vmatprep.subr.mxu0 %v6725
        %9180 = vmatpush2.msra.mxu0 %v6724
        %9181 = vmatprep.subr.mxu0 %v6717
        %9182 = vmatpush2.msra.mxu0 %v6716
        %9183 = vmatprep.subr.mxu0 %v6709
        %9184 = vmatpush2.msra.mxu0 %v6708
        %9185 = vmatprep.subr.mxu0 %v6701
        %9186 = vmatpush2.msra.mxu0 %v6700
        %9187 = vmatprep.subr.mxu0 %v6693
        %9188 = vmatpush2.msra.mxu0 %v6692
        %9189 = vmatprep.subr.mxu0 %v6685
        %9190 = vmatpush2.msra.mxu0 %v6684
        %9191 = vmatprep.mubr.f32.mxu0 %v8061
        %9192 = vmatmul.mubr.f32.gmra.mxu0 %v8054
        %v9193 = vpop.f32.mrf.mxu0
        %v9194 = vadd.f32 %v9123, %v9193
        %v9195 = vpop.f32.mrf.mxu0
        %v9196 = vadd.f32 %v9125, %v9195
        %9197 = vdwg.mxu0
        %v9198 = vrsqrt.pop %v8342
        %v9199 = vrsqrt.pop %v8344
        %v9200 = vrsqrt.pop %v8626
        %v9201 = vrsqrt.pop %v8628
        %v9202 = vrsqrt.pop %v8910
        %v9203 = vrsqrt.pop %v8912
        %v9204 = vrsqrt.pop %v9194
        %v9205 = vrsqrt.pop %v9196
        %v9206 = vld [vmem:[#allocation8] sm:$0xff]
        %v9208 = vlaneseq
        %v9209 = vshrl.u32 %v9208, 7
        %v9210 = vsub.s32 0, %v9209
        %v9211 = vrot.slane %v9206, %v9210
        %v9212 = vlaneseq
        %v9213 = vshrl.u32 %v9212, 7
        %v9214 = vsub.s32 1, %v9213
        %v9215 = vrot.slane %v9206, %v9214
        %v9216 = vlaneseq
        %v9217 = vshrl.u32 %v9216, 7
        %v9218 = vsub.s32 2, %v9217
        %v9219 = vrot.slane %v9206, %v9218
        %v9220 = vlaneseq
        %v9221 = vshrl.u32 %v9220, 7
        %v9222 = vsub.s32 3, %v9221
        %v9223 = vrot.slane %v9206, %v9222
        %v9224 = vlaneseq
        %v9225 = vshrl.u32 %v9224, 7
        %v9226 = vsub.s32 4, %v9225
        %v9227 = vrot.slane %v9206, %v9226
        %v9228 = vlaneseq
        %v9229 = vshrl.u32 %v9228, 7
        %v9230 = vsub.s32 5, %v9229
        %v9231 = vrot.slane %v9206, %v9230
        %v9232 = vlaneseq
        %v9233 = vshrl.u32 %v9232, 7
        %v9234 = vsub.s32 6, %v9233
        %v9235 = vrot.slane %v9206, %v9234
        %v9236 = vlaneseq
        %v9237 = vshrl.u32 %v9236, 7
        %v9238 = vsub.s32 7, %v9237
        %v9239 = vrot.slane %v9206, %v9238
        %v9248 = vmul.f32 %v9198, %v9211
        %v9249 = vmul.f32 %v9199, %v9215
        %v9250 = vmul.f32 %v9200, %v9219
        %v9251 = vmul.f32 %v9201, %v9223
        %v9252 = vmul.f32 %v9202, %v9227
        %v9253 = vmul.f32 %v9203, %v9231
        %v9254 = vmul.f32 %v9204, %v9235
        %v9255 = vmul.f32 %v9205, %v9239
        %v9256 = vld [vmem:[#allocation10] sm:$0xff]
        %v9257 = vlaneseq
        %v9258 = vshrl.u32 %v9257, 7
        %v9259 = vsub.s32 0, %v9258
        %v9260 = vrot.slane %v9248, %v9259
        %v9261 = vlaneseq
        %v9262 = vshrl.u32 %v9261, 7
        %v9263 = vsub.s32 0, %v9262
        %v9264 = vrot.slane %v9249, %v9263
        %v9265 = vmul.f32 %v7974, %v9260
        %v9266 = vmul.f32 %v7975, %v9264
        %v9267 = vmul.f32 %v7982, %v9260
        %v9268 = vmul.f32 %v7983, %v9264
        %v9270 = vlaneseq
        %v9271 = vshrl.u32 %v9270, 7
        %v9272 = vsub.s32 0, %v9271
        %v9273 = vrot.slane %v9256, %v9272
        %v9274 = vlaneseq
        %v9275 = vshrl.u32 %v9274, 7
        %v9276 = vsub.s32 1, %v9275
        %v9277 = vrot.slane %v9256, %v9276
        %v9280 = vadd.f32 %v9265, %v9273
        %v9281 = vadd.f32 %v9266, %v9277
        %v9282 = vadd.f32 %v9267, %v9273
        %v9283 = vadd.f32 %v9268, %v9277
        %v9284 = vmax.f32 %v9280, 0.0
        %v9285 = vmax.f32 %v9281, 0.0
        %v9286 = vmax.f32 %v9282, 0.0
        %v9287 = vmax.f32 %v9283, 0.0
        %v9288 = vlaneseq
        %v9289 = vshrl.u32 %v9288, 7
        %v9290 = vsub.s32 0, %v9289
        %v9291 = vrot.slane %v9250, %v9290
        %v9292 = vlaneseq
        %v9293 = vshrl.u32 %v9292, 7
        %v9294 = vsub.s32 0, %v9293
        %v9295 = vrot.slane %v9251, %v9294
        %v9296 = vmul.f32 %v7976, %v9291
        %v9297 = vmul.f32 %v7977, %v9295
        %v9298 = vmul.f32 %v7984, %v9291
        %v9299 = vmul.f32 %v7985, %v9295
        %v9300 = vrot.slane %v9256, 2
        %v9301 = vlaneseq
        %v9302 = vshrl.u32 %v9301, 7
        %v9303 = vsub.s32 0, %v9302
        %v9304 = vrot.slane %v9300, %v9303
        %v9305 = vlaneseq
        %v9306 = vshrl.u32 %v9305, 7
        %v9307 = vsub.s32 1, %v9306
        %v9308 = vrot.slane %v9300, %v9307
        %v9311 = vadd.f32 %v9296, %v9304
        %v9312 = vadd.f32 %v9297, %v9308
        %v9313 = vadd.f32 %v9298, %v9304
        %v9314 = vadd.f32 %v9299, %v9308
        %v9315 = vmax.f32 %v9311, 0.0
        %v9316 = vmax.f32 %v9312, 0.0
        %v9317 = vmax.f32 %v9313, 0.0
        %v9318 = vmax.f32 %v9314, 0.0
        %v9319 = vadd.f32 %v9284, %v9315
        %v9320 = vadd.f32 %v9285, %v9316
        %v9321 = vadd.f32 %v9286, %v9317
        %v9322 = vadd.f32 %v9287, %v9318
        %v9323 = vlaneseq
        %v9324 = vshrl.u32 %v9323, 7
        %v9325 = vsub.s32 0, %v9324
        %v9326 = vrot.slane %v9252, %v9325
        %v9327 = vlaneseq
        %v9328 = vshrl.u32 %v9327, 7
        %v9329 = vsub.s32 0, %v9328
        %v9330 = vrot.slane %v9253, %v9329
        %v9331 = vmul.f32 %v7978, %v9326
        %v9332 = vmul.f32 %v7979, %v9330
        %v9333 = vmul.f32 %v7986, %v9326
        %v9334 = vmul.f32 %v7987, %v9330
        %v9335 = vrot.slane %v9256, 4
        %v9336 = vlaneseq
        %v9337 = vshrl.u32 %v9336, 7
        %v9338 = vsub.s32 0, %v9337
        %v9339 = vrot.slane %v9335, %v9338
        %v9340 = vlaneseq
        %v9341 = vshrl.u32 %v9340, 7
        %v9342 = vsub.s32 1, %v9341
        %v9343 = vrot.slane %v9335, %v9342
        %v9346 = vadd.f32 %v9331, %v9339
        %v9347 = vadd.f32 %v9332, %v9343
        %v9348 = vadd.f32 %v9333, %v9339
        %v9349 = vadd.f32 %v9334, %v9343
        %v9350 = vmax.f32 %v9346, 0.0
        %v9351 = vmax.f32 %v9347, 0.0
        %v9352 = vmax.f32 %v9348, 0.0
        %v9353 = vmax.f32 %v9349, 0.0
        %v9354 = vadd.f32 %v9319, %v9350
        %v9355 = vadd.f32 %v9320, %v9351
        %v9356 = vadd.f32 %v9321, %v9352
        %v9357 = vadd.f32 %v9322, %v9353
        %v9358 = vlaneseq
        %v9359 = vshrl.u32 %v9358, 7
        %v9360 = vsub.s32 0, %v9359
        %v9361 = vrot.slane %v9254, %v9360
        %v9362 = vlaneseq
        %v9363 = vshrl.u32 %v9362, 7
        %v9364 = vsub.s32 0, %v9363
        %v9365 = vrot.slane %v9255, %v9364
        %v9366 = vmul.f32 %v7980, %v9361
        %v9367 = vmul.f32 %v7981, %v9365
        %v9368 = vmul.f32 %v7988, %v9361
        %v9369 = vmul.f32 %v7989, %v9365
        %v9370 = vrot.slane %v9256, 6
        %v9371 = vlaneseq
        %v9372 = vshrl.u32 %v9371, 7
        %v9373 = vsub.s32 0, %v9372
        %v9374 = vrot.slane %v9370, %v9373
        %v9375 = vlaneseq
        %v9376 = vshrl.u32 %v9375, 7
        %v9377 = vsub.s32 1, %v9376
        %v9378 = vrot.slane %v9370, %v9377
        %v9381 = vadd.f32 %v9366, %v9374
        %v9382 = vadd.f32 %v9367, %v9378
        %v9383 = vadd.f32 %v9368, %v9374
        %v9384 = vadd.f32 %v9369, %v9378
        %v9385 = vmax.f32 %v9381, 0.0
        %v9386 = vmax.f32 %v9382, 0.0
        %v9387 = vmax.f32 %v9383, 0.0
        %v9388 = vmax.f32 %v9384, 0.0
        %v9389 = vadd.f32 %v9354, %v9385
        %v9390 = vadd.f32 %v9355, %v9386
        %v9391 = vadd.f32 %v9356, %v9387
        %v9392 = vadd.f32 %v9357, %v9388
        %9393 = vst [vmem:[%s296] sm:$0xff] %v9389
        %9394 = vst [vmem:[%s296 + $0x8] sm:$0xff] %v9390
        %9395 = vst [vmem:[%s296 + $0x10] sm:$0xff] %v9391
        %9396 = vst [vmem:[%s296 + $0x18] sm:$0xff] %v9392
        %s9397 = sand.u32 %s142, 1
        %s9398 = scalar_lea.sflag [#allocation4], %s9397
        %s9399 = sand.u32 %s142, 1
        %s9400 = smul.addr %s9399, 32
        %s9401 = scalar_lea.vmem [#allocation11], %s9400
        // Predicated region
        $region61: #{tpu_custom_call.1} parent=39 // pred_check
          %p9402 = pneg %p152
        $region62: #{tpu_custom_call.1} parent=39 // pred_check_branch
          %9404 = sbr.rel (%p9402) target = $region64
        $region63: #{tpu_custom_call.1} parent=39 // pred_region
          %s9406 = ssub.s32 512, 512
          %9407 = vsyncadd %s9398, %s9406
          %s9408 = smul.addr %s24, 4
          %s9409 = smul.addr %s9408, 128
          %s9410 = scalar_lea.hbm %s5, %s9409
          %s9411 = sshll.u32 %s9401, 4
          %s9412 = int_to_ptr.vmem [resolvable:$true] %s9411
          %9417 = dma.vmem_to_hbm [thread:$0]  %s9412, 512, %s9410, %s9398, 256, 256, 16
        $region64: #{tpu_custom_call.1} parent=39 // pred_fallthru
          _
      $region40: #{tpu_custom_call.1} parent=5 // pred_fallthru
        _
      %p9418 = scmp.le.s32.totalorder 2, %s19
      // Predicated region
      $region65: #{tpu_custom_call.1} parent=5 // pred_check
        %p9419 = pneg %p9418
      $region66: #{tpu_custom_call.1} parent=5 // pred_check_branch
        %9421 = sbr.rel (%p9419) target = $region68
      $region67: #{tpu_custom_call.1} parent=5 // pred_region
        %s9422 = ssub.s32 %s19, 2
        // Predicated region
        $region69: #{tpu_custom_call.1} parent=67 // pred_check
          %p9423 = pneg %p158
        $region70: #{tpu_custom_call.1} parent=67 // pred_check_branch
          %9425 = sbr.rel (%p9423) target = $region72
        $region71: #{tpu_custom_call.1} parent=67 // pred_region
          %s9426 = sand.u32 %s143, 1
          %s9427 = scalar_lea.sflag [#allocation4], %s9426
          %s9428 = sand.u32 %s143, 1
          %s9429 = smul.addr %s9428, 32
          %s9430 = scalar_lea.vmem [#allocation11], %s9429
          %9431 = dma.done %s9427, 512
        $region72: #{tpu_custom_call.1} parent=67 // pred_fallthru
          _
      $region68: #{tpu_custom_call.1} parent=5 // pred_fallthru
        _
    $region6: #{tpu_custom_call.1} parent=1 // loop_footer
      %s23 = sadd.s32 1, %s19
    $region7: #{tpu_custom_call.1} parent=1 // loop_footer_branch
      %18 = sbr.rel target = $region3
    $region8: #{tpu_custom_call.1} parent=1 // loop_exit
      _
    %9432 = vsyncpa [#allocation3], 1
    %s9433 = scalar_lea.sflag [#allocation3], 1
    %9434 = vsyncpa %s9433, 1
    %9435 = vsyncpa [#allocation6], 1
    %9436 = vsyncpa [#allocation9], 1
    %9437 = vsyncpa [#allocation4], 1
    %s9438 = scalar_lea.sflag [#allocation4], 1
    %9439 = vsyncpa %s9438, 1

</llo_original>
